<compile_context>
chip_gen: v5e
topology: v5e:2x2
jax: 0.10.0
libtpu: 0.0.40
codegen_flags: <defaults>
</compile_context>

<pallas_src>
import math

import jax
import jax.numpy as jnp
from jax.experimental import pallas as pl
from jax.experimental.pallas import tpu as pltpu

D_MODEL = 768
N_HEADS = 3
D_K = 156
D_V = 156
D_HP = 256                          # padded per-head width (multiple of 128 lanes)
DQP = N_HEADS * D_HP                # 768
SCALE = 1.0 / math.sqrt(156.0)      # hard-coded sqrt(156), exactly as in the reference module
LN_EPS = 1e-5                       # PyTorch nn.LayerNorm default eps


# ----------------------------------------------------------------------------- kernel
def mha_kernel(q_ref, kproj_ref, vproj_ref,
               wq_ref, bq_ref, wfc_ref, bfc_ref, gamma_ref, beta_ref,
               out_ref, attn_ref):
    q_in = q_ref[0]                                       # (TQ, D_MODEL) f32, also residual
    tq = q_in.shape[0]

    # Q projection: bf16 operands, f32 accumulate.  W_Q / b_Q already carry the
    # 1/sqrt(156) score scale and are zero-padded to 256 per head.
    q_proj = (jnp.dot(q_in.astype(jnp.bfloat16), wq_ref[...],
                      preferred_element_type=jnp.float32) + bq_ref[...])   # (TQ, DQP) f32

    out_acc = jnp.zeros((tq, D_MODEL), jnp.float32)
    for h in range(N_HEADS):                              # n_heads=3, static unroll
        lo, hi = h * D_HP, (h + 1) * D_HP
        qh = q_proj[:, lo:hi].astype(jnp.bfloat16)        # (TQ, D_HP)   lane-aligned slice
        kh = kproj_ref[0, :, lo:hi]                       # (S,  D_HP)   bf16
        vh = vproj_ref[0, :, lo:hi]                       # (S,  D_HP)   bf16

        # scores = (q * scale) @ k^T ; padded columns are zero on both sides.
        scores = jax.lax.dot_general(
            qh, kh, (((1,), (1,)), ((), ())),
            preferred_element_type=jnp.float32)           # (TQ, S) f32

        # numerically stable softmax over the key axis (f32); approximate
        # reciprocal runs on the EUP slot -- free while the MXU is busy.
        scores = scores - jnp.max(scores, axis=-1, keepdims=True)
        e = jnp.exp(scores)
        attn = e * pl.reciprocal(jnp.sum(e, axis=-1, keepdims=True), approx=True)

        attn_ref[0, h] = attn.astype(attn_ref.dtype)      # (TQ, S) writeback

        # Per-head fc accumulation (no (S, 3*156) concatenate); wfc padding rows
        # are zero so the padded context columns contribute exactly zero.
        ctx_h = jnp.dot(attn.astype(jnp.bfloat16), vh,
                        preferred_element_type=jnp.float32)               # (TQ, D_HP)
        out_acc = out_acc + jnp.dot(ctx_h.astype(jnp.bfloat16), wfc_ref[lo:hi, :],
                                    preferred_element_type=jnp.float32)   # (TQ, D_MODEL)

    # fc bias + residual, then LayerNorm (biased variance, eps=1e-5, affine) in f32.
    res = out_acc + bfc_ref[...] + q_in
    mean = jnp.mean(res, axis=-1, keepdims=True)
    var = jnp.mean((res - mean) ** 2, axis=-1, keepdims=True)
    normed = (res - mean) * jax.lax.rsqrt(var + LN_EPS)
    out_ref[0] = (normed * gamma_ref[...] + beta_ref[...]).astype(out_ref.dtype)


# ----------------------------------------------------------------------------- weight prep
def _pad_heads_in(w, b):
    """(D_MODEL, H*D_K), (1, H*D_K) -> zero-padded to D_HP per head (f32)."""
    w3 = w.reshape(D_MODEL, N_HEADS, D_K)
    b3 = b.reshape(1, N_HEADS, D_K)
    wp = jnp.zeros((D_MODEL, N_HEADS, D_HP), w.dtype).at[:, :, :D_K].set(w3)
    bp = jnp.zeros((1, N_HEADS, D_HP), b.dtype).at[:, :, :D_K].set(b3)
    return wp.reshape(D_MODEL, DQP), bp.reshape(1, DQP)


def _pad_heads_out(wfc):
    """(H*D_V, D_MODEL) -> (H*D_HP, D_MODEL) with zero rows in the padding."""
    w3 = wfc.reshape(N_HEADS, D_V, D_MODEL)
    wp = jnp.zeros((N_HEADS, D_HP, D_MODEL), wfc.dtype).at[:, :D_V, :].set(w3)
    return wp.reshape(DQP, D_MODEL)


# ----------------------------------------------------------------------------- per-chip tuning
def _device_caps():
    """Return (max query tile, scoped-VMEM cap bytes) for the local TPU generation."""
    try:
        kind = jax.devices()[0].device_kind.lower()
    except Exception:
        kind = ""
    if "v7" in kind:                         # v7x: 64 MiB physical VMEM per TensorCore
        return 256, 52 * 1024 * 1024
    return 512, 96 * 1024 * 1024             # v5e / v6e: 128 MiB physical VMEM


def _vmem_budget_bytes(S, tq, attn_itemsize):
    """Rough per-step VMEM footprint of the kernel (bytes)."""
    f32, bf16 = 4, 2
    b = 0
    b += 2 * tq * D_MODEL * f32              # Q block (double-buffered)
    b += 2 * S * DQP * bf16                  # kproj + vproj (single-buffered)
    b += 2 * D_MODEL * DQP * bf16            # wq + wfc (single-buffered)
    b += (2 * DQP + 3 * D_MODEL) * f32       # biases / LN params
    b += 2 * tq * D_MODEL * f32              # out block (double-buffered)
    b += 2 * N_HEADS * tq * S * attn_itemsize   # attn block (double-buffered)
    # live in-kernel values: q_proj, out_acc, per-head scores/e/attn, ctx
    b += tq * DQP * f32 + tq * D_MODEL * f32 + 4 * tq * S * f32 + tq * D_HP * f32
    return b


def _pick_tq(S, max_tq, vmem_cap, attn_itemsize):
    if S <= max_tq:
        return S
    candidates = [t for t in (512, 256, 128, 64, 32, 16, 8)
                  if t <= max_tq and S % t == 0]
    for t in candidates:
        if 1.4 * _vmem_budget_bytes(S, t, attn_itemsize) <= vmem_cap:
            return t
    return candidates[-1] if candidates else S


# ----------------------------------------------------------------------------- pallas_call builder
def _build_call(B, S, tq, attn_dtype, vmem_limit, single_buffer_invariants):
    nq = S // tq

    def _maybe_single(shape, index_map):
        if single_buffer_invariants:
            # Block index is constant along the query axis: single-buffer it.
            return pl.BlockSpec(shape, index_map, pipeline_mode=pl.Buffered(1))
        return pl.BlockSpec(shape, index_map)

    def inv_spec(shape):
        return _maybe_single(shape, lambda b, q: (0,) * len(shape))

    def batch_spec(shape):
        return _maybe_single(shape, lambda b, q: (b,) + (0,) * (len(shape) - 1))

    in_specs = [
        pl.BlockSpec((1, tq, D_MODEL), lambda b, q: (b, q, 0)),   # Q (query-tiled, f32)
        batch_spec((1, S, DQP)),                                  # K projection (bf16, per batch)
        batch_spec((1, S, DQP)),                                  # V projection (bf16, per batch)
        inv_spec((D_MODEL, DQP)), inv_spec((1, DQP)),             # W_Q (bf16, scaled+padded), b_Q (f32)
        inv_spec((DQP, D_MODEL)), inv_spec((1, D_MODEL)),         # fc W (bf16, padded), fc b (f32)
        inv_spec((1, D_MODEL)), inv_spec((1, D_MODEL)),           # ln gamma, beta (f32)
    ]
    out_specs = [
        pl.BlockSpec((1, tq, D_MODEL), lambda b, q: (b, q, 0)),
        pl.BlockSpec((1, N_HEADS, tq, S), lambda b, q: (b, 0, q, 0)),
    ]
    out_shape = (
        jax.ShapeDtypeStruct((B, S, D_MODEL), jnp.float32),
        jax.ShapeDtypeStruct((B, N_HEADS, S, S), attn_dtype),
    )
    return pl.pallas_call(
        mha_kernel,
        grid=(B, nq),
        in_specs=in_specs,
        out_specs=out_specs,
        out_shape=out_shape,
        compiler_params=pltpu.CompilerParams(
            # K/V projections are hoisted, so the query axis is order-independent
            # and both axes can be sharded across TensorCores (v7x).
            dimension_semantics=("parallel", "parallel"),
            vmem_limit_bytes=vmem_limit,
        ),
    )


def multi_head_attention(Q, K, V, params, *, tq=None, attn_dtype=jnp.float32):
    """Q, K, V: (B, S, D_MODEL) float32.

    Returns (output (B, S, D_MODEL) f32, attn (B, N_HEADS, S, S) attn_dtype).
    Pass attn_dtype=jnp.bfloat16 to halve the O(S^2) attention writeback.
    """
    B, S, _ = Q.shape
    bf16 = jnp.bfloat16
    attn_itemsize = jnp.dtype(attn_dtype).itemsize

    max_tq, vmem_cap = _device_caps()
    if tq is None:
        tq = _pick_tq(S, max_tq, vmem_cap, attn_itemsize)
    assert S % tq == 0 and (tq % 8 == 0 or tq == S), "query tile must be 8-aligned"

    # One-time weight prep: fold the 1/sqrt(156) score scale into W_Q / b_Q,
    # zero-pad every head to 256 lanes, store matmul weights in bf16.
    wq_f, bq_f = _pad_heads_in(params["wq"] * SCALE, params["bq"] * SCALE)
    wk_f, bk_f = _pad_heads_in(params["wk"], params["bk"])
    wv_f, bv_f = _pad_heads_in(params["wv"], params["bv"])
    wfc_f = _pad_heads_out(params["wfc"])
    wq16, wfc16 = wq_f.astype(bf16), wfc_f.astype(bf16)

    # K/V projections hoisted out of the kernel: plain XLA GEMMs (bf16 operands,
    # f32 accumulate), reused by every query tile of a batch element.
    kproj = (jnp.einsum("bsd,de->bse", K.astype(bf16), wk_f.astype(bf16),
                        preferred_element_type=jnp.float32) + bk_f).astype(bf16)
    vproj = (jnp.einsum("bsd,de->bse", V.astype(bf16), wv_f.astype(bf16),
                        preferred_element_type=jnp.float32) + bv_f).astype(bf16)

    vmem_limit = int(min(vmem_cap,
                         max(16 * 1024 * 1024,
                             1.4 * _vmem_budget_bytes(S, tq, attn_itemsize))))

    operands = (Q, kproj, vproj, wq16, bq_f, wfc16,
                params["bfc"], params["gamma"], params["beta"])
    try:
        return _build_call(B, S, tq, attn_dtype, vmem_limit, True)(*operands)
    except Exception:
        # pl.Buffered(1) is a VMEM-only hint; if this Pallas version rejects it,
        # fall back to default (double) buffering -- numerics are identical.
        return _build_call(B, S, tq, attn_dtype, vmem_limit, False)(*operands)


# ----------------------------------------------------------------------------- reference + test
def reference(Q, K, V, p):
    """Pure-JAX reference mirroring the PyTorch forward exactly (unpadded f32 weights)."""
    B, S, _ = Q.shape
    q = (Q @ p["wq"] + p["bq"]).reshape(B, S, N_HEADS, D_K).transpose(0, 2, 1, 3)
    k = (K @ p["wk"] + p["bk"]).reshape(B, S, N_HEADS, D_K).transpose(0, 2, 1, 3)
    v = (V @ p["wv"] + p["bv"]).reshape(B, S, N_HEADS, D_V).transpose(0, 2, 1, 3)
    scores = jnp.einsum("bhqd,bhkd->bhqk", q, k) * SCALE
    attn = jax.nn.softmax(scores, axis=-1)
    ctx = jnp.einsum("bhqk,bhkd->bhqd", attn, v).transpose(0, 2, 1, 3).reshape(B, S, N_HEADS * D_V)
    out = ctx @ p["wfc"] + p["bfc"]
    res = out + Q
    mean = res.mean(-1, keepdims=True)
    var = ((res - mean) ** 2).mean(-1, keepdims=True)
    y = (res - mean) / jnp.sqrt(var + LN_EPS) * p["gamma"] + p["beta"]
    return y, attn


def make_params(key):
    ks = jax.random.split(key, 8)
    dqk = N_HEADS * D_K
    scale_in = 1.0 / math.sqrt(D_MODEL)
    scale_fc = 1.0 / math.sqrt(dqk)
    return {
        "wq": jax.random.normal(ks[0], (D_MODEL, dqk), jnp.float32) * scale_in,
        "bq": jax.random.normal(ks[1], (1, dqk), jnp.float32) * 0.01,
        "wk": jax.random.normal(ks[2], (D_MODEL, dqk), jnp.float32) * scale_in,
        "bk": jax.random.normal(ks[3], (1, dqk), jnp.float32) * 0.01,
        "wv": jax.random.normal(ks[4], (D_MODEL, dqk), jnp.float32) * scale_in,
        "bv": jax.random.normal(ks[5], (1, dqk), jnp.float32) * 0.01,
        "wfc": jax.random.normal(ks[6], (dqk, D_MODEL), jnp.float32) * scale_fc,
        "bfc": jax.random.normal(ks[7], (1, D_MODEL), jnp.float32) * 0.01,
        "gamma": jnp.ones((1, D_MODEL), jnp.float32),
        "beta": jnp.zeros((1, D_MODEL), jnp.float32),
    }


if __name__ == "__main__":
    B, S = 2, 8
    key = jax.random.PRNGKey(0)
    kq, kk, kv, kp = jax.random.split(key, 4)
    Q = jax.random.normal(kq, (B, S, D_MODEL), jnp.float32)
    K = jax.random.normal(kk, (B, S, D_MODEL), jnp.float32)
    V = jax.random.normal(kv, (B, S, D_MODEL), jnp.float32)
    params = make_params(kp)

    out, attn = multi_head_attention(Q, K, V, params)
    out = jax.block_until_ready(out)
    attn = jax.block_until_ready(attn)

    ref_out, ref_attn = reference(Q, K, V, params)
    assert out.shape == (B, S, D_MODEL) and attn.shape == (B, N_HEADS, S, S)
    # bf16 MXU operands + approximate softmax reciprocal -> relaxed tolerances.
    assert jnp.allclose(out, ref_out, atol=3e-2, rtol=3e-2)
    assert jnp.allclose(attn.astype(jnp.float32), ref_attn, atol=2e-2, rtol=2e-2)

    print("KERNEL_OK")
</pallas_src>

<mosaic_0001>
module attributes {stable_mosaic.version = 11 : i64} {
  func.func @mha_kernel(%arg0: i32, %arg1: i32, %arg2: memref<1x8x768xf32, #tpu.memory_space<vmem>>, %arg3: memref<1x8x768xbf16, #tpu.memory_space<vmem>>, %arg4: memref<1x8x768xbf16, #tpu.memory_space<vmem>>, %arg5: memref<768x768xbf16, #tpu.memory_space<vmem>>, %arg6: memref<1x768xf32, #tpu.memory_space<vmem>>, %arg7: memref<768x768xbf16, #tpu.memory_space<vmem>>, %arg8: memref<1x768xf32, #tpu.memory_space<vmem>>, %arg9: memref<1x768xf32, #tpu.memory_space<vmem>>, %arg10: memref<1x768xf32, #tpu.memory_space<vmem>>, %arg11: memref<1x8x768xf32, #tpu.memory_space<vmem>>, %arg12: memref<1x3x8x8xf32, #tpu.memory_space<vmem>>) attributes {dimension_semantics = [#tpu.dimension_semantics<parallel>, #tpu.dimension_semantics<parallel>], iteration_bounds = array<i64: 2, 1>, scalar_prefetch = 0 : i64, scratch_operands = 0 : i64, tpu.core_type = #tpu.core_type<tc>, window_params = [{transform_indices = @transform_0, window_bounds = array<i64: 1, 8, 768>}, {pipeline_mode = #tpu.pipeline_mode<synchronous>, transform_indices = @transform_1, window_bounds = array<i64: 1, 8, 768>}, {pipeline_mode = #tpu.pipeline_mode<synchronous>, transform_indices = @transform_2, window_bounds = array<i64: 1, 8, 768>}, {pipeline_mode = #tpu.pipeline_mode<synchronous>, transform_indices = @transform_3, window_bounds = array<i64: 768, 768>}, {pipeline_mode = #tpu.pipeline_mode<synchronous>, transform_indices = @transform_4, window_bounds = array<i64: 1, 768>}, {pipeline_mode = #tpu.pipeline_mode<synchronous>, transform_indices = @transform_5, window_bounds = array<i64: 768, 768>}, {pipeline_mode = #tpu.pipeline_mode<synchronous>, transform_indices = @transform_6, window_bounds = array<i64: 1, 768>}, {pipeline_mode = #tpu.pipeline_mode<synchronous>, transform_indices = @transform_7, window_bounds = array<i64: 1, 768>}, {pipeline_mode = #tpu.pipeline_mode<synchronous>, transform_indices = @transform_8, window_bounds = array<i64: 1, 768>}, {transform_indices = @transform_9, window_bounds = array<i64: 1, 8, 768>}, {transform_indices = @transform_10, window_bounds = array<i64: 1, 3, 8, 8>}]} {
    %c0 = arith.constant 0 : index
    %c0_0 = arith.constant 0 : index
    %c0_1 = arith.constant 0 : index
    %0 = vector.load %arg2[%c0, %c0_0, %c0_1] : memref<1x8x768xf32, #tpu.memory_space<vmem>>, vector<1x8x768xf32>
    %1 = vector.shape_cast %0 : vector<1x8x768xf32> to vector<8x768xf32>
    %2 = arith.truncf %1 : vector<8x768xf32> to vector<8x768xbf16>
    %c0_2 = arith.constant 0 : index
    %c0_3 = arith.constant 0 : index
    %3 = vector.load %arg5[%c0_2, %c0_3] : memref<768x768xbf16, #tpu.memory_space<vmem>>, vector<768x768xbf16>
    %cst = arith.constant dense<0.000000e+00> : vector<8x768xf32>
    %4 = tpu.matmul %2, %3, %cst {dimension_numbers = #tpu.dot_dimension_numbers<[1], [0], [0], [1], [0, 0, 1, 1], [], []>} : vector<8x768xbf16>, vector<768x768xbf16>, vector<8x768xf32> -> vector<8x768xf32>
    %c0_4 = arith.constant 0 : index
    %c0_5 = arith.constant 0 : index
    %5 = vector.load %arg6[%c0_4, %c0_5] : memref<1x768xf32, #tpu.memory_space<vmem>>, vector<1x768xf32>
    %6 = vector.broadcast %5 : vector<1x768xf32> to vector<8x768xf32>
    %7 = arith.addf %4, %6 : vector<8x768xf32>
    %cst_6 = arith.constant 0.000000e+00 : f32
    %8 = vector.broadcast %cst_6 : f32 to vector<8x768xf32>
    %9 = vector.extract_strided_slice %7 {offsets = [0, 0], sizes = [8, 256], strides = [1, 1]} : vector<8x768xf32> to vector<8x256xf32>
    %10 = arith.truncf %9 : vector<8x256xf32> to vector<8x256xbf16>
    %c0_7 = arith.constant 0 : index
    %c0_8 = arith.constant 0 : index
    %c0_9 = arith.constant 0 : index
    %11 = vector.load %arg3[%c0_7, %c0_8, %c0_9] : memref<1x8x768xbf16, #tpu.memory_space<vmem>>, vector<1x8x256xbf16>
    %12 = vector.shape_cast %11 : vector<1x8x256xbf16> to vector<8x256xbf16>
    %c0_10 = arith.constant 0 : index
    %c0_11 = arith.constant 0 : index
    %c0_12 = arith.constant 0 : index
    %13 = vector.load %arg4[%c0_10, %c0_11, %c0_12] : memref<1x8x768xbf16, #tpu.memory_space<vmem>>, vector<1x8x256xbf16>
    %14 = vector.shape_cast %13 : vector<1x8x256xbf16> to vector<8x256xbf16>
    %cst_13 = arith.constant dense<0.000000e+00> : vector<8x8xf32>
    %15 = tpu.matmul %10, %12, %cst_13 {dimension_numbers = #tpu.dot_dimension_numbers<[1], [1], [0], [0], [0, 0, 1, 0], [], []>} : vector<8x256xbf16>, vector<8x256xbf16>, vector<8x8xf32> -> vector<8x8xf32>
    %cst_14 = arith.constant dense<0xFF800000> : vector<8xf32>
    %16 = vector.multi_reduction <maximumf>, %15, %cst_14 [1] : vector<8x8xf32> to vector<8xf32>
    %17 = vector.shape_cast %16 : vector<8xf32> to vector<8x1xf32>
    %18 = vector.broadcast %17 : vector<8x1xf32> to vector<8x8xf32>
    %19 = arith.subf %15, %18 : vector<8x8xf32>
    %20 = math.exp %19 : vector<8x8xf32>
    %cst_15 = arith.constant dense<0.000000e+00> : vector<8xf32>
    %21 = vector.multi_reduction <add>, %20, %cst_15 [1] : vector<8x8xf32> to vector<8xf32>
    %22 = vector.shape_cast %21 : vector<8xf32> to vector<8x1xf32>
    %23 = tpu.reciprocal %22 {approx = true} : vector<8x1xf32> -> vector<8x1xf32>
    %24 = vector.broadcast %23 : vector<8x1xf32> to vector<8x8xf32>
    %25 = arith.mulf %20, %24 : vector<8x8xf32>
    %c0_16 = arith.constant 0 : index
    %c0_17 = arith.constant 0 : index
    %c0_18 = arith.constant 0 : index
    %c0_19 = arith.constant 0 : index
    %26 = vector.load %arg12[%c0_16, %c0_17, %c0_18, %c0_19] : memref<1x3x8x8xf32, #tpu.memory_space<vmem>>, vector<1x1x8x8xf32>
    %27 = vector.shape_cast %26 : vector<1x1x8x8xf32> to vector<8x8xf32>
    %28 = vector.shape_cast %25 : vector<8x8xf32> to vector<1x1x8x8xf32>
    tpu.vector_store %arg12[%c0_16, %c0_17, %c0_18, %c0_19], %28 {strides = array<i32>} : memref<1x3x8x8xf32, #tpu.memory_space<vmem>>, vector<1x1x8x8xf32>,
    %29 = arith.truncf %25 : vector<8x8xf32> to vector<8x8xbf16>
    %cst_20 = arith.constant dense<0.000000e+00> : vector<8x256xf32>
    %30 = tpu.matmul %29, %14, %cst_20 {dimension_numbers = #tpu.dot_dimension_numbers<[1], [0], [0], [1], [0, 0, 1, 1], [], []>} : vector<8x8xbf16>, vector<8x256xbf16>, vector<8x256xf32> -> vector<8x256xf32>
    %31 = arith.truncf %30 : vector<8x256xf32> to vector<8x256xbf16>
    %c0_21 = arith.constant 0 : index
    %c0_22 = arith.constant 0 : index
    %32 = vector.load %arg7[%c0_21, %c0_22] : memref<768x768xbf16, #tpu.memory_space<vmem>>, vector<256x768xbf16>
    %cst_23 = arith.constant dense<0.000000e+00> : vector<8x768xf32>
    %33 = tpu.matmul %31, %32, %cst_23 {dimension_numbers = #tpu.dot_dimension_numbers<[1], [0], [0], [1], [0, 0, 1, 1], [], []>} : vector<8x256xbf16>, vector<256x768xbf16>, vector<8x768xf32> -> vector<8x768xf32>
    %34 = arith.addf %8, %33 : vector<8x768xf32>
    %35 = vector.extract_strided_slice %7 {offsets = [0, 256], sizes = [8, 256], strides = [1, 1]} : vector<8x768xf32> to vector<8x256xf32>
    %36 = arith.truncf %35 : vector<8x256xf32> to vector<8x256xbf16>
    %c0_24 = arith.constant 0 : index
    %c0_25 = arith.constant 0 : index
    %c256 = arith.constant 256 : index
    %37 = vector.load %arg3[%c0_24, %c0_25, %c256] : memref<1x8x768xbf16, #tpu.memory_space<vmem>>, vector<1x8x256xbf16>
    %38 = vector.shape_cast %37 : vector<1x8x256xbf16> to vector<8x256xbf16>
    %c0_26 = arith.constant 0 : index
    %c0_27 = arith.constant 0 : index
    %c256_28 = arith.constant 256 : index
    %39 = vector.load %arg4[%c0_26, %c0_27, %c256_28] : memref<1x8x768xbf16, #tpu.memory_space<vmem>>, vector<1x8x256xbf16>
    %40 = vector.shape_cast %39 : vector<1x8x256xbf16> to vector<8x256xbf16>
    %cst_29 = arith.constant dense<0.000000e+00> : vector<8x8xf32>
    %41 = tpu.matmul %36, %38, %cst_29 {dimension_numbers = #tpu.dot_dimension_numbers<[1], [1], [0], [0], [0, 0, 1, 0], [], []>} : vector<8x256xbf16>, vector<8x256xbf16>, vector<8x8xf32> -> vector<8x8xf32>
    %cst_30 = arith.constant dense<0xFF800000> : vector<8xf32>
    %42 = vector.multi_reduction <maximumf>, %41, %cst_30 [1] : vector<8x8xf32> to vector<8xf32>
    %43 = vector.shape_cast %42 : vector<8xf32> to vector<8x1xf32>
    %44 = vector.broadcast %43 : vector<8x1xf32> to vector<8x8xf32>
    %45 = arith.subf %41, %44 : vector<8x8xf32>
    %46 = math.exp %45 : vector<8x8xf32>
    %cst_31 = arith.constant dense<0.000000e+00> : vector<8xf32>
    %47 = vector.multi_reduction <add>, %46, %cst_31 [1] : vector<8x8xf32> to vector<8xf32>
    %48 = vector.shape_cast %47 : vector<8xf32> to vector<8x1xf32>
    %49 = tpu.reciprocal %48 {approx = true} : vector<8x1xf32> -> vector<8x1xf32>
    %50 = vector.broadcast %49 : vector<8x1xf32> to vector<8x8xf32>
    %51 = arith.mulf %46, %50 : vector<8x8xf32>
    %c0_32 = arith.constant 0 : index
    %c1 = arith.constant 1 : index
    %c0_33 = arith.constant 0 : index
    %c0_34 = arith.constant 0 : index
    %52 = vector.load %arg12[%c0_32, %c1, %c0_33, %c0_34] : memref<1x3x8x8xf32, #tpu.memory_space<vmem>>, vector<1x1x8x8xf32>
    %53 = vector.shape_cast %52 : vector<1x1x8x8xf32> to vector<8x8xf32>
    %54 = vector.shape_cast %51 : vector<8x8xf32> to vector<1x1x8x8xf32>
    tpu.vector_store %arg12[%c0_32, %c1, %c0_33, %c0_34], %54 {strides = array<i32>} : memref<1x3x8x8xf32, #tpu.memory_space<vmem>>, vector<1x1x8x8xf32>,
    %55 = arith.truncf %51 : vector<8x8xf32> to vector<8x8xbf16>
    %cst_35 = arith.constant dense<0.000000e+00> : vector<8x256xf32>
    %56 = tpu.matmul %55, %40, %cst_35 {dimension_numbers = #tpu.dot_dimension_numbers<[1], [0], [0], [1], [0, 0, 1, 1], [], []>} : vector<8x8xbf16>, vector<8x256xbf16>, vector<8x256xf32> -> vector<8x256xf32>
    %57 = arith.truncf %56 : vector<8x256xf32> to vector<8x256xbf16>
    %c256_36 = arith.constant 256 : index
    %c0_37 = arith.constant 0 : index
    %58 = vector.load %arg7[%c256_36, %c0_37] : memref<768x768xbf16, #tpu.memory_space<vmem>>, vector<256x768xbf16>
    %cst_38 = arith.constant dense<0.000000e+00> : vector<8x768xf32>
    %59 = tpu.matmul %57, %58, %cst_38 {dimension_numbers = #tpu.dot_dimension_numbers<[1], [0], [0], [1], [0, 0, 1, 1], [], []>} : vector<8x256xbf16>, vector<256x768xbf16>, vector<8x768xf32> -> vector<8x768xf32>
    %60 = arith.addf %34, %59 : vector<8x768xf32>
    %61 = vector.extract_strided_slice %7 {offsets = [0, 512], sizes = [8, 256], strides = [1, 1]} : vector<8x768xf32> to vector<8x256xf32>
    %62 = arith.truncf %61 : vector<8x256xf32> to vector<8x256xbf16>
    %c0_39 = arith.constant 0 : index
    %c0_40 = arith.constant 0 : index
    %c512 = arith.constant 512 : index
    %63 = vector.load %arg3[%c0_39, %c0_40, %c512] : memref<1x8x768xbf16, #tpu.memory_space<vmem>>, vector<1x8x256xbf16>
    %64 = vector.shape_cast %63 : vector<1x8x256xbf16> to vector<8x256xbf16>
    %c0_41 = arith.constant 0 : index
    %c0_42 = arith.constant 0 : index
    %c512_43 = arith.constant 512 : index
    %65 = vector.load %arg4[%c0_41, %c0_42, %c512_43] : memref<1x8x768xbf16, #tpu.memory_space<vmem>>, vector<1x8x256xbf16>
    %66 = vector.shape_cast %65 : vector<1x8x256xbf16> to vector<8x256xbf16>
    %cst_44 = arith.constant dense<0.000000e+00> : vector<8x8xf32>
    %67 = tpu.matmul %62, %64, %cst_44 {dimension_numbers = #tpu.dot_dimension_numbers<[1], [1], [0], [0], [0, 0, 1, 0], [], []>} : vector<8x256xbf16>, vector<8x256xbf16>, vector<8x8xf32> -> vector<8x8xf32>
    %cst_45 = arith.constant dense<0xFF800000> : vector<8xf32>
    %68 = vector.multi_reduction <maximumf>, %67, %cst_45 [1] : vector<8x8xf32> to vector<8xf32>
    %69 = vector.shape_cast %68 : vector<8xf32> to vector<8x1xf32>
    %70 = vector.broadcast %69 : vector<8x1xf32> to vector<8x8xf32>
    %71 = arith.subf %67, %70 : vector<8x8xf32>
    %72 = math.exp %71 : vector<8x8xf32>
    %cst_46 = arith.constant dense<0.000000e+00> : vector<8xf32>
    %73 = vector.multi_reduction <add>, %72, %cst_46 [1] : vector<8x8xf32> to vector<8xf32>
    %74 = vector.shape_cast %73 : vector<8xf32> to vector<8x1xf32>
    %75 = tpu.reciprocal %74 {approx = true} : vector<8x1xf32> -> vector<8x1xf32>
    %76 = vector.broadcast %75 : vector<8x1xf32> to vector<8x8xf32>
    %77 = arith.mulf %72, %76 : vector<8x8xf32>
    %c0_47 = arith.constant 0 : index
    %c2 = arith.constant 2 : index
    %c0_48 = arith.constant 0 : index
    %c0_49 = arith.constant 0 : index
    %78 = vector.load %arg12[%c0_47, %c2, %c0_48, %c0_49] : memref<1x3x8x8xf32, #tpu.memory_space<vmem>>, vector<1x1x8x8xf32>
    %79 = vector.shape_cast %78 : vector<1x1x8x8xf32> to vector<8x8xf32>
    %80 = vector.shape_cast %77 : vector<8x8xf32> to vector<1x1x8x8xf32>
    tpu.vector_store %arg12[%c0_47, %c2, %c0_48, %c0_49], %80 {strides = array<i32>} : memref<1x3x8x8xf32, #tpu.memory_space<vmem>>, vector<1x1x8x8xf32>,
    %81 = arith.truncf %77 : vector<8x8xf32> to vector<8x8xbf16>
    %cst_50 = arith.constant dense<0.000000e+00> : vector<8x256xf32>
    %82 = tpu.matmul %81, %66, %cst_50 {dimension_numbers = #tpu.dot_dimension_numbers<[1], [0], [0], [1], [0, 0, 1, 1], [], []>} : vector<8x8xbf16>, vector<8x256xbf16>, vector<8x256xf32> -> vector<8x256xf32>
    %83 = arith.truncf %82 : vector<8x256xf32> to vector<8x256xbf16>
    %c512_51 = arith.constant 512 : index
    %c0_52 = arith.constant 0 : index
    %84 = vector.load %arg7[%c512_51, %c0_52] : memref<768x768xbf16, #tpu.memory_space<vmem>>, vector<256x768xbf16>
    %cst_53 = arith.constant dense<0.000000e+00> : vector<8x768xf32>
    %85 = tpu.matmul %83, %84, %cst_53 {dimension_numbers = #tpu.dot_dimension_numbers<[1], [0], [0], [1], [0, 0, 1, 1], [], []>} : vector<8x256xbf16>, vector<256x768xbf16>, vector<8x768xf32> -> vector<8x768xf32>
    %86 = arith.addf %60, %85 : vector<8x768xf32>
    %c0_54 = arith.constant 0 : index
    %c0_55 = arith.constant 0 : index
    %87 = vector.load %arg8[%c0_54, %c0_55] : memref<1x768xf32, #tpu.memory_space<vmem>>, vector<1x768xf32>
    %88 = vector.broadcast %87 : vector<1x768xf32> to vector<8x768xf32>
    %89 = arith.addf %86, %88 : vector<8x768xf32>
    %90 = arith.addf %89, %1 : vector<8x768xf32>
    %cst_56 = arith.constant dense<0.000000e+00> : vector<8xf32>
    %91 = vector.multi_reduction <add>, %90, %cst_56 [1] : vector<8x768xf32> to vector<8xf32>
    %92 = vector.shape_cast %91 : vector<8xf32> to vector<8x1xf32>
    %cst_57 = arith.constant 7.680000e+02 : f32
    %93 = vector.broadcast %cst_57 : f32 to vector<8x1xf32>
    %94 = arith.divf %92, %93 : vector<8x1xf32>
    %95 = vector.broadcast %94 : vector<8x1xf32> to vector<8x768xf32>
    %96 = arith.subf %90, %95 : vector<8x768xf32>
    %97 = arith.mulf %96, %96 : vector<8x768xf32>
    %cst_58 = arith.constant dense<0.000000e+00> : vector<8xf32>
    %98 = vector.multi_reduction <add>, %97, %cst_58 [1] : vector<8x768xf32> to vector<8xf32>
    %99 = vector.shape_cast %98 : vector<8xf32> to vector<8x1xf32>
    %cst_59 = arith.constant 7.680000e+02 : f32
    %100 = vector.broadcast %cst_59 : f32 to vector<8x1xf32>
    %101 = arith.divf %99, %100 : vector<8x1xf32>
    %102 = vector.broadcast %94 : vector<8x1xf32> to vector<8x768xf32>
    %103 = arith.subf %90, %102 : vector<8x768xf32>
    %cst_60 = arith.constant 9.99999974E-6 : f32
    %104 = vector.broadcast %cst_60 : f32 to vector<8x1xf32>
    %105 = arith.addf %101, %104 : vector<8x1xf32>
    %106 = math.rsqrt %105 : vector<8x1xf32>
    %107 = vector.broadcast %106 : vector<8x1xf32> to vector<8x768xf32>
    %108 = arith.mulf %103, %107 : vector<8x768xf32>
    %c0_61 = arith.constant 0 : index
    %c0_62 = arith.constant 0 : index
    %109 = vector.load %arg9[%c0_61, %c0_62] : memref<1x768xf32, #tpu.memory_space<vmem>>, vector<1x768xf32>
    %110 = vector.broadcast %109 : vector<1x768xf32> to vector<8x768xf32>
    %111 = arith.mulf %108, %110 : vector<8x768xf32>
    %c0_63 = arith.constant 0 : index
    %c0_64 = arith.constant 0 : index
    %112 = vector.load %arg10[%c0_63, %c0_64] : memref<1x768xf32, #tpu.memory_space<vmem>>, vector<1x768xf32>
    %113 = vector.broadcast %112 : vector<1x768xf32> to vector<8x768xf32>
    %114 = arith.addf %111, %113 : vector<8x768xf32>
    %c0_65 = arith.constant 0 : index
    %c0_66 = arith.constant 0 : index
    %c0_67 = arith.constant 0 : index
    %115 = vector.load %arg11[%c0_65, %c0_66, %c0_67] : memref<1x8x768xf32, #tpu.memory_space<vmem>>, vector<1x8x768xf32>
    %116 = vector.shape_cast %115 : vector<1x8x768xf32> to vector<8x768xf32>
    %117 = vector.shape_cast %114 : vector<8x768xf32> to vector<1x8x768xf32>
    tpu.vector_store %arg11[%c0_65, %c0_66, %c0_67], %117 {strides = array<i32>} : memref<1x8x768xf32, #tpu.memory_space<vmem>>, vector<1x8x768xf32>,
    return
  }
  func.func @transform_0(%arg0: i32, %arg1: i32) -> (i32, i32, i32) {
    %c0_i32 = arith.constant 0 : i32
    %c0_i32_0 = arith.constant 0 : i32
    return %arg0, %arg1, %c0_i32 : i32, i32, i32
  }
  func.func @transform_1(%arg0: i32, %arg1: i32) -> (i32, i32, i32) {
    %c0_i32 = arith.constant 0 : i32
    %c0_i32_0 = arith.constant 0 : i32
    %c0_i32_1 = arith.constant 0 : i32
    return %arg0, %c0_i32, %c0_i32_0 : i32, i32, i32
  }
  func.func @transform_2(%arg0: i32, %arg1: i32) -> (i32, i32, i32) {
    %c0_i32 = arith.constant 0 : i32
    %c0_i32_0 = arith.constant 0 : i32
    %c0_i32_1 = arith.constant 0 : i32
    return %arg0, %c0_i32, %c0_i32_0 : i32, i32, i32
  }
  func.func @transform_3(%arg0: i32, %arg1: i32) -> (i32, i32) {
    %c0_i32 = arith.constant 0 : i32
    %c0_i32_0 = arith.constant 0 : i32
    %c0_i32_1 = arith.constant 0 : i32
    return %c0_i32, %c0_i32_0 : i32, i32
  }
  func.func @transform_4(%arg0: i32, %arg1: i32) -> (i32, i32) {
    %c0_i32 = arith.constant 0 : i32
    %c0_i32_0 = arith.constant 0 : i32
    %c0_i32_1 = arith.constant 0 : i32
    return %c0_i32, %c0_i32_0 : i32, i32
  }
  func.func @transform_5(%arg0: i32, %arg1: i32) -> (i32, i32) {
    %c0_i32 = arith.constant 0 : i32
    %c0_i32_0 = arith.constant 0 : i32
    %c0_i32_1 = arith.constant 0 : i32
    return %c0_i32, %c0_i32_0 : i32, i32
  }
  func.func @transform_6(%arg0: i32, %arg1: i32) -> (i32, i32) {
    %c0_i32 = arith.constant 0 : i32
    %c0_i32_0 = arith.constant 0 : i32
    %c0_i32_1 = arith.constant 0 : i32
    return %c0_i32, %c0_i32_0 : i32, i32
  }
  func.func @transform_7(%arg0: i32, %arg1: i32) -> (i32, i32) {
    %c0_i32 = arith.constant 0 : i32
    %c0_i32_0 = arith.constant 0 : i32
    %c0_i32_1 = arith.constant 0 : i32
    return %c0_i32, %c0_i32_0 : i32, i32
  }
  func.func @transform_8(%arg0: i32, %arg1: i32) -> (i32, i32) {
    %c0_i32 = arith.constant 0 : i32
    %c0_i32_0 = arith.constant 0 : i32
    %c0_i32_1 = arith.constant 0 : i32
    return %c0_i32, %c0_i32_0 : i32, i32
  }
  func.func @transform_9(%arg0: i32, %arg1: i32) -> (i32, i32, i32) {
    %c0_i32 = arith.constant 0 : i32
    %c0_i32_0 = arith.constant 0 : i32
    return %arg0, %arg1, %c0_i32 : i32, i32, i32
  }
  func.func @transform_10(%arg0: i32, %arg1: i32) -> (i32, i32, i32, i32) {
    %c0_i32 = arith.constant 0 : i32
    %c0_i32_0 = arith.constant 0 : i32
    %c0_i32_1 = arith.constant 0 : i32
    return %arg0, %c0_i32, %arg1, %c0_i32_0 : i32, i32, i32, i32
  }
}

module attributes {stable_mosaic.version = 11 : i64} {
  func.func @mha_kernel(%arg0: i32, %arg1: i32, %arg2: memref<1x8x768xf32, #tpu.memory_space<vmem>>, %arg3: memref<1x8x768xbf16, #tpu.memory_space<vmem>>, %arg4: memref<1x8x768xbf16, #tpu.memory_space<vmem>>, %arg5: memref<768x768xbf16, #tpu.memory_space<vmem>>, %arg6: memref<1x768xf32, #tpu.memory_space<vmem>>, %arg7: memref<768x768xbf16, #tpu.memory_space<vmem>>, %arg8: memref<1x768xf32, #tpu.memory_space<vmem>>, %arg9: memref<1x768xf32, #tpu.memory_space<vmem>>, %arg10: memref<1x768xf32, #tpu.memory_space<vmem>>, %arg11: memref<1x8x768xf32, #tpu.memory_space<vmem>>, %arg12: memref<1x3x8x8xf32, #tpu.memory_space<vmem>>) attributes {dimension_semantics = [#tpu.dimension_semantics<parallel>, #tpu.dimension_semantics<parallel>], iteration_bounds = array<i64: 2, 1>, scalar_prefetch = 0 : i64, scratch_operands = 0 : i64, tpu.core_type = #tpu.core_type<tc>, window_params = [{transform_indices = @transform_0, window_bounds = array<i64: 1, 8, 768>}, {transform_indices = @transform_1, window_bounds = array<i64: 1, 8, 768>}, {transform_indices = @transform_2, window_bounds = array<i64: 1, 8, 768>}, {pipeline_mode = #tpu.pipeline_mode<synchronous>, transform_indices = @transform_3, window_bounds = array<i64: 768, 768>}, {pipeline_mode = #tpu.pipeline_mode<synchronous>, transform_indices = @transform_4, window_bounds = array<i64: 1, 768>}, {pipeline_mode = #tpu.pipeline_mode<synchronous>, transform_indices = @transform_5, window_bounds = array<i64: 768, 768>}, {pipeline_mode = #tpu.pipeline_mode<synchronous>, transform_indices = @transform_6, window_bounds = array<i64: 1, 768>}, {pipeline_mode = #tpu.pipeline_mode<synchronous>, transform_indices = @transform_7, window_bounds = array<i64: 1, 768>}, {pipeline_mode = #tpu.pipeline_mode<synchronous>, transform_indices = @transform_8, window_bounds = array<i64: 1, 768>}, {transform_indices = @transform_9, window_bounds = array<i64: 1, 8, 768>}, {transform_indices = @transform_10, window_bounds = array<i64: 1, 3, 8, 8>}]} {
    %c0 = arith.constant 0 : index
    %c0_0 = arith.constant 0 : index
    %c0_1 = arith.constant 0 : index
    %0 = vector.load %arg2[%c0, %c0_0, %c0_1] : memref<1x8x768xf32, #tpu.memory_space<vmem>>, vector<1x8x768xf32>
    %1 = vector.shape_cast %0 : vector<1x8x768xf32> to vector<8x768xf32>
    %2 = arith.truncf %1 : vector<8x768xf32> to vector<8x768xbf16>
    %c0_2 = arith.constant 0 : index
    %c0_3 = arith.constant 0 : index
    %3 = vector.load %arg5[%c0_2, %c0_3] : memref<768x768xbf16, #tpu.memory_space<vmem>>, vector<768x768xbf16>
    %cst = arith.constant dense<0.000000e+00> : vector<8x768xf32>
    %4 = tpu.matmul %2, %3, %cst {dimension_numbers = #tpu.dot_dimension_numbers<[1], [0], [0], [1], [0, 0, 1, 1], [], []>} : vector<8x768xbf16>, vector<768x768xbf16>, vector<8x768xf32> -> vector<8x768xf32>
    %c0_4 = arith.constant 0 : index
    %c0_5 = arith.constant 0 : index
    %5 = vector.load %arg6[%c0_4, %c0_5] : memref<1x768xf32, #tpu.memory_space<vmem>>, vector<1x768xf32>
    %6 = vector.broadcast %5 : vector<1x768xf32> to vector<8x768xf32>
    %7 = arith.addf %4, %6 : vector<8x768xf32>
    %cst_6 = arith.constant 0.000000e+00 : f32
    %8 = vector.broadcast %cst_6 : f32 to vector<8x768xf32>
    %9 = vector.extract_strided_slice %7 {offsets = [0, 0], sizes = [8, 256], strides = [1, 1]} : vector<8x768xf32> to vector<8x256xf32>
    %10 = arith.truncf %9 : vector<8x256xf32> to vector<8x256xbf16>
    %c0_7 = arith.constant 0 : index
    %c0_8 = arith.constant 0 : index
    %c0_9 = arith.constant 0 : index
    %11 = vector.load %arg3[%c0_7, %c0_8, %c0_9] : memref<1x8x768xbf16, #tpu.memory_space<vmem>>, vector<1x8x256xbf16>
    %12 = vector.shape_cast %11 : vector<1x8x256xbf16> to vector<8x256xbf16>
    %c0_10 = arith.constant 0 : index
    %c0_11 = arith.constant 0 : index
    %c0_12 = arith.constant 0 : index
    %13 = vector.load %arg4[%c0_10, %c0_11, %c0_12] : memref<1x8x768xbf16, #tpu.memory_space<vmem>>, vector<1x8x256xbf16>
    %14 = vector.shape_cast %13 : vector<1x8x256xbf16> to vector<8x256xbf16>
    %cst_13 = arith.constant dense<0.000000e+00> : vector<8x8xf32>
    %15 = tpu.matmul %10, %12, %cst_13 {dimension_numbers = #tpu.dot_dimension_numbers<[1], [1], [0], [0], [0, 0, 1, 0], [], []>} : vector<8x256xbf16>, vector<8x256xbf16>, vector<8x8xf32> -> vector<8x8xf32>
    %cst_14 = arith.constant dense<0xFF800000> : vector<8xf32>
    %16 = vector.multi_reduction <maximumf>, %15, %cst_14 [1] : vector<8x8xf32> to vector<8xf32>
    %17 = vector.shape_cast %16 : vector<8xf32> to vector<8x1xf32>
    %18 = vector.broadcast %17 : vector<8x1xf32> to vector<8x8xf32>
    %19 = arith.subf %15, %18 : vector<8x8xf32>
    %20 = math.exp %19 : vector<8x8xf32>
    %cst_15 = arith.constant dense<0.000000e+00> : vector<8xf32>
    %21 = vector.multi_reduction <add>, %20, %cst_15 [1] : vector<8x8xf32> to vector<8xf32>
    %22 = vector.shape_cast %21 : vector<8xf32> to vector<8x1xf32>
    %23 = tpu.reciprocal %22 {approx = true} : vector<8x1xf32> -> vector<8x1xf32>
    %24 = vector.broadcast %23 : vector<8x1xf32> to vector<8x8xf32>
    %25 = arith.mulf %20, %24 : vector<8x8xf32>
    %c0_16 = arith.constant 0 : index
    %c0_17 = arith.constant 0 : index
    %c0_18 = arith.constant 0 : index
    %c0_19 = arith.constant 0 : index
    %26 = vector.load %arg12[%c0_16, %c0_17, %c0_18, %c0_19] : memref<1x3x8x8xf32, #tpu.memory_space<vmem>>, vector<1x1x8x8xf32>
    %27 = vector.shape_cast %26 : vector<1x1x8x8xf32> to vector<8x8xf32>
    %28 = vector.shape_cast %25 : vector<8x8xf32> to vector<1x1x8x8xf32>
    tpu.vector_store %arg12[%c0_16, %c0_17, %c0_18, %c0_19], %28 {strides = array<i32>} : memref<1x3x8x8xf32, #tpu.memory_space<vmem>>, vector<1x1x8x8xf32>,
    %29 = arith.truncf %25 : vector<8x8xf32> to vector<8x8xbf16>
    %cst_20 = arith.constant dense<0.000000e+00> : vector<8x256xf32>
    %30 = tpu.matmul %29, %14, %cst_20 {dimension_numbers = #tpu.dot_dimension_numbers<[1], [0], [0], [1], [0, 0, 1, 1], [], []>} : vector<8x8xbf16>, vector<8x256xbf16>, vector<8x256xf32> -> vector<8x256xf32>
    %31 = arith.truncf %30 : vector<8x256xf32> to vector<8x256xbf16>
    %c0_21 = arith.constant 0 : index
    %c0_22 = arith.constant 0 : index
    %32 = vector.load %arg7[%c0_21, %c0_22] : memref<768x768xbf16, #tpu.memory_space<vmem>>, vector<256x768xbf16>
    %cst_23 = arith.constant dense<0.000000e+00> : vector<8x768xf32>
    %33 = tpu.matmul %31, %32, %cst_23 {dimension_numbers = #tpu.dot_dimension_numbers<[1], [0], [0], [1], [0, 0, 1, 1], [], []>} : vector<8x256xbf16>, vector<256x768xbf16>, vector<8x768xf32> -> vector<8x768xf32>
    %34 = arith.addf %8, %33 : vector<8x768xf32>
    %35 = vector.extract_strided_slice %7 {offsets = [0, 256], sizes = [8, 256], strides = [1, 1]} : vector<8x768xf32> to vector<8x256xf32>
    %36 = arith.truncf %35 : vector<8x256xf32> to vector<8x256xbf16>
    %c0_24 = arith.constant 0 : index
    %c0_25 = arith.constant 0 : index
    %c256 = arith.constant 256 : index
    %37 = vector.load %arg3[%c0_24, %c0_25, %c256] : memref<1x8x768xbf16, #tpu.memory_space<vmem>>, vector<1x8x256xbf16>
    %38 = vector.shape_cast %37 : vector<1x8x256xbf16> to vector<8x256xbf16>
    %c0_26 = arith.constant 0 : index
    %c0_27 = arith.constant 0 : index
    %c256_28 = arith.constant 256 : index
    %39 = vector.load %arg4[%c0_26, %c0_27, %c256_28] : memref<1x8x768xbf16, #tpu.memory_space<vmem>>, vector<1x8x256xbf16>
    %40 = vector.shape_cast %39 : vector<1x8x256xbf16> to vector<8x256xbf16>
    %cst_29 = arith.constant dense<0.000000e+00> : vector<8x8xf32>
    %41 = tpu.matmul %36, %38, %cst_29 {dimension_numbers = #tpu.dot_dimension_numbers<[1], [1], [0], [0], [0, 0, 1, 0], [], []>} : vector<8x256xbf16>, vector<8x256xbf16>, vector<8x8xf32> -> vector<8x8xf32>
    %cst_30 = arith.constant dense<0xFF800000> : vector<8xf32>
    %42 = vector.multi_reduction <maximumf>, %41, %cst_30 [1] : vector<8x8xf32> to vector<8xf32>
    %43 = vector.shape_cast %42 : vector<8xf32> to vector<8x1xf32>
    %44 = vector.broadcast %43 : vector<8x1xf32> to vector<8x8xf32>
    %45 = arith.subf %41, %44 : vector<8x8xf32>
    %46 = math.exp %45 : vector<8x8xf32>
    %cst_31 = arith.constant dense<0.000000e+00> : vector<8xf32>
    %47 = vector.multi_reduction <add>, %46, %cst_31 [1] : vector<8x8xf32> to vector<8xf32>
    %48 = vector.shape_cast %47 : vector<8xf32> to vector<8x1xf32>
    %49 = tpu.reciprocal %48 {approx = true} : vector<8x1xf32> -> vector<8x1xf32>
    %50 = vector.broadcast %49 : vector<8x1xf32> to vector<8x8xf32>
    %51 = arith.mulf %46, %50 : vector<8x8xf32>
    %c0_32 = arith.constant 0 : index
    %c1 = arith.constant 1 : index
    %c0_33 = arith.constant 0 : index
    %c0_34 = arith.constant 0 : index
    %52 = vector.load %arg12[%c0_32, %c1, %c0_33, %c0_34] : memref<1x3x8x8xf32, #tpu.memory_space<vmem>>, vector<1x1x8x8xf32>
    %53 = vector.shape_cast %52 : vector<1x1x8x8xf32> to vector<8x8xf32>
    %54 = vector.shape_cast %51 : vector<8x8xf32> to vector<1x1x8x8xf32>
    tpu.vector_store %arg12[%c0_32, %c1, %c0_33, %c0_34], %54 {strides = array<i32>} : memref<1x3x8x8xf32, #tpu.memory_space<vmem>>, vector<1x1x8x8xf32>,
    %55 = arith.truncf %51 : vector<8x8xf32> to vector<8x8xbf16>
    %cst_35 = arith.constant dense<0.000000e+00> : vector<8x256xf32>
    %56 = tpu.matmul %55, %40, %cst_35 {dimension_numbers = #tpu.dot_dimension_numbers<[1], [0], [0], [1], [0, 0, 1, 1], [], []>} : vector<8x8xbf16>, vector<8x256xbf16>, vector<8x256xf32> -> vector<8x256xf32>
    %57 = arith.truncf %56 : vector<8x256xf32> to vector<8x256xbf16>
    %c256_36 = arith.constant 256 : index
    %c0_37 = arith.constant 0 : index
    %58 = vector.load %arg7[%c256_36, %c0_37] : memref<768x768xbf16, #tpu.memory_space<vmem>>, vector<256x768xbf16>
    %cst_38 = arith.constant dense<0.000000e+00> : vector<8x768xf32>
    %59 = tpu.matmul %57, %58, %cst_38 {dimension_numbers = #tpu.dot_dimension_numbers<[1], [0], [0], [1], [0, 0, 1, 1], [], []>} : vector<8x256xbf16>, vector<256x768xbf16>, vector<8x768xf32> -> vector<8x768xf32>
    %60 = arith.addf %34, %59 : vector<8x768xf32>
    %61 = vector.extract_strided_slice %7 {offsets = [0, 512], sizes = [8, 256], strides = [1, 1]} : vector<8x768xf32> to vector<8x256xf32>
    %62 = arith.truncf %61 : vector<8x256xf32> to vector<8x256xbf16>
    %c0_39 = arith.constant 0 : index
    %c0_40 = arith.constant 0 : index
    %c512 = arith.constant 512 : index
    %63 = vector.load %arg3[%c0_39, %c0_40, %c512] : memref<1x8x768xbf16, #tpu.memory_space<vmem>>, vector<1x8x256xbf16>
    %64 = vector.shape_cast %63 : vector<1x8x256xbf16> to vector<8x256xbf16>
    %c0_41 = arith.constant 0 : index
    %c0_42 = arith.constant 0 : index
    %c512_43 = arith.constant 512 : index
    %65 = vector.load %arg4[%c0_41, %c0_42, %c512_43] : memref<1x8x768xbf16, #tpu.memory_space<vmem>>, vector<1x8x256xbf16>
    %66 = vector.shape_cast %65 : vector<1x8x256xbf16> to vector<8x256xbf16>
    %cst_44 = arith.constant dense<0.000000e+00> : vector<8x8xf32>
    %67 = tpu.matmul %62, %64, %cst_44 {dimension_numbers = #tpu.dot_dimension_numbers<[1], [1], [0], [0], [0, 0, 1, 0], [], []>} : vector<8x256xbf16>, vector<8x256xbf16>, vector<8x8xf32> -> vector<8x8xf32>
    %cst_45 = arith.constant dense<0xFF800000> : vector<8xf32>
    %68 = vector.multi_reduction <maximumf>, %67, %cst_45 [1] : vector<8x8xf32> to vector<8xf32>
    %69 = vector.shape_cast %68 : vector<8xf32> to vector<8x1xf32>
    %70 = vector.broadcast %69 : vector<8x1xf32> to vector<8x8xf32>
    %71 = arith.subf %67, %70 : vector<8x8xf32>
    %72 = math.exp %71 : vector<8x8xf32>
    %cst_46 = arith.constant dense<0.000000e+00> : vector<8xf32>
    %73 = vector.multi_reduction <add>, %72, %cst_46 [1] : vector<8x8xf32> to vector<8xf32>
    %74 = vector.shape_cast %73 : vector<8xf32> to vector<8x1xf32>
    %75 = tpu.reciprocal %74 {approx = true} : vector<8x1xf32> -> vector<8x1xf32>
    %76 = vector.broadcast %75 : vector<8x1xf32> to vector<8x8xf32>
    %77 = arith.mulf %72, %76 : vector<8x8xf32>
    %c0_47 = arith.constant 0 : index
    %c2 = arith.constant 2 : index
    %c0_48 = arith.constant 0 : index
    %c0_49 = arith.constant 0 : index
    %78 = vector.load %arg12[%c0_47, %c2, %c0_48, %c0_49] : memref<1x3x8x8xf32, #tpu.memory_space<vmem>>, vector<1x1x8x8xf32>
    %79 = vector.shape_cast %78 : vector<1x1x8x8xf32> to vector<8x8xf32>
    %80 = vector.shape_cast %77 : vector<8x8xf32> to vector<1x1x8x8xf32>
    tpu.vector_store %arg12[%c0_47, %c2, %c0_48, %c0_49], %80 {strides = array<i32>} : memref<1x3x8x8xf32, #tpu.memory_space<vmem>>, vector<1x1x8x8xf32>,
    %81 = arith.truncf %77 : vector<8x8xf32> to vector<8x8xbf16>
    %cst_50 = arith.constant dense<0.000000e+00> : vector<8x256xf32>
    %82 = tpu.matmul %81, %66, %cst_50 {dimension_numbers = #tpu.dot_dimension_numbers<[1], [0], [0], [1], [0, 0, 1, 1], [], []>} : vector<8x8xbf16>, vector<8x256xbf16>, vector<8x256xf32> -> vector<8x256xf32>
    %83 = arith.truncf %82 : vector<8x256xf32> to vector<8x256xbf16>
    %c512_51 = arith.constant 512 : index
    %c0_52 = arith.constant 0 : index
    %84 = vector.load %arg7[%c512_51, %c0_52] : memref<768x768xbf16, #tpu.memory_space<vmem>>, vector<256x768xbf16>
    %cst_53 = arith.constant dense<0.000000e+00> : vector<8x768xf32>
    %85 = tpu.matmul %83, %84, %cst_53 {dimension_numbers = #tpu.dot_dimension_numbers<[1], [0], [0], [1], [0, 0, 1, 1], [], []>} : vector<8x256xbf16>, vector<256x768xbf16>, vector<8x768xf32> -> vector<8x768xf32>
    %86 = arith.addf %60, %85 : vector<8x768xf32>
    %c0_54 = arith.constant 0 : index
    %c0_55 = arith.constant 0 : index
    %87 = vector.load %arg8[%c0_54, %c0_55] : memref<1x768xf32, #tpu.memory_space<vmem>>, vector<1x768xf32>
    %88 = vector.broadcast %87 : vector<1x768xf32> to vector<8x768xf32>
    %89 = arith.addf %86, %88 : vector<8x768xf32>
    %90 = arith.addf %89, %1 : vector<8x768xf32>
    %cst_56 = arith.constant dense<0.000000e+00> : vector<8xf32>
    %91 = vector.multi_reduction <add>, %90, %cst_56 [1] : vector<8x768xf32> to vector<8xf32>
    %92 = vector.shape_cast %91 : vector<8xf32> to vector<8x1xf32>
    %cst_57 = arith.constant 7.680000e+02 : f32
    %93 = vector.broadcast %cst_57 : f32 to vector<8x1xf32>
    %94 = arith.divf %92, %93 : vector<8x1xf32>
    %95 = vector.broadcast %94 : vector<8x1xf32> to vector<8x768xf32>
    %96 = arith.subf %90, %95 : vector<8x768xf32>
    %97 = arith.mulf %96, %96 : vector<8x768xf32>
    %cst_58 = arith.constant dense<0.000000e+00> : vector<8xf32>
    %98 = vector.multi_reduction <add>, %97, %cst_58 [1] : vector<8x768xf32> to vector<8xf32>
    %99 = vector.shape_cast %98 : vector<8xf32> to vector<8x1xf32>
    %cst_59 = arith.constant 7.680000e+02 : f32
    %100 = vector.broadcast %cst_59 : f32 to vector<8x1xf32>
    %101 = arith.divf %99, %100 : vector<8x1xf32>
    %102 = vector.broadcast %94 : vector<8x1xf32> to vector<8x768xf32>
    %103 = arith.subf %90, %102 : vector<8x768xf32>
    %cst_60 = arith.constant 9.99999974E-6 : f32
    %104 = vector.broadcast %cst_60 : f32 to vector<8x1xf32>
    %105 = arith.addf %101, %104 : vector<8x1xf32>
    %106 = math.rsqrt %105 : vector<8x1xf32>
    %107 = vector.broadcast %106 : vector<8x1xf32> to vector<8x768xf32>
    %108 = arith.mulf %103, %107 : vector<8x768xf32>
    %c0_61 = arith.constant 0 : index
    %c0_62 = arith.constant 0 : index
    %109 = vector.load %arg9[%c0_61, %c0_62] : memref<1x768xf32, #tpu.memory_space<vmem>>, vector<1x768xf32>
    %110 = vector.broadcast %109 : vector<1x768xf32> to vector<8x768xf32>
    %111 = arith.mulf %108, %110 : vector<8x768xf32>
    %c0_63 = arith.constant 0 : index
    %c0_64 = arith.constant 0 : index
    %112 = vector.load %arg10[%c0_63, %c0_64] : memref<1x768xf32, #tpu.memory_space<vmem>>, vector<1x768xf32>
    %113 = vector.broadcast %112 : vector<1x768xf32> to vector<8x768xf32>
    %114 = arith.addf %111, %113 : vector<8x768xf32>
    %c0_65 = arith.constant 0 : index
    %c0_66 = arith.constant 0 : index
    %c0_67 = arith.constant 0 : index
    %115 = vector.load %arg11[%c0_65, %c0_66, %c0_67] : memref<1x8x768xf32, #tpu.memory_space<vmem>>, vector<1x8x768xf32>
    %116 = vector.shape_cast %115 : vector<1x8x768xf32> to vector<8x768xf32>
    %117 = vector.shape_cast %114 : vector<8x768xf32> to vector<1x8x768xf32>
    tpu.vector_store %arg11[%c0_65, %c0_66, %c0_67], %117 {strides = array<i32>} : memref<1x8x768xf32, #tpu.memory_space<vmem>>, vector<1x8x768xf32>,
    return
  }
  func.func @transform_0(%arg0: i32, %arg1: i32) -> (i32, i32, i32) {
    %c0_i32 = arith.constant 0 : i32
    %c0_i32_0 = arith.constant 0 : i32
    return %arg0, %arg1, %c0_i32 : i32, i32, i32
  }
  func.func @transform_1(%arg0: i32, %arg1: i32) -> (i32, i32, i32) {
    %c0_i32 = arith.constant 0 : i32
    %c0_i32_0 = arith.constant 0 : i32
    %c0_i32_1 = arith.constant 0 : i32
    return %arg0, %c0_i32, %c0_i32_0 : i32, i32, i32
  }
  func.func @transform_2(%arg0: i32, %arg1: i32) -> (i32, i32, i32) {
    %c0_i32 = arith.constant 0 : i32
    %c0_i32_0 = arith.constant 0 : i32
    %c0_i32_1 = arith.constant 0 : i32
    return %arg0, %c0_i32, %c0_i32_0 : i32, i32, i32
  }
  func.func @transform_3(%arg0: i32, %arg1: i32) -> (i32, i32) {
    %c0_i32 = arith.constant 0 : i32
    %c0_i32_0 = arith.constant 0 : i32
    %c0_i32_1 = arith.constant 0 : i32
    return %c0_i32, %c0_i32_0 : i32, i32
  }
  func.func @transform_4(%arg0: i32, %arg1: i32) -> (i32, i32) {
    %c0_i32 = arith.constant 0 : i32
    %c0_i32_0 = arith.constant 0 : i32
    %c0_i32_1 = arith.constant 0 : i32
    return %c0_i32, %c0_i32_0 : i32, i32
  }
  func.func @transform_5(%arg0: i32, %arg1: i32) -> (i32, i32) {
    %c0_i32 = arith.constant 0 : i32
    %c0_i32_0 = arith.constant 0 : i32
    %c0_i32_1 = arith.constant 0 : i32
    return %c0_i32, %c0_i32_0 : i32, i32
  }
  func.func @transform_6(%arg0: i32, %arg1: i32) -> (i32, i32) {
    %c0_i32 = arith.constant 0 : i32
    %c0_i32_0 = arith.constant 0 : i32
    %c0_i32_1 = arith.constant 0 : i32
    return %c0_i32, %c0_i32_0 : i32, i32
  }
  func.func @transform_7(%arg0: i32, %arg1: i32) -> (i32, i32) {
    %c0_i32 = arith.constant 0 : i32
    %c0_i32_0 = arith.constant 0 : i32
    %c0_i32_1 = arith.constant 0 : i32
    return %c0_i32, %c0_i32_0 : i32, i32
  }
  func.func @transform_8(%arg0: i32, %arg1: i32) -> (i32, i32) {
    %c0_i32 = arith.constant 0 : i32
    %c0_i32_0 = arith.constant 0 : i32
    %c0_i32_1 = arith.constant 0 : i32
    return %c0_i32, %c0_i32_0 : i32, i32
  }
  func.func @transform_9(%arg0: i32, %arg1: i32) -> (i32, i32, i32) {
    %c0_i32 = arith.constant 0 : i32
    %c0_i32_0 = arith.constant 0 : i32
    return %arg0, %arg1, %c0_i32 : i32, i32, i32
  }
  func.func @transform_10(%arg0: i32, %arg1: i32) -> (i32, i32, i32, i32) {
    %c0_i32 = arith.constant 0 : i32
    %c0_i32_0 = arith.constant 0 : i32
    %c0_i32_1 = arith.constant 0 : i32
    return %arg0, %c0_i32, %arg1, %c0_i32_0 : i32, i32, i32, i32
  }
}

</mosaic_0001>

<llo_original>
// kernel: tpu_custom_call.1
$region0: #{tpu_custom_call.1}
  #allocation0 [shape = 'u32[]', space=smem, size = 0x4, offset = 0x4, fixed_abs, tag = 'smem constant byte address 0x4 - core index']
  #allocation1 [shape = 'u32[72,128]{1,0:T(1,128)}', space=vmem, size = 0x9000, scoped, tag = 'internal scratch']
  %s0 = inlined_call_operand.hbm [shape: f32[2,8,768], index: 0, kind: input, shape index: {}]
  %s1 = inlined_call_operand.hbm [shape: bf16[2,8,768], index: 1, kind: input, shape index: {}]
  %s2 = inlined_call_operand.hbm [shape: bf16[2,8,768], index: 2, kind: input, shape index: {}]
  %s3 = inlined_call_operand.hbm [shape: bf16[768,768], index: 3, kind: input, shape index: {}]
  %s4 = inlined_call_operand.hbm [shape: f32[1,768], index: 4, kind: input, shape index: {}]
  %s5 = inlined_call_operand.hbm [shape: bf16[768,768], index: 5, kind: input, shape index: {}]
  %s6 = inlined_call_operand.hbm [shape: f32[1,768], index: 6, kind: input, shape index: {}]
  %s7 = inlined_call_operand.hbm [shape: f32[1,768], index: 7, kind: input, shape index: {}]
  %s8 = inlined_call_operand.hbm [shape: f32[1,768], index: 8, kind: input, shape index: {}]
  %s9 = inlined_call_operand.hbm [shape: f32[2,8,768], index: 9, kind: output, shape index: {0}]
  %s10 = inlined_call_operand.hbm [shape: f32[2,3,8,8], index: 10, kind: output, shape index: {1}]
  %11 = xla_tuple %s9, %s10
  %s12 = sld [smem:[#allocation0]]
  $region113: #{tpu_custom_call.1} parent=0
    _
  %s14 = ssub.s32 1, %s12
  %s15 = scalar_select 0, %s14, %s12
  $region1: #{tpu_custom_call.1} parent=0
    #allocation2 [shape = 'u8[49152]{0}', space=vmem, size = 0xc000, scoped, tag = 'input window, operand 0']
    #allocation3 [shape = 's32[2]{0}', space=sflag, size = 0x8, scoped, tag = 'scoped memory for tpu_custom_call.1']
    #allocation4 [shape = 's32[2]{0}', space=sflag, size = 0x8, scoped, tag = 'scoped memory for tpu_custom_call.1']
    #allocation5 [shape = 'u8[12288]{0}', space=vmem, size = 0x3000, scoped, tag = 'input window, operand 1, single buffered']
    #allocation6 [shape = 's32[1]{0}', space=sflag, size = 0x4, scoped, tag = 'scoped memory for tpu_custom_call.1']
    #allocation7 [shape = 'u8[12288]{0}', space=vmem, size = 0x3000, scoped, tag = 'input window, operand 2, single buffered']
    #allocation8 [shape = 'u8[1179648]{0}', space=vmem, size = 0x120000, scoped, tag = 'input window, operand 3, single buffered']
    #allocation9 [shape = 's32[1]{0}', space=sflag, size = 0x4, scoped, tag = 'scoped memory for tpu_custom_call.1']
    #allocation10 [shape = 'u8[3072]{0}', space=vmem, size = 0xc00, scoped, tag = 'input window, operand 4, single buffered']
    #allocation11 [shape = 'u8[1179648]{0}', space=vmem, size = 0x120000, scoped, tag = 'input window, operand 5, single buffered']
    #allocation12 [shape = 's32[1]{0}', space=sflag, size = 0x4, scoped, tag = 'scoped memory for tpu_custom_call.1']
    #allocation13 [shape = 'u8[3072]{0}', space=vmem, size = 0xc00, scoped, tag = 'input window, operand 6, single buffered']
    #allocation14 [shape = 'u8[3072]{0}', space=vmem, size = 0xc00, scoped, tag = 'input window, operand 7, single buffered']
    #allocation15 [shape = 's32[1]{0}', space=sflag, size = 0x4, scoped, tag = 'scoped memory for tpu_custom_call.1']
    #allocation16 [shape = 'u8[3072]{0}', space=vmem, size = 0xc00, scoped, tag = 'input window, operand 8, single buffered']
    #allocation17 [shape = 'u8[49152]{0}', space=vmem, size = 0xc000, scoped, tag = 'output window, operand 0']
    #allocation18 [shape = 'u8[24576]{0}', space=vmem, size = 0x6000, scoped, tag = 'output window, operand 1']
    #allocation19 [shape = 's32[2]{0}', space=sflag, size = 0x8, scoped, tag = 'scoped memory for tpu_custom_call.1']
    %16 = vsyncpa [#allocation3], 0
    %s17 = scalar_lea.sflag [#allocation3], 1
    %18 = vsyncpa %s17, 0
    %19 = vsyncpa [#allocation6], 0
    %20 = vsyncpa [#allocation9], 0
    %21 = vsyncpa [#allocation12], 0
    %22 = vsyncpa [#allocation15], 0
    %23 = vsyncpa [#allocation4], 0
    %s24 = scalar_lea.sflag [#allocation4], 1
    %25 = vsyncpa %s24, 0
    %26 = vsyncpa [#allocation19], 0
    %s27 = scalar_lea.sflag [#allocation19], 1
    %28 = vsyncpa %s27, 0
    loop: start=0, step=1, limit=4
    $region2: #{tpu_custom_call.1} parent=1 // loop_pre_header
      _
    $region3: #{tpu_custom_call.1} parent=1 // loop_header
      %s30 = sphi 0, %s34
      %p31 = scmp.ge.s32.totalorder %s30, 4
      %s37 = sphi 0, %s49
      %s38 = sphi 0, %s45
      %s39 = sphi 0, %s37
      %s40 = sphi 0, %s38
      %s41 = sphi 0, %s39
      %s42 = sphi 0, %s40
      %s54 = sphi 0, %s56
      %s57 = sphi 0, %s54
      %s58 = sphi 0, %s57
      %s74 = sphi 0, %s58
      %s80 = sphi 0, %s82
      %s83 = sphi 0, %s80
      %s84 = sphi 0, %s83
      %s100 = sphi 0, %s84
      %s106 = sphi 0, %s108
      %s109 = sphi 0, %s106
      %s110 = sphi 0, %s109
      %s126 = sphi 0, %s110
      %s130 = sphi 0, %s130
      %s132 = sphi 0, %s130
      %s133 = sphi 0, %s132
      %s147 = sphi 0, %s133
      %s151 = sphi 0, %s151
      %s153 = sphi 0, %s151
      %s154 = sphi 0, %s153
      %s168 = sphi 0, %s154
      %s172 = sphi 0, %s172
      %s174 = sphi 0, %s172
      %s175 = sphi 0, %s174
      %s189 = sphi 0, %s175
      %s193 = sphi 0, %s193
      %s195 = sphi 0, %s193
      %s196 = sphi 0, %s195
      %s210 = sphi 0, %s196
      %s214 = sphi 0, %s214
      %s216 = sphi 0, %s214
      %s217 = sphi 0, %s216
      %s231 = sphi 0, %s217
      %s235 = sphi 0, %s235
      %s237 = sphi 0, %s235
      %s238 = sphi 0, %s237
      %s252 = sphi 0, %s238
      %s260 = sphi 0, %s262
      %s263 = sphi 0, %s260
      %s264 = sphi 0, %s263
      %s280 = sphi 0, %s264
      %s288 = sphi 0, %s290
      %s291 = sphi 0, %s288
      %s292 = sphi 0, %s291
      %s308 = sphi 0, %s292
    $region4: #{tpu_custom_call.1} parent=1 // loop_header_branch
      %33 = sbr.rel (%p31) target = $region8
    $region5: #{tpu_custom_call.1} parent=1 // loop_body
      %s35 = ssub.s32 %s30, 1
      %s36 = ssub.s32 %s30, 2
      %s43 = sadd.s32 1, %s38
      %p44 = scmp.ge.s32.totalorder %s43, 1
      %s45 = scalar_select %p44, 0, %s43
      %s46 = sadd.s32 1, %s37
      %s47 = scalar_select %p44, %s46, %s37
      %p48 = scmp.ge.s32.totalorder %s47, 2
      %s49 = scalar_select %p48, 0, %s47
      %s50 = ssub.s32 %s37, %s49
      %s51 = ssub.s32 %s38, %s45
      %s52 = sor.u32 %s50, %s51
      %p53 = scmp.eq.s32.totalorder %s52, 0
      %s55 = sadd.s32 %s54, 1
      %s56 = scalar_select %p53, %s54, %s55
      %p59 = pneg %p53
      %p60 = scmp.eq.s32.totalorder %s30, 1
      %p61 = por %p59, %p60
      %p62 = scmp.ne.s32.totalorder %s54, %s57
      %p63 = scmp.eq.s32.totalorder %s30, 0
      %p64 = por %p62, %p63
      %p65 = scmp.ne.s32.totalorder %s54, %s57
      %p66 = scmp.eq.s32.totalorder %s35, 1
      %p67 = por %p65, %p66
      %p68 = scmp.ne.s32.totalorder %s57, %s58
      %p69 = scmp.eq.s32.totalorder %s35, 0
      %p70 = por %p68, %p69
      %p71 = scmp.ne.s32.totalorder %s57, %s58
      %p72 = scmp.eq.s32.totalorder %s36, 1
      %p73 = por %p71, %p72
      %p75 = scmp.ne.s32.totalorder %s58, %s74
      %p76 = scmp.eq.s32.totalorder %s36, 0
      %p77 = por %p75, %p76
      %s78 = ssub.s32 %s37, %s49
      %p79 = scmp.eq.s32.totalorder %s78, 0
      %s81 = sadd.s32 %s80, 1
      %s82 = scalar_select %p79, %s80, %s81
      %p85 = pneg %p79
      %p86 = scmp.eq.s32.totalorder %s30, 1
      %p87 = por %p85, %p86
      %p88 = scmp.ne.s32.totalorder %s80, %s83
      %p89 = scmp.eq.s32.totalorder %s30, 0
      %p90 = por %p88, %p89
      %p91 = scmp.ne.s32.totalorder %s80, %s83
      %p92 = scmp.eq.s32.totalorder %s35, 1
      %p93 = por %p91, %p92
      %p94 = scmp.ne.s32.totalorder %s83, %s84
      %p95 = scmp.eq.s32.totalorder %s35, 0
      %p96 = por %p94, %p95
      %p97 = scmp.ne.s32.totalorder %s83, %s84
      %p98 = scmp.eq.s32.totalorder %s36, 1
      %p99 = por %p97, %p98
      %p101 = scmp.ne.s32.totalorder %s84, %s100
      %p102 = scmp.eq.s32.totalorder %s36, 0
      %p103 = por %p101, %p102
      %s104 = ssub.s32 %s37, %s49
      %p105 = scmp.eq.s32.totalorder %s104, 0
      %s107 = sadd.s32 %s106, 1
      %s108 = scalar_select %p105, %s106, %s107
      %p111 = pneg %p105
      %p112 = scmp.eq.s32.totalorder %s30, 1
      %p113 = por %p111, %p112
      %p114 = scmp.ne.s32.totalorder %s106, %s109
      %p115 = scmp.eq.s32.totalorder %s30, 0
      %p116 = por %p114, %p115
      %p117 = scmp.ne.s32.totalorder %s106, %s109
      %p118 = scmp.eq.s32.totalorder %s35, 1
      %p119 = por %p117, %p118
      %p120 = scmp.ne.s32.totalorder %s109, %s110
      %p121 = scmp.eq.s32.totalorder %s35, 0
      %p122 = por %p120, %p121
      %p123 = scmp.ne.s32.totalorder %s109, %s110
      %p124 = scmp.eq.s32.totalorder %s36, 1
      %p125 = por %p123, %p124
      %p127 = scmp.ne.s32.totalorder %s110, %s126
      %p128 = scmp.eq.s32.totalorder %s36, 0
      %p129 = por %p127, %p128
      %s131 = sadd.s32 %s130, 1
      %p134 = scmp.eq.s32.totalorder %s30, 1
      %p135 = scmp.ne.s32.totalorder %s130, %s132
      %p136 = scmp.eq.s32.totalorder %s30, 0
      %p137 = por %p135, %p136
      %p138 = scmp.ne.s32.totalorder %s130, %s132
      %p139 = scmp.eq.s32.totalorder %s35, 1
      %p140 = por %p138, %p139
      %p141 = scmp.ne.s32.totalorder %s132, %s133
      %p142 = scmp.eq.s32.totalorder %s35, 0
      %p143 = por %p141, %p142
      %p144 = scmp.ne.s32.totalorder %s132, %s133
      %p145 = scmp.eq.s32.totalorder %s36, 1
      %p146 = por %p144, %p145
      %p148 = scmp.ne.s32.totalorder %s133, %s147
      %p149 = scmp.eq.s32.totalorder %s36, 0
      %p150 = por %p148, %p149
      %s152 = sadd.s32 %s151, 1
      %p155 = scmp.eq.s32.totalorder %s30, 1
      %p156 = scmp.ne.s32.totalorder %s151, %s153
      %p157 = scmp.eq.s32.totalorder %s30, 0
      %p158 = por %p156, %p157
      %p159 = scmp.ne.s32.totalorder %s151, %s153
      %p160 = scmp.eq.s32.totalorder %s35, 1
      %p161 = por %p159, %p160
      %p162 = scmp.ne.s32.totalorder %s153, %s154
      %p163 = scmp.eq.s32.totalorder %s35, 0
      %p164 = por %p162, %p163
      %p165 = scmp.ne.s32.totalorder %s153, %s154
      %p166 = scmp.eq.s32.totalorder %s36, 1
      %p167 = por %p165, %p166
      %p169 = scmp.ne.s32.totalorder %s154, %s168
      %p170 = scmp.eq.s32.totalorder %s36, 0
      %p171 = por %p169, %p170
      %s173 = sadd.s32 %s172, 1
      %p176 = scmp.eq.s32.totalorder %s30, 1
      %p177 = scmp.ne.s32.totalorder %s172, %s174
      %p178 = scmp.eq.s32.totalorder %s30, 0
      %p179 = por %p177, %p178
      %p180 = scmp.ne.s32.totalorder %s172, %s174
      %p181 = scmp.eq.s32.totalorder %s35, 1
      %p182 = por %p180, %p181
      %p183 = scmp.ne.s32.totalorder %s174, %s175
      %p184 = scmp.eq.s32.totalorder %s35, 0
      %p185 = por %p183, %p184
      %p186 = scmp.ne.s32.totalorder %s174, %s175
      %p187 = scmp.eq.s32.totalorder %s36, 1
      %p188 = por %p186, %p187
      %p190 = scmp.ne.s32.totalorder %s175, %s189
      %p191 = scmp.eq.s32.totalorder %s36, 0
      %p192 = por %p190, %p191
      %s194 = sadd.s32 %s193, 1
      %p197 = scmp.eq.s32.totalorder %s30, 1
      %p198 = scmp.ne.s32.totalorder %s193, %s195
      %p199 = scmp.eq.s32.totalorder %s30, 0
      %p200 = por %p198, %p199
      %p201 = scmp.ne.s32.totalorder %s193, %s195
      %p202 = scmp.eq.s32.totalorder %s35, 1
      %p203 = por %p201, %p202
      %p204 = scmp.ne.s32.totalorder %s195, %s196
      %p205 = scmp.eq.s32.totalorder %s35, 0
      %p206 = por %p204, %p205
      %p207 = scmp.ne.s32.totalorder %s195, %s196
      %p208 = scmp.eq.s32.totalorder %s36, 1
      %p209 = por %p207, %p208
      %p211 = scmp.ne.s32.totalorder %s196, %s210
      %p212 = scmp.eq.s32.totalorder %s36, 0
      %p213 = por %p211, %p212
      %s215 = sadd.s32 %s214, 1
      %p218 = scmp.eq.s32.totalorder %s30, 1
      %p219 = scmp.ne.s32.totalorder %s214, %s216
      %p220 = scmp.eq.s32.totalorder %s30, 0
      %p221 = por %p219, %p220
      %p222 = scmp.ne.s32.totalorder %s214, %s216
      %p223 = scmp.eq.s32.totalorder %s35, 1
      %p224 = por %p222, %p223
      %p225 = scmp.ne.s32.totalorder %s216, %s217
      %p226 = scmp.eq.s32.totalorder %s35, 0
      %p227 = por %p225, %p226
      %p228 = scmp.ne.s32.totalorder %s216, %s217
      %p229 = scmp.eq.s32.totalorder %s36, 1
      %p230 = por %p228, %p229
      %p232 = scmp.ne.s32.totalorder %s217, %s231
      %p233 = scmp.eq.s32.totalorder %s36, 0
      %p234 = por %p232, %p233
      %s236 = sadd.s32 %s235, 1
      %p239 = scmp.eq.s32.totalorder %s30, 1
      %p240 = scmp.ne.s32.totalorder %s235, %s237
      %p241 = scmp.eq.s32.totalorder %s30, 0
      %p242 = por %p240, %p241
      %p243 = scmp.ne.s32.totalorder %s235, %s237
      %p244 = scmp.eq.s32.totalorder %s35, 1
      %p245 = por %p243, %p244
      %p246 = scmp.ne.s32.totalorder %s237, %s238
      %p247 = scmp.eq.s32.totalorder %s35, 0
      %p248 = por %p246, %p247
      %p249 = scmp.ne.s32.totalorder %s237, %s238
      %p250 = scmp.eq.s32.totalorder %s36, 1
      %p251 = por %p249, %p250
      %p253 = scmp.ne.s32.totalorder %s238, %s252
      %p254 = scmp.eq.s32.totalorder %s36, 0
      %p255 = por %p253, %p254
      %s256 = ssub.s32 %s37, %s49
      %s257 = ssub.s32 %s38, %s45
      %s258 = sor.u32 %s256, %s257
      %p259 = scmp.eq.s32.totalorder %s258, 0
      %s261 = sadd.s32 %s260, 1
      %s262 = scalar_select %p259, %s260, %s261
      %p265 = pneg %p259
      %p266 = scmp.eq.s32.totalorder %s30, 1
      %p267 = por %p265, %p266
      %p268 = scmp.ne.s32.totalorder %s260, %s263
      %p269 = scmp.eq.s32.totalorder %s30, 0
      %p270 = por %p268, %p269
      %p271 = scmp.ne.s32.totalorder %s260, %s263
      %p272 = scmp.eq.s32.totalorder %s35, 1
      %p273 = por %p271, %p272
      %p274 = scmp.ne.s32.totalorder %s263, %s264
      %p275 = scmp.eq.s32.totalorder %s35, 0
      %p276 = por %p274, %p275
      %p277 = scmp.ne.s32.totalorder %s263, %s264
      %p278 = scmp.eq.s32.totalorder %s36, 1
      %p279 = por %p277, %p278
      %p281 = scmp.ne.s32.totalorder %s264, %s280
      %p282 = scmp.eq.s32.totalorder %s36, 0
      %p283 = por %p281, %p282
      %s284 = ssub.s32 %s37, %s49
      %s285 = ssub.s32 %s38, %s45
      %s286 = sor.u32 %s284, %s285
      %p287 = scmp.eq.s32.totalorder %s286, 0
      %s289 = sadd.s32 %s288, 1
      %s290 = scalar_select %p287, %s288, %s289
      %p293 = pneg %p287
      %p294 = scmp.eq.s32.totalorder %s30, 1
      %p295 = por %p293, %p294
      %p296 = scmp.ne.s32.totalorder %s288, %s291
      %p297 = scmp.eq.s32.totalorder %s30, 0
      %p298 = por %p296, %p297
      %p299 = scmp.ne.s32.totalorder %s288, %s291
      %p300 = scmp.eq.s32.totalorder %s35, 1
      %p301 = por %p299, %p300
      %p302 = scmp.ne.s32.totalorder %s291, %s292
      %p303 = scmp.eq.s32.totalorder %s35, 0
      %p304 = por %p302, %p303
      %p305 = scmp.ne.s32.totalorder %s291, %s292
      %p306 = scmp.eq.s32.totalorder %s36, 1
      %p307 = por %p305, %p306
      %p309 = scmp.ne.s32.totalorder %s292, %s308
      %p310 = scmp.eq.s32.totalorder %s36, 0
      %p311 = por %p309, %p310
      %p312 = scmp.le.s32.totalorder 1, %s30
      %p313 = scmp.lt.s32.totalorder %s30, 3
      %p314 = pnand %p312, %p313
      %p315 = pneg %p314
      // Predicated region
      $region9: #{tpu_custom_call.1} parent=5 // pred_check
        _
      $region10: #{tpu_custom_call.1} parent=5 // pred_check_branch
        %317 = sbr.rel (%p314) target = $region12
      $region11: #{tpu_custom_call.1} parent=5 // pred_region
        %s318 = ssub.s32 %s30, 1
        // Predicated region
        $region13: #{tpu_custom_call.1} parent=11 // pred_check
          %p319 = pneg %p96
        $region14: #{tpu_custom_call.1} parent=11 // pred_check_branch
          %321 = sbr.rel (%p319) target = $region16
        $region15: #{tpu_custom_call.1} parent=11 // pred_region
          %323 = vsyncadd [#allocation6], 0
          %s324 = smul.addr %s39, 6
          %s325 = smul.addr %s324, 4
          %s326 = scalar_lea.hbm %s1, %s325
          %s328 = sshll.u32 %s326, 4
          %s329 = int_to_ptr.hbm [resolvable:$true] %s328
          %s330 = sshll.u32 [#allocation5], 4
          %s331 = int_to_ptr.vmem [resolvable:$true] %s330
          %333 = dma.hbm_to_vmem [thread:$0]  %s329, 384, %s331, [#allocation6]
        $region16: #{tpu_custom_call.1} parent=11 // pred_fallthru
          _
        // Predicated region
        $region17: #{tpu_custom_call.1} parent=11 // pred_check
          %p334 = pneg %p122
        $region18: #{tpu_custom_call.1} parent=11 // pred_check_branch
          %336 = sbr.rel (%p334) target = $region20
        $region19: #{tpu_custom_call.1} parent=11 // pred_region
          %338 = vsyncadd [#allocation6], 0
          %s339 = smul.addr %s39, 6
          %s340 = smul.addr %s339, 4
          %s341 = scalar_lea.hbm %s2, %s340
          %s343 = sshll.u32 %s341, 4
          %s344 = int_to_ptr.hbm [resolvable:$true] %s343
          %s345 = sshll.u32 [#allocation7], 4
          %s346 = int_to_ptr.vmem [resolvable:$true] %s345
          %348 = dma.hbm_to_vmem [thread:$0]  %s344, 384, %s346, [#allocation6]
        $region20: #{tpu_custom_call.1} parent=11 // pred_fallthru
          _
        // Predicated region
        $region21: #{tpu_custom_call.1} parent=11 // pred_check
          %p349 = pneg %p143
        $region22: #{tpu_custom_call.1} parent=11 // pred_check_branch
          %351 = sbr.rel (%p349) target = $region24
        $region23: #{tpu_custom_call.1} parent=11 // pred_region
          %353 = vsyncadd [#allocation9], 0
          %s354 = sshll.u32 %s3, 4
          %s355 = int_to_ptr.hbm [resolvable:$true] %s354
          %s356 = sshll.u32 [#allocation8], 4
          %s357 = int_to_ptr.vmem [resolvable:$true] %s356
          %362 = dma.hbm_to_vmem [thread:$0]  %s355, 36864, %s357, [#allocation9], 384, 384, 24
        $region24: #{tpu_custom_call.1} parent=11 // pred_fallthru
          _
        // Predicated region
        $region25: #{tpu_custom_call.1} parent=11 // pred_check
          %p363 = pneg %p164
        $region26: #{tpu_custom_call.1} parent=11 // pred_check_branch
          %365 = sbr.rel (%p363) target = $region28
        $region27: #{tpu_custom_call.1} parent=11 // pred_region
          %367 = vsyncadd [#allocation9], 0
          %s369 = sshll.u32 %s4, 4
          %s370 = int_to_ptr.hbm [resolvable:$true] %s369
          %s371 = sshll.u32 [#allocation10], 4
          %s372 = int_to_ptr.vmem [resolvable:$true] %s371
          %374 = dma.hbm_to_vmem [thread:$0]  %s370, 96, %s372, [#allocation9]
        $region28: #{tpu_custom_call.1} parent=11 // pred_fallthru
          _
        // Predicated region
        $region29: #{tpu_custom_call.1} parent=11 // pred_check
          %p375 = pneg %p185
        $region30: #{tpu_custom_call.1} parent=11 // pred_check_branch
          %377 = sbr.rel (%p375) target = $region32
        $region31: #{tpu_custom_call.1} parent=11 // pred_region
          %379 = vsyncadd [#allocation12], 0
          %s380 = sshll.u32 %s5, 4
          %s381 = int_to_ptr.hbm [resolvable:$true] %s380
          %s382 = sshll.u32 [#allocation11], 4
          %s383 = int_to_ptr.vmem [resolvable:$true] %s382
          %388 = dma.hbm_to_vmem [thread:$0]  %s381, 36864, %s383, [#allocation12], 384, 384, 24
        $region32: #{tpu_custom_call.1} parent=11 // pred_fallthru
          _
        // Predicated region
        $region33: #{tpu_custom_call.1} parent=11 // pred_check
          %p389 = pneg %p206
        $region34: #{tpu_custom_call.1} parent=11 // pred_check_branch
          %391 = sbr.rel (%p389) target = $region36
        $region35: #{tpu_custom_call.1} parent=11 // pred_region
          %393 = vsyncadd [#allocation12], 0
          %s395 = sshll.u32 %s6, 4
          %s396 = int_to_ptr.hbm [resolvable:$true] %s395
          %s397 = sshll.u32 [#allocation13], 4
          %s398 = int_to_ptr.vmem [resolvable:$true] %s397
          %400 = dma.hbm_to_vmem [thread:$0]  %s396, 96, %s398, [#allocation12]
        $region36: #{tpu_custom_call.1} parent=11 // pred_fallthru
          _
        // Predicated region
        $region37: #{tpu_custom_call.1} parent=11 // pred_check
          %p401 = pneg %p227
        $region38: #{tpu_custom_call.1} parent=11 // pred_check_branch
          %403 = sbr.rel (%p401) target = $region40
        $region39: #{tpu_custom_call.1} parent=11 // pred_region
          %405 = vsyncadd [#allocation15], 0
          %s407 = sshll.u32 %s7, 4
          %s408 = int_to_ptr.hbm [resolvable:$true] %s407
          %s409 = sshll.u32 [#allocation14], 4
          %s410 = int_to_ptr.vmem [resolvable:$true] %s409
          %412 = dma.hbm_to_vmem [thread:$0]  %s408, 96, %s410, [#allocation15]
        $region40: #{tpu_custom_call.1} parent=11 // pred_fallthru
          _
        // Predicated region
        $region41: #{tpu_custom_call.1} parent=11 // pred_check
          %p413 = pneg %p248
        $region42: #{tpu_custom_call.1} parent=11 // pred_check_branch
          %415 = sbr.rel (%p413) target = $region44
        $region43: #{tpu_custom_call.1} parent=11 // pred_region
          %417 = vsyncadd [#allocation15], 0
          %s419 = sshll.u32 %s8, 4
          %s420 = int_to_ptr.hbm [resolvable:$true] %s419
          %s421 = sshll.u32 [#allocation16], 4
          %s422 = int_to_ptr.vmem [resolvable:$true] %s421
          %424 = dma.hbm_to_vmem [thread:$0]  %s420, 96, %s422, [#allocation15]
        $region44: #{tpu_custom_call.1} parent=11 // pred_fallthru
          _
      $region12: #{tpu_custom_call.1} parent=5 // pred_fallthru
        _
      %p425 = scmp.lt.s32.totalorder %s30, 2
      // Predicated region
      $region45: #{tpu_custom_call.1} parent=5 // pred_check
        %p426 = pneg %p425
      $region46: #{tpu_custom_call.1} parent=5 // pred_check_branch
        %428 = sbr.rel (%p426) target = $region48
      $region47: #{tpu_custom_call.1} parent=5 // pred_region
        // Predicated region
        $region49: #{tpu_custom_call.1} parent=47 // pred_check
          %p429 = pneg %p64
        $region50: #{tpu_custom_call.1} parent=47 // pred_check_branch
          %431 = sbr.rel (%p429) target = $region52
        $region51: #{tpu_custom_call.1} parent=47 // pred_region
          %s432 = sand.u32 %s54, 1
          %s433 = scalar_lea.sflag [#allocation3], %s432
          %s434 = sand.u32 %s54, 1
          %s435 = smul.addr %s434, 48
          %s436 = scalar_lea.vmem [#allocation2], %s435
          %438 = vsyncadd %s433, 0
          %s439 = smul.addr %s38, 6
          %s440 = smul.addr %s37, 6
          %s441 = sadd.s32 %s439, %s440
          %s442 = smul.addr %s441, 8
          %s443 = scalar_lea.hbm %s0, %s442
          %s445 = sshll.u32 %s443, 4
          %s446 = int_to_ptr.hbm [resolvable:$true] %s445
          %s447 = sshll.u32 %s436, 4
          %s448 = int_to_ptr.vmem [resolvable:$true] %s447
          %450 = dma.hbm_to_vmem [thread:$0]  %s446, 768, %s448, %s433
        $region52: #{tpu_custom_call.1} parent=47 // pred_fallthru
          _
      $region48: #{tpu_custom_call.1} parent=5 // pred_fallthru
        _
      %p451 = scmp.le.s32.totalorder 1, %s30
      %p452 = scmp.lt.s32.totalorder %s30, 3
      %p453 = pnand %p451, %p452
      %p454 = pneg %p453
      // Predicated region
      $region53: #{tpu_custom_call.1} parent=5 // pred_check
        _
      $region54: #{tpu_custom_call.1} parent=5 // pred_check_branch
        %456 = sbr.rel (%p453) target = $region56
      $region55: #{tpu_custom_call.1} parent=5 // pred_region
        %s457 = ssub.s32 %s30, 1
        %s458 = sand.u32 %s57, 1
        %s459 = scalar_lea.sflag [#allocation3], %s458
        %s460 = sand.u32 %s57, 1
        %s461 = smul.addr %s460, 48
        %s462 = scalar_lea.vmem [#allocation2], %s461
        // Predicated region
        $region57: #{tpu_custom_call.1} parent=55 // pred_check
          %p463 = pneg %p70
        $region58: #{tpu_custom_call.1} parent=55 // pred_check_branch
          %465 = sbr.rel (%p463) target = $region60
        $region59: #{tpu_custom_call.1} parent=55 // pred_region
          %467 = dma.done %s459, 768
        $region60: #{tpu_custom_call.1} parent=55 // pred_fallthru
          _
        // Predicated region
        $region61: #{tpu_custom_call.1} parent=55 // pred_check
          %p468 = pneg %p96
        $region62: #{tpu_custom_call.1} parent=55 // pred_check_branch
          %470 = sbr.rel (%p468) target = $region64
        $region63: #{tpu_custom_call.1} parent=55 // pred_region
          %472 = dma.done [#allocation6], 384
        $region64: #{tpu_custom_call.1} parent=55 // pred_fallthru
          _
        // Predicated region
        $region65: #{tpu_custom_call.1} parent=55 // pred_check
          %p473 = pneg %p122
        $region66: #{tpu_custom_call.1} parent=55 // pred_check_branch
          %475 = sbr.rel (%p473) target = $region68
        $region67: #{tpu_custom_call.1} parent=55 // pred_region
          %477 = dma.done [#allocation6], 384
        $region68: #{tpu_custom_call.1} parent=55 // pred_fallthru
          _
        // Predicated region
        $region69: #{tpu_custom_call.1} parent=55 // pred_check
          %p478 = pneg %p143
        $region70: #{tpu_custom_call.1} parent=55 // pred_check_branch
          %480 = sbr.rel (%p478) target = $region72
        $region71: #{tpu_custom_call.1} parent=55 // pred_region
          %482 = dma.done [#allocation9], 36864
        $region72: #{tpu_custom_call.1} parent=55 // pred_fallthru
          _
        // Predicated region
        $region73: #{tpu_custom_call.1} parent=55 // pred_check
          %p483 = pneg %p164
        $region74: #{tpu_custom_call.1} parent=55 // pred_check_branch
          %485 = sbr.rel (%p483) target = $region76
        $region75: #{tpu_custom_call.1} parent=55 // pred_region
          %487 = dma.done [#allocation9], 96
        $region76: #{tpu_custom_call.1} parent=55 // pred_fallthru
          _
        // Predicated region
        $region77: #{tpu_custom_call.1} parent=55 // pred_check
          %p488 = pneg %p185
        $region78: #{tpu_custom_call.1} parent=55 // pred_check_branch
          %490 = sbr.rel (%p488) target = $region80
        $region79: #{tpu_custom_call.1} parent=55 // pred_region
          %492 = dma.done [#allocation12], 36864
        $region80: #{tpu_custom_call.1} parent=55 // pred_fallthru
          _
        // Predicated region
        $region81: #{tpu_custom_call.1} parent=55 // pred_check
          %p493 = pneg %p206
        $region82: #{tpu_custom_call.1} parent=55 // pred_check_branch
          %495 = sbr.rel (%p493) target = $region84
        $region83: #{tpu_custom_call.1} parent=55 // pred_region
          %497 = dma.done [#allocation12], 96
        $region84: #{tpu_custom_call.1} parent=55 // pred_fallthru
          _
        // Predicated region
        $region85: #{tpu_custom_call.1} parent=55 // pred_check
          %p498 = pneg %p227
        $region86: #{tpu_custom_call.1} parent=55 // pred_check_branch
          %500 = sbr.rel (%p498) target = $region88
        $region87: #{tpu_custom_call.1} parent=55 // pred_region
          %502 = dma.done [#allocation15], 96
        $region88: #{tpu_custom_call.1} parent=55 // pred_fallthru
          _
        // Predicated region
        $region89: #{tpu_custom_call.1} parent=55 // pred_check
          %p503 = pneg %p248
        $region90: #{tpu_custom_call.1} parent=55 // pred_check_branch
          %505 = sbr.rel (%p503) target = $region92
        $region91: #{tpu_custom_call.1} parent=55 // pred_region
          %507 = dma.done [#allocation15], 96
        $region92: #{tpu_custom_call.1} parent=55 // pred_fallthru
          _
        %s508 = sand.u32 %s57, 1
        %s509 = scalar_lea.sflag [#allocation3], %s508
        %s510 = sand.u32 %s57, 1
        %s511 = smul.addr %s510, 48
        %s512 = scalar_lea.vmem [#allocation2], %s511
        %p513 = pneg %p70
        %p514 = pneg %p67
        %p515 = pneg %p96
        %p516 = pneg %p93
        %p517 = pneg %p122
        %p518 = pneg %p119
        %p519 = pneg %p143
        %p520 = pneg %p140
        %p521 = pneg %p164
        %p522 = pneg %p161
        %p523 = pneg %p185
        %p524 = pneg %p182
        %p525 = pneg %p206
        %p526 = pneg %p203
        %p527 = pneg %p227
        %p528 = pneg %p224
        %p529 = pneg %p248
        %p530 = pneg %p245
        %p531 = pneg %p276
        %p532 = pneg %p273
        %s533 = sand.u32 %s263, 1
        %s534 = scalar_lea.sflag [#allocation4], %s533
        %s535 = sand.u32 %s263, 1
        %s536 = smul.addr %s535, 48
        %s537 = scalar_lea.vmem [#allocation17], %s536
        %p538 = pneg %p304
        %p539 = pneg %p301
        %s540 = sand.u32 %s291, 1
        %s541 = scalar_lea.sflag [#allocation19], %s540
        %s542 = sand.u32 %s291, 1
        %s543 = smul.addr %s542, 24
        %s544 = scalar_lea.vmem [#allocation18], %s543
        %v546 = vld [vmem:[%s462] sm:$0xff]
        %v547 = vld [vmem:[%s462 + $0x8] sm:$0xff]
        %v548 = vld [vmem:[%s462 + $0x10] sm:$0xff]
        %v549 = vld [vmem:[%s462 + $0x18] sm:$0xff]
        %v550 = vld [vmem:[%s462 + $0x20] sm:$0xff]
        %v551 = vld [vmem:[%s462 + $0x28] sm:$0xff]
        %v552 = vpack.c.bf16 %v546, %v546
        %v553 = vpack.c.bf16 %v547, %v547
        %v554 = vpack.c.bf16 %v548, %v548
        %v555 = vpack.c.bf16 %v549, %v549
        %v556 = vpack.c.bf16 %v550, %v550
        %v557 = vpack.c.bf16 %v551, %v551
        %v558 = vld [vmem:[#allocation8] sm:$0xff]
        %v559 = vld [vmem:[#allocation8 + $0x8] sm:$0xff]
        %v560 = vld [vmem:[#allocation8 + $0x10] sm:$0xff]
        %v561 = vld [vmem:[#allocation8 + $0x18] sm:$0xff]
        %v562 = vld [vmem:[#allocation8 + $0x20] sm:$0xff]
        %v563 = vld [vmem:[#allocation8 + $0x28] sm:$0xff]
        %v564 = vld [vmem:[#allocation8 + $0x30] sm:$0xff]
        %v565 = vld [vmem:[#allocation8 + $0x38] sm:$0xff]
        %v566 = vld [vmem:[#allocation8 + $0x40] sm:$0xff]
        %v567 = vld [vmem:[#allocation8 + $0x48] sm:$0xff]
        %v568 = vld [vmem:[#allocation8 + $0x50] sm:$0xff]
        %v569 = vld [vmem:[#allocation8 + $0x58] sm:$0xff]
        %v570 = vld [vmem:[#allocation8 + $0x60] sm:$0xff]
        %v571 = vld [vmem:[#allocation8 + $0x68] sm:$0xff]
        %v572 = vld [vmem:[#allocation8 + $0x70] sm:$0xff]
        %v573 = vld [vmem:[#allocation8 + $0x78] sm:$0xff]
        %v574 = vld [vmem:[#allocation8 + $0x80] sm:$0xff]
        %v575 = vld [vmem:[#allocation8 + $0x88] sm:$0xff]
        %v576 = vld [vmem:[#allocation8 + $0x90] sm:$0xff]
        %v577 = vld [vmem:[#allocation8 + $0x98] sm:$0xff]
        %v578 = vld [vmem:[#allocation8 + $0xa0] sm:$0xff]
        %v579 = vld [vmem:[#allocation8 + $0xa8] sm:$0xff]
        %v580 = vld [vmem:[#allocation8 + $0xb0] sm:$0xff]
        %v581 = vld [vmem:[#allocation8 + $0xb8] sm:$0xff]
        %v582 = vld [vmem:[#allocation8 + $0xc0] sm:$0xff]
        %v583 = vld [vmem:[#allocation8 + $0xc8] sm:$0xff]
        %v584 = vld [vmem:[#allocation8 + $0xd0] sm:$0xff]
        %v585 = vld [vmem:[#allocation8 + $0xd8] sm:$0xff]
        %v586 = vld [vmem:[#allocation8 + $0xe0] sm:$0xff]
        %v587 = vld [vmem:[#allocation8 + $0xe8] sm:$0xff]
        %v588 = vld [vmem:[#allocation8 + $0xf0] sm:$0xff]
        %v589 = vld [vmem:[#allocation8 + $0xf8] sm:$0xff]
        %v590 = vld [vmem:[#allocation8 + $0x100] sm:$0xff]
        %v591 = vld [vmem:[#allocation8 + $0x108] sm:$0xff]
        %v592 = vld [vmem:[#allocation8 + $0x110] sm:$0xff]
        %v593 = vld [vmem:[#allocation8 + $0x118] sm:$0xff]
        %v594 = vld [vmem:[#allocation8 + $0x120] sm:$0xff]
        %v595 = vld [vmem:[#allocation8 + $0x128] sm:$0xff]
        %v596 = vld [vmem:[#allocation8 + $0x130] sm:$0xff]
        %v597 = vld [vmem:[#allocation8 + $0x138] sm:$0xff]
        %v598 = vld [vmem:[#allocation8 + $0x140] sm:$0xff]
        %v599 = vld [vmem:[#allocation8 + $0x148] sm:$0xff]
        %v600 = vld [vmem:[#allocation8 + $0x150] sm:$0xff]
        %v601 = vld [vmem:[#allocation8 + $0x158] sm:$0xff]
        %v602 = vld [vmem:[#allocation8 + $0x160] sm:$0xff]
        %v603 = vld [vmem:[#allocation8 + $0x168] sm:$0xff]
        %v604 = vld [vmem:[#allocation8 + $0x170] sm:$0xff]
        %v605 = vld [vmem:[#allocation8 + $0x178] sm:$0xff]
        %v606 = vld [vmem:[#allocation8 + $0x180] sm:$0xff]
        %v607 = vld [vmem:[#allocation8 + $0x188] sm:$0xff]
        %v608 = vld [vmem:[#allocation8 + $0x190] sm:$0xff]
        %v609 = vld [vmem:[#allocation8 + $0x198] sm:$0xff]
        %v610 = vld [vmem:[#allocation8 + $0x1a0] sm:$0xff]
        %v611 = vld [vmem:[#allocation8 + $0x1a8] sm:$0xff]
        %v612 = vld [vmem:[#allocation8 + $0x1b0] sm:$0xff]
        %v613 = vld [vmem:[#allocation8 + $0x1b8] sm:$0xff]
        %v614 = vld [vmem:[#allocation8 + $0x1c0] sm:$0xff]
        %v615 = vld [vmem:[#allocation8 + $0x1c8] sm:$0xff]
        %v616 = vld [vmem:[#allocation8 + $0x1d0] sm:$0xff]
        %v617 = vld [vmem:[#allocation8 + $0x1d8] sm:$0xff]
        %v618 = vld [vmem:[#allocation8 + $0x1e0] sm:$0xff]
        %v619 = vld [vmem:[#allocation8 + $0x1e8] sm:$0xff]
        %v620 = vld [vmem:[#allocation8 + $0x1f0] sm:$0xff]
        %v621 = vld [vmem:[#allocation8 + $0x1f8] sm:$0xff]
        %v622 = vld [vmem:[#allocation8 + $0x200] sm:$0xff]
        %v623 = vld [vmem:[#allocation8 + $0x208] sm:$0xff]
        %v624 = vld [vmem:[#allocation8 + $0x210] sm:$0xff]
        %v625 = vld [vmem:[#allocation8 + $0x218] sm:$0xff]
        %v626 = vld [vmem:[#allocation8 + $0x220] sm:$0xff]
        %v627 = vld [vmem:[#allocation8 + $0x228] sm:$0xff]
        %v628 = vld [vmem:[#allocation8 + $0x230] sm:$0xff]
        %v629 = vld [vmem:[#allocation8 + $0x238] sm:$0xff]
        %v630 = vld [vmem:[#allocation8 + $0x240] sm:$0xff]
        %v631 = vld [vmem:[#allocation8 + $0x248] sm:$0xff]
        %v632 = vld [vmem:[#allocation8 + $0x250] sm:$0xff]
        %v633 = vld [vmem:[#allocation8 + $0x258] sm:$0xff]
        %v634 = vld [vmem:[#allocation8 + $0x260] sm:$0xff]
        %v635 = vld [vmem:[#allocation8 + $0x268] sm:$0xff]
        %v636 = vld [vmem:[#allocation8 + $0x270] sm:$0xff]
        %v637 = vld [vmem:[#allocation8 + $0x278] sm:$0xff]
        %v638 = vld [vmem:[#allocation8 + $0x280] sm:$0xff]
        %v639 = vld [vmem:[#allocation8 + $0x288] sm:$0xff]
        %v640 = vld [vmem:[#allocation8 + $0x290] sm:$0xff]
        %v641 = vld [vmem:[#allocation8 + $0x298] sm:$0xff]
        %v642 = vld [vmem:[#allocation8 + $0x2a0] sm:$0xff]
        %v643 = vld [vmem:[#allocation8 + $0x2a8] sm:$0xff]
        %v644 = vld [vmem:[#allocation8 + $0x2b0] sm:$0xff]
        %v645 = vld [vmem:[#allocation8 + $0x2b8] sm:$0xff]
        %v646 = vld [vmem:[#allocation8 + $0x2c0] sm:$0xff]
        %v647 = vld [vmem:[#allocation8 + $0x2c8] sm:$0xff]
        %v648 = vld [vmem:[#allocation8 + $0x2d0] sm:$0xff]
        %v649 = vld [vmem:[#allocation8 + $0x2d8] sm:$0xff]
        %v650 = vld [vmem:[#allocation8 + $0x2e0] sm:$0xff]
        %v651 = vld [vmem:[#allocation8 + $0x2e8] sm:$0xff]
        %v652 = vld [vmem:[#allocation8 + $0x2f0] sm:$0xff]
        %v653 = vld [vmem:[#allocation8 + $0x2f8] sm:$0xff]
        %v654 = vld [vmem:[#allocation8 + $0x300] sm:$0xff]
        %v655 = vld [vmem:[#allocation8 + $0x308] sm:$0xff]
        %v656 = vld [vmem:[#allocation8 + $0x310] sm:$0xff]
        %v657 = vld [vmem:[#allocation8 + $0x318] sm:$0xff]
        %v658 = vld [vmem:[#allocation8 + $0x320] sm:$0xff]
        %v659 = vld [vmem:[#allocation8 + $0x328] sm:$0xff]
        %v660 = vld [vmem:[#allocation8 + $0x330] sm:$0xff]
        %v661 = vld [vmem:[#allocation8 + $0x338] sm:$0xff]
        %v662 = vld [vmem:[#allocation8 + $0x340] sm:$0xff]
        %v663 = vld [vmem:[#allocation8 + $0x348] sm:$0xff]
        %v664 = vld [vmem:[#allocation8 + $0x350] sm:$0xff]
        %v665 = vld [vmem:[#allocation8 + $0x358] sm:$0xff]
        %v666 = vld [vmem:[#allocation8 + $0x360] sm:$0xff]
        %v667 = vld [vmem:[#allocation8 + $0x368] sm:$0xff]
        %v668 = vld [vmem:[#allocation8 + $0x370] sm:$0xff]
        %v669 = vld [vmem:[#allocation8 + $0x378] sm:$0xff]
        %v670 = vld [vmem:[#allocation8 + $0x380] sm:$0xff]
        %v671 = vld [vmem:[#allocation8 + $0x388] sm:$0xff]
        %v672 = vld [vmem:[#allocation8 + $0x390] sm:$0xff]
        %v673 = vld [vmem:[#allocation8 + $0x398] sm:$0xff]
        %v674 = vld [vmem:[#allocation8 + $0x3a0] sm:$0xff]
        %v675 = vld [vmem:[#allocation8 + $0x3a8] sm:$0xff]
        %v676 = vld [vmem:[#allocation8 + $0x3b0] sm:$0xff]
        %v677 = vld [vmem:[#allocation8 + $0x3b8] sm:$0xff]
        %v678 = vld [vmem:[#allocation8 + $0x3c0] sm:$0xff]
        %v679 = vld [vmem:[#allocation8 + $0x3c8] sm:$0xff]
        %v680 = vld [vmem:[#allocation8 + $0x3d0] sm:$0xff]
        %v681 = vld [vmem:[#allocation8 + $0x3d8] sm:$0xff]
        %v682 = vld [vmem:[#allocation8 + $0x3e0] sm:$0xff]
        %v683 = vld [vmem:[#allocation8 + $0x3e8] sm:$0xff]
        %v684 = vld [vmem:[#allocation8 + $0x3f0] sm:$0xff]
        %v685 = vld [vmem:[#allocation8 + $0x3f8] sm:$0xff]
        %v686 = vld [vmem:[#allocation8 + $0x400] sm:$0xff]
        %v687 = vld [vmem:[#allocation8 + $0x408] sm:$0xff]
        %v688 = vld [vmem:[#allocation8 + $0x410] sm:$0xff]
        %v689 = vld [vmem:[#allocation8 + $0x418] sm:$0xff]
        %v690 = vld [vmem:[#allocation8 + $0x420] sm:$0xff]
        %v691 = vld [vmem:[#allocation8 + $0x428] sm:$0xff]
        %v692 = vld [vmem:[#allocation8 + $0x430] sm:$0xff]
        %v693 = vld [vmem:[#allocation8 + $0x438] sm:$0xff]
        %v694 = vld [vmem:[#allocation8 + $0x440] sm:$0xff]
        %v695 = vld [vmem:[#allocation8 + $0x448] sm:$0xff]
        %v696 = vld [vmem:[#allocation8 + $0x450] sm:$0xff]
        %v697 = vld [vmem:[#allocation8 + $0x458] sm:$0xff]
        %v698 = vld [vmem:[#allocation8 + $0x460] sm:$0xff]
        %v699 = vld [vmem:[#allocation8 + $0x468] sm:$0xff]
        %v700 = vld [vmem:[#allocation8 + $0x470] sm:$0xff]
        %v701 = vld [vmem:[#allocation8 + $0x478] sm:$0xff]
        %v702 = vld [vmem:[#allocation8 + $0x480] sm:$0xff]
        %v703 = vld [vmem:[#allocation8 + $0x488] sm:$0xff]
        %v704 = vld [vmem:[#allocation8 + $0x490] sm:$0xff]
        %v705 = vld [vmem:[#allocation8 + $0x498] sm:$0xff]
        %v706 = vld [vmem:[#allocation8 + $0x4a0] sm:$0xff]
        %v707 = vld [vmem:[#allocation8 + $0x4a8] sm:$0xff]
        %v708 = vld [vmem:[#allocation8 + $0x4b0] sm:$0xff]
        %v709 = vld [vmem:[#allocation8 + $0x4b8] sm:$0xff]
        %v710 = vld [vmem:[#allocation8 + $0x4c0] sm:$0xff]
        %v711 = vld [vmem:[#allocation8 + $0x4c8] sm:$0xff]
        %v712 = vld [vmem:[#allocation8 + $0x4d0] sm:$0xff]
        %v713 = vld [vmem:[#allocation8 + $0x4d8] sm:$0xff]
        %v714 = vld [vmem:[#allocation8 + $0x4e0] sm:$0xff]
        %v715 = vld [vmem:[#allocation8 + $0x4e8] sm:$0xff]
        %v716 = vld [vmem:[#allocation8 + $0x4f0] sm:$0xff]
        %v717 = vld [vmem:[#allocation8 + $0x4f8] sm:$0xff]
        %v718 = vld [vmem:[#allocation8 + $0x500] sm:$0xff]
        %v719 = vld [vmem:[#allocation8 + $0x508] sm:$0xff]
        %v720 = vld [vmem:[#allocation8 + $0x510] sm:$0xff]
        %v721 = vld [vmem:[#allocation8 + $0x518] sm:$0xff]
        %v722 = vld [vmem:[#allocation8 + $0x520] sm:$0xff]
        %v723 = vld [vmem:[#allocation8 + $0x528] sm:$0xff]
        %v724 = vld [vmem:[#allocation8 + $0x530] sm:$0xff]
        %v725 = vld [vmem:[#allocation8 + $0x538] sm:$0xff]
        %v726 = vld [vmem:[#allocation8 + $0x540] sm:$0xff]
        %v727 = vld [vmem:[#allocation8 + $0x548] sm:$0xff]
        %v728 = vld [vmem:[#allocation8 + $0x550] sm:$0xff]
        %v729 = vld [vmem:[#allocation8 + $0x558] sm:$0xff]
        %v730 = vld [vmem:[#allocation8 + $0x560] sm:$0xff]
        %v731 = vld [vmem:[#allocation8 + $0x568] sm:$0xff]
        %v732 = vld [vmem:[#allocation8 + $0x570] sm:$0xff]
        %v733 = vld [vmem:[#allocation8 + $0x578] sm:$0xff]
        %v734 = vld [vmem:[#allocation8 + $0x580] sm:$0xff]
        %v735 = vld [vmem:[#allocation8 + $0x588] sm:$0xff]
        %v736 = vld [vmem:[#allocation8 + $0x590] sm:$0xff]
        %v737 = vld [vmem:[#allocation8 + $0x598] sm:$0xff]
        %v738 = vld [vmem:[#allocation8 + $0x5a0] sm:$0xff]
        %v739 = vld [vmem:[#allocation8 + $0x5a8] sm:$0xff]
        %v740 = vld [vmem:[#allocation8 + $0x5b0] sm:$0xff]
        %v741 = vld [vmem:[#allocation8 + $0x5b8] sm:$0xff]
        %v742 = vld [vmem:[#allocation8 + $0x5c0] sm:$0xff]
        %v743 = vld [vmem:[#allocation8 + $0x5c8] sm:$0xff]
        %v744 = vld [vmem:[#allocation8 + $0x5d0] sm:$0xff]
        %v745 = vld [vmem:[#allocation8 + $0x5d8] sm:$0xff]
        %v746 = vld [vmem:[#allocation8 + $0x5e0] sm:$0xff]
        %v747 = vld [vmem:[#allocation8 + $0x5e8] sm:$0xff]
        %v748 = vld [vmem:[#allocation8 + $0x5f0] sm:$0xff]
        %v749 = vld [vmem:[#allocation8 + $0x5f8] sm:$0xff]
        %v750 = vld [vmem:[#allocation8 + $0x600] sm:$0xff]
        %v751 = vld [vmem:[#allocation8 + $0x608] sm:$0xff]
        %v752 = vld [vmem:[#allocation8 + $0x610] sm:$0xff]
        %v753 = vld [vmem:[#allocation8 + $0x618] sm:$0xff]
        %v754 = vld [vmem:[#allocation8 + $0x620] sm:$0xff]
        %v755 = vld [vmem:[#allocation8 + $0x628] sm:$0xff]
        %v756 = vld [vmem:[#allocation8 + $0x630] sm:$0xff]
        %v757 = vld [vmem:[#allocation8 + $0x638] sm:$0xff]
        %v758 = vld [vmem:[#allocation8 + $0x640] sm:$0xff]
        %v759 = vld [vmem:[#allocation8 + $0x648] sm:$0xff]
        %v760 = vld [vmem:[#allocation8 + $0x650] sm:$0xff]
        %v761 = vld [vmem:[#allocation8 + $0x658] sm:$0xff]
        %v762 = vld [vmem:[#allocation8 + $0x660] sm:$0xff]
        %v763 = vld [vmem:[#allocation8 + $0x668] sm:$0xff]
        %v764 = vld [vmem:[#allocation8 + $0x670] sm:$0xff]
        %v765 = vld [vmem:[#allocation8 + $0x678] sm:$0xff]
        %v766 = vld [vmem:[#allocation8 + $0x680] sm:$0xff]
        %v767 = vld [vmem:[#allocation8 + $0x688] sm:$0xff]
        %v768 = vld [vmem:[#allocation8 + $0x690] sm:$0xff]
        %v769 = vld [vmem:[#allocation8 + $0x698] sm:$0xff]
        %v770 = vld [vmem:[#allocation8 + $0x6a0] sm:$0xff]
        %v771 = vld [vmem:[#allocation8 + $0x6a8] sm:$0xff]
        %v772 = vld [vmem:[#allocation8 + $0x6b0] sm:$0xff]
        %v773 = vld [vmem:[#allocation8 + $0x6b8] sm:$0xff]
        %v774 = vld [vmem:[#allocation8 + $0x6c0] sm:$0xff]
        %v775 = vld [vmem:[#allocation8 + $0x6c8] sm:$0xff]
        %v776 = vld [vmem:[#allocation8 + $0x6d0] sm:$0xff]
        %v777 = vld [vmem:[#allocation8 + $0x6d8] sm:$0xff]
        %v778 = vld [vmem:[#allocation8 + $0x6e0] sm:$0xff]
        %v779 = vld [vmem:[#allocation8 + $0x6e8] sm:$0xff]
        %v780 = vld [vmem:[#allocation8 + $0x6f0] sm:$0xff]
        %v781 = vld [vmem:[#allocation8 + $0x6f8] sm:$0xff]
        %v782 = vld [vmem:[#allocation8 + $0x700] sm:$0xff]
        %v783 = vld [vmem:[#allocation8 + $0x708] sm:$0xff]
        %v784 = vld [vmem:[#allocation8 + $0x710] sm:$0xff]
        %v785 = vld [vmem:[#allocation8 + $0x718] sm:$0xff]
        %v786 = vld [vmem:[#allocation8 + $0x720] sm:$0xff]
        %v787 = vld [vmem:[#allocation8 + $0x728] sm:$0xff]
        %v788 = vld [vmem:[#allocation8 + $0x730] sm:$0xff]
        %v789 = vld [vmem:[#allocation8 + $0x738] sm:$0xff]
        %v790 = vld [vmem:[#allocation8 + $0x740] sm:$0xff]
        %v791 = vld [vmem:[#allocation8 + $0x748] sm:$0xff]
        %v792 = vld [vmem:[#allocation8 + $0x750] sm:$0xff]
        %v793 = vld [vmem:[#allocation8 + $0x758] sm:$0xff]
        %v794 = vld [vmem:[#allocation8 + $0x760] sm:$0xff]
        %v795 = vld [vmem:[#allocation8 + $0x768] sm:$0xff]
        %v796 = vld [vmem:[#allocation8 + $0x770] sm:$0xff]
        %v797 = vld [vmem:[#allocation8 + $0x778] sm:$0xff]
        %v798 = vld [vmem:[#allocation8 + $0x780] sm:$0xff]
        %v799 = vld [vmem:[#allocation8 + $0x788] sm:$0xff]
        %v800 = vld [vmem:[#allocation8 + $0x790] sm:$0xff]
        %v801 = vld [vmem:[#allocation8 + $0x798] sm:$0xff]
        %v802 = vld [vmem:[#allocation8 + $0x7a0] sm:$0xff]
        %v803 = vld [vmem:[#allocation8 + $0x7a8] sm:$0xff]
        %v804 = vld [vmem:[#allocation8 + $0x7b0] sm:$0xff]
        %v805 = vld [vmem:[#allocation8 + $0x7b8] sm:$0xff]
        %v806 = vld [vmem:[#allocation8 + $0x7c0] sm:$0xff]
        %v807 = vld [vmem:[#allocation8 + $0x7c8] sm:$0xff]
        %v808 = vld [vmem:[#allocation8 + $0x7d0] sm:$0xff]
        %v809 = vld [vmem:[#allocation8 + $0x7d8] sm:$0xff]
        %v810 = vld [vmem:[#allocation8 + $0x7e0] sm:$0xff]
        %v811 = vld [vmem:[#allocation8 + $0x7e8] sm:$0xff]
        %v812 = vld [vmem:[#allocation8 + $0x7f0] sm:$0xff]
        %v813 = vld [vmem:[#allocation8 + $0x7f8] sm:$0xff]
        %v814 = vld [vmem:[#allocation8 + $0x800] sm:$0xff]
        %v815 = vld [vmem:[#allocation8 + $0x808] sm:$0xff]
        %v816 = vld [vmem:[#allocation8 + $0x810] sm:$0xff]
        %v817 = vld [vmem:[#allocation8 + $0x818] sm:$0xff]
        %v818 = vld [vmem:[#allocation8 + $0x820] sm:$0xff]
        %v819 = vld [vmem:[#allocation8 + $0x828] sm:$0xff]
        %v820 = vld [vmem:[#allocation8 + $0x830] sm:$0xff]
        %v821 = vld [vmem:[#allocation8 + $0x838] sm:$0xff]
        %v822 = vld [vmem:[#allocation8 + $0x840] sm:$0xff]
        %v823 = vld [vmem:[#allocation8 + $0x848] sm:$0xff]
        %v824 = vld [vmem:[#allocation8 + $0x850] sm:$0xff]
        %v825 = vld [vmem:[#allocation8 + $0x858] sm:$0xff]
        %v826 = vld [vmem:[#allocation8 + $0x860] sm:$0xff]
        %v827 = vld [vmem:[#allocation8 + $0x868] sm:$0xff]
        %v828 = vld [vmem:[#allocation8 + $0x870] sm:$0xff]
        %v829 = vld [vmem:[#allocation8 + $0x878] sm:$0xff]
        %v830 = vld [vmem:[#allocation8 + $0x880] sm:$0xff]
        %v831 = vld [vmem:[#allocation8 + $0x888] sm:$0xff]
        %v832 = vld [vmem:[#allocation8 + $0x890] sm:$0xff]
        %v833 = vld [vmem:[#allocation8 + $0x898] sm:$0xff]
        %v834 = vld [vmem:[#allocation8 + $0x8a0] sm:$0xff]
        %v835 = vld [vmem:[#allocation8 + $0x8a8] sm:$0xff]
        %v836 = vld [vmem:[#allocation8 + $0x8b0] sm:$0xff]
        %v837 = vld [vmem:[#allocation8 + $0x8b8] sm:$0xff]
        %v838 = vld [vmem:[#allocation8 + $0x8c0] sm:$0xff]
        %v839 = vld [vmem:[#allocation8 + $0x8c8] sm:$0xff]
        %v840 = vld [vmem:[#allocation8 + $0x8d0] sm:$0xff]
        %v841 = vld [vmem:[#allocation8 + $0x8d8] sm:$0xff]
        %v842 = vld [vmem:[#allocation8 + $0x8e0] sm:$0xff]
        %v843 = vld [vmem:[#allocation8 + $0x8e8] sm:$0xff]
        %v844 = vld [vmem:[#allocation8 + $0x8f0] sm:$0xff]
        %v845 = vld [vmem:[#allocation8 + $0x8f8] sm:$0xff]
        %v846 = vld [vmem:[#allocation10] sm:$0x3f]
        %v848 = vperm.slane %v846, 0
        %v849 = vperm.slane %v846, 1
        %v850 = vperm.slane %v846, 2
        %v851 = vperm.slane %v846, 3
        %v852 = vperm.slane %v846, 4
        %v853 = vperm.slane %v846, 5
        %v1148 = vunpack.c.l.b16 %v558
        %v1149 = vunpack.c.h.b16 %v558
        %v1150 = vunpack.c.l.b16 %v559
        %v1151 = vunpack.c.h.b16 %v559
        %v1152 = vunpack.c.l.b16 %v560
        %v1153 = vunpack.c.h.b16 %v560
        %v1154 = vunpack.c.l.b16 %v561
        %v1155 = vunpack.c.h.b16 %v561
        %v1156 = vunpack.c.l.b16 %v562
        %v1157 = vunpack.c.h.b16 %v562
        %v1158 = vunpack.c.l.b16 %v563
        %v1159 = vunpack.c.h.b16 %v563
        %v1160 = vunpack.c.l.b16 %v564
        %v1161 = vunpack.c.h.b16 %v564
        %v1162 = vunpack.c.l.b16 %v565
        %v1163 = vunpack.c.h.b16 %v565
        %v1164 = vunpack.c.l.b16 %v566
        %v1165 = vunpack.c.h.b16 %v566
        %v1166 = vunpack.c.l.b16 %v567
        %v1167 = vunpack.c.h.b16 %v567
        %v1168 = vunpack.c.l.b16 %v568
        %v1169 = vunpack.c.h.b16 %v568
        %v1170 = vunpack.c.l.b16 %v569
        %v1171 = vunpack.c.h.b16 %v569
        %v1172 = vunpack.c.l.b16 %v570
        %v1173 = vunpack.c.h.b16 %v570
        %v1174 = vunpack.c.l.b16 %v571
        %v1175 = vunpack.c.h.b16 %v571
        %v1176 = vunpack.c.l.b16 %v572
        %v1177 = vunpack.c.h.b16 %v572
        %v1178 = vunpack.c.l.b16 %v573
        %v1179 = vunpack.c.h.b16 %v573
        %v1180 = vunpack.c.l.b16 %v574
        %v1181 = vunpack.c.h.b16 %v574
        %v1182 = vunpack.c.l.b16 %v575
        %v1183 = vunpack.c.h.b16 %v575
        %v1184 = vunpack.c.l.b16 %v576
        %v1185 = vunpack.c.h.b16 %v576
        %v1186 = vunpack.c.l.b16 %v577
        %v1187 = vunpack.c.h.b16 %v577
        %v1188 = vunpack.c.l.b16 %v578
        %v1189 = vunpack.c.h.b16 %v578
        %v1190 = vunpack.c.l.b16 %v579
        %v1191 = vunpack.c.h.b16 %v579
        %v1192 = vunpack.c.l.b16 %v580
        %v1193 = vunpack.c.h.b16 %v580
        %v1194 = vunpack.c.l.b16 %v581
        %v1195 = vunpack.c.h.b16 %v581
        %v1196 = vunpack.c.l.b16 %v582
        %v1197 = vunpack.c.h.b16 %v582
        %v1198 = vunpack.c.l.b16 %v583
        %v1199 = vunpack.c.h.b16 %v583
        %v1200 = vunpack.c.l.b16 %v584
        %v1201 = vunpack.c.h.b16 %v584
        %v1202 = vunpack.c.l.b16 %v585
        %v1203 = vunpack.c.h.b16 %v585
        %v1204 = vunpack.c.l.b16 %v586
        %v1205 = vunpack.c.h.b16 %v586
        %v1206 = vunpack.c.l.b16 %v587
        %v1207 = vunpack.c.h.b16 %v587
        %v1208 = vunpack.c.l.b16 %v588
        %v1209 = vunpack.c.h.b16 %v588
        %v1210 = vunpack.c.l.b16 %v589
        %v1211 = vunpack.c.h.b16 %v589
        %v1212 = vunpack.c.l.b16 %v590
        %v1213 = vunpack.c.h.b16 %v590
        %v1214 = vunpack.c.l.b16 %v591
        %v1215 = vunpack.c.h.b16 %v591
        %v1216 = vunpack.c.l.b16 %v592
        %v1217 = vunpack.c.h.b16 %v592
        %v1218 = vunpack.c.l.b16 %v593
        %v1219 = vunpack.c.h.b16 %v593
        %v1220 = vunpack.c.l.b16 %v594
        %v1221 = vunpack.c.h.b16 %v594
        %v1222 = vunpack.c.l.b16 %v595
        %v1223 = vunpack.c.h.b16 %v595
        %v1224 = vunpack.c.l.b16 %v596
        %v1225 = vunpack.c.h.b16 %v596
        %v1226 = vunpack.c.l.b16 %v597
        %v1227 = vunpack.c.h.b16 %v597
        %v1228 = vunpack.c.l.b16 %v598
        %v1229 = vunpack.c.h.b16 %v598
        %v1230 = vunpack.c.l.b16 %v599
        %v1231 = vunpack.c.h.b16 %v599
        %v1232 = vunpack.c.l.b16 %v600
        %v1233 = vunpack.c.h.b16 %v600
        %v1234 = vunpack.c.l.b16 %v601
        %v1235 = vunpack.c.h.b16 %v601
        %v1236 = vunpack.c.l.b16 %v602
        %v1237 = vunpack.c.h.b16 %v602
        %v1238 = vunpack.c.l.b16 %v603
        %v1239 = vunpack.c.h.b16 %v603
        %v1240 = vunpack.c.l.b16 %v604
        %v1241 = vunpack.c.h.b16 %v604
        %v1242 = vunpack.c.l.b16 %v605
        %v1243 = vunpack.c.h.b16 %v605
        %v1244 = vunpack.c.l.b16 %v606
        %v1245 = vunpack.c.h.b16 %v606
        %v1246 = vunpack.c.l.b16 %v607
        %v1247 = vunpack.c.h.b16 %v607
        %v1248 = vunpack.c.l.b16 %v608
        %v1249 = vunpack.c.h.b16 %v608
        %v1250 = vunpack.c.l.b16 %v609
        %v1251 = vunpack.c.h.b16 %v609
        %v1252 = vunpack.c.l.b16 %v610
        %v1253 = vunpack.c.h.b16 %v610
        %v1254 = vunpack.c.l.b16 %v611
        %v1255 = vunpack.c.h.b16 %v611
        %v1256 = vunpack.c.l.b16 %v612
        %v1257 = vunpack.c.h.b16 %v612
        %v1258 = vunpack.c.l.b16 %v613
        %v1259 = vunpack.c.h.b16 %v613
        %v1260 = vunpack.c.l.b16 %v614
        %v1261 = vunpack.c.h.b16 %v614
        %v1262 = vunpack.c.l.b16 %v615
        %v1263 = vunpack.c.h.b16 %v615
        %v1264 = vunpack.c.l.b16 %v616
        %v1265 = vunpack.c.h.b16 %v616
        %v1266 = vunpack.c.l.b16 %v617
        %v1267 = vunpack.c.h.b16 %v617
        %v1268 = vunpack.c.l.b16 %v618
        %v1269 = vunpack.c.h.b16 %v618
        %v1270 = vunpack.c.l.b16 %v619
        %v1271 = vunpack.c.h.b16 %v619
        %v1272 = vunpack.c.l.b16 %v620
        %v1273 = vunpack.c.h.b16 %v620
        %v1274 = vunpack.c.l.b16 %v621
        %v1275 = vunpack.c.h.b16 %v621
        %v1276 = vunpack.c.l.b16 %v622
        %v1277 = vunpack.c.h.b16 %v622
        %v1278 = vunpack.c.l.b16 %v623
        %v1279 = vunpack.c.h.b16 %v623
        %v1280 = vunpack.c.l.b16 %v624
        %v1281 = vunpack.c.h.b16 %v624
        %v1282 = vunpack.c.l.b16 %v625
        %v1283 = vunpack.c.h.b16 %v625
        %v1284 = vunpack.c.l.b16 %v626
        %v1285 = vunpack.c.h.b16 %v626
        %v1286 = vunpack.c.l.b16 %v627
        %v1287 = vunpack.c.h.b16 %v627
        %v1288 = vunpack.c.l.b16 %v628
        %v1289 = vunpack.c.h.b16 %v628
        %v1290 = vunpack.c.l.b16 %v629
        %v1291 = vunpack.c.h.b16 %v629
        %v1292 = vunpack.c.l.b16 %v630
        %v1293 = vunpack.c.h.b16 %v630
        %v1294 = vunpack.c.l.b16 %v631
        %v1295 = vunpack.c.h.b16 %v631
        %v1296 = vunpack.c.l.b16 %v632
        %v1297 = vunpack.c.h.b16 %v632
        %v1298 = vunpack.c.l.b16 %v633
        %v1299 = vunpack.c.h.b16 %v633
        %v1300 = vunpack.c.l.b16 %v634
        %v1301 = vunpack.c.h.b16 %v634
        %v1302 = vunpack.c.l.b16 %v635
        %v1303 = vunpack.c.h.b16 %v635
        %v1304 = vunpack.c.l.b16 %v636
        %v1305 = vunpack.c.h.b16 %v636
        %v1306 = vunpack.c.l.b16 %v637
        %v1307 = vunpack.c.h.b16 %v637
        %v1308 = vunpack.c.l.b16 %v638
        %v1309 = vunpack.c.h.b16 %v638
        %v1310 = vunpack.c.l.b16 %v639
        %v1311 = vunpack.c.h.b16 %v639
        %v1312 = vunpack.c.l.b16 %v640
        %v1313 = vunpack.c.h.b16 %v640
        %v1314 = vunpack.c.l.b16 %v641
        %v1315 = vunpack.c.h.b16 %v641
        %v1316 = vunpack.c.l.b16 %v642
        %v1317 = vunpack.c.h.b16 %v642
        %v1318 = vunpack.c.l.b16 %v643
        %v1319 = vunpack.c.h.b16 %v643
        %v1320 = vunpack.c.l.b16 %v644
        %v1321 = vunpack.c.h.b16 %v644
        %v1322 = vunpack.c.l.b16 %v645
        %v1323 = vunpack.c.h.b16 %v645
        %v1324 = vunpack.c.l.b16 %v646
        %v1325 = vunpack.c.h.b16 %v646
        %v1326 = vunpack.c.l.b16 %v647
        %v1327 = vunpack.c.h.b16 %v647
        %v1328 = vunpack.c.l.b16 %v648
        %v1329 = vunpack.c.h.b16 %v648
        %v1330 = vunpack.c.l.b16 %v649
        %v1331 = vunpack.c.h.b16 %v649
        %v1332 = vunpack.c.l.b16 %v650
        %v1333 = vunpack.c.h.b16 %v650
        %v1334 = vunpack.c.l.b16 %v651
        %v1335 = vunpack.c.h.b16 %v651
        %v1336 = vunpack.c.l.b16 %v652
        %v1337 = vunpack.c.h.b16 %v652
        %v1338 = vunpack.c.l.b16 %v653
        %v1339 = vunpack.c.h.b16 %v653
        %v1340 = vunpack.c.l.b16 %v654
        %v1341 = vunpack.c.h.b16 %v654
        %v1342 = vunpack.c.l.b16 %v655
        %v1343 = vunpack.c.h.b16 %v655
        %v1344 = vunpack.c.l.b16 %v656
        %v1345 = vunpack.c.h.b16 %v656
        %v1346 = vunpack.c.l.b16 %v657
        %v1347 = vunpack.c.h.b16 %v657
        %v1348 = vunpack.c.l.b16 %v658
        %v1349 = vunpack.c.h.b16 %v658
        %v1350 = vunpack.c.l.b16 %v659
        %v1351 = vunpack.c.h.b16 %v659
        %v1352 = vunpack.c.l.b16 %v660
        %v1353 = vunpack.c.h.b16 %v660
        %v1354 = vunpack.c.l.b16 %v661
        %v1355 = vunpack.c.h.b16 %v661
        %v1356 = vunpack.c.l.b16 %v662
        %v1357 = vunpack.c.h.b16 %v662
        %v1358 = vunpack.c.l.b16 %v663
        %v1359 = vunpack.c.h.b16 %v663
        %v1360 = vunpack.c.l.b16 %v664
        %v1361 = vunpack.c.h.b16 %v664
        %v1362 = vunpack.c.l.b16 %v665
        %v1363 = vunpack.c.h.b16 %v665
        %v1364 = vunpack.c.l.b16 %v666
        %v1365 = vunpack.c.h.b16 %v666
        %v1366 = vunpack.c.l.b16 %v667
        %v1367 = vunpack.c.h.b16 %v667
        %v1368 = vunpack.c.l.b16 %v668
        %v1369 = vunpack.c.h.b16 %v668
        %v1370 = vunpack.c.l.b16 %v669
        %v1371 = vunpack.c.h.b16 %v669
        %v1372 = vunpack.c.l.b16 %v670
        %v1373 = vunpack.c.h.b16 %v670
        %v1374 = vunpack.c.l.b16 %v671
        %v1375 = vunpack.c.h.b16 %v671
        %v1376 = vunpack.c.l.b16 %v672
        %v1377 = vunpack.c.h.b16 %v672
        %v1378 = vunpack.c.l.b16 %v673
        %v1379 = vunpack.c.h.b16 %v673
        %v1380 = vunpack.c.l.b16 %v674
        %v1381 = vunpack.c.h.b16 %v674
        %v1382 = vunpack.c.l.b16 %v675
        %v1383 = vunpack.c.h.b16 %v675
        %v1384 = vunpack.c.l.b16 %v676
        %v1385 = vunpack.c.h.b16 %v676
        %v1386 = vunpack.c.l.b16 %v677
        %v1387 = vunpack.c.h.b16 %v677
        %v1388 = vunpack.c.l.b16 %v678
        %v1389 = vunpack.c.h.b16 %v678
        %v1390 = vunpack.c.l.b16 %v679
        %v1391 = vunpack.c.h.b16 %v679
        %v1392 = vunpack.c.l.b16 %v680
        %v1393 = vunpack.c.h.b16 %v680
        %v1394 = vunpack.c.l.b16 %v681
        %v1395 = vunpack.c.h.b16 %v681
        %v1396 = vunpack.c.l.b16 %v682
        %v1397 = vunpack.c.h.b16 %v682
        %v1398 = vunpack.c.l.b16 %v683
        %v1399 = vunpack.c.h.b16 %v683
        %v1400 = vunpack.c.l.b16 %v684
        %v1401 = vunpack.c.h.b16 %v684
        %v1402 = vunpack.c.l.b16 %v685
        %v1403 = vunpack.c.h.b16 %v685
        %v1404 = vunpack.c.l.b16 %v686
        %v1405 = vunpack.c.h.b16 %v686
        %v1406 = vunpack.c.l.b16 %v687
        %v1407 = vunpack.c.h.b16 %v687
        %v1408 = vunpack.c.l.b16 %v688
        %v1409 = vunpack.c.h.b16 %v688
        %v1410 = vunpack.c.l.b16 %v689
        %v1411 = vunpack.c.h.b16 %v689
        %v1412 = vunpack.c.l.b16 %v690
        %v1413 = vunpack.c.h.b16 %v690
        %v1414 = vunpack.c.l.b16 %v691
        %v1415 = vunpack.c.h.b16 %v691
        %v1416 = vunpack.c.l.b16 %v692
        %v1417 = vunpack.c.h.b16 %v692
        %v1418 = vunpack.c.l.b16 %v693
        %v1419 = vunpack.c.h.b16 %v693
        %v1420 = vunpack.c.l.b16 %v694
        %v1421 = vunpack.c.h.b16 %v694
        %v1422 = vunpack.c.l.b16 %v695
        %v1423 = vunpack.c.h.b16 %v695
        %v1424 = vunpack.c.l.b16 %v696
        %v1425 = vunpack.c.h.b16 %v696
        %v1426 = vunpack.c.l.b16 %v697
        %v1427 = vunpack.c.h.b16 %v697
        %v1428 = vunpack.c.l.b16 %v698
        %v1429 = vunpack.c.h.b16 %v698
        %v1430 = vunpack.c.l.b16 %v699
        %v1431 = vunpack.c.h.b16 %v699
        %v1432 = vunpack.c.l.b16 %v700
        %v1433 = vunpack.c.h.b16 %v700
        %v1434 = vunpack.c.l.b16 %v701
        %v1435 = vunpack.c.h.b16 %v701
        %v1436 = vunpack.c.l.b16 %v702
        %v1437 = vunpack.c.h.b16 %v702
        %v1438 = vunpack.c.l.b16 %v703
        %v1439 = vunpack.c.h.b16 %v703
        %v1440 = vunpack.c.l.b16 %v704
        %v1441 = vunpack.c.h.b16 %v704
        %v1442 = vunpack.c.l.b16 %v705
        %v1443 = vunpack.c.h.b16 %v705
        %v1444 = vunpack.c.l.b16 %v706
        %v1445 = vunpack.c.h.b16 %v706
        %v1446 = vunpack.c.l.b16 %v707
        %v1447 = vunpack.c.h.b16 %v707
        %v1448 = vunpack.c.l.b16 %v708
        %v1449 = vunpack.c.h.b16 %v708
        %v1450 = vunpack.c.l.b16 %v709
        %v1451 = vunpack.c.h.b16 %v709
        %v1452 = vunpack.c.l.b16 %v710
        %v1453 = vunpack.c.h.b16 %v710
        %v1454 = vunpack.c.l.b16 %v711
        %v1455 = vunpack.c.h.b16 %v711
        %v1456 = vunpack.c.l.b16 %v712
        %v1457 = vunpack.c.h.b16 %v712
        %v1458 = vunpack.c.l.b16 %v713
        %v1459 = vunpack.c.h.b16 %v713
        %v1460 = vunpack.c.l.b16 %v714
        %v1461 = vunpack.c.h.b16 %v714
        %v1462 = vunpack.c.l.b16 %v715
        %v1463 = vunpack.c.h.b16 %v715
        %v1464 = vunpack.c.l.b16 %v716
        %v1465 = vunpack.c.h.b16 %v716
        %v1466 = vunpack.c.l.b16 %v717
        %v1467 = vunpack.c.h.b16 %v717
        %v1468 = vunpack.c.l.b16 %v718
        %v1469 = vunpack.c.h.b16 %v718
        %v1470 = vunpack.c.l.b16 %v719
        %v1471 = vunpack.c.h.b16 %v719
        %v1472 = vunpack.c.l.b16 %v720
        %v1473 = vunpack.c.h.b16 %v720
        %v1474 = vunpack.c.l.b16 %v721
        %v1475 = vunpack.c.h.b16 %v721
        %v1476 = vunpack.c.l.b16 %v722
        %v1477 = vunpack.c.h.b16 %v722
        %v1478 = vunpack.c.l.b16 %v723
        %v1479 = vunpack.c.h.b16 %v723
        %v1480 = vunpack.c.l.b16 %v724
        %v1481 = vunpack.c.h.b16 %v724
        %v1482 = vunpack.c.l.b16 %v725
        %v1483 = vunpack.c.h.b16 %v725
        %v1484 = vunpack.c.l.b16 %v726
        %v1485 = vunpack.c.h.b16 %v726
        %v1486 = vunpack.c.l.b16 %v727
        %v1487 = vunpack.c.h.b16 %v727
        %v1488 = vunpack.c.l.b16 %v728
        %v1489 = vunpack.c.h.b16 %v728
        %v1490 = vunpack.c.l.b16 %v729
        %v1491 = vunpack.c.h.b16 %v729
        %v1492 = vunpack.c.l.b16 %v730
        %v1493 = vunpack.c.h.b16 %v730
        %v1494 = vunpack.c.l.b16 %v731
        %v1495 = vunpack.c.h.b16 %v731
        %v1496 = vunpack.c.l.b16 %v732
        %v1497 = vunpack.c.h.b16 %v732
        %v1498 = vunpack.c.l.b16 %v733
        %v1499 = vunpack.c.h.b16 %v733
        %v1500 = vunpack.c.l.b16 %v734
        %v1501 = vunpack.c.h.b16 %v734
        %v1502 = vunpack.c.l.b16 %v735
        %v1503 = vunpack.c.h.b16 %v735
        %v1504 = vunpack.c.l.b16 %v736
        %v1505 = vunpack.c.h.b16 %v736
        %v1506 = vunpack.c.l.b16 %v737
        %v1507 = vunpack.c.h.b16 %v737
        %v1508 = vunpack.c.l.b16 %v738
        %v1509 = vunpack.c.h.b16 %v738
        %v1510 = vunpack.c.l.b16 %v739
        %v1511 = vunpack.c.h.b16 %v739
        %v1512 = vunpack.c.l.b16 %v740
        %v1513 = vunpack.c.h.b16 %v740
        %v1514 = vunpack.c.l.b16 %v741
        %v1515 = vunpack.c.h.b16 %v741
        %v1516 = vunpack.c.l.b16 %v742
        %v1517 = vunpack.c.h.b16 %v742
        %v1518 = vunpack.c.l.b16 %v743
        %v1519 = vunpack.c.h.b16 %v743
        %v1520 = vunpack.c.l.b16 %v744
        %v1521 = vunpack.c.h.b16 %v744
        %v1522 = vunpack.c.l.b16 %v745
        %v1523 = vunpack.c.h.b16 %v745
        %v1524 = vunpack.c.l.b16 %v746
        %v1525 = vunpack.c.h.b16 %v746
        %v1526 = vunpack.c.l.b16 %v747
        %v1527 = vunpack.c.h.b16 %v747
        %v1528 = vunpack.c.l.b16 %v748
        %v1529 = vunpack.c.h.b16 %v748
        %v1530 = vunpack.c.l.b16 %v749
        %v1531 = vunpack.c.h.b16 %v749
        %v1532 = vunpack.c.l.b16 %v750
        %v1533 = vunpack.c.h.b16 %v750
        %v1534 = vunpack.c.l.b16 %v751
        %v1535 = vunpack.c.h.b16 %v751
        %v1536 = vunpack.c.l.b16 %v752
        %v1537 = vunpack.c.h.b16 %v752
        %v1538 = vunpack.c.l.b16 %v753
        %v1539 = vunpack.c.h.b16 %v753
        %v1540 = vunpack.c.l.b16 %v754
        %v1541 = vunpack.c.h.b16 %v754
        %v1542 = vunpack.c.l.b16 %v755
        %v1543 = vunpack.c.h.b16 %v755
        %v1544 = vunpack.c.l.b16 %v756
        %v1545 = vunpack.c.h.b16 %v756
        %v1546 = vunpack.c.l.b16 %v757
        %v1547 = vunpack.c.h.b16 %v757
        %v1548 = vunpack.c.l.b16 %v758
        %v1549 = vunpack.c.h.b16 %v758
        %v1550 = vunpack.c.l.b16 %v759
        %v1551 = vunpack.c.h.b16 %v759
        %v1552 = vunpack.c.l.b16 %v760
        %v1553 = vunpack.c.h.b16 %v760
        %v1554 = vunpack.c.l.b16 %v761
        %v1555 = vunpack.c.h.b16 %v761
        %v1556 = vunpack.c.l.b16 %v762
        %v1557 = vunpack.c.h.b16 %v762
        %v1558 = vunpack.c.l.b16 %v763
        %v1559 = vunpack.c.h.b16 %v763
        %v1560 = vunpack.c.l.b16 %v764
        %v1561 = vunpack.c.h.b16 %v764
        %v1562 = vunpack.c.l.b16 %v765
        %v1563 = vunpack.c.h.b16 %v765
        %v1564 = vunpack.c.l.b16 %v766
        %v1565 = vunpack.c.h.b16 %v766
        %v1566 = vunpack.c.l.b16 %v767
        %v1567 = vunpack.c.h.b16 %v767
        %v1568 = vunpack.c.l.b16 %v768
        %v1569 = vunpack.c.h.b16 %v768
        %v1570 = vunpack.c.l.b16 %v769
        %v1571 = vunpack.c.h.b16 %v769
        %v1572 = vunpack.c.l.b16 %v770
        %v1573 = vunpack.c.h.b16 %v770
        %v1574 = vunpack.c.l.b16 %v771
        %v1575 = vunpack.c.h.b16 %v771
        %v1576 = vunpack.c.l.b16 %v772
        %v1577 = vunpack.c.h.b16 %v772
        %v1578 = vunpack.c.l.b16 %v773
        %v1579 = vunpack.c.h.b16 %v773
        %v1580 = vunpack.c.l.b16 %v774
        %v1581 = vunpack.c.h.b16 %v774
        %v1582 = vunpack.c.l.b16 %v775
        %v1583 = vunpack.c.h.b16 %v775
        %v1584 = vunpack.c.l.b16 %v776
        %v1585 = vunpack.c.h.b16 %v776
        %v1586 = vunpack.c.l.b16 %v777
        %v1587 = vunpack.c.h.b16 %v777
        %v1588 = vunpack.c.l.b16 %v778
        %v1589 = vunpack.c.h.b16 %v778
        %v1590 = vunpack.c.l.b16 %v779
        %v1591 = vunpack.c.h.b16 %v779
        %v1592 = vunpack.c.l.b16 %v780
        %v1593 = vunpack.c.h.b16 %v780
        %v1594 = vunpack.c.l.b16 %v781
        %v1595 = vunpack.c.h.b16 %v781
        %v1596 = vunpack.c.l.b16 %v782
        %v1597 = vunpack.c.h.b16 %v782
        %v1598 = vunpack.c.l.b16 %v783
        %v1599 = vunpack.c.h.b16 %v783
        %v1600 = vunpack.c.l.b16 %v784
        %v1601 = vunpack.c.h.b16 %v784
        %v1602 = vunpack.c.l.b16 %v785
        %v1603 = vunpack.c.h.b16 %v785
        %v1604 = vunpack.c.l.b16 %v786
        %v1605 = vunpack.c.h.b16 %v786
        %v1606 = vunpack.c.l.b16 %v787
        %v1607 = vunpack.c.h.b16 %v787
        %v1608 = vunpack.c.l.b16 %v788
        %v1609 = vunpack.c.h.b16 %v788
        %v1610 = vunpack.c.l.b16 %v789
        %v1611 = vunpack.c.h.b16 %v789
        %v1612 = vunpack.c.l.b16 %v790
        %v1613 = vunpack.c.h.b16 %v790
        %v1614 = vunpack.c.l.b16 %v791
        %v1615 = vunpack.c.h.b16 %v791
        %v1616 = vunpack.c.l.b16 %v792
        %v1617 = vunpack.c.h.b16 %v792
        %v1618 = vunpack.c.l.b16 %v793
        %v1619 = vunpack.c.h.b16 %v793
        %v1620 = vunpack.c.l.b16 %v794
        %v1621 = vunpack.c.h.b16 %v794
        %v1622 = vunpack.c.l.b16 %v795
        %v1623 = vunpack.c.h.b16 %v795
        %v1624 = vunpack.c.l.b16 %v796
        %v1625 = vunpack.c.h.b16 %v796
        %v1626 = vunpack.c.l.b16 %v797
        %v1627 = vunpack.c.h.b16 %v797
        %v1628 = vunpack.c.l.b16 %v798
        %v1629 = vunpack.c.h.b16 %v798
        %v1630 = vunpack.c.l.b16 %v799
        %v1631 = vunpack.c.h.b16 %v799
        %v1632 = vunpack.c.l.b16 %v800
        %v1633 = vunpack.c.h.b16 %v800
        %v1634 = vunpack.c.l.b16 %v801
        %v1635 = vunpack.c.h.b16 %v801
        %v1636 = vunpack.c.l.b16 %v802
        %v1637 = vunpack.c.h.b16 %v802
        %v1638 = vunpack.c.l.b16 %v803
        %v1639 = vunpack.c.h.b16 %v803
        %v1640 = vunpack.c.l.b16 %v804
        %v1641 = vunpack.c.h.b16 %v804
        %v1642 = vunpack.c.l.b16 %v805
        %v1643 = vunpack.c.h.b16 %v805
        %v1644 = vunpack.c.l.b16 %v806
        %v1645 = vunpack.c.h.b16 %v806
        %v1646 = vunpack.c.l.b16 %v807
        %v1647 = vunpack.c.h.b16 %v807
        %v1648 = vunpack.c.l.b16 %v808
        %v1649 = vunpack.c.h.b16 %v808
        %v1650 = vunpack.c.l.b16 %v809
        %v1651 = vunpack.c.h.b16 %v809
        %v1652 = vunpack.c.l.b16 %v810
        %v1653 = vunpack.c.h.b16 %v810
        %v1654 = vunpack.c.l.b16 %v811
        %v1655 = vunpack.c.h.b16 %v811
        %v1656 = vunpack.c.l.b16 %v812
        %v1657 = vunpack.c.h.b16 %v812
        %v1658 = vunpack.c.l.b16 %v813
        %v1659 = vunpack.c.h.b16 %v813
        %v1660 = vunpack.c.l.b16 %v814
        %v1661 = vunpack.c.h.b16 %v814
        %v1662 = vunpack.c.l.b16 %v815
        %v1663 = vunpack.c.h.b16 %v815
        %v1664 = vunpack.c.l.b16 %v816
        %v1665 = vunpack.c.h.b16 %v816
        %v1666 = vunpack.c.l.b16 %v817
        %v1667 = vunpack.c.h.b16 %v817
        %v1668 = vunpack.c.l.b16 %v818
        %v1669 = vunpack.c.h.b16 %v818
        %v1670 = vunpack.c.l.b16 %v819
        %v1671 = vunpack.c.h.b16 %v819
        %v1672 = vunpack.c.l.b16 %v820
        %v1673 = vunpack.c.h.b16 %v820
        %v1674 = vunpack.c.l.b16 %v821
        %v1675 = vunpack.c.h.b16 %v821
        %v1676 = vunpack.c.l.b16 %v822
        %v1677 = vunpack.c.h.b16 %v822
        %v1678 = vunpack.c.l.b16 %v823
        %v1679 = vunpack.c.h.b16 %v823
        %v1680 = vunpack.c.l.b16 %v824
        %v1681 = vunpack.c.h.b16 %v824
        %v1682 = vunpack.c.l.b16 %v825
        %v1683 = vunpack.c.h.b16 %v825
        %v1684 = vunpack.c.l.b16 %v826
        %v1685 = vunpack.c.h.b16 %v826
        %v1686 = vunpack.c.l.b16 %v827
        %v1687 = vunpack.c.h.b16 %v827
        %v1688 = vunpack.c.l.b16 %v828
        %v1689 = vunpack.c.h.b16 %v828
        %v1690 = vunpack.c.l.b16 %v829
        %v1691 = vunpack.c.h.b16 %v829
        %v1692 = vunpack.c.l.b16 %v830
        %v1693 = vunpack.c.h.b16 %v830
        %v1694 = vunpack.c.l.b16 %v831
        %v1695 = vunpack.c.h.b16 %v831
        %v1696 = vunpack.c.l.b16 %v832
        %v1697 = vunpack.c.h.b16 %v832
        %v1698 = vunpack.c.l.b16 %v833
        %v1699 = vunpack.c.h.b16 %v833
        %v1700 = vunpack.c.l.b16 %v834
        %v1701 = vunpack.c.h.b16 %v834
        %v1702 = vunpack.c.l.b16 %v835
        %v1703 = vunpack.c.h.b16 %v835
        %v1704 = vunpack.c.l.b16 %v836
        %v1705 = vunpack.c.h.b16 %v836
        %v1706 = vunpack.c.l.b16 %v837
        %v1707 = vunpack.c.h.b16 %v837
        %v1708 = vunpack.c.l.b16 %v838
        %v1709 = vunpack.c.h.b16 %v838
        %v1710 = vunpack.c.l.b16 %v839
        %v1711 = vunpack.c.h.b16 %v839
        %v1712 = vunpack.c.l.b16 %v840
        %v1713 = vunpack.c.h.b16 %v840
        %v1714 = vunpack.c.l.b16 %v841
        %v1715 = vunpack.c.h.b16 %v841
        %v1716 = vunpack.c.l.b16 %v842
        %v1717 = vunpack.c.h.b16 %v842
        %v1718 = vunpack.c.l.b16 %v843
        %v1719 = vunpack.c.h.b16 %v843
        %v1720 = vunpack.c.l.b16 %v844
        %v1721 = vunpack.c.h.b16 %v844
        %v1722 = vunpack.c.l.b16 %v845
        %v1723 = vunpack.c.h.b16 %v845
        %v1724 = vpack.c.b16 %v1154, %v1148
        %v1725 = vpack.c.b16 %v1155, %v1149
        %v1726 = vpack.c.b16 %v1156, %v1150
        %v1727 = vpack.c.b16 %v1157, %v1151
        %v1728 = vpack.c.b16 %v1158, %v1152
        %v1729 = vpack.c.b16 %v1159, %v1153
        %v1730 = vpack.c.b16 %v1166, %v1160
        %v1731 = vpack.c.b16 %v1167, %v1161
        %v1732 = vpack.c.b16 %v1168, %v1162
        %v1733 = vpack.c.b16 %v1169, %v1163
        %v1734 = vpack.c.b16 %v1170, %v1164
        %v1735 = vpack.c.b16 %v1171, %v1165
        %v1736 = vpack.c.b16 %v1178, %v1172
        %v1737 = vpack.c.b16 %v1179, %v1173
        %v1738 = vpack.c.b16 %v1180, %v1174
        %v1739 = vpack.c.b16 %v1181, %v1175
        %v1740 = vpack.c.b16 %v1182, %v1176
        %v1741 = vpack.c.b16 %v1183, %v1177
        %v1742 = vpack.c.b16 %v1190, %v1184
        %v1743 = vpack.c.b16 %v1191, %v1185
        %v1744 = vpack.c.b16 %v1192, %v1186
        %v1745 = vpack.c.b16 %v1193, %v1187
        %v1746 = vpack.c.b16 %v1194, %v1188
        %v1747 = vpack.c.b16 %v1195, %v1189
        %v1748 = vpack.c.b16 %v1202, %v1196
        %v1749 = vpack.c.b16 %v1203, %v1197
        %v1750 = vpack.c.b16 %v1204, %v1198
        %v1751 = vpack.c.b16 %v1205, %v1199
        %v1752 = vpack.c.b16 %v1206, %v1200
        %v1753 = vpack.c.b16 %v1207, %v1201
        %v1754 = vpack.c.b16 %v1214, %v1208
        %v1755 = vpack.c.b16 %v1215, %v1209
        %v1756 = vpack.c.b16 %v1216, %v1210
        %v1757 = vpack.c.b16 %v1217, %v1211
        %v1758 = vpack.c.b16 %v1218, %v1212
        %v1759 = vpack.c.b16 %v1219, %v1213
        %v1760 = vpack.c.b16 %v1226, %v1220
        %v1761 = vpack.c.b16 %v1227, %v1221
        %v1762 = vpack.c.b16 %v1228, %v1222
        %v1763 = vpack.c.b16 %v1229, %v1223
        %v1764 = vpack.c.b16 %v1230, %v1224
        %v1765 = vpack.c.b16 %v1231, %v1225
        %v1766 = vpack.c.b16 %v1238, %v1232
        %v1767 = vpack.c.b16 %v1239, %v1233
        %v1768 = vpack.c.b16 %v1240, %v1234
        %v1769 = vpack.c.b16 %v1241, %v1235
        %v1770 = vpack.c.b16 %v1242, %v1236
        %v1771 = vpack.c.b16 %v1243, %v1237
        %v1772 = vpack.c.b16 %v1250, %v1244
        %v1773 = vpack.c.b16 %v1251, %v1245
        %v1774 = vpack.c.b16 %v1252, %v1246
        %v1775 = vpack.c.b16 %v1253, %v1247
        %v1776 = vpack.c.b16 %v1254, %v1248
        %v1777 = vpack.c.b16 %v1255, %v1249
        %v1778 = vpack.c.b16 %v1262, %v1256
        %v1779 = vpack.c.b16 %v1263, %v1257
        %v1780 = vpack.c.b16 %v1264, %v1258
        %v1781 = vpack.c.b16 %v1265, %v1259
        %v1782 = vpack.c.b16 %v1266, %v1260
        %v1783 = vpack.c.b16 %v1267, %v1261
        %v1784 = vpack.c.b16 %v1274, %v1268
        %v1785 = vpack.c.b16 %v1275, %v1269
        %v1786 = vpack.c.b16 %v1276, %v1270
        %v1787 = vpack.c.b16 %v1277, %v1271
        %v1788 = vpack.c.b16 %v1278, %v1272
        %v1789 = vpack.c.b16 %v1279, %v1273
        %v1790 = vpack.c.b16 %v1286, %v1280
        %v1791 = vpack.c.b16 %v1287, %v1281
        %v1792 = vpack.c.b16 %v1288, %v1282
        %v1793 = vpack.c.b16 %v1289, %v1283
        %v1794 = vpack.c.b16 %v1290, %v1284
        %v1795 = vpack.c.b16 %v1291, %v1285
        %v1796 = vpack.c.b16 %v1298, %v1292
        %v1797 = vpack.c.b16 %v1299, %v1293
        %v1798 = vpack.c.b16 %v1300, %v1294
        %v1799 = vpack.c.b16 %v1301, %v1295
        %v1800 = vpack.c.b16 %v1302, %v1296
        %v1801 = vpack.c.b16 %v1303, %v1297
        %v1802 = vpack.c.b16 %v1310, %v1304
        %v1803 = vpack.c.b16 %v1311, %v1305
        %v1804 = vpack.c.b16 %v1312, %v1306
        %v1805 = vpack.c.b16 %v1313, %v1307
        %v1806 = vpack.c.b16 %v1314, %v1308
        %v1807 = vpack.c.b16 %v1315, %v1309
        %v1808 = vpack.c.b16 %v1322, %v1316
        %v1809 = vpack.c.b16 %v1323, %v1317
        %v1810 = vpack.c.b16 %v1324, %v1318
        %v1811 = vpack.c.b16 %v1325, %v1319
        %v1812 = vpack.c.b16 %v1326, %v1320
        %v1813 = vpack.c.b16 %v1327, %v1321
        %v1814 = vpack.c.b16 %v1334, %v1328
        %v1815 = vpack.c.b16 %v1335, %v1329
        %v1816 = vpack.c.b16 %v1336, %v1330
        %v1817 = vpack.c.b16 %v1337, %v1331
        %v1818 = vpack.c.b16 %v1338, %v1332
        %v1819 = vpack.c.b16 %v1339, %v1333
        %v1820 = vpack.c.b16 %v1346, %v1340
        %v1821 = vpack.c.b16 %v1347, %v1341
        %v1822 = vpack.c.b16 %v1348, %v1342
        %v1823 = vpack.c.b16 %v1349, %v1343
        %v1824 = vpack.c.b16 %v1350, %v1344
        %v1825 = vpack.c.b16 %v1351, %v1345
        %v1826 = vpack.c.b16 %v1358, %v1352
        %v1827 = vpack.c.b16 %v1359, %v1353
        %v1828 = vpack.c.b16 %v1360, %v1354
        %v1829 = vpack.c.b16 %v1361, %v1355
        %v1830 = vpack.c.b16 %v1362, %v1356
        %v1831 = vpack.c.b16 %v1363, %v1357
        %v1832 = vpack.c.b16 %v1370, %v1364
        %v1833 = vpack.c.b16 %v1371, %v1365
        %v1834 = vpack.c.b16 %v1372, %v1366
        %v1835 = vpack.c.b16 %v1373, %v1367
        %v1836 = vpack.c.b16 %v1374, %v1368
        %v1837 = vpack.c.b16 %v1375, %v1369
        %v1838 = vpack.c.b16 %v1382, %v1376
        %v1839 = vpack.c.b16 %v1383, %v1377
        %v1840 = vpack.c.b16 %v1384, %v1378
        %v1841 = vpack.c.b16 %v1385, %v1379
        %v1842 = vpack.c.b16 %v1386, %v1380
        %v1843 = vpack.c.b16 %v1387, %v1381
        %v1844 = vpack.c.b16 %v1394, %v1388
        %v1845 = vpack.c.b16 %v1395, %v1389
        %v1846 = vpack.c.b16 %v1396, %v1390
        %v1847 = vpack.c.b16 %v1397, %v1391
        %v1848 = vpack.c.b16 %v1398, %v1392
        %v1849 = vpack.c.b16 %v1399, %v1393
        %v1850 = vpack.c.b16 %v1406, %v1400
        %v1851 = vpack.c.b16 %v1407, %v1401
        %v1852 = vpack.c.b16 %v1408, %v1402
        %v1853 = vpack.c.b16 %v1409, %v1403
        %v1854 = vpack.c.b16 %v1410, %v1404
        %v1855 = vpack.c.b16 %v1411, %v1405
        %v1856 = vpack.c.b16 %v1418, %v1412
        %v1857 = vpack.c.b16 %v1419, %v1413
        %v1858 = vpack.c.b16 %v1420, %v1414
        %v1859 = vpack.c.b16 %v1421, %v1415
        %v1860 = vpack.c.b16 %v1422, %v1416
        %v1861 = vpack.c.b16 %v1423, %v1417
        %v1862 = vpack.c.b16 %v1430, %v1424
        %v1863 = vpack.c.b16 %v1431, %v1425
        %v1864 = vpack.c.b16 %v1432, %v1426
        %v1865 = vpack.c.b16 %v1433, %v1427
        %v1866 = vpack.c.b16 %v1434, %v1428
        %v1867 = vpack.c.b16 %v1435, %v1429
        %v1868 = vpack.c.b16 %v1442, %v1436
        %v1869 = vpack.c.b16 %v1443, %v1437
        %v1870 = vpack.c.b16 %v1444, %v1438
        %v1871 = vpack.c.b16 %v1445, %v1439
        %v1872 = vpack.c.b16 %v1446, %v1440
        %v1873 = vpack.c.b16 %v1447, %v1441
        %v1874 = vpack.c.b16 %v1454, %v1448
        %v1875 = vpack.c.b16 %v1455, %v1449
        %v1876 = vpack.c.b16 %v1456, %v1450
        %v1877 = vpack.c.b16 %v1457, %v1451
        %v1878 = vpack.c.b16 %v1458, %v1452
        %v1879 = vpack.c.b16 %v1459, %v1453
        %v1880 = vpack.c.b16 %v1466, %v1460
        %v1881 = vpack.c.b16 %v1467, %v1461
        %v1882 = vpack.c.b16 %v1468, %v1462
        %v1883 = vpack.c.b16 %v1469, %v1463
        %v1884 = vpack.c.b16 %v1470, %v1464
        %v1885 = vpack.c.b16 %v1471, %v1465
        %v1886 = vpack.c.b16 %v1478, %v1472
        %v1887 = vpack.c.b16 %v1479, %v1473
        %v1888 = vpack.c.b16 %v1480, %v1474
        %v1889 = vpack.c.b16 %v1481, %v1475
        %v1890 = vpack.c.b16 %v1482, %v1476
        %v1891 = vpack.c.b16 %v1483, %v1477
        %v1892 = vpack.c.b16 %v1490, %v1484
        %v1893 = vpack.c.b16 %v1491, %v1485
        %v1894 = vpack.c.b16 %v1492, %v1486
        %v1895 = vpack.c.b16 %v1493, %v1487
        %v1896 = vpack.c.b16 %v1494, %v1488
        %v1897 = vpack.c.b16 %v1495, %v1489
        %v1898 = vpack.c.b16 %v1502, %v1496
        %v1899 = vpack.c.b16 %v1503, %v1497
        %v1900 = vpack.c.b16 %v1504, %v1498
        %v1901 = vpack.c.b16 %v1505, %v1499
        %v1902 = vpack.c.b16 %v1506, %v1500
        %v1903 = vpack.c.b16 %v1507, %v1501
        %v1904 = vpack.c.b16 %v1514, %v1508
        %v1905 = vpack.c.b16 %v1515, %v1509
        %v1906 = vpack.c.b16 %v1516, %v1510
        %v1907 = vpack.c.b16 %v1517, %v1511
        %v1908 = vpack.c.b16 %v1518, %v1512
        %v1909 = vpack.c.b16 %v1519, %v1513
        %v1910 = vpack.c.b16 %v1526, %v1520
        %v1911 = vpack.c.b16 %v1527, %v1521
        %v1912 = vpack.c.b16 %v1528, %v1522
        %v1913 = vpack.c.b16 %v1529, %v1523
        %v1914 = vpack.c.b16 %v1530, %v1524
        %v1915 = vpack.c.b16 %v1531, %v1525
        %v1916 = vpack.c.b16 %v1538, %v1532
        %v1917 = vpack.c.b16 %v1539, %v1533
        %v1918 = vpack.c.b16 %v1540, %v1534
        %v1919 = vpack.c.b16 %v1541, %v1535
        %v1920 = vpack.c.b16 %v1542, %v1536
        %v1921 = vpack.c.b16 %v1543, %v1537
        %v1922 = vpack.c.b16 %v1550, %v1544
        %v1923 = vpack.c.b16 %v1551, %v1545
        %v1924 = vpack.c.b16 %v1552, %v1546
        %v1925 = vpack.c.b16 %v1553, %v1547
        %v1926 = vpack.c.b16 %v1554, %v1548
        %v1927 = vpack.c.b16 %v1555, %v1549
        %v1928 = vpack.c.b16 %v1562, %v1556
        %v1929 = vpack.c.b16 %v1563, %v1557
        %v1930 = vpack.c.b16 %v1564, %v1558
        %v1931 = vpack.c.b16 %v1565, %v1559
        %v1932 = vpack.c.b16 %v1566, %v1560
        %v1933 = vpack.c.b16 %v1567, %v1561
        %v1934 = vpack.c.b16 %v1574, %v1568
        %v1935 = vpack.c.b16 %v1575, %v1569
        %v1936 = vpack.c.b16 %v1576, %v1570
        %v1937 = vpack.c.b16 %v1577, %v1571
        %v1938 = vpack.c.b16 %v1578, %v1572
        %v1939 = vpack.c.b16 %v1579, %v1573
        %v1940 = vpack.c.b16 %v1586, %v1580
        %v1941 = vpack.c.b16 %v1587, %v1581
        %v1942 = vpack.c.b16 %v1588, %v1582
        %v1943 = vpack.c.b16 %v1589, %v1583
        %v1944 = vpack.c.b16 %v1590, %v1584
        %v1945 = vpack.c.b16 %v1591, %v1585
        %v1946 = vpack.c.b16 %v1598, %v1592
        %v1947 = vpack.c.b16 %v1599, %v1593
        %v1948 = vpack.c.b16 %v1600, %v1594
        %v1949 = vpack.c.b16 %v1601, %v1595
        %v1950 = vpack.c.b16 %v1602, %v1596
        %v1951 = vpack.c.b16 %v1603, %v1597
        %v1952 = vpack.c.b16 %v1610, %v1604
        %v1953 = vpack.c.b16 %v1611, %v1605
        %v1954 = vpack.c.b16 %v1612, %v1606
        %v1955 = vpack.c.b16 %v1613, %v1607
        %v1956 = vpack.c.b16 %v1614, %v1608
        %v1957 = vpack.c.b16 %v1615, %v1609
        %v1958 = vpack.c.b16 %v1622, %v1616
        %v1959 = vpack.c.b16 %v1623, %v1617
        %v1960 = vpack.c.b16 %v1624, %v1618
        %v1961 = vpack.c.b16 %v1625, %v1619
        %v1962 = vpack.c.b16 %v1626, %v1620
        %v1963 = vpack.c.b16 %v1627, %v1621
        %v1964 = vpack.c.b16 %v1634, %v1628
        %v1965 = vpack.c.b16 %v1635, %v1629
        %v1966 = vpack.c.b16 %v1636, %v1630
        %v1967 = vpack.c.b16 %v1637, %v1631
        %v1968 = vpack.c.b16 %v1638, %v1632
        %v1969 = vpack.c.b16 %v1639, %v1633
        %v1970 = vpack.c.b16 %v1646, %v1640
        %v1971 = vpack.c.b16 %v1647, %v1641
        %v1972 = vpack.c.b16 %v1648, %v1642
        %v1973 = vpack.c.b16 %v1649, %v1643
        %v1974 = vpack.c.b16 %v1650, %v1644
        %v1975 = vpack.c.b16 %v1651, %v1645
        %v1976 = vpack.c.b16 %v1658, %v1652
        %v1977 = vpack.c.b16 %v1659, %v1653
        %v1978 = vpack.c.b16 %v1660, %v1654
        %v1979 = vpack.c.b16 %v1661, %v1655
        %v1980 = vpack.c.b16 %v1662, %v1656
        %v1981 = vpack.c.b16 %v1663, %v1657
        %v1982 = vpack.c.b16 %v1670, %v1664
        %v1983 = vpack.c.b16 %v1671, %v1665
        %v1984 = vpack.c.b16 %v1672, %v1666
        %v1985 = vpack.c.b16 %v1673, %v1667
        %v1986 = vpack.c.b16 %v1674, %v1668
        %v1987 = vpack.c.b16 %v1675, %v1669
        %v1988 = vpack.c.b16 %v1682, %v1676
        %v1989 = vpack.c.b16 %v1683, %v1677
        %v1990 = vpack.c.b16 %v1684, %v1678
        %v1991 = vpack.c.b16 %v1685, %v1679
        %v1992 = vpack.c.b16 %v1686, %v1680
        %v1993 = vpack.c.b16 %v1687, %v1681
        %v1994 = vpack.c.b16 %v1694, %v1688
        %v1995 = vpack.c.b16 %v1695, %v1689
        %v1996 = vpack.c.b16 %v1696, %v1690
        %v1997 = vpack.c.b16 %v1697, %v1691
        %v1998 = vpack.c.b16 %v1698, %v1692
        %v1999 = vpack.c.b16 %v1699, %v1693
        %v2000 = vpack.c.b16 %v1706, %v1700
        %v2001 = vpack.c.b16 %v1707, %v1701
        %v2002 = vpack.c.b16 %v1708, %v1702
        %v2003 = vpack.c.b16 %v1709, %v1703
        %v2004 = vpack.c.b16 %v1710, %v1704
        %v2005 = vpack.c.b16 %v1711, %v1705
        %v2006 = vpack.c.b16 %v1718, %v1712
        %v2007 = vpack.c.b16 %v1719, %v1713
        %v2008 = vpack.c.b16 %v1720, %v1714
        %v2009 = vpack.c.b16 %v1721, %v1715
        %v2010 = vpack.c.b16 %v1722, %v1716
        %v2011 = vpack.c.b16 %v1723, %v1717
        %2300 = vmatpush.bf16.msra.mxu0 %v1766
        %2301 = vmatpush.bf16.msra.mxu0 %v1760
        %2302 = vmatpush.bf16.msra.mxu0 %v1754
        %2303 = vmatpush.bf16.msra.mxu0 %v1748
        %2304 = vmatpush.bf16.msra.mxu0 %v1742
        %2305 = vmatpush.bf16.msra.mxu0 %v1736
        %2306 = vmatpush.bf16.msra.mxu0 %v1730
        %2307 = vmatpush.bf16.msra.mxu0 %v1724
        %2308 = vmatmul.bf16.gmra.mxu0 %v552
        %v2309 = vpop.f32.mrf.mxu0
        %v2310 = vadd.f32 %v848, %v2309
        %v2311 = vpop.f32.mrf.mxu0
        %2312 = vdwg.mxu0
        %2313 = vmatpush.bf16.msra.mxu0 %v1814
        %2314 = vmatpush.bf16.msra.mxu0 %v1808
        %2315 = vmatpush.bf16.msra.mxu0 %v1802
        %2316 = vmatpush.bf16.msra.mxu0 %v1796
        %2317 = vmatpush.bf16.msra.mxu0 %v1790
        %2318 = vmatpush.bf16.msra.mxu0 %v1784
        %2319 = vmatpush.bf16.msra.mxu0 %v1778
        %2320 = vmatpush.bf16.msra.mxu0 %v1772
        %2321 = vmatmul.bf16.gmra.mxu0 %v553
        %v2322 = vpop.f32.mrf.mxu0
        %v2323 = vadd.f32 %v2310, %v2322
        %v2324 = vpop.f32.mrf.mxu0
        %2325 = vdwg.mxu0
        %2326 = vmatpush.bf16.msra.mxu0 %v1862
        %2327 = vmatpush.bf16.msra.mxu0 %v1856
        %2328 = vmatpush.bf16.msra.mxu0 %v1850
        %2329 = vmatpush.bf16.msra.mxu0 %v1844
        %2330 = vmatpush.bf16.msra.mxu0 %v1838
        %2331 = vmatpush.bf16.msra.mxu0 %v1832
        %2332 = vmatpush.bf16.msra.mxu0 %v1826
        %2333 = vmatpush.bf16.msra.mxu0 %v1820
        %2334 = vmatmul.bf16.gmra.mxu0 %v554
        %v2335 = vpop.f32.mrf.mxu0
        %v2336 = vadd.f32 %v2323, %v2335
        %v2337 = vpop.f32.mrf.mxu0
        %2338 = vdwg.mxu0
        %2339 = vmatpush.bf16.msra.mxu0 %v1910
        %2340 = vmatpush.bf16.msra.mxu0 %v1904
        %2341 = vmatpush.bf16.msra.mxu0 %v1898
        %2342 = vmatpush.bf16.msra.mxu0 %v1892
        %2343 = vmatpush.bf16.msra.mxu0 %v1886
        %2344 = vmatpush.bf16.msra.mxu0 %v1880
        %2345 = vmatpush.bf16.msra.mxu0 %v1874
        %2346 = vmatpush.bf16.msra.mxu0 %v1868
        %2347 = vmatmul.bf16.gmra.mxu0 %v555
        %v2348 = vpop.f32.mrf.mxu0
        %v2349 = vadd.f32 %v2336, %v2348
        %v2350 = vpop.f32.mrf.mxu0
        %2351 = vdwg.mxu0
        %2352 = vmatpush.bf16.msra.mxu0 %v1958
        %2353 = vmatpush.bf16.msra.mxu0 %v1952
        %2354 = vmatpush.bf16.msra.mxu0 %v1946
        %2355 = vmatpush.bf16.msra.mxu0 %v1940
        %2356 = vmatpush.bf16.msra.mxu0 %v1934
        %2357 = vmatpush.bf16.msra.mxu0 %v1928
        %2358 = vmatpush.bf16.msra.mxu0 %v1922
        %2359 = vmatpush.bf16.msra.mxu0 %v1916
        %2360 = vmatmul.bf16.gmra.mxu0 %v556
        %v2361 = vpop.f32.mrf.mxu0
        %v2362 = vadd.f32 %v2349, %v2361
        %v2363 = vpop.f32.mrf.mxu0
        %2364 = vdwg.mxu0
        %2365 = vmatpush.bf16.msra.mxu0 %v2006
        %2366 = vmatpush.bf16.msra.mxu0 %v2000
        %2367 = vmatpush.bf16.msra.mxu0 %v1994
        %2368 = vmatpush.bf16.msra.mxu0 %v1988
        %2369 = vmatpush.bf16.msra.mxu0 %v1982
        %2370 = vmatpush.bf16.msra.mxu0 %v1976
        %2371 = vmatpush.bf16.msra.mxu0 %v1970
        %2372 = vmatpush.bf16.msra.mxu0 %v1964
        %2373 = vmatmul.bf16.gmra.mxu0 %v557
        %v2374 = vpop.f32.mrf.mxu0
        %v2375 = vadd.f32 %v2362, %v2374
        %v2376 = vpop.f32.mrf.mxu0
        %2377 = vdwg.mxu0
        %2378 = vmatpush.bf16.msra.mxu0 %v1767
        %2379 = vmatpush.bf16.msra.mxu0 %v1761
        %2380 = vmatpush.bf16.msra.mxu0 %v1755
        %2381 = vmatpush.bf16.msra.mxu0 %v1749
        %2382 = vmatpush.bf16.msra.mxu0 %v1743
        %2383 = vmatpush.bf16.msra.mxu0 %v1737
        %2384 = vmatpush.bf16.msra.mxu0 %v1731
        %2385 = vmatpush.bf16.msra.mxu0 %v1725
        %2386 = vmatmul.bf16.gmra.mxu0 %v552
        %v2387 = vpop.f32.mrf.mxu0
        %v2388 = vadd.f32 %v849, %v2387
        %v2389 = vpop.f32.mrf.mxu0
        %2390 = vdwg.mxu0
        %2391 = vmatpush.bf16.msra.mxu0 %v1815
        %2392 = vmatpush.bf16.msra.mxu0 %v1809
        %2393 = vmatpush.bf16.msra.mxu0 %v1803
        %2394 = vmatpush.bf16.msra.mxu0 %v1797
        %2395 = vmatpush.bf16.msra.mxu0 %v1791
        %2396 = vmatpush.bf16.msra.mxu0 %v1785
        %2397 = vmatpush.bf16.msra.mxu0 %v1779
        %2398 = vmatpush.bf16.msra.mxu0 %v1773
        %2399 = vmatmul.bf16.gmra.mxu0 %v553
        %v2400 = vpop.f32.mrf.mxu0
        %v2401 = vadd.f32 %v2388, %v2400
        %v2402 = vpop.f32.mrf.mxu0
        %2403 = vdwg.mxu0
        %2404 = vmatpush.bf16.msra.mxu0 %v1863
        %2405 = vmatpush.bf16.msra.mxu0 %v1857
        %2406 = vmatpush.bf16.msra.mxu0 %v1851
        %2407 = vmatpush.bf16.msra.mxu0 %v1845
        %2408 = vmatpush.bf16.msra.mxu0 %v1839
        %2409 = vmatpush.bf16.msra.mxu0 %v1833
        %2410 = vmatpush.bf16.msra.mxu0 %v1827
        %2411 = vmatpush.bf16.msra.mxu0 %v1821
        %2412 = vmatmul.bf16.gmra.mxu0 %v554
        %v2413 = vpop.f32.mrf.mxu0
        %v2414 = vadd.f32 %v2401, %v2413
        %v2415 = vpop.f32.mrf.mxu0
        %2416 = vdwg.mxu0
        %2417 = vmatpush.bf16.msra.mxu0 %v1911
        %2418 = vmatpush.bf16.msra.mxu0 %v1905
        %2419 = vmatpush.bf16.msra.mxu0 %v1899
        %2420 = vmatpush.bf16.msra.mxu0 %v1893
        %2421 = vmatpush.bf16.msra.mxu0 %v1887
        %2422 = vmatpush.bf16.msra.mxu0 %v1881
        %2423 = vmatpush.bf16.msra.mxu0 %v1875
        %2424 = vmatpush.bf16.msra.mxu0 %v1869
        %2425 = vmatmul.bf16.gmra.mxu0 %v555
        %v2426 = vpop.f32.mrf.mxu0
        %v2427 = vadd.f32 %v2414, %v2426
        %v2428 = vpop.f32.mrf.mxu0
        %2429 = vdwg.mxu0
        %2430 = vmatpush.bf16.msra.mxu0 %v1959
        %2431 = vmatpush.bf16.msra.mxu0 %v1953
        %2432 = vmatpush.bf16.msra.mxu0 %v1947
        %2433 = vmatpush.bf16.msra.mxu0 %v1941
        %2434 = vmatpush.bf16.msra.mxu0 %v1935
        %2435 = vmatpush.bf16.msra.mxu0 %v1929
        %2436 = vmatpush.bf16.msra.mxu0 %v1923
        %2437 = vmatpush.bf16.msra.mxu0 %v1917
        %2438 = vmatmul.bf16.gmra.mxu0 %v556
        %v2439 = vpop.f32.mrf.mxu0
        %v2440 = vadd.f32 %v2427, %v2439
        %v2441 = vpop.f32.mrf.mxu0
        %2442 = vdwg.mxu0
        %2443 = vmatpush.bf16.msra.mxu0 %v2007
        %2444 = vmatpush.bf16.msra.mxu0 %v2001
        %2445 = vmatpush.bf16.msra.mxu0 %v1995
        %2446 = vmatpush.bf16.msra.mxu0 %v1989
        %2447 = vmatpush.bf16.msra.mxu0 %v1983
        %2448 = vmatpush.bf16.msra.mxu0 %v1977
        %2449 = vmatpush.bf16.msra.mxu0 %v1971
        %2450 = vmatpush.bf16.msra.mxu0 %v1965
        %2451 = vmatmul.bf16.gmra.mxu0 %v557
        %v2452 = vpop.f32.mrf.mxu0
        %v2453 = vadd.f32 %v2440, %v2452
        %v2454 = vpop.f32.mrf.mxu0
        %2455 = vdwg.mxu0
        %2456 = vmatpush.bf16.msra.mxu0 %v1768
        %2457 = vmatpush.bf16.msra.mxu0 %v1762
        %2458 = vmatpush.bf16.msra.mxu0 %v1756
        %2459 = vmatpush.bf16.msra.mxu0 %v1750
        %2460 = vmatpush.bf16.msra.mxu0 %v1744
        %2461 = vmatpush.bf16.msra.mxu0 %v1738
        %2462 = vmatpush.bf16.msra.mxu0 %v1732
        %2463 = vmatpush.bf16.msra.mxu0 %v1726
        %2464 = vmatmul.bf16.gmra.mxu0 %v552
        %v2465 = vpop.f32.mrf.mxu0
        %v2466 = vadd.f32 %v850, %v2465
        %v2467 = vpop.f32.mrf.mxu0
        %2468 = vdwg.mxu0
        %2469 = vmatpush.bf16.msra.mxu0 %v1816
        %2470 = vmatpush.bf16.msra.mxu0 %v1810
        %2471 = vmatpush.bf16.msra.mxu0 %v1804
        %2472 = vmatpush.bf16.msra.mxu0 %v1798
        %2473 = vmatpush.bf16.msra.mxu0 %v1792
        %2474 = vmatpush.bf16.msra.mxu0 %v1786
        %2475 = vmatpush.bf16.msra.mxu0 %v1780
        %2476 = vmatpush.bf16.msra.mxu0 %v1774
        %2477 = vmatmul.bf16.gmra.mxu0 %v553
        %v2478 = vpop.f32.mrf.mxu0
        %v2479 = vadd.f32 %v2466, %v2478
        %v2480 = vpop.f32.mrf.mxu0
        %2481 = vdwg.mxu0
        %2482 = vmatpush.bf16.msra.mxu0 %v1864
        %2483 = vmatpush.bf16.msra.mxu0 %v1858
        %2484 = vmatpush.bf16.msra.mxu0 %v1852
        %2485 = vmatpush.bf16.msra.mxu0 %v1846
        %2486 = vmatpush.bf16.msra.mxu0 %v1840
        %2487 = vmatpush.bf16.msra.mxu0 %v1834
        %2488 = vmatpush.bf16.msra.mxu0 %v1828
        %2489 = vmatpush.bf16.msra.mxu0 %v1822
        %2490 = vmatmul.bf16.gmra.mxu0 %v554
        %v2491 = vpop.f32.mrf.mxu0
        %v2492 = vadd.f32 %v2479, %v2491
        %v2493 = vpop.f32.mrf.mxu0
        %2494 = vdwg.mxu0
        %2495 = vmatpush.bf16.msra.mxu0 %v1912
        %2496 = vmatpush.bf16.msra.mxu0 %v1906
        %2497 = vmatpush.bf16.msra.mxu0 %v1900
        %2498 = vmatpush.bf16.msra.mxu0 %v1894
        %2499 = vmatpush.bf16.msra.mxu0 %v1888
        %2500 = vmatpush.bf16.msra.mxu0 %v1882
        %2501 = vmatpush.bf16.msra.mxu0 %v1876
        %2502 = vmatpush.bf16.msra.mxu0 %v1870
        %2503 = vmatmul.bf16.gmra.mxu0 %v555
        %v2504 = vpop.f32.mrf.mxu0
        %v2505 = vadd.f32 %v2492, %v2504
        %v2506 = vpop.f32.mrf.mxu0
        %2507 = vdwg.mxu0
        %2508 = vmatpush.bf16.msra.mxu0 %v1960
        %2509 = vmatpush.bf16.msra.mxu0 %v1954
        %2510 = vmatpush.bf16.msra.mxu0 %v1948
        %2511 = vmatpush.bf16.msra.mxu0 %v1942
        %2512 = vmatpush.bf16.msra.mxu0 %v1936
        %2513 = vmatpush.bf16.msra.mxu0 %v1930
        %2514 = vmatpush.bf16.msra.mxu0 %v1924
        %2515 = vmatpush.bf16.msra.mxu0 %v1918
        %2516 = vmatmul.bf16.gmra.mxu0 %v556
        %v2517 = vpop.f32.mrf.mxu0
        %v2518 = vadd.f32 %v2505, %v2517
        %v2519 = vpop.f32.mrf.mxu0
        %2520 = vdwg.mxu0
        %2521 = vmatpush.bf16.msra.mxu0 %v2008
        %2522 = vmatpush.bf16.msra.mxu0 %v2002
        %2523 = vmatpush.bf16.msra.mxu0 %v1996
        %2524 = vmatpush.bf16.msra.mxu0 %v1990
        %2525 = vmatpush.bf16.msra.mxu0 %v1984
        %2526 = vmatpush.bf16.msra.mxu0 %v1978
        %2527 = vmatpush.bf16.msra.mxu0 %v1972
        %2528 = vmatpush.bf16.msra.mxu0 %v1966
        %2529 = vmatmul.bf16.gmra.mxu0 %v557
        %v2530 = vpop.f32.mrf.mxu0
        %v2531 = vadd.f32 %v2518, %v2530
        %v2532 = vpop.f32.mrf.mxu0
        %2533 = vdwg.mxu0
        %2534 = vmatpush.bf16.msra.mxu0 %v1769
        %2535 = vmatpush.bf16.msra.mxu0 %v1763
        %2536 = vmatpush.bf16.msra.mxu0 %v1757
        %2537 = vmatpush.bf16.msra.mxu0 %v1751
        %2538 = vmatpush.bf16.msra.mxu0 %v1745
        %2539 = vmatpush.bf16.msra.mxu0 %v1739
        %2540 = vmatpush.bf16.msra.mxu0 %v1733
        %2541 = vmatpush.bf16.msra.mxu0 %v1727
        %2542 = vmatmul.bf16.gmra.mxu0 %v552
        %v2543 = vpop.f32.mrf.mxu0
        %v2544 = vadd.f32 %v851, %v2543
        %v2545 = vpop.f32.mrf.mxu0
        %2546 = vdwg.mxu0
        %2547 = vmatpush.bf16.msra.mxu0 %v1817
        %2548 = vmatpush.bf16.msra.mxu0 %v1811
        %2549 = vmatpush.bf16.msra.mxu0 %v1805
        %2550 = vmatpush.bf16.msra.mxu0 %v1799
        %2551 = vmatpush.bf16.msra.mxu0 %v1793
        %2552 = vmatpush.bf16.msra.mxu0 %v1787
        %2553 = vmatpush.bf16.msra.mxu0 %v1781
        %2554 = vmatpush.bf16.msra.mxu0 %v1775
        %2555 = vmatmul.bf16.gmra.mxu0 %v553
        %v2556 = vpop.f32.mrf.mxu0
        %v2557 = vadd.f32 %v2544, %v2556
        %v2558 = vpop.f32.mrf.mxu0
        %2559 = vdwg.mxu0
        %2560 = vmatpush.bf16.msra.mxu0 %v1865
        %2561 = vmatpush.bf16.msra.mxu0 %v1859
        %2562 = vmatpush.bf16.msra.mxu0 %v1853
        %2563 = vmatpush.bf16.msra.mxu0 %v1847
        %2564 = vmatpush.bf16.msra.mxu0 %v1841
        %2565 = vmatpush.bf16.msra.mxu0 %v1835
        %2566 = vmatpush.bf16.msra.mxu0 %v1829
        %2567 = vmatpush.bf16.msra.mxu0 %v1823
        %2568 = vmatmul.bf16.gmra.mxu0 %v554
        %v2569 = vpop.f32.mrf.mxu0
        %v2570 = vadd.f32 %v2557, %v2569
        %v2571 = vpop.f32.mrf.mxu0
        %2572 = vdwg.mxu0
        %2573 = vmatpush.bf16.msra.mxu0 %v1913
        %2574 = vmatpush.bf16.msra.mxu0 %v1907
        %2575 = vmatpush.bf16.msra.mxu0 %v1901
        %2576 = vmatpush.bf16.msra.mxu0 %v1895
        %2577 = vmatpush.bf16.msra.mxu0 %v1889
        %2578 = vmatpush.bf16.msra.mxu0 %v1883
        %2579 = vmatpush.bf16.msra.mxu0 %v1877
        %2580 = vmatpush.bf16.msra.mxu0 %v1871
        %2581 = vmatmul.bf16.gmra.mxu0 %v555
        %v2582 = vpop.f32.mrf.mxu0
        %v2583 = vadd.f32 %v2570, %v2582
        %v2584 = vpop.f32.mrf.mxu0
        %2585 = vdwg.mxu0
        %2586 = vmatpush.bf16.msra.mxu0 %v1961
        %2587 = vmatpush.bf16.msra.mxu0 %v1955
        %2588 = vmatpush.bf16.msra.mxu0 %v1949
        %2589 = vmatpush.bf16.msra.mxu0 %v1943
        %2590 = vmatpush.bf16.msra.mxu0 %v1937
        %2591 = vmatpush.bf16.msra.mxu0 %v1931
        %2592 = vmatpush.bf16.msra.mxu0 %v1925
        %2593 = vmatpush.bf16.msra.mxu0 %v1919
        %2594 = vmatmul.bf16.gmra.mxu0 %v556
        %v2595 = vpop.f32.mrf.mxu0
        %v2596 = vadd.f32 %v2583, %v2595
        %v2597 = vpop.f32.mrf.mxu0
        %2598 = vdwg.mxu0
        %2599 = vmatpush.bf16.msra.mxu0 %v2009
        %2600 = vmatpush.bf16.msra.mxu0 %v2003
        %2601 = vmatpush.bf16.msra.mxu0 %v1997
        %2602 = vmatpush.bf16.msra.mxu0 %v1991
        %2603 = vmatpush.bf16.msra.mxu0 %v1985
        %2604 = vmatpush.bf16.msra.mxu0 %v1979
        %2605 = vmatpush.bf16.msra.mxu0 %v1973
        %2606 = vmatpush.bf16.msra.mxu0 %v1967
        %2607 = vmatmul.bf16.gmra.mxu0 %v557
        %v2608 = vpop.f32.mrf.mxu0
        %v2609 = vadd.f32 %v2596, %v2608
        %v2610 = vpop.f32.mrf.mxu0
        %2611 = vdwg.mxu0
        %2612 = vmatpush.bf16.msra.mxu0 %v1770
        %2613 = vmatpush.bf16.msra.mxu0 %v1764
        %2614 = vmatpush.bf16.msra.mxu0 %v1758
        %2615 = vmatpush.bf16.msra.mxu0 %v1752
        %2616 = vmatpush.bf16.msra.mxu0 %v1746
        %2617 = vmatpush.bf16.msra.mxu0 %v1740
        %2618 = vmatpush.bf16.msra.mxu0 %v1734
        %2619 = vmatpush.bf16.msra.mxu0 %v1728
        %2620 = vmatmul.bf16.gmra.mxu0 %v552
        %v2621 = vpop.f32.mrf.mxu0
        %v2622 = vadd.f32 %v852, %v2621
        %v2623 = vpop.f32.mrf.mxu0
        %2624 = vdwg.mxu0
        %2625 = vmatpush.bf16.msra.mxu0 %v1818
        %2626 = vmatpush.bf16.msra.mxu0 %v1812
        %2627 = vmatpush.bf16.msra.mxu0 %v1806
        %2628 = vmatpush.bf16.msra.mxu0 %v1800
        %2629 = vmatpush.bf16.msra.mxu0 %v1794
        %2630 = vmatpush.bf16.msra.mxu0 %v1788
        %2631 = vmatpush.bf16.msra.mxu0 %v1782
        %2632 = vmatpush.bf16.msra.mxu0 %v1776
        %2633 = vmatmul.bf16.gmra.mxu0 %v553
        %v2634 = vpop.f32.mrf.mxu0
        %v2635 = vadd.f32 %v2622, %v2634
        %v2636 = vpop.f32.mrf.mxu0
        %2637 = vdwg.mxu0
        %2638 = vmatpush.bf16.msra.mxu0 %v1866
        %2639 = vmatpush.bf16.msra.mxu0 %v1860
        %2640 = vmatpush.bf16.msra.mxu0 %v1854
        %2641 = vmatpush.bf16.msra.mxu0 %v1848
        %2642 = vmatpush.bf16.msra.mxu0 %v1842
        %2643 = vmatpush.bf16.msra.mxu0 %v1836
        %2644 = vmatpush.bf16.msra.mxu0 %v1830
        %2645 = vmatpush.bf16.msra.mxu0 %v1824
        %2646 = vmatmul.bf16.gmra.mxu0 %v554
        %v2647 = vpop.f32.mrf.mxu0
        %v2648 = vadd.f32 %v2635, %v2647
        %v2649 = vpop.f32.mrf.mxu0
        %2650 = vdwg.mxu0
        %2651 = vmatpush.bf16.msra.mxu0 %v1914
        %2652 = vmatpush.bf16.msra.mxu0 %v1908
        %2653 = vmatpush.bf16.msra.mxu0 %v1902
        %2654 = vmatpush.bf16.msra.mxu0 %v1896
        %2655 = vmatpush.bf16.msra.mxu0 %v1890
        %2656 = vmatpush.bf16.msra.mxu0 %v1884
        %2657 = vmatpush.bf16.msra.mxu0 %v1878
        %2658 = vmatpush.bf16.msra.mxu0 %v1872
        %2659 = vmatmul.bf16.gmra.mxu0 %v555
        %v2660 = vpop.f32.mrf.mxu0
        %v2661 = vadd.f32 %v2648, %v2660
        %v2662 = vpop.f32.mrf.mxu0
        %2663 = vdwg.mxu0
        %2664 = vmatpush.bf16.msra.mxu0 %v1962
        %2665 = vmatpush.bf16.msra.mxu0 %v1956
        %2666 = vmatpush.bf16.msra.mxu0 %v1950
        %2667 = vmatpush.bf16.msra.mxu0 %v1944
        %2668 = vmatpush.bf16.msra.mxu0 %v1938
        %2669 = vmatpush.bf16.msra.mxu0 %v1932
        %2670 = vmatpush.bf16.msra.mxu0 %v1926
        %2671 = vmatpush.bf16.msra.mxu0 %v1920
        %2672 = vmatmul.bf16.gmra.mxu0 %v556
        %v2673 = vpop.f32.mrf.mxu0
        %v2674 = vadd.f32 %v2661, %v2673
        %v2675 = vpop.f32.mrf.mxu0
        %2676 = vdwg.mxu0
        %2677 = vmatpush.bf16.msra.mxu0 %v2010
        %2678 = vmatpush.bf16.msra.mxu0 %v2004
        %2679 = vmatpush.bf16.msra.mxu0 %v1998
        %2680 = vmatpush.bf16.msra.mxu0 %v1992
        %2681 = vmatpush.bf16.msra.mxu0 %v1986
        %2682 = vmatpush.bf16.msra.mxu0 %v1980
        %2683 = vmatpush.bf16.msra.mxu0 %v1974
        %2684 = vmatpush.bf16.msra.mxu0 %v1968
        %2685 = vmatmul.bf16.gmra.mxu0 %v557
        %v2686 = vpop.f32.mrf.mxu0
        %v2687 = vadd.f32 %v2674, %v2686
        %v2688 = vpop.f32.mrf.mxu0
        %2689 = vdwg.mxu0
        %2690 = vmatpush.bf16.msra.mxu0 %v1771
        %2691 = vmatpush.bf16.msra.mxu0 %v1765
        %2692 = vmatpush.bf16.msra.mxu0 %v1759
        %2693 = vmatpush.bf16.msra.mxu0 %v1753
        %2694 = vmatpush.bf16.msra.mxu0 %v1747
        %2695 = vmatpush.bf16.msra.mxu0 %v1741
        %2696 = vmatpush.bf16.msra.mxu0 %v1735
        %2697 = vmatpush.bf16.msra.mxu0 %v1729
        %2698 = vmatmul.bf16.gmra.mxu0 %v552
        %v2699 = vpop.f32.mrf.mxu0
        %v2700 = vadd.f32 %v853, %v2699
        %v2701 = vpop.f32.mrf.mxu0
        %2702 = vdwg.mxu0
        %2703 = vmatpush.bf16.msra.mxu0 %v1819
        %2704 = vmatpush.bf16.msra.mxu0 %v1813
        %2705 = vmatpush.bf16.msra.mxu0 %v1807
        %2706 = vmatpush.bf16.msra.mxu0 %v1801
        %2707 = vmatpush.bf16.msra.mxu0 %v1795
        %2708 = vmatpush.bf16.msra.mxu0 %v1789
        %2709 = vmatpush.bf16.msra.mxu0 %v1783
        %2710 = vmatpush.bf16.msra.mxu0 %v1777
        %2711 = vmatmul.bf16.gmra.mxu0 %v553
        %v2712 = vpop.f32.mrf.mxu0
        %v2713 = vadd.f32 %v2700, %v2712
        %v2714 = vpop.f32.mrf.mxu0
        %2715 = vdwg.mxu0
        %2716 = vmatpush.bf16.msra.mxu0 %v1867
        %2717 = vmatpush.bf16.msra.mxu0 %v1861
        %2718 = vmatpush.bf16.msra.mxu0 %v1855
        %2719 = vmatpush.bf16.msra.mxu0 %v1849
        %2720 = vmatpush.bf16.msra.mxu0 %v1843
        %2721 = vmatpush.bf16.msra.mxu0 %v1837
        %2722 = vmatpush.bf16.msra.mxu0 %v1831
        %2723 = vmatpush.bf16.msra.mxu0 %v1825
        %2724 = vmatmul.bf16.gmra.mxu0 %v554
        %v2725 = vpop.f32.mrf.mxu0
        %v2726 = vadd.f32 %v2713, %v2725
        %v2727 = vpop.f32.mrf.mxu0
        %2728 = vdwg.mxu0
        %2729 = vmatpush.bf16.msra.mxu0 %v1915
        %2730 = vmatpush.bf16.msra.mxu0 %v1909
        %2731 = vmatpush.bf16.msra.mxu0 %v1903
        %2732 = vmatpush.bf16.msra.mxu0 %v1897
        %2733 = vmatpush.bf16.msra.mxu0 %v1891
        %2734 = vmatpush.bf16.msra.mxu0 %v1885
        %2735 = vmatpush.bf16.msra.mxu0 %v1879
        %2736 = vmatpush.bf16.msra.mxu0 %v1873
        %2737 = vmatmul.bf16.gmra.mxu0 %v555
        %v2738 = vpop.f32.mrf.mxu0
        %v2739 = vadd.f32 %v2726, %v2738
        %v2740 = vpop.f32.mrf.mxu0
        %2741 = vdwg.mxu0
        %2742 = vmatpush.bf16.msra.mxu0 %v1963
        %2743 = vmatpush.bf16.msra.mxu0 %v1957
        %2744 = vmatpush.bf16.msra.mxu0 %v1951
        %2745 = vmatpush.bf16.msra.mxu0 %v1945
        %2746 = vmatpush.bf16.msra.mxu0 %v1939
        %2747 = vmatpush.bf16.msra.mxu0 %v1933
        %2748 = vmatpush.bf16.msra.mxu0 %v1927
        %2749 = vmatpush.bf16.msra.mxu0 %v1921
        %2750 = vmatmul.bf16.gmra.mxu0 %v556
        %v2751 = vpop.f32.mrf.mxu0
        %v2752 = vadd.f32 %v2739, %v2751
        %v2753 = vpop.f32.mrf.mxu0
        %2754 = vdwg.mxu0
        %2755 = vmatpush.bf16.msra.mxu0 %v2011
        %2756 = vmatpush.bf16.msra.mxu0 %v2005
        %2757 = vmatpush.bf16.msra.mxu0 %v1999
        %2758 = vmatpush.bf16.msra.mxu0 %v1993
        %2759 = vmatpush.bf16.msra.mxu0 %v1987
        %2760 = vmatpush.bf16.msra.mxu0 %v1981
        %2761 = vmatpush.bf16.msra.mxu0 %v1975
        %2762 = vmatpush.bf16.msra.mxu0 %v1969
        %2763 = vmatmul.bf16.gmra.mxu0 %v557
        %v2764 = vpop.f32.mrf.mxu0
        %v2765 = vadd.f32 %v2752, %v2764
        %v2766 = vpop.f32.mrf.mxu0
        %2767 = vdwg.mxu0
        %v2768 = vpack.c.bf16 %v2375, %v2375
        %v2769 = vpack.c.bf16 %v2453, %v2453
        %v2770 = vld [vmem:[#allocation5] sm:$0xff]
        %v2771 = vld [vmem:[#allocation7] sm:$0xff]
        %v2773 = vunpack.c.l.b16 %v2770
        %v2774 = vunpack.c.h.b16 %v2770
        %v2775 = vpack.c.b16 %v2773, %v2773
        %v2776 = vpack.c.b16 %v2774, %v2774
        %2779 = vmatpush.bf16.xpose.msra.mxu0 0
        %2780 = vmatpush.bf16.xpose.msra.mxu0 0
        %2781 = vmatpush.bf16.xpose.msra.mxu0 0
        %2782 = vmatpush.bf16.xpose.msra.mxu0 0
        %2783 = vmatpush.bf16.xpose.msra.mxu0 0
        %2784 = vmatpush.bf16.xpose.msra.mxu0 0
        %2785 = vmatpush.bf16.xpose.msra.mxu0 0
        %2786 = vmatpush.bf16.xpose.msra.mxu0 %v2775
        %2787 = vmatmul.bf16.gmra.mxu0 %v2768
        %v2788 = vpop.f32.mrf.mxu0
        %v2789 = vadd.f32 0.0, %v2788
        %v2790 = vpop.f32.mrf.mxu0
        %2791 = vdwg.mxu0
        %2792 = vmatpush.bf16.xpose.msra.mxu0 0
        %2793 = vmatpush.bf16.xpose.msra.mxu0 0
        %2794 = vmatpush.bf16.xpose.msra.mxu0 0
        %2795 = vmatpush.bf16.xpose.msra.mxu0 0
        %2796 = vmatpush.bf16.xpose.msra.mxu0 0
        %2797 = vmatpush.bf16.xpose.msra.mxu0 0
        %2798 = vmatpush.bf16.xpose.msra.mxu0 0
        %2799 = vmatpush.bf16.xpose.msra.mxu0 %v2776
        %2800 = vmatmul.bf16.gmra.mxu0 %v2769
        %v2801 = vpop.f32.mrf.mxu0
        %v2802 = vadd.f32 %v2789, %v2801
        %v2803 = vpop.f32.mrf.mxu0
        %2804 = vdwg.mxu0
        %vm2805 = vcmask 64512
        %v2806 = vsel %vm2805, %v2802, -inf
        %2807 = vmax.xlane.f32.xlu0 %v2806
        %v2808 = vpop.xlane.xlu0 %2807
        %v2809 = vsub.f32 %v2802, %v2808
        %v2810 = vmul.f32 %v2809, 1.442695
        %v2811 = vpow.pop %v2810
        %v2812 = vsel %vm2805, %v2811, 0.0
        %2813 = vadd.xlane.f32.xlu0 %v2812
        %v2814 = vpop.xlane.xlu0 %2813
        %v2815 = vrcp.pop %v2814
        %v2816 = vmul.f32 %v2811, %v2815
        %2817 = vst.msk [vmem:[%s544] sm:$0xff] %vm2805, %v2816
        %v2818 = vpack.c.bf16 %v2816, %v2816
        %v2820 = vunpack.c.l.b16 %v2771
        %v2821 = vunpack.c.h.b16 %v2771
        %v2822 = vpack.c.b16 %v2820, %v2820
        %v2823 = vpack.c.b16 %v2821, %v2821
        %v2825 = vsel %vm2805, %v2818, 0
        %vm2827 = vcmask 1043456
        %v2829 = vsel %vm2827, %v2822, 0
        %v2832 = vsel %vm2827, %v2823, 0
        %2834 = vmatpush.bf16.msra.mxu0 0
        %2835 = vmatpush.bf16.msra.mxu0 0
        %2836 = vmatpush.bf16.msra.mxu0 0
        %2837 = vmatpush.bf16.msra.mxu0 0
        %2838 = vmatpush.bf16.msra.mxu0 0
        %2839 = vmatpush.bf16.msra.mxu0 0
        %2840 = vmatpush.bf16.msra.mxu0 0
        %2841 = vmatpush.bf16.msra.mxu0 %v2829
        %2842 = vmatmul.bf16.gmra.mxu0 %v2825
        %v2843 = vpop.f32.mrf.mxu0
        %v2844 = vadd.f32 0.0, %v2843
        %v2845 = vpop.f32.mrf.mxu0
        %2846 = vdwg.mxu0
        %2847 = vmatpush.bf16.msra.mxu0 0
        %2848 = vmatpush.bf16.msra.mxu0 0
        %2849 = vmatpush.bf16.msra.mxu0 0
        %2850 = vmatpush.bf16.msra.mxu0 0
        %2851 = vmatpush.bf16.msra.mxu0 0
        %2852 = vmatpush.bf16.msra.mxu0 0
        %2853 = vmatpush.bf16.msra.mxu0 0
        %2854 = vmatpush.bf16.msra.mxu0 %v2832
        %2855 = vmatmul.bf16.gmra.mxu0 %v2825
        %v2856 = vpop.f32.mrf.mxu0
        %v2857 = vadd.f32 0.0, %v2856
        %v2858 = vpop.f32.mrf.mxu0
        %2859 = vdwg.mxu0
        %v2860 = vpack.c.bf16 %v2844, %v2844
        %v2861 = vpack.c.bf16 %v2857, %v2857
        %v2862 = vld [vmem:[#allocation11] sm:$0xff]
        %v2863 = vld [vmem:[#allocation11 + $0x8] sm:$0xff]
        %v2864 = vld [vmem:[#allocation11 + $0x10] sm:$0xff]
        %v2865 = vld [vmem:[#allocation11 + $0x18] sm:$0xff]
        %v2866 = vld [vmem:[#allocation11 + $0x20] sm:$0xff]
        %v2867 = vld [vmem:[#allocation11 + $0x28] sm:$0xff]
        %v2868 = vld [vmem:[#allocation11 + $0x30] sm:$0xff]
        %v2869 = vld [vmem:[#allocation11 + $0x38] sm:$0xff]
        %v2870 = vld [vmem:[#allocation11 + $0x40] sm:$0xff]
        %v2871 = vld [vmem:[#allocation11 + $0x48] sm:$0xff]
        %v2872 = vld [vmem:[#allocation11 + $0x50] sm:$0xff]
        %v2873 = vld [vmem:[#allocation11 + $0x58] sm:$0xff]
        %v2874 = vld [vmem:[#allocation11 + $0x60] sm:$0xff]
        %v2875 = vld [vmem:[#allocation11 + $0x68] sm:$0xff]
        %v2876 = vld [vmem:[#allocation11 + $0x70] sm:$0xff]
        %v2877 = vld [vmem:[#allocation11 + $0x78] sm:$0xff]
        %v2878 = vld [vmem:[#allocation11 + $0x80] sm:$0xff]
        %v2879 = vld [vmem:[#allocation11 + $0x88] sm:$0xff]
        %v2880 = vld [vmem:[#allocation11 + $0x90] sm:$0xff]
        %v2881 = vld [vmem:[#allocation11 + $0x98] sm:$0xff]
        %v2882 = vld [vmem:[#allocation11 + $0xa0] sm:$0xff]
        %v2883 = vld [vmem:[#allocation11 + $0xa8] sm:$0xff]
        %v2884 = vld [vmem:[#allocation11 + $0xb0] sm:$0xff]
        %v2885 = vld [vmem:[#allocation11 + $0xb8] sm:$0xff]
        %v2886 = vld [vmem:[#allocation11 + $0xc0] sm:$0xff]
        %v2887 = vld [vmem:[#allocation11 + $0xc8] sm:$0xff]
        %v2888 = vld [vmem:[#allocation11 + $0xd0] sm:$0xff]
        %v2889 = vld [vmem:[#allocation11 + $0xd8] sm:$0xff]
        %v2890 = vld [vmem:[#allocation11 + $0xe0] sm:$0xff]
        %v2891 = vld [vmem:[#allocation11 + $0xe8] sm:$0xff]
        %v2892 = vld [vmem:[#allocation11 + $0xf0] sm:$0xff]
        %v2893 = vld [vmem:[#allocation11 + $0xf8] sm:$0xff]
        %v2894 = vld [vmem:[#allocation11 + $0x100] sm:$0xff]
        %v2895 = vld [vmem:[#allocation11 + $0x108] sm:$0xff]
        %v2896 = vld [vmem:[#allocation11 + $0x110] sm:$0xff]
        %v2897 = vld [vmem:[#allocation11 + $0x118] sm:$0xff]
        %v2898 = vld [vmem:[#allocation11 + $0x120] sm:$0xff]
        %v2899 = vld [vmem:[#allocation11 + $0x128] sm:$0xff]
        %v2900 = vld [vmem:[#allocation11 + $0x130] sm:$0xff]
        %v2901 = vld [vmem:[#allocation11 + $0x138] sm:$0xff]
        %v2902 = vld [vmem:[#allocation11 + $0x140] sm:$0xff]
        %v2903 = vld [vmem:[#allocation11 + $0x148] sm:$0xff]
        %v2904 = vld [vmem:[#allocation11 + $0x150] sm:$0xff]
        %v2905 = vld [vmem:[#allocation11 + $0x158] sm:$0xff]
        %v2906 = vld [vmem:[#allocation11 + $0x160] sm:$0xff]
        %v2907 = vld [vmem:[#allocation11 + $0x168] sm:$0xff]
        %v2908 = vld [vmem:[#allocation11 + $0x170] sm:$0xff]
        %v2909 = vld [vmem:[#allocation11 + $0x178] sm:$0xff]
        %v2910 = vld [vmem:[#allocation11 + $0x180] sm:$0xff]
        %v2911 = vld [vmem:[#allocation11 + $0x188] sm:$0xff]
        %v2912 = vld [vmem:[#allocation11 + $0x190] sm:$0xff]
        %v2913 = vld [vmem:[#allocation11 + $0x198] sm:$0xff]
        %v2914 = vld [vmem:[#allocation11 + $0x1a0] sm:$0xff]
        %v2915 = vld [vmem:[#allocation11 + $0x1a8] sm:$0xff]
        %v2916 = vld [vmem:[#allocation11 + $0x1b0] sm:$0xff]
        %v2917 = vld [vmem:[#allocation11 + $0x1b8] sm:$0xff]
        %v2918 = vld [vmem:[#allocation11 + $0x1c0] sm:$0xff]
        %v2919 = vld [vmem:[#allocation11 + $0x1c8] sm:$0xff]
        %v2920 = vld [vmem:[#allocation11 + $0x1d0] sm:$0xff]
        %v2921 = vld [vmem:[#allocation11 + $0x1d8] sm:$0xff]
        %v2922 = vld [vmem:[#allocation11 + $0x1e0] sm:$0xff]
        %v2923 = vld [vmem:[#allocation11 + $0x1e8] sm:$0xff]
        %v2924 = vld [vmem:[#allocation11 + $0x1f0] sm:$0xff]
        %v2925 = vld [vmem:[#allocation11 + $0x1f8] sm:$0xff]
        %v2926 = vld [vmem:[#allocation11 + $0x200] sm:$0xff]
        %v2927 = vld [vmem:[#allocation11 + $0x208] sm:$0xff]
        %v2928 = vld [vmem:[#allocation11 + $0x210] sm:$0xff]
        %v2929 = vld [vmem:[#allocation11 + $0x218] sm:$0xff]
        %v2930 = vld [vmem:[#allocation11 + $0x220] sm:$0xff]
        %v2931 = vld [vmem:[#allocation11 + $0x228] sm:$0xff]
        %v2932 = vld [vmem:[#allocation11 + $0x230] sm:$0xff]
        %v2933 = vld [vmem:[#allocation11 + $0x238] sm:$0xff]
        %v2934 = vld [vmem:[#allocation11 + $0x240] sm:$0xff]
        %v2935 = vld [vmem:[#allocation11 + $0x248] sm:$0xff]
        %v2936 = vld [vmem:[#allocation11 + $0x250] sm:$0xff]
        %v2937 = vld [vmem:[#allocation11 + $0x258] sm:$0xff]
        %v2938 = vld [vmem:[#allocation11 + $0x260] sm:$0xff]
        %v2939 = vld [vmem:[#allocation11 + $0x268] sm:$0xff]
        %v2940 = vld [vmem:[#allocation11 + $0x270] sm:$0xff]
        %v2941 = vld [vmem:[#allocation11 + $0x278] sm:$0xff]
        %v2942 = vld [vmem:[#allocation11 + $0x280] sm:$0xff]
        %v2943 = vld [vmem:[#allocation11 + $0x288] sm:$0xff]
        %v2944 = vld [vmem:[#allocation11 + $0x290] sm:$0xff]
        %v2945 = vld [vmem:[#allocation11 + $0x298] sm:$0xff]
        %v2946 = vld [vmem:[#allocation11 + $0x2a0] sm:$0xff]
        %v2947 = vld [vmem:[#allocation11 + $0x2a8] sm:$0xff]
        %v2948 = vld [vmem:[#allocation11 + $0x2b0] sm:$0xff]
        %v2949 = vld [vmem:[#allocation11 + $0x2b8] sm:$0xff]
        %v2950 = vld [vmem:[#allocation11 + $0x2c0] sm:$0xff]
        %v2951 = vld [vmem:[#allocation11 + $0x2c8] sm:$0xff]
        %v2952 = vld [vmem:[#allocation11 + $0x2d0] sm:$0xff]
        %v2953 = vld [vmem:[#allocation11 + $0x2d8] sm:$0xff]
        %v2954 = vld [vmem:[#allocation11 + $0x2e0] sm:$0xff]
        %v2955 = vld [vmem:[#allocation11 + $0x2e8] sm:$0xff]
        %v2956 = vld [vmem:[#allocation11 + $0x2f0] sm:$0xff]
        %v2957 = vld [vmem:[#allocation11 + $0x2f8] sm:$0xff]
        %v2958 = vpack.c.bf16 %v2531, %v2531
        %v2959 = vpack.c.bf16 %v2609, %v2609
        %v2960 = vld [vmem:[#allocation5 + $0x8] sm:$0xff]
        %v2961 = vld [vmem:[#allocation7 + $0x8] sm:$0xff]
        %v2963 = vunpack.c.l.b16 %v2960
        %v2964 = vunpack.c.h.b16 %v2960
        %v2965 = vpack.c.b16 %v2963, %v2963
        %v2966 = vpack.c.b16 %v2964, %v2964
        %2969 = vmatpush.bf16.xpose.msra.mxu0 0
        %2970 = vmatpush.bf16.xpose.msra.mxu0 0
        %2971 = vmatpush.bf16.xpose.msra.mxu0 0
        %2972 = vmatpush.bf16.xpose.msra.mxu0 0
        %2973 = vmatpush.bf16.xpose.msra.mxu0 0
        %2974 = vmatpush.bf16.xpose.msra.mxu0 0
        %2975 = vmatpush.bf16.xpose.msra.mxu0 0
        %2976 = vmatpush.bf16.xpose.msra.mxu0 %v2965
        %2977 = vmatmul.bf16.gmra.mxu0 %v2958
        %v2978 = vpop.f32.mrf.mxu0
        %v2979 = vadd.f32 0.0, %v2978
        %v2980 = vpop.f32.mrf.mxu0
        %2981 = vdwg.mxu0
        %2982 = vmatpush.bf16.xpose.msra.mxu0 0
        %2983 = vmatpush.bf16.xpose.msra.mxu0 0
        %2984 = vmatpush.bf16.xpose.msra.mxu0 0
        %2985 = vmatpush.bf16.xpose.msra.mxu0 0
        %2986 = vmatpush.bf16.xpose.msra.mxu0 0
        %2987 = vmatpush.bf16.xpose.msra.mxu0 0
        %2988 = vmatpush.bf16.xpose.msra.mxu0 0
        %2989 = vmatpush.bf16.xpose.msra.mxu0 %v2966
        %2990 = vmatmul.bf16.gmra.mxu0 %v2959
        %v2991 = vpop.f32.mrf.mxu0
        %v2992 = vadd.f32 %v2979, %v2991
        %v2993 = vpop.f32.mrf.mxu0
        %2994 = vdwg.mxu0
        %v2995 = vsel %vm2805, %v2992, -inf
        %2996 = vmax.xlane.f32.xlu0 %v2995
        %v2997 = vpop.xlane.xlu0 %2996
        %v2998 = vsub.f32 %v2992, %v2997
        %v2999 = vmul.f32 %v2998, 1.442695
        %v3000 = vpow.pop %v2999
        %v3001 = vsel %vm2805, %v3000, 0.0
        %3002 = vadd.xlane.f32.xlu0 %v3001
        %v3003 = vpop.xlane.xlu0 %3002
        %v3004 = vrcp.pop %v3003
        %v3005 = vmul.f32 %v3000, %v3004
        %s3006 = scalar_lea.vmem %s544, 8 [#allocation18]
        %3007 = vst.msk [vmem:[%s3006] sm:$0xff] %vm2805, %v3005
        %v3008 = vpack.c.bf16 %v3005, %v3005
        %v3010 = vunpack.c.l.b16 %v2961
        %v3011 = vunpack.c.h.b16 %v2961
        %v3012 = vpack.c.b16 %v3010, %v3010
        %v3013 = vpack.c.b16 %v3011, %v3011
        %v3015 = vsel %vm2805, %v3008, 0
        %v3018 = vsel %vm2827, %v3012, 0
        %v3021 = vsel %vm2827, %v3013, 0
        %3023 = vmatpush.bf16.msra.mxu0 0
        %3024 = vmatpush.bf16.msra.mxu0 0
        %3025 = vmatpush.bf16.msra.mxu0 0
        %3026 = vmatpush.bf16.msra.mxu0 0
        %3027 = vmatpush.bf16.msra.mxu0 0
        %3028 = vmatpush.bf16.msra.mxu0 0
        %3029 = vmatpush.bf16.msra.mxu0 0
        %3030 = vmatpush.bf16.msra.mxu0 %v3018
        %3031 = vmatmul.bf16.gmra.mxu0 %v3015
        %v3032 = vpop.f32.mrf.mxu0
        %v3033 = vadd.f32 0.0, %v3032
        %v3034 = vpop.f32.mrf.mxu0
        %3035 = vdwg.mxu0
        %3036 = vmatpush.bf16.msra.mxu0 0
        %3037 = vmatpush.bf16.msra.mxu0 0
        %3038 = vmatpush.bf16.msra.mxu0 0
        %3039 = vmatpush.bf16.msra.mxu0 0
        %3040 = vmatpush.bf16.msra.mxu0 0
        %3041 = vmatpush.bf16.msra.mxu0 0
        %3042 = vmatpush.bf16.msra.mxu0 0
        %3043 = vmatpush.bf16.msra.mxu0 %v3021
        %3044 = vmatmul.bf16.gmra.mxu0 %v3015
        %v3045 = vpop.f32.mrf.mxu0
        %v3046 = vadd.f32 0.0, %v3045
        %v3047 = vpop.f32.mrf.mxu0
        %3048 = vdwg.mxu0
        %v3049 = vpack.c.bf16 %v3033, %v3033
        %v3050 = vpack.c.bf16 %v3046, %v3046
        %v3051 = vld [vmem:[#allocation11 + $0x300] sm:$0xff]
        %v3052 = vld [vmem:[#allocation11 + $0x308] sm:$0xff]
        %v3053 = vld [vmem:[#allocation11 + $0x310] sm:$0xff]
        %v3054 = vld [vmem:[#allocation11 + $0x318] sm:$0xff]
        %v3055 = vld [vmem:[#allocation11 + $0x320] sm:$0xff]
        %v3056 = vld [vmem:[#allocation11 + $0x328] sm:$0xff]
        %v3057 = vld [vmem:[#allocation11 + $0x330] sm:$0xff]
        %v3058 = vld [vmem:[#allocation11 + $0x338] sm:$0xff]
        %v3059 = vld [vmem:[#allocation11 + $0x340] sm:$0xff]
        %v3060 = vld [vmem:[#allocation11 + $0x348] sm:$0xff]
        %v3061 = vld [vmem:[#allocation11 + $0x350] sm:$0xff]
        %v3062 = vld [vmem:[#allocation11 + $0x358] sm:$0xff]
        %v3063 = vld [vmem:[#allocation11 + $0x360] sm:$0xff]
        %v3064 = vld [vmem:[#allocation11 + $0x368] sm:$0xff]
        %v3065 = vld [vmem:[#allocation11 + $0x370] sm:$0xff]
        %v3066 = vld [vmem:[#allocation11 + $0x378] sm:$0xff]
        %v3067 = vld [vmem:[#allocation11 + $0x380] sm:$0xff]
        %v3068 = vld [vmem:[#allocation11 + $0x388] sm:$0xff]
        %v3069 = vld [vmem:[#allocation11 + $0x390] sm:$0xff]
        %v3070 = vld [vmem:[#allocation11 + $0x398] sm:$0xff]
        %v3071 = vld [vmem:[#allocation11 + $0x3a0] sm:$0xff]
        %v3072 = vld [vmem:[#allocation11 + $0x3a8] sm:$0xff]
        %v3073 = vld [vmem:[#allocation11 + $0x3b0] sm:$0xff]
        %v3074 = vld [vmem:[#allocation11 + $0x3b8] sm:$0xff]
        %v3075 = vld [vmem:[#allocation11 + $0x3c0] sm:$0xff]
        %v3076 = vld [vmem:[#allocation11 + $0x3c8] sm:$0xff]
        %v3077 = vld [vmem:[#allocation11 + $0x3d0] sm:$0xff]
        %v3078 = vld [vmem:[#allocation11 + $0x3d8] sm:$0xff]
        %v3079 = vld [vmem:[#allocation11 + $0x3e0] sm:$0xff]
        %v3080 = vld [vmem:[#allocation11 + $0x3e8] sm:$0xff]
        %v3081 = vld [vmem:[#allocation11 + $0x3f0] sm:$0xff]
        %v3082 = vld [vmem:[#allocation11 + $0x3f8] sm:$0xff]
        %v3083 = vld [vmem:[#allocation11 + $0x400] sm:$0xff]
        %v3084 = vld [vmem:[#allocation11 + $0x408] sm:$0xff]
        %v3085 = vld [vmem:[#allocation11 + $0x410] sm:$0xff]
        %v3086 = vld [vmem:[#allocation11 + $0x418] sm:$0xff]
        %v3087 = vld [vmem:[#allocation11 + $0x420] sm:$0xff]
        %v3088 = vld [vmem:[#allocation11 + $0x428] sm:$0xff]
        %v3089 = vld [vmem:[#allocation11 + $0x430] sm:$0xff]
        %v3090 = vld [vmem:[#allocation11 + $0x438] sm:$0xff]
        %v3091 = vld [vmem:[#allocation11 + $0x440] sm:$0xff]
        %v3092 = vld [vmem:[#allocation11 + $0x448] sm:$0xff]
        %v3093 = vld [vmem:[#allocation11 + $0x450] sm:$0xff]
        %v3094 = vld [vmem:[#allocation11 + $0x458] sm:$0xff]
        %v3095 = vld [vmem:[#allocation11 + $0x460] sm:$0xff]
        %v3096 = vld [vmem:[#allocation11 + $0x468] sm:$0xff]
        %v3097 = vld [vmem:[#allocation11 + $0x470] sm:$0xff]
        %v3098 = vld [vmem:[#allocation11 + $0x478] sm:$0xff]
        %v3099 = vld [vmem:[#allocation11 + $0x480] sm:$0xff]
        %v3100 = vld [vmem:[#allocation11 + $0x488] sm:$0xff]
        %v3101 = vld [vmem:[#allocation11 + $0x490] sm:$0xff]
        %v3102 = vld [vmem:[#allocation11 + $0x498] sm:$0xff]
        %v3103 = vld [vmem:[#allocation11 + $0x4a0] sm:$0xff]
        %v3104 = vld [vmem:[#allocation11 + $0x4a8] sm:$0xff]
        %v3105 = vld [vmem:[#allocation11 + $0x4b0] sm:$0xff]
        %v3106 = vld [vmem:[#allocation11 + $0x4b8] sm:$0xff]
        %v3107 = vld [vmem:[#allocation11 + $0x4c0] sm:$0xff]
        %v3108 = vld [vmem:[#allocation11 + $0x4c8] sm:$0xff]
        %v3109 = vld [vmem:[#allocation11 + $0x4d0] sm:$0xff]
        %v3110 = vld [vmem:[#allocation11 + $0x4d8] sm:$0xff]
        %v3111 = vld [vmem:[#allocation11 + $0x4e0] sm:$0xff]
        %v3112 = vld [vmem:[#allocation11 + $0x4e8] sm:$0xff]
        %v3113 = vld [vmem:[#allocation11 + $0x4f0] sm:$0xff]
        %v3114 = vld [vmem:[#allocation11 + $0x4f8] sm:$0xff]
        %v3115 = vld [vmem:[#allocation11 + $0x500] sm:$0xff]
        %v3116 = vld [vmem:[#allocation11 + $0x508] sm:$0xff]
        %v3117 = vld [vmem:[#allocation11 + $0x510] sm:$0xff]
        %v3118 = vld [vmem:[#allocation11 + $0x518] sm:$0xff]
        %v3119 = vld [vmem:[#allocation11 + $0x520] sm:$0xff]
        %v3120 = vld [vmem:[#allocation11 + $0x528] sm:$0xff]
        %v3121 = vld [vmem:[#allocation11 + $0x530] sm:$0xff]
        %v3122 = vld [vmem:[#allocation11 + $0x538] sm:$0xff]
        %v3123 = vld [vmem:[#allocation11 + $0x540] sm:$0xff]
        %v3124 = vld [vmem:[#allocation11 + $0x548] sm:$0xff]
        %v3125 = vld [vmem:[#allocation11 + $0x550] sm:$0xff]
        %v3126 = vld [vmem:[#allocation11 + $0x558] sm:$0xff]
        %v3127 = vld [vmem:[#allocation11 + $0x560] sm:$0xff]
        %v3128 = vld [vmem:[#allocation11 + $0x568] sm:$0xff]
        %v3129 = vld [vmem:[#allocation11 + $0x570] sm:$0xff]
        %v3130 = vld [vmem:[#allocation11 + $0x578] sm:$0xff]
        %v3131 = vld [vmem:[#allocation11 + $0x580] sm:$0xff]
        %v3132 = vld [vmem:[#allocation11 + $0x588] sm:$0xff]
        %v3133 = vld [vmem:[#allocation11 + $0x590] sm:$0xff]
        %v3134 = vld [vmem:[#allocation11 + $0x598] sm:$0xff]
        %v3135 = vld [vmem:[#allocation11 + $0x5a0] sm:$0xff]
        %v3136 = vld [vmem:[#allocation11 + $0x5a8] sm:$0xff]
        %v3137 = vld [vmem:[#allocation11 + $0x5b0] sm:$0xff]
        %v3138 = vld [vmem:[#allocation11 + $0x5b8] sm:$0xff]
        %v3139 = vld [vmem:[#allocation11 + $0x5c0] sm:$0xff]
        %v3140 = vld [vmem:[#allocation11 + $0x5c8] sm:$0xff]
        %v3141 = vld [vmem:[#allocation11 + $0x5d0] sm:$0xff]
        %v3142 = vld [vmem:[#allocation11 + $0x5d8] sm:$0xff]
        %v3143 = vld [vmem:[#allocation11 + $0x5e0] sm:$0xff]
        %v3144 = vld [vmem:[#allocation11 + $0x5e8] sm:$0xff]
        %v3145 = vld [vmem:[#allocation11 + $0x5f0] sm:$0xff]
        %v3146 = vld [vmem:[#allocation11 + $0x5f8] sm:$0xff]
        %v3243 = vunpack.c.l.b16 %v3051
        %v3244 = vunpack.c.h.b16 %v3051
        %v3245 = vunpack.c.l.b16 %v3052
        %v3246 = vunpack.c.h.b16 %v3052
        %v3247 = vunpack.c.l.b16 %v3053
        %v3248 = vunpack.c.h.b16 %v3053
        %v3249 = vunpack.c.l.b16 %v3054
        %v3250 = vunpack.c.h.b16 %v3054
        %v3251 = vunpack.c.l.b16 %v3055
        %v3252 = vunpack.c.h.b16 %v3055
        %v3253 = vunpack.c.l.b16 %v3056
        %v3254 = vunpack.c.h.b16 %v3056
        %v3255 = vunpack.c.l.b16 %v3057
        %v3256 = vunpack.c.h.b16 %v3057
        %v3257 = vunpack.c.l.b16 %v3058
        %v3258 = vunpack.c.h.b16 %v3058
        %v3259 = vunpack.c.l.b16 %v3059
        %v3260 = vunpack.c.h.b16 %v3059
        %v3261 = vunpack.c.l.b16 %v3060
        %v3262 = vunpack.c.h.b16 %v3060
        %v3263 = vunpack.c.l.b16 %v3061
        %v3264 = vunpack.c.h.b16 %v3061
        %v3265 = vunpack.c.l.b16 %v3062
        %v3266 = vunpack.c.h.b16 %v3062
        %v3267 = vunpack.c.l.b16 %v3063
        %v3268 = vunpack.c.h.b16 %v3063
        %v3269 = vunpack.c.l.b16 %v3064
        %v3270 = vunpack.c.h.b16 %v3064
        %v3271 = vunpack.c.l.b16 %v3065
        %v3272 = vunpack.c.h.b16 %v3065
        %v3273 = vunpack.c.l.b16 %v3066
        %v3274 = vunpack.c.h.b16 %v3066
        %v3275 = vunpack.c.l.b16 %v3067
        %v3276 = vunpack.c.h.b16 %v3067
        %v3277 = vunpack.c.l.b16 %v3068
        %v3278 = vunpack.c.h.b16 %v3068
        %v3279 = vunpack.c.l.b16 %v3069
        %v3280 = vunpack.c.h.b16 %v3069
        %v3281 = vunpack.c.l.b16 %v3070
        %v3282 = vunpack.c.h.b16 %v3070
        %v3283 = vunpack.c.l.b16 %v3071
        %v3284 = vunpack.c.h.b16 %v3071
        %v3285 = vunpack.c.l.b16 %v3072
        %v3286 = vunpack.c.h.b16 %v3072
        %v3287 = vunpack.c.l.b16 %v3073
        %v3288 = vunpack.c.h.b16 %v3073
        %v3289 = vunpack.c.l.b16 %v3074
        %v3290 = vunpack.c.h.b16 %v3074
        %v3291 = vunpack.c.l.b16 %v3075
        %v3292 = vunpack.c.h.b16 %v3075
        %v3293 = vunpack.c.l.b16 %v3076
        %v3294 = vunpack.c.h.b16 %v3076
        %v3295 = vunpack.c.l.b16 %v3077
        %v3296 = vunpack.c.h.b16 %v3077
        %v3297 = vunpack.c.l.b16 %v3078
        %v3298 = vunpack.c.h.b16 %v3078
        %v3299 = vunpack.c.l.b16 %v3079
        %v3300 = vunpack.c.h.b16 %v3079
        %v3301 = vunpack.c.l.b16 %v3080
        %v3302 = vunpack.c.h.b16 %v3080
        %v3303 = vunpack.c.l.b16 %v3081
        %v3304 = vunpack.c.h.b16 %v3081
        %v3305 = vunpack.c.l.b16 %v3082
        %v3306 = vunpack.c.h.b16 %v3082
        %v3307 = vunpack.c.l.b16 %v3083
        %v3308 = vunpack.c.h.b16 %v3083
        %v3309 = vunpack.c.l.b16 %v3084
        %v3310 = vunpack.c.h.b16 %v3084
        %v3311 = vunpack.c.l.b16 %v3085
        %v3312 = vunpack.c.h.b16 %v3085
        %v3313 = vunpack.c.l.b16 %v3086
        %v3314 = vunpack.c.h.b16 %v3086
        %v3315 = vunpack.c.l.b16 %v3087
        %v3316 = vunpack.c.h.b16 %v3087
        %v3317 = vunpack.c.l.b16 %v3088
        %v3318 = vunpack.c.h.b16 %v3088
        %v3319 = vunpack.c.l.b16 %v3089
        %v3320 = vunpack.c.h.b16 %v3089
        %v3321 = vunpack.c.l.b16 %v3090
        %v3322 = vunpack.c.h.b16 %v3090
        %v3323 = vunpack.c.l.b16 %v3091
        %v3324 = vunpack.c.h.b16 %v3091
        %v3325 = vunpack.c.l.b16 %v3092
        %v3326 = vunpack.c.h.b16 %v3092
        %v3327 = vunpack.c.l.b16 %v3093
        %v3328 = vunpack.c.h.b16 %v3093
        %v3329 = vunpack.c.l.b16 %v3094
        %v3330 = vunpack.c.h.b16 %v3094
        %v3331 = vunpack.c.l.b16 %v3095
        %v3332 = vunpack.c.h.b16 %v3095
        %v3333 = vunpack.c.l.b16 %v3096
        %v3334 = vunpack.c.h.b16 %v3096
        %v3335 = vunpack.c.l.b16 %v3097
        %v3336 = vunpack.c.h.b16 %v3097
        %v3337 = vunpack.c.l.b16 %v3098
        %v3338 = vunpack.c.h.b16 %v3098
        %v3339 = vunpack.c.l.b16 %v3099
        %v3340 = vunpack.c.h.b16 %v3099
        %v3341 = vunpack.c.l.b16 %v3100
        %v3342 = vunpack.c.h.b16 %v3100
        %v3343 = vunpack.c.l.b16 %v3101
        %v3344 = vunpack.c.h.b16 %v3101
        %v3345 = vunpack.c.l.b16 %v3102
        %v3346 = vunpack.c.h.b16 %v3102
        %v3347 = vunpack.c.l.b16 %v3103
        %v3348 = vunpack.c.h.b16 %v3103
        %v3349 = vunpack.c.l.b16 %v3104
        %v3350 = vunpack.c.h.b16 %v3104
        %v3351 = vunpack.c.l.b16 %v3105
        %v3352 = vunpack.c.h.b16 %v3105
        %v3353 = vunpack.c.l.b16 %v3106
        %v3354 = vunpack.c.h.b16 %v3106
        %v3355 = vunpack.c.l.b16 %v3107
        %v3356 = vunpack.c.h.b16 %v3107
        %v3357 = vunpack.c.l.b16 %v3108
        %v3358 = vunpack.c.h.b16 %v3108
        %v3359 = vunpack.c.l.b16 %v3109
        %v3360 = vunpack.c.h.b16 %v3109
        %v3361 = vunpack.c.l.b16 %v3110
        %v3362 = vunpack.c.h.b16 %v3110
        %v3363 = vunpack.c.l.b16 %v3111
        %v3364 = vunpack.c.h.b16 %v3111
        %v3365 = vunpack.c.l.b16 %v3112
        %v3366 = vunpack.c.h.b16 %v3112
        %v3367 = vunpack.c.l.b16 %v3113
        %v3368 = vunpack.c.h.b16 %v3113
        %v3369 = vunpack.c.l.b16 %v3114
        %v3370 = vunpack.c.h.b16 %v3114
        %v3371 = vunpack.c.l.b16 %v3115
        %v3372 = vunpack.c.h.b16 %v3115
        %v3373 = vunpack.c.l.b16 %v3116
        %v3374 = vunpack.c.h.b16 %v3116
        %v3375 = vunpack.c.l.b16 %v3117
        %v3376 = vunpack.c.h.b16 %v3117
        %v3377 = vunpack.c.l.b16 %v3118
        %v3378 = vunpack.c.h.b16 %v3118
        %v3379 = vunpack.c.l.b16 %v3119
        %v3380 = vunpack.c.h.b16 %v3119
        %v3381 = vunpack.c.l.b16 %v3120
        %v3382 = vunpack.c.h.b16 %v3120
        %v3383 = vunpack.c.l.b16 %v3121
        %v3384 = vunpack.c.h.b16 %v3121
        %v3385 = vunpack.c.l.b16 %v3122
        %v3386 = vunpack.c.h.b16 %v3122
        %v3387 = vunpack.c.l.b16 %v3123
        %v3388 = vunpack.c.h.b16 %v3123
        %v3389 = vunpack.c.l.b16 %v3124
        %v3390 = vunpack.c.h.b16 %v3124
        %v3391 = vunpack.c.l.b16 %v3125
        %v3392 = vunpack.c.h.b16 %v3125
        %v3393 = vunpack.c.l.b16 %v3126
        %v3394 = vunpack.c.h.b16 %v3126
        %v3395 = vunpack.c.l.b16 %v3127
        %v3396 = vunpack.c.h.b16 %v3127
        %v3397 = vunpack.c.l.b16 %v3128
        %v3398 = vunpack.c.h.b16 %v3128
        %v3399 = vunpack.c.l.b16 %v3129
        %v3400 = vunpack.c.h.b16 %v3129
        %v3401 = vunpack.c.l.b16 %v3130
        %v3402 = vunpack.c.h.b16 %v3130
        %v3403 = vunpack.c.l.b16 %v3131
        %v3404 = vunpack.c.h.b16 %v3131
        %v3405 = vunpack.c.l.b16 %v3132
        %v3406 = vunpack.c.h.b16 %v3132
        %v3407 = vunpack.c.l.b16 %v3133
        %v3408 = vunpack.c.h.b16 %v3133
        %v3409 = vunpack.c.l.b16 %v3134
        %v3410 = vunpack.c.h.b16 %v3134
        %v3411 = vunpack.c.l.b16 %v3135
        %v3412 = vunpack.c.h.b16 %v3135
        %v3413 = vunpack.c.l.b16 %v3136
        %v3414 = vunpack.c.h.b16 %v3136
        %v3415 = vunpack.c.l.b16 %v3137
        %v3416 = vunpack.c.h.b16 %v3137
        %v3417 = vunpack.c.l.b16 %v3138
        %v3418 = vunpack.c.h.b16 %v3138
        %v3419 = vunpack.c.l.b16 %v3139
        %v3420 = vunpack.c.h.b16 %v3139
        %v3421 = vunpack.c.l.b16 %v3140
        %v3422 = vunpack.c.h.b16 %v3140
        %v3423 = vunpack.c.l.b16 %v3141
        %v3424 = vunpack.c.h.b16 %v3141
        %v3425 = vunpack.c.l.b16 %v3142
        %v3426 = vunpack.c.h.b16 %v3142
        %v3427 = vunpack.c.l.b16 %v3143
        %v3428 = vunpack.c.h.b16 %v3143
        %v3429 = vunpack.c.l.b16 %v3144
        %v3430 = vunpack.c.h.b16 %v3144
        %v3431 = vunpack.c.l.b16 %v3145
        %v3432 = vunpack.c.h.b16 %v3145
        %v3433 = vunpack.c.l.b16 %v3146
        %v3434 = vunpack.c.h.b16 %v3146
        %v3435 = vpack.c.b16 %v3249, %v3243
        %v3436 = vpack.c.b16 %v3250, %v3244
        %v3437 = vpack.c.b16 %v3251, %v3245
        %v3438 = vpack.c.b16 %v3252, %v3246
        %v3439 = vpack.c.b16 %v3253, %v3247
        %v3440 = vpack.c.b16 %v3254, %v3248
        %v3441 = vpack.c.b16 %v3261, %v3255
        %v3442 = vpack.c.b16 %v3262, %v3256
        %v3443 = vpack.c.b16 %v3263, %v3257
        %v3444 = vpack.c.b16 %v3264, %v3258
        %v3445 = vpack.c.b16 %v3265, %v3259
        %v3446 = vpack.c.b16 %v3266, %v3260
        %v3447 = vpack.c.b16 %v3273, %v3267
        %v3448 = vpack.c.b16 %v3274, %v3268
        %v3449 = vpack.c.b16 %v3275, %v3269
        %v3450 = vpack.c.b16 %v3276, %v3270
        %v3451 = vpack.c.b16 %v3277, %v3271
        %v3452 = vpack.c.b16 %v3278, %v3272
        %v3453 = vpack.c.b16 %v3285, %v3279
        %v3454 = vpack.c.b16 %v3286, %v3280
        %v3455 = vpack.c.b16 %v3287, %v3281
        %v3456 = vpack.c.b16 %v3288, %v3282
        %v3457 = vpack.c.b16 %v3289, %v3283
        %v3458 = vpack.c.b16 %v3290, %v3284
        %v3459 = vpack.c.b16 %v3297, %v3291
        %v3460 = vpack.c.b16 %v3298, %v3292
        %v3461 = vpack.c.b16 %v3299, %v3293
        %v3462 = vpack.c.b16 %v3300, %v3294
        %v3463 = vpack.c.b16 %v3301, %v3295
        %v3464 = vpack.c.b16 %v3302, %v3296
        %v3465 = vpack.c.b16 %v3309, %v3303
        %v3466 = vpack.c.b16 %v3310, %v3304
        %v3467 = vpack.c.b16 %v3311, %v3305
        %v3468 = vpack.c.b16 %v3312, %v3306
        %v3469 = vpack.c.b16 %v3313, %v3307
        %v3470 = vpack.c.b16 %v3314, %v3308
        %v3471 = vpack.c.b16 %v3321, %v3315
        %v3472 = vpack.c.b16 %v3322, %v3316
        %v3473 = vpack.c.b16 %v3323, %v3317
        %v3474 = vpack.c.b16 %v3324, %v3318
        %v3475 = vpack.c.b16 %v3325, %v3319
        %v3476 = vpack.c.b16 %v3326, %v3320
        %v3477 = vpack.c.b16 %v3333, %v3327
        %v3478 = vpack.c.b16 %v3334, %v3328
        %v3479 = vpack.c.b16 %v3335, %v3329
        %v3480 = vpack.c.b16 %v3336, %v3330
        %v3481 = vpack.c.b16 %v3337, %v3331
        %v3482 = vpack.c.b16 %v3338, %v3332
        %v3483 = vpack.c.b16 %v3345, %v3339
        %v3484 = vpack.c.b16 %v3346, %v3340
        %v3485 = vpack.c.b16 %v3347, %v3341
        %v3486 = vpack.c.b16 %v3348, %v3342
        %v3487 = vpack.c.b16 %v3349, %v3343
        %v3488 = vpack.c.b16 %v3350, %v3344
        %v3489 = vpack.c.b16 %v3357, %v3351
        %v3490 = vpack.c.b16 %v3358, %v3352
        %v3491 = vpack.c.b16 %v3359, %v3353
        %v3492 = vpack.c.b16 %v3360, %v3354
        %v3493 = vpack.c.b16 %v3361, %v3355
        %v3494 = vpack.c.b16 %v3362, %v3356
        %v3495 = vpack.c.b16 %v3369, %v3363
        %v3496 = vpack.c.b16 %v3370, %v3364
        %v3497 = vpack.c.b16 %v3371, %v3365
        %v3498 = vpack.c.b16 %v3372, %v3366
        %v3499 = vpack.c.b16 %v3373, %v3367
        %v3500 = vpack.c.b16 %v3374, %v3368
        %v3501 = vpack.c.b16 %v3381, %v3375
        %v3502 = vpack.c.b16 %v3382, %v3376
        %v3503 = vpack.c.b16 %v3383, %v3377
        %v3504 = vpack.c.b16 %v3384, %v3378
        %v3505 = vpack.c.b16 %v3385, %v3379
        %v3506 = vpack.c.b16 %v3386, %v3380
        %v3507 = vpack.c.b16 %v3393, %v3387
        %v3508 = vpack.c.b16 %v3394, %v3388
        %v3509 = vpack.c.b16 %v3395, %v3389
        %v3510 = vpack.c.b16 %v3396, %v3390
        %v3511 = vpack.c.b16 %v3397, %v3391
        %v3512 = vpack.c.b16 %v3398, %v3392
        %v3513 = vpack.c.b16 %v3405, %v3399
        %v3514 = vpack.c.b16 %v3406, %v3400
        %v3515 = vpack.c.b16 %v3407, %v3401
        %v3516 = vpack.c.b16 %v3408, %v3402
        %v3517 = vpack.c.b16 %v3409, %v3403
        %v3518 = vpack.c.b16 %v3410, %v3404
        %v3519 = vpack.c.b16 %v3417, %v3411
        %v3520 = vpack.c.b16 %v3418, %v3412
        %v3521 = vpack.c.b16 %v3419, %v3413
        %v3522 = vpack.c.b16 %v3420, %v3414
        %v3523 = vpack.c.b16 %v3421, %v3415
        %v3524 = vpack.c.b16 %v3422, %v3416
        %v3525 = vpack.c.b16 %v3429, %v3423
        %v3526 = vpack.c.b16 %v3430, %v3424
        %v3527 = vpack.c.b16 %v3431, %v3425
        %v3528 = vpack.c.b16 %v3432, %v3426
        %v3529 = vpack.c.b16 %v3433, %v3427
        %v3530 = vpack.c.b16 %v3434, %v3428
        %3627 = vmatpush.bf16.msra.mxu0 %v3477
        %3628 = vmatpush.bf16.msra.mxu0 %v3471
        %3629 = vmatpush.bf16.msra.mxu0 %v3465
        %3630 = vmatpush.bf16.msra.mxu0 %v3459
        %3631 = vmatpush.bf16.msra.mxu0 %v3453
        %3632 = vmatpush.bf16.msra.mxu0 %v3447
        %3633 = vmatpush.bf16.msra.mxu0 %v3441
        %3634 = vmatpush.bf16.msra.mxu0 %v3435
        %3635 = vmatmul.bf16.gmra.mxu0 %v3049
        %v3636 = vpop.f32.mrf.mxu0
        %v3637 = vadd.f32 0.0, %v3636
        %v3638 = vpop.f32.mrf.mxu0
        %3639 = vdwg.mxu0
        %3640 = vmatpush.bf16.msra.mxu0 %v3525
        %3641 = vmatpush.bf16.msra.mxu0 %v3519
        %3642 = vmatpush.bf16.msra.mxu0 %v3513
        %3643 = vmatpush.bf16.msra.mxu0 %v3507
        %3644 = vmatpush.bf16.msra.mxu0 %v3501
        %3645 = vmatpush.bf16.msra.mxu0 %v3495
        %3646 = vmatpush.bf16.msra.mxu0 %v3489
        %3647 = vmatpush.bf16.msra.mxu0 %v3483
        %3648 = vmatmul.bf16.gmra.mxu0 %v3050
        %v3649 = vpop.f32.mrf.mxu0
        %v3650 = vadd.f32 %v3637, %v3649
        %v3651 = vpop.f32.mrf.mxu0
        %3652 = vdwg.mxu0
        %3653 = vmatpush.bf16.msra.mxu0 %v3478
        %3654 = vmatpush.bf16.msra.mxu0 %v3472
        %3655 = vmatpush.bf16.msra.mxu0 %v3466
        %3656 = vmatpush.bf16.msra.mxu0 %v3460
        %3657 = vmatpush.bf16.msra.mxu0 %v3454
        %3658 = vmatpush.bf16.msra.mxu0 %v3448
        %3659 = vmatpush.bf16.msra.mxu0 %v3442
        %3660 = vmatpush.bf16.msra.mxu0 %v3436
        %3661 = vmatmul.bf16.gmra.mxu0 %v3049
        %v3662 = vpop.f32.mrf.mxu0
        %v3663 = vadd.f32 0.0, %v3662
        %v3664 = vpop.f32.mrf.mxu0
        %3665 = vdwg.mxu0
        %3666 = vmatpush.bf16.msra.mxu0 %v3526
        %3667 = vmatpush.bf16.msra.mxu0 %v3520
        %3668 = vmatpush.bf16.msra.mxu0 %v3514
        %3669 = vmatpush.bf16.msra.mxu0 %v3508
        %3670 = vmatpush.bf16.msra.mxu0 %v3502
        %3671 = vmatpush.bf16.msra.mxu0 %v3496
        %3672 = vmatpush.bf16.msra.mxu0 %v3490
        %3673 = vmatpush.bf16.msra.mxu0 %v3484
        %3674 = vmatmul.bf16.gmra.mxu0 %v3050
        %v3675 = vpop.f32.mrf.mxu0
        %v3676 = vadd.f32 %v3663, %v3675
        %v3677 = vpop.f32.mrf.mxu0
        %3678 = vdwg.mxu0
        %3679 = vmatpush.bf16.msra.mxu0 %v3479
        %3680 = vmatpush.bf16.msra.mxu0 %v3473
        %3681 = vmatpush.bf16.msra.mxu0 %v3467
        %3682 = vmatpush.bf16.msra.mxu0 %v3461
        %3683 = vmatpush.bf16.msra.mxu0 %v3455
        %3684 = vmatpush.bf16.msra.mxu0 %v3449
        %3685 = vmatpush.bf16.msra.mxu0 %v3443
        %3686 = vmatpush.bf16.msra.mxu0 %v3437
        %3687 = vmatmul.bf16.gmra.mxu0 %v3049
        %v3688 = vpop.f32.mrf.mxu0
        %v3689 = vadd.f32 0.0, %v3688
        %v3690 = vpop.f32.mrf.mxu0
        %3691 = vdwg.mxu0
        %3692 = vmatpush.bf16.msra.mxu0 %v3527
        %3693 = vmatpush.bf16.msra.mxu0 %v3521
        %3694 = vmatpush.bf16.msra.mxu0 %v3515
        %3695 = vmatpush.bf16.msra.mxu0 %v3509
        %3696 = vmatpush.bf16.msra.mxu0 %v3503
        %3697 = vmatpush.bf16.msra.mxu0 %v3497
        %3698 = vmatpush.bf16.msra.mxu0 %v3491
        %3699 = vmatpush.bf16.msra.mxu0 %v3485
        %3700 = vmatmul.bf16.gmra.mxu0 %v3050
        %v3701 = vpop.f32.mrf.mxu0
        %v3702 = vadd.f32 %v3689, %v3701
        %v3703 = vpop.f32.mrf.mxu0
        %3704 = vdwg.mxu0
        %3705 = vmatpush.bf16.msra.mxu0 %v3480
        %3706 = vmatpush.bf16.msra.mxu0 %v3474
        %3707 = vmatpush.bf16.msra.mxu0 %v3468
        %3708 = vmatpush.bf16.msra.mxu0 %v3462
        %3709 = vmatpush.bf16.msra.mxu0 %v3456
        %3710 = vmatpush.bf16.msra.mxu0 %v3450
        %3711 = vmatpush.bf16.msra.mxu0 %v3444
        %3712 = vmatpush.bf16.msra.mxu0 %v3438
        %3713 = vmatmul.bf16.gmra.mxu0 %v3049
        %v3714 = vpop.f32.mrf.mxu0
        %v3715 = vadd.f32 0.0, %v3714
        %v3716 = vpop.f32.mrf.mxu0
        %3717 = vdwg.mxu0
        %3718 = vmatpush.bf16.msra.mxu0 %v3528
        %3719 = vmatpush.bf16.msra.mxu0 %v3522
        %3720 = vmatpush.bf16.msra.mxu0 %v3516
        %3721 = vmatpush.bf16.msra.mxu0 %v3510
        %3722 = vmatpush.bf16.msra.mxu0 %v3504
        %3723 = vmatpush.bf16.msra.mxu0 %v3498
        %3724 = vmatpush.bf16.msra.mxu0 %v3492
        %3725 = vmatpush.bf16.msra.mxu0 %v3486
        %3726 = vmatmul.bf16.gmra.mxu0 %v3050
        %v3727 = vpop.f32.mrf.mxu0
        %v3728 = vadd.f32 %v3715, %v3727
        %v3729 = vpop.f32.mrf.mxu0
        %3730 = vdwg.mxu0
        %3731 = vmatpush.bf16.msra.mxu0 %v3481
        %3732 = vmatpush.bf16.msra.mxu0 %v3475
        %3733 = vmatpush.bf16.msra.mxu0 %v3469
        %3734 = vmatpush.bf16.msra.mxu0 %v3463
        %3735 = vmatpush.bf16.msra.mxu0 %v3457
        %3736 = vmatpush.bf16.msra.mxu0 %v3451
        %3737 = vmatpush.bf16.msra.mxu0 %v3445
        %3738 = vmatpush.bf16.msra.mxu0 %v3439
        %3739 = vmatmul.bf16.gmra.mxu0 %v3049
        %v3740 = vpop.f32.mrf.mxu0
        %v3741 = vadd.f32 0.0, %v3740
        %v3742 = vpop.f32.mrf.mxu0
        %3743 = vdwg.mxu0
        %3744 = vmatpush.bf16.msra.mxu0 %v3529
        %3745 = vmatpush.bf16.msra.mxu0 %v3523
        %3746 = vmatpush.bf16.msra.mxu0 %v3517
        %3747 = vmatpush.bf16.msra.mxu0 %v3511
        %3748 = vmatpush.bf16.msra.mxu0 %v3505
        %3749 = vmatpush.bf16.msra.mxu0 %v3499
        %3750 = vmatpush.bf16.msra.mxu0 %v3493
        %3751 = vmatpush.bf16.msra.mxu0 %v3487
        %3752 = vmatmul.bf16.gmra.mxu0 %v3050
        %v3753 = vpop.f32.mrf.mxu0
        %v3754 = vadd.f32 %v3741, %v3753
        %v3755 = vpop.f32.mrf.mxu0
        %3756 = vdwg.mxu0
        %3757 = vmatpush.bf16.msra.mxu0 %v3482
        %3758 = vmatpush.bf16.msra.mxu0 %v3476
        %3759 = vmatpush.bf16.msra.mxu0 %v3470
        %3760 = vmatpush.bf16.msra.mxu0 %v3464
        %3761 = vmatpush.bf16.msra.mxu0 %v3458
        %3762 = vmatpush.bf16.msra.mxu0 %v3452
        %3763 = vmatpush.bf16.msra.mxu0 %v3446
        %3764 = vmatpush.bf16.msra.mxu0 %v3440
        %3765 = vmatmul.bf16.gmra.mxu0 %v3049
        %v3766 = vpop.f32.mrf.mxu0
        %v3767 = vadd.f32 0.0, %v3766
        %v3768 = vpop.f32.mrf.mxu0
        %3769 = vdwg.mxu0
        %3770 = vmatpush.bf16.msra.mxu0 %v3530
        %3771 = vmatpush.bf16.msra.mxu0 %v3524
        %3772 = vmatpush.bf16.msra.mxu0 %v3518
        %3773 = vmatpush.bf16.msra.mxu0 %v3512
        %3774 = vmatpush.bf16.msra.mxu0 %v3506
        %3775 = vmatpush.bf16.msra.mxu0 %v3500
        %3776 = vmatpush.bf16.msra.mxu0 %v3494
        %3777 = vmatpush.bf16.msra.mxu0 %v3488
        %3778 = vmatmul.bf16.gmra.mxu0 %v3050
        %v3779 = vpop.f32.mrf.mxu0
        %v3780 = vadd.f32 %v3767, %v3779
        %v3781 = vpop.f32.mrf.mxu0
        %3782 = vdwg.mxu0
        %v3879 = vunpack.c.l.b16 %v2862
        %v3880 = vunpack.c.h.b16 %v2862
        %v3881 = vunpack.c.l.b16 %v2863
        %v3882 = vunpack.c.h.b16 %v2863
        %v3883 = vunpack.c.l.b16 %v2864
        %v3884 = vunpack.c.h.b16 %v2864
        %v3885 = vunpack.c.l.b16 %v2865
        %v3886 = vunpack.c.h.b16 %v2865
        %v3887 = vunpack.c.l.b16 %v2866
        %v3888 = vunpack.c.h.b16 %v2866
        %v3889 = vunpack.c.l.b16 %v2867
        %v3890 = vunpack.c.h.b16 %v2867
        %v3891 = vunpack.c.l.b16 %v2868
        %v3892 = vunpack.c.h.b16 %v2868
        %v3893 = vunpack.c.l.b16 %v2869
        %v3894 = vunpack.c.h.b16 %v2869
        %v3895 = vunpack.c.l.b16 %v2870
        %v3896 = vunpack.c.h.b16 %v2870
        %v3897 = vunpack.c.l.b16 %v2871
        %v3898 = vunpack.c.h.b16 %v2871
        %v3899 = vunpack.c.l.b16 %v2872
        %v3900 = vunpack.c.h.b16 %v2872
        %v3901 = vunpack.c.l.b16 %v2873
        %v3902 = vunpack.c.h.b16 %v2873
        %v3903 = vunpack.c.l.b16 %v2874
        %v3904 = vunpack.c.h.b16 %v2874
        %v3905 = vunpack.c.l.b16 %v2875
        %v3906 = vunpack.c.h.b16 %v2875
        %v3907 = vunpack.c.l.b16 %v2876
        %v3908 = vunpack.c.h.b16 %v2876
        %v3909 = vunpack.c.l.b16 %v2877
        %v3910 = vunpack.c.h.b16 %v2877
        %v3911 = vunpack.c.l.b16 %v2878
        %v3912 = vunpack.c.h.b16 %v2878
        %v3913 = vunpack.c.l.b16 %v2879
        %v3914 = vunpack.c.h.b16 %v2879
        %v3915 = vunpack.c.l.b16 %v2880
        %v3916 = vunpack.c.h.b16 %v2880
        %v3917 = vunpack.c.l.b16 %v2881
        %v3918 = vunpack.c.h.b16 %v2881
        %v3919 = vunpack.c.l.b16 %v2882
        %v3920 = vunpack.c.h.b16 %v2882
        %v3921 = vunpack.c.l.b16 %v2883
        %v3922 = vunpack.c.h.b16 %v2883
        %v3923 = vunpack.c.l.b16 %v2884
        %v3924 = vunpack.c.h.b16 %v2884
        %v3925 = vunpack.c.l.b16 %v2885
        %v3926 = vunpack.c.h.b16 %v2885
        %v3927 = vunpack.c.l.b16 %v2886
        %v3928 = vunpack.c.h.b16 %v2886
        %v3929 = vunpack.c.l.b16 %v2887
        %v3930 = vunpack.c.h.b16 %v2887
        %v3931 = vunpack.c.l.b16 %v2888
        %v3932 = vunpack.c.h.b16 %v2888
        %v3933 = vunpack.c.l.b16 %v2889
        %v3934 = vunpack.c.h.b16 %v2889
        %v3935 = vunpack.c.l.b16 %v2890
        %v3936 = vunpack.c.h.b16 %v2890
        %v3937 = vunpack.c.l.b16 %v2891
        %v3938 = vunpack.c.h.b16 %v2891
        %v3939 = vunpack.c.l.b16 %v2892
        %v3940 = vunpack.c.h.b16 %v2892
        %v3941 = vunpack.c.l.b16 %v2893
        %v3942 = vunpack.c.h.b16 %v2893
        %v3943 = vunpack.c.l.b16 %v2894
        %v3944 = vunpack.c.h.b16 %v2894
        %v3945 = vunpack.c.l.b16 %v2895
        %v3946 = vunpack.c.h.b16 %v2895
        %v3947 = vunpack.c.l.b16 %v2896
        %v3948 = vunpack.c.h.b16 %v2896
        %v3949 = vunpack.c.l.b16 %v2897
        %v3950 = vunpack.c.h.b16 %v2897
        %v3951 = vunpack.c.l.b16 %v2898
        %v3952 = vunpack.c.h.b16 %v2898
        %v3953 = vunpack.c.l.b16 %v2899
        %v3954 = vunpack.c.h.b16 %v2899
        %v3955 = vunpack.c.l.b16 %v2900
        %v3956 = vunpack.c.h.b16 %v2900
        %v3957 = vunpack.c.l.b16 %v2901
        %v3958 = vunpack.c.h.b16 %v2901
        %v3959 = vunpack.c.l.b16 %v2902
        %v3960 = vunpack.c.h.b16 %v2902
        %v3961 = vunpack.c.l.b16 %v2903
        %v3962 = vunpack.c.h.b16 %v2903
        %v3963 = vunpack.c.l.b16 %v2904
        %v3964 = vunpack.c.h.b16 %v2904
        %v3965 = vunpack.c.l.b16 %v2905
        %v3966 = vunpack.c.h.b16 %v2905
        %v3967 = vunpack.c.l.b16 %v2906
        %v3968 = vunpack.c.h.b16 %v2906
        %v3969 = vunpack.c.l.b16 %v2907
        %v3970 = vunpack.c.h.b16 %v2907
        %v3971 = vunpack.c.l.b16 %v2908
        %v3972 = vunpack.c.h.b16 %v2908
        %v3973 = vunpack.c.l.b16 %v2909
        %v3974 = vunpack.c.h.b16 %v2909
        %v3975 = vunpack.c.l.b16 %v2910
        %v3976 = vunpack.c.h.b16 %v2910
        %v3977 = vunpack.c.l.b16 %v2911
        %v3978 = vunpack.c.h.b16 %v2911
        %v3979 = vunpack.c.l.b16 %v2912
        %v3980 = vunpack.c.h.b16 %v2912
        %v3981 = vunpack.c.l.b16 %v2913
        %v3982 = vunpack.c.h.b16 %v2913
        %v3983 = vunpack.c.l.b16 %v2914
        %v3984 = vunpack.c.h.b16 %v2914
        %v3985 = vunpack.c.l.b16 %v2915
        %v3986 = vunpack.c.h.b16 %v2915
        %v3987 = vunpack.c.l.b16 %v2916
        %v3988 = vunpack.c.h.b16 %v2916
        %v3989 = vunpack.c.l.b16 %v2917
        %v3990 = vunpack.c.h.b16 %v2917
        %v3991 = vunpack.c.l.b16 %v2918
        %v3992 = vunpack.c.h.b16 %v2918
        %v3993 = vunpack.c.l.b16 %v2919
        %v3994 = vunpack.c.h.b16 %v2919
        %v3995 = vunpack.c.l.b16 %v2920
        %v3996 = vunpack.c.h.b16 %v2920
        %v3997 = vunpack.c.l.b16 %v2921
        %v3998 = vunpack.c.h.b16 %v2921
        %v3999 = vunpack.c.l.b16 %v2922
        %v4000 = vunpack.c.h.b16 %v2922
        %v4001 = vunpack.c.l.b16 %v2923
        %v4002 = vunpack.c.h.b16 %v2923
        %v4003 = vunpack.c.l.b16 %v2924
        %v4004 = vunpack.c.h.b16 %v2924
        %v4005 = vunpack.c.l.b16 %v2925
        %v4006 = vunpack.c.h.b16 %v2925
        %v4007 = vunpack.c.l.b16 %v2926
        %v4008 = vunpack.c.h.b16 %v2926
        %v4009 = vunpack.c.l.b16 %v2927
        %v4010 = vunpack.c.h.b16 %v2927
        %v4011 = vunpack.c.l.b16 %v2928
        %v4012 = vunpack.c.h.b16 %v2928
        %v4013 = vunpack.c.l.b16 %v2929
        %v4014 = vunpack.c.h.b16 %v2929
        %v4015 = vunpack.c.l.b16 %v2930
        %v4016 = vunpack.c.h.b16 %v2930
        %v4017 = vunpack.c.l.b16 %v2931
        %v4018 = vunpack.c.h.b16 %v2931
        %v4019 = vunpack.c.l.b16 %v2932
        %v4020 = vunpack.c.h.b16 %v2932
        %v4021 = vunpack.c.l.b16 %v2933
        %v4022 = vunpack.c.h.b16 %v2933
        %v4023 = vunpack.c.l.b16 %v2934
        %v4024 = vunpack.c.h.b16 %v2934
        %v4025 = vunpack.c.l.b16 %v2935
        %v4026 = vunpack.c.h.b16 %v2935
        %v4027 = vunpack.c.l.b16 %v2936
        %v4028 = vunpack.c.h.b16 %v2936
        %v4029 = vunpack.c.l.b16 %v2937
        %v4030 = vunpack.c.h.b16 %v2937
        %v4031 = vunpack.c.l.b16 %v2938
        %v4032 = vunpack.c.h.b16 %v2938
        %v4033 = vunpack.c.l.b16 %v2939
        %v4034 = vunpack.c.h.b16 %v2939
        %v4035 = vunpack.c.l.b16 %v2940
        %v4036 = vunpack.c.h.b16 %v2940
        %v4037 = vunpack.c.l.b16 %v2941
        %v4038 = vunpack.c.h.b16 %v2941
        %v4039 = vunpack.c.l.b16 %v2942
        %v4040 = vunpack.c.h.b16 %v2942
        %v4041 = vunpack.c.l.b16 %v2943
        %v4042 = vunpack.c.h.b16 %v2943
        %v4043 = vunpack.c.l.b16 %v2944
        %v4044 = vunpack.c.h.b16 %v2944
        %v4045 = vunpack.c.l.b16 %v2945
        %v4046 = vunpack.c.h.b16 %v2945
        %v4047 = vunpack.c.l.b16 %v2946
        %v4048 = vunpack.c.h.b16 %v2946
        %v4049 = vunpack.c.l.b16 %v2947
        %v4050 = vunpack.c.h.b16 %v2947
        %v4051 = vunpack.c.l.b16 %v2948
        %v4052 = vunpack.c.h.b16 %v2948
        %v4053 = vunpack.c.l.b16 %v2949
        %v4054 = vunpack.c.h.b16 %v2949
        %v4055 = vunpack.c.l.b16 %v2950
        %v4056 = vunpack.c.h.b16 %v2950
        %v4057 = vunpack.c.l.b16 %v2951
        %v4058 = vunpack.c.h.b16 %v2951
        %v4059 = vunpack.c.l.b16 %v2952
        %v4060 = vunpack.c.h.b16 %v2952
        %v4061 = vunpack.c.l.b16 %v2953
        %v4062 = vunpack.c.h.b16 %v2953
        %v4063 = vunpack.c.l.b16 %v2954
        %v4064 = vunpack.c.h.b16 %v2954
        %v4065 = vunpack.c.l.b16 %v2955
        %v4066 = vunpack.c.h.b16 %v2955
        %v4067 = vunpack.c.l.b16 %v2956
        %v4068 = vunpack.c.h.b16 %v2956
        %v4069 = vunpack.c.l.b16 %v2957
        %v4070 = vunpack.c.h.b16 %v2957
        %v4071 = vpack.c.b16 %v3885, %v3879
        %v4072 = vpack.c.b16 %v3886, %v3880
        %v4073 = vpack.c.b16 %v3887, %v3881
        %v4074 = vpack.c.b16 %v3888, %v3882
        %v4075 = vpack.c.b16 %v3889, %v3883
        %v4076 = vpack.c.b16 %v3890, %v3884
        %v4077 = vpack.c.b16 %v3897, %v3891
        %v4078 = vpack.c.b16 %v3898, %v3892
        %v4079 = vpack.c.b16 %v3899, %v3893
        %v4080 = vpack.c.b16 %v3900, %v3894
        %v4081 = vpack.c.b16 %v3901, %v3895
        %v4082 = vpack.c.b16 %v3902, %v3896
        %v4083 = vpack.c.b16 %v3909, %v3903
        %v4084 = vpack.c.b16 %v3910, %v3904
        %v4085 = vpack.c.b16 %v3911, %v3905
        %v4086 = vpack.c.b16 %v3912, %v3906
        %v4087 = vpack.c.b16 %v3913, %v3907
        %v4088 = vpack.c.b16 %v3914, %v3908
        %v4089 = vpack.c.b16 %v3921, %v3915
        %v4090 = vpack.c.b16 %v3922, %v3916
        %v4091 = vpack.c.b16 %v3923, %v3917
        %v4092 = vpack.c.b16 %v3924, %v3918
        %v4093 = vpack.c.b16 %v3925, %v3919
        %v4094 = vpack.c.b16 %v3926, %v3920
        %v4095 = vpack.c.b16 %v3933, %v3927
        %v4096 = vpack.c.b16 %v3934, %v3928
        %v4097 = vpack.c.b16 %v3935, %v3929
        %v4098 = vpack.c.b16 %v3936, %v3930
        %v4099 = vpack.c.b16 %v3937, %v3931
        %v4100 = vpack.c.b16 %v3938, %v3932
        %v4101 = vpack.c.b16 %v3945, %v3939
        %v4102 = vpack.c.b16 %v3946, %v3940
        %v4103 = vpack.c.b16 %v3947, %v3941
        %v4104 = vpack.c.b16 %v3948, %v3942
        %v4105 = vpack.c.b16 %v3949, %v3943
        %v4106 = vpack.c.b16 %v3950, %v3944
        %v4107 = vpack.c.b16 %v3957, %v3951
        %v4108 = vpack.c.b16 %v3958, %v3952
        %v4109 = vpack.c.b16 %v3959, %v3953
        %v4110 = vpack.c.b16 %v3960, %v3954
        %v4111 = vpack.c.b16 %v3961, %v3955
        %v4112 = vpack.c.b16 %v3962, %v3956
        %v4113 = vpack.c.b16 %v3969, %v3963
        %v4114 = vpack.c.b16 %v3970, %v3964
        %v4115 = vpack.c.b16 %v3971, %v3965
        %v4116 = vpack.c.b16 %v3972, %v3966
        %v4117 = vpack.c.b16 %v3973, %v3967
        %v4118 = vpack.c.b16 %v3974, %v3968
        %v4119 = vpack.c.b16 %v3981, %v3975
        %v4120 = vpack.c.b16 %v3982, %v3976
        %v4121 = vpack.c.b16 %v3983, %v3977
        %v4122 = vpack.c.b16 %v3984, %v3978
        %v4123 = vpack.c.b16 %v3985, %v3979
        %v4124 = vpack.c.b16 %v3986, %v3980
        %v4125 = vpack.c.b16 %v3993, %v3987
        %v4126 = vpack.c.b16 %v3994, %v3988
        %v4127 = vpack.c.b16 %v3995, %v3989
        %v4128 = vpack.c.b16 %v3996, %v3990
        %v4129 = vpack.c.b16 %v3997, %v3991
        %v4130 = vpack.c.b16 %v3998, %v3992
        %v4131 = vpack.c.b16 %v4005, %v3999
        %v4132 = vpack.c.b16 %v4006, %v4000
        %v4133 = vpack.c.b16 %v4007, %v4001
        %v4134 = vpack.c.b16 %v4008, %v4002
        %v4135 = vpack.c.b16 %v4009, %v4003
        %v4136 = vpack.c.b16 %v4010, %v4004
        %v4137 = vpack.c.b16 %v4017, %v4011
        %v4138 = vpack.c.b16 %v4018, %v4012
        %v4139 = vpack.c.b16 %v4019, %v4013
        %v4140 = vpack.c.b16 %v4020, %v4014
        %v4141 = vpack.c.b16 %v4021, %v4015
        %v4142 = vpack.c.b16 %v4022, %v4016
        %v4143 = vpack.c.b16 %v4029, %v4023
        %v4144 = vpack.c.b16 %v4030, %v4024
        %v4145 = vpack.c.b16 %v4031, %v4025
        %v4146 = vpack.c.b16 %v4032, %v4026
        %v4147 = vpack.c.b16 %v4033, %v4027
        %v4148 = vpack.c.b16 %v4034, %v4028
        %v4149 = vpack.c.b16 %v4041, %v4035
        %v4150 = vpack.c.b16 %v4042, %v4036
        %v4151 = vpack.c.b16 %v4043, %v4037
        %v4152 = vpack.c.b16 %v4044, %v4038
        %v4153 = vpack.c.b16 %v4045, %v4039
        %v4154 = vpack.c.b16 %v4046, %v4040
        %v4155 = vpack.c.b16 %v4053, %v4047
        %v4156 = vpack.c.b16 %v4054, %v4048
        %v4157 = vpack.c.b16 %v4055, %v4049
        %v4158 = vpack.c.b16 %v4056, %v4050
        %v4159 = vpack.c.b16 %v4057, %v4051
        %v4160 = vpack.c.b16 %v4058, %v4052
        %v4161 = vpack.c.b16 %v4065, %v4059
        %v4162 = vpack.c.b16 %v4066, %v4060
        %v4163 = vpack.c.b16 %v4067, %v4061
        %v4164 = vpack.c.b16 %v4068, %v4062
        %v4165 = vpack.c.b16 %v4069, %v4063
        %v4166 = vpack.c.b16 %v4070, %v4064
        %4263 = vmatpush.bf16.msra.mxu0 %v4113
        %4264 = vmatpush.bf16.msra.mxu0 %v4107
        %4265 = vmatpush.bf16.msra.mxu0 %v4101
        %4266 = vmatpush.bf16.msra.mxu0 %v4095
        %4267 = vmatpush.bf16.msra.mxu0 %v4089
        %4268 = vmatpush.bf16.msra.mxu0 %v4083
        %4269 = vmatpush.bf16.msra.mxu0 %v4077
        %4270 = vmatpush.bf16.msra.mxu0 %v4071
        %4271 = vmatmul.bf16.gmra.mxu0 %v2860
        %v4272 = vpop.f32.mrf.mxu0
        %v4273 = vadd.f32 %v3650, %v4272
        %v4274 = vpop.f32.mrf.mxu0
        %4275 = vdwg.mxu0
        %4276 = vmatpush.bf16.msra.mxu0 %v4161
        %4277 = vmatpush.bf16.msra.mxu0 %v4155
        %4278 = vmatpush.bf16.msra.mxu0 %v4149
        %4279 = vmatpush.bf16.msra.mxu0 %v4143
        %4280 = vmatpush.bf16.msra.mxu0 %v4137
        %4281 = vmatpush.bf16.msra.mxu0 %v4131
        %4282 = vmatpush.bf16.msra.mxu0 %v4125
        %4283 = vmatpush.bf16.msra.mxu0 %v4119
        %4284 = vmatmul.bf16.gmra.mxu0 %v2861
        %v4285 = vpop.f32.mrf.mxu0
        %v4286 = vadd.f32 %v4273, %v4285
        %v4287 = vpop.f32.mrf.mxu0
        %4288 = vdwg.mxu0
        %4289 = vmatpush.bf16.msra.mxu0 %v4114
        %4290 = vmatpush.bf16.msra.mxu0 %v4108
        %4291 = vmatpush.bf16.msra.mxu0 %v4102
        %4292 = vmatpush.bf16.msra.mxu0 %v4096
        %4293 = vmatpush.bf16.msra.mxu0 %v4090
        %4294 = vmatpush.bf16.msra.mxu0 %v4084
        %4295 = vmatpush.bf16.msra.mxu0 %v4078
        %4296 = vmatpush.bf16.msra.mxu0 %v4072
        %4297 = vmatmul.bf16.gmra.mxu0 %v2860
        %v4298 = vpop.f32.mrf.mxu0
        %v4299 = vadd.f32 %v3676, %v4298
        %v4300 = vpop.f32.mrf.mxu0
        %4301 = vdwg.mxu0
        %4302 = vmatpush.bf16.msra.mxu0 %v4162
        %4303 = vmatpush.bf16.msra.mxu0 %v4156
        %4304 = vmatpush.bf16.msra.mxu0 %v4150
        %4305 = vmatpush.bf16.msra.mxu0 %v4144
        %4306 = vmatpush.bf16.msra.mxu0 %v4138
        %4307 = vmatpush.bf16.msra.mxu0 %v4132
        %4308 = vmatpush.bf16.msra.mxu0 %v4126
        %4309 = vmatpush.bf16.msra.mxu0 %v4120
        %4310 = vmatmul.bf16.gmra.mxu0 %v2861
        %v4311 = vpop.f32.mrf.mxu0
        %v4312 = vadd.f32 %v4299, %v4311
        %v4313 = vpop.f32.mrf.mxu0
        %4314 = vdwg.mxu0
        %4315 = vmatpush.bf16.msra.mxu0 %v4115
        %4316 = vmatpush.bf16.msra.mxu0 %v4109
        %4317 = vmatpush.bf16.msra.mxu0 %v4103
        %4318 = vmatpush.bf16.msra.mxu0 %v4097
        %4319 = vmatpush.bf16.msra.mxu0 %v4091
        %4320 = vmatpush.bf16.msra.mxu0 %v4085
        %4321 = vmatpush.bf16.msra.mxu0 %v4079
        %4322 = vmatpush.bf16.msra.mxu0 %v4073
        %4323 = vmatmul.bf16.gmra.mxu0 %v2860
        %v4324 = vpop.f32.mrf.mxu0
        %v4325 = vadd.f32 %v3702, %v4324
        %v4326 = vpop.f32.mrf.mxu0
        %4327 = vdwg.mxu0
        %4328 = vmatpush.bf16.msra.mxu0 %v4163
        %4329 = vmatpush.bf16.msra.mxu0 %v4157
        %4330 = vmatpush.bf16.msra.mxu0 %v4151
        %4331 = vmatpush.bf16.msra.mxu0 %v4145
        %4332 = vmatpush.bf16.msra.mxu0 %v4139
        %4333 = vmatpush.bf16.msra.mxu0 %v4133
        %4334 = vmatpush.bf16.msra.mxu0 %v4127
        %4335 = vmatpush.bf16.msra.mxu0 %v4121
        %4336 = vmatmul.bf16.gmra.mxu0 %v2861
        %v4337 = vpop.f32.mrf.mxu0
        %v4338 = vadd.f32 %v4325, %v4337
        %v4339 = vpop.f32.mrf.mxu0
        %4340 = vdwg.mxu0
        %4341 = vmatpush.bf16.msra.mxu0 %v4116
        %4342 = vmatpush.bf16.msra.mxu0 %v4110
        %4343 = vmatpush.bf16.msra.mxu0 %v4104
        %4344 = vmatpush.bf16.msra.mxu0 %v4098
        %4345 = vmatpush.bf16.msra.mxu0 %v4092
        %4346 = vmatpush.bf16.msra.mxu0 %v4086
        %4347 = vmatpush.bf16.msra.mxu0 %v4080
        %4348 = vmatpush.bf16.msra.mxu0 %v4074
        %4349 = vmatmul.bf16.gmra.mxu0 %v2860
        %v4350 = vpop.f32.mrf.mxu0
        %v4351 = vadd.f32 %v3728, %v4350
        %v4352 = vpop.f32.mrf.mxu0
        %4353 = vdwg.mxu0
        %4354 = vmatpush.bf16.msra.mxu0 %v4164
        %4355 = vmatpush.bf16.msra.mxu0 %v4158
        %4356 = vmatpush.bf16.msra.mxu0 %v4152
        %4357 = vmatpush.bf16.msra.mxu0 %v4146
        %4358 = vmatpush.bf16.msra.mxu0 %v4140
        %4359 = vmatpush.bf16.msra.mxu0 %v4134
        %4360 = vmatpush.bf16.msra.mxu0 %v4128
        %4361 = vmatpush.bf16.msra.mxu0 %v4122
        %4362 = vmatmul.bf16.gmra.mxu0 %v2861
        %v4363 = vpop.f32.mrf.mxu0
        %v4364 = vadd.f32 %v4351, %v4363
        %v4365 = vpop.f32.mrf.mxu0
        %4366 = vdwg.mxu0
        %4367 = vmatpush.bf16.msra.mxu0 %v4117
        %4368 = vmatpush.bf16.msra.mxu0 %v4111
        %4369 = vmatpush.bf16.msra.mxu0 %v4105
        %4370 = vmatpush.bf16.msra.mxu0 %v4099
        %4371 = vmatpush.bf16.msra.mxu0 %v4093
        %4372 = vmatpush.bf16.msra.mxu0 %v4087
        %4373 = vmatpush.bf16.msra.mxu0 %v4081
        %4374 = vmatpush.bf16.msra.mxu0 %v4075
        %4375 = vmatmul.bf16.gmra.mxu0 %v2860
        %v4376 = vpop.f32.mrf.mxu0
        %v4377 = vadd.f32 %v3754, %v4376
        %v4378 = vpop.f32.mrf.mxu0
        %4379 = vdwg.mxu0
        %4380 = vmatpush.bf16.msra.mxu0 %v4165
        %4381 = vmatpush.bf16.msra.mxu0 %v4159
        %4382 = vmatpush.bf16.msra.mxu0 %v4153
        %4383 = vmatpush.bf16.msra.mxu0 %v4147
        %4384 = vmatpush.bf16.msra.mxu0 %v4141
        %4385 = vmatpush.bf16.msra.mxu0 %v4135
        %4386 = vmatpush.bf16.msra.mxu0 %v4129
        %4387 = vmatpush.bf16.msra.mxu0 %v4123
        %4388 = vmatmul.bf16.gmra.mxu0 %v2861
        %v4389 = vpop.f32.mrf.mxu0
        %v4390 = vadd.f32 %v4377, %v4389
        %v4391 = vpop.f32.mrf.mxu0
        %4392 = vdwg.mxu0
        %4393 = vmatpush.bf16.msra.mxu0 %v4118
        %4394 = vmatpush.bf16.msra.mxu0 %v4112
        %4395 = vmatpush.bf16.msra.mxu0 %v4106
        %4396 = vmatpush.bf16.msra.mxu0 %v4100
        %4397 = vmatpush.bf16.msra.mxu0 %v4094
        %4398 = vmatpush.bf16.msra.mxu0 %v4088
        %4399 = vmatpush.bf16.msra.mxu0 %v4082
        %4400 = vmatpush.bf16.msra.mxu0 %v4076
        %4401 = vmatmul.bf16.gmra.mxu0 %v2860
        %v4402 = vpop.f32.mrf.mxu0
        %v4403 = vadd.f32 %v3780, %v4402
        %v4404 = vpop.f32.mrf.mxu0
        %4405 = vdwg.mxu0
        %4406 = vmatpush.bf16.msra.mxu0 %v4166
        %4407 = vmatpush.bf16.msra.mxu0 %v4160
        %4408 = vmatpush.bf16.msra.mxu0 %v4154
        %4409 = vmatpush.bf16.msra.mxu0 %v4148
        %4410 = vmatpush.bf16.msra.mxu0 %v4142
        %4411 = vmatpush.bf16.msra.mxu0 %v4136
        %4412 = vmatpush.bf16.msra.mxu0 %v4130
        %4413 = vmatpush.bf16.msra.mxu0 %v4124
        %4414 = vmatmul.bf16.gmra.mxu0 %v2861
        %v4415 = vpop.f32.mrf.mxu0
        %v4416 = vadd.f32 %v4403, %v4415
        %v4417 = vpop.f32.mrf.mxu0
        %4418 = vdwg.mxu0
        %v4419 = vpack.c.bf16 %v2687, %v2687
        %v4420 = vpack.c.bf16 %v2765, %v2765
        %v4421 = vld [vmem:[#allocation5 + $0x10] sm:$0xff]
        %v4422 = vld [vmem:[#allocation7 + $0x10] sm:$0xff]
        %v4424 = vunpack.c.l.b16 %v4421
        %v4425 = vunpack.c.h.b16 %v4421
        %v4426 = vpack.c.b16 %v4424, %v4424
        %v4427 = vpack.c.b16 %v4425, %v4425
        %4430 = vmatpush.bf16.xpose.msra.mxu0 0
        %4431 = vmatpush.bf16.xpose.msra.mxu0 0
        %4432 = vmatpush.bf16.xpose.msra.mxu0 0
        %4433 = vmatpush.bf16.xpose.msra.mxu0 0
        %4434 = vmatpush.bf16.xpose.msra.mxu0 0
        %4435 = vmatpush.bf16.xpose.msra.mxu0 0
        %4436 = vmatpush.bf16.xpose.msra.mxu0 0
        %4437 = vmatpush.bf16.xpose.msra.mxu0 %v4426
        %4438 = vmatmul.bf16.gmra.mxu0 %v4419
        %v4439 = vpop.f32.mrf.mxu0
        %v4440 = vadd.f32 0.0, %v4439
        %v4441 = vpop.f32.mrf.mxu0
        %4442 = vdwg.mxu0
        %4443 = vmatpush.bf16.xpose.msra.mxu0 0
        %4444 = vmatpush.bf16.xpose.msra.mxu0 0
        %4445 = vmatpush.bf16.xpose.msra.mxu0 0
        %4446 = vmatpush.bf16.xpose.msra.mxu0 0
        %4447 = vmatpush.bf16.xpose.msra.mxu0 0
        %4448 = vmatpush.bf16.xpose.msra.mxu0 0
        %4449 = vmatpush.bf16.xpose.msra.mxu0 0
        %4450 = vmatpush.bf16.xpose.msra.mxu0 %v4427
        %4451 = vmatmul.bf16.gmra.mxu0 %v4420
        %v4452 = vpop.f32.mrf.mxu0
        %v4453 = vadd.f32 %v4440, %v4452
        %v4454 = vpop.f32.mrf.mxu0
        %4455 = vdwg.mxu0
        %v4456 = vsel %vm2805, %v4453, -inf
        %4457 = vmax.xlane.f32.xlu0 %v4456
        %v4458 = vpop.xlane.xlu0 %4457
        %v4459 = vsub.f32 %v4453, %v4458
        %v4460 = vmul.f32 %v4459, 1.442695
        %v4461 = vpow.pop %v4460
        %v4462 = vsel %vm2805, %v4461, 0.0
        %4463 = vadd.xlane.f32.xlu0 %v4462
        %v4464 = vpop.xlane.xlu0 %4463
        %v4465 = vrcp.pop %v4464
        %v4466 = vmul.f32 %v4461, %v4465
        %s4467 = scalar_lea.vmem %s544, 16 [#allocation18]
        %4468 = vst.msk [vmem:[%s4467] sm:$0xff] %vm2805, %v4466
        %v4469 = vpack.c.bf16 %v4466, %v4466
        %v4471 = vunpack.c.l.b16 %v4422
        %v4472 = vunpack.c.h.b16 %v4422
        %v4473 = vpack.c.b16 %v4471, %v4471
        %v4474 = vpack.c.b16 %v4472, %v4472
        %v4476 = vsel %vm2805, %v4469, 0
        %v4479 = vsel %vm2827, %v4473, 0
        %v4482 = vsel %vm2827, %v4474, 0
        %4484 = vmatpush.bf16.msra.mxu0 0
        %4485 = vmatpush.bf16.msra.mxu0 0
        %4486 = vmatpush.bf16.msra.mxu0 0
        %4487 = vmatpush.bf16.msra.mxu0 0
        %4488 = vmatpush.bf16.msra.mxu0 0
        %4489 = vmatpush.bf16.msra.mxu0 0
        %4490 = vmatpush.bf16.msra.mxu0 0
        %4491 = vmatpush.bf16.msra.mxu0 %v4479
        %4492 = vmatmul.bf16.gmra.mxu0 %v4476
        %v4493 = vpop.f32.mrf.mxu0
        %v4494 = vadd.f32 0.0, %v4493
        %v4495 = vpop.f32.mrf.mxu0
        %4496 = vdwg.mxu0
        %4497 = vmatpush.bf16.msra.mxu0 0
        %4498 = vmatpush.bf16.msra.mxu0 0
        %4499 = vmatpush.bf16.msra.mxu0 0
        %4500 = vmatpush.bf16.msra.mxu0 0
        %4501 = vmatpush.bf16.msra.mxu0 0
        %4502 = vmatpush.bf16.msra.mxu0 0
        %4503 = vmatpush.bf16.msra.mxu0 0
        %4504 = vmatpush.bf16.msra.mxu0 %v4482
        %4505 = vmatmul.bf16.gmra.mxu0 %v4476
        %v4506 = vpop.f32.mrf.mxu0
        %v4507 = vadd.f32 0.0, %v4506
        %v4508 = vpop.f32.mrf.mxu0
        %4509 = vdwg.mxu0
        %v4510 = vpack.c.bf16 %v4494, %v4494
        %v4511 = vpack.c.bf16 %v4507, %v4507
        %v4512 = vld [vmem:[#allocation11 + $0x600] sm:$0xff]
        %v4513 = vld [vmem:[#allocation11 + $0x608] sm:$0xff]
        %v4514 = vld [vmem:[#allocation11 + $0x610] sm:$0xff]
        %v4515 = vld [vmem:[#allocation11 + $0x618] sm:$0xff]
        %v4516 = vld [vmem:[#allocation11 + $0x620] sm:$0xff]
        %v4517 = vld [vmem:[#allocation11 + $0x628] sm:$0xff]
        %v4518 = vld [vmem:[#allocation11 + $0x630] sm:$0xff]
        %v4519 = vld [vmem:[#allocation11 + $0x638] sm:$0xff]
        %v4520 = vld [vmem:[#allocation11 + $0x640] sm:$0xff]
        %v4521 = vld [vmem:[#allocation11 + $0x648] sm:$0xff]
        %v4522 = vld [vmem:[#allocation11 + $0x650] sm:$0xff]
        %v4523 = vld [vmem:[#allocation11 + $0x658] sm:$0xff]
        %v4524 = vld [vmem:[#allocation11 + $0x660] sm:$0xff]
        %v4525 = vld [vmem:[#allocation11 + $0x668] sm:$0xff]
        %v4526 = vld [vmem:[#allocation11 + $0x670] sm:$0xff]
        %v4527 = vld [vmem:[#allocation11 + $0x678] sm:$0xff]
        %v4528 = vld [vmem:[#allocation11 + $0x680] sm:$0xff]
        %v4529 = vld [vmem:[#allocation11 + $0x688] sm:$0xff]
        %v4530 = vld [vmem:[#allocation11 + $0x690] sm:$0xff]
        %v4531 = vld [vmem:[#allocation11 + $0x698] sm:$0xff]
        %v4532 = vld [vmem:[#allocation11 + $0x6a0] sm:$0xff]
        %v4533 = vld [vmem:[#allocation11 + $0x6a8] sm:$0xff]
        %v4534 = vld [vmem:[#allocation11 + $0x6b0] sm:$0xff]
        %v4535 = vld [vmem:[#allocation11 + $0x6b8] sm:$0xff]
        %v4536 = vld [vmem:[#allocation11 + $0x6c0] sm:$0xff]
        %v4537 = vld [vmem:[#allocation11 + $0x6c8] sm:$0xff]
        %v4538 = vld [vmem:[#allocation11 + $0x6d0] sm:$0xff]
        %v4539 = vld [vmem:[#allocation11 + $0x6d8] sm:$0xff]
        %v4540 = vld [vmem:[#allocation11 + $0x6e0] sm:$0xff]
        %v4541 = vld [vmem:[#allocation11 + $0x6e8] sm:$0xff]
        %v4542 = vld [vmem:[#allocation11 + $0x6f0] sm:$0xff]
        %v4543 = vld [vmem:[#allocation11 + $0x6f8] sm:$0xff]
        %v4544 = vld [vmem:[#allocation11 + $0x700] sm:$0xff]
        %v4545 = vld [vmem:[#allocation11 + $0x708] sm:$0xff]
        %v4546 = vld [vmem:[#allocation11 + $0x710] sm:$0xff]
        %v4547 = vld [vmem:[#allocation11 + $0x718] sm:$0xff]
        %v4548 = vld [vmem:[#allocation11 + $0x720] sm:$0xff]
        %v4549 = vld [vmem:[#allocation11 + $0x728] sm:$0xff]
        %v4550 = vld [vmem:[#allocation11 + $0x730] sm:$0xff]
        %v4551 = vld [vmem:[#allocation11 + $0x738] sm:$0xff]
        %v4552 = vld [vmem:[#allocation11 + $0x740] sm:$0xff]
        %v4553 = vld [vmem:[#allocation11 + $0x748] sm:$0xff]
        %v4554 = vld [vmem:[#allocation11 + $0x750] sm:$0xff]
        %v4555 = vld [vmem:[#allocation11 + $0x758] sm:$0xff]
        %v4556 = vld [vmem:[#allocation11 + $0x760] sm:$0xff]
        %v4557 = vld [vmem:[#allocation11 + $0x768] sm:$0xff]
        %v4558 = vld [vmem:[#allocation11 + $0x770] sm:$0xff]
        %v4559 = vld [vmem:[#allocation11 + $0x778] sm:$0xff]
        %v4560 = vld [vmem:[#allocation11 + $0x780] sm:$0xff]
        %v4561 = vld [vmem:[#allocation11 + $0x788] sm:$0xff]
        %v4562 = vld [vmem:[#allocation11 + $0x790] sm:$0xff]
        %v4563 = vld [vmem:[#allocation11 + $0x798] sm:$0xff]
        %v4564 = vld [vmem:[#allocation11 + $0x7a0] sm:$0xff]
        %v4565 = vld [vmem:[#allocation11 + $0x7a8] sm:$0xff]
        %v4566 = vld [vmem:[#allocation11 + $0x7b0] sm:$0xff]
        %v4567 = vld [vmem:[#allocation11 + $0x7b8] sm:$0xff]
        %v4568 = vld [vmem:[#allocation11 + $0x7c0] sm:$0xff]
        %v4569 = vld [vmem:[#allocation11 + $0x7c8] sm:$0xff]
        %v4570 = vld [vmem:[#allocation11 + $0x7d0] sm:$0xff]
        %v4571 = vld [vmem:[#allocation11 + $0x7d8] sm:$0xff]
        %v4572 = vld [vmem:[#allocation11 + $0x7e0] sm:$0xff]
        %v4573 = vld [vmem:[#allocation11 + $0x7e8] sm:$0xff]
        %v4574 = vld [vmem:[#allocation11 + $0x7f0] sm:$0xff]
        %v4575 = vld [vmem:[#allocation11 + $0x7f8] sm:$0xff]
        %v4576 = vld [vmem:[#allocation11 + $0x800] sm:$0xff]
        %v4577 = vld [vmem:[#allocation11 + $0x808] sm:$0xff]
        %v4578 = vld [vmem:[#allocation11 + $0x810] sm:$0xff]
        %v4579 = vld [vmem:[#allocation11 + $0x818] sm:$0xff]
        %v4580 = vld [vmem:[#allocation11 + $0x820] sm:$0xff]
        %v4581 = vld [vmem:[#allocation11 + $0x828] sm:$0xff]
        %v4582 = vld [vmem:[#allocation11 + $0x830] sm:$0xff]
        %v4583 = vld [vmem:[#allocation11 + $0x838] sm:$0xff]
        %v4584 = vld [vmem:[#allocation11 + $0x840] sm:$0xff]
        %v4585 = vld [vmem:[#allocation11 + $0x848] sm:$0xff]
        %v4586 = vld [vmem:[#allocation11 + $0x850] sm:$0xff]
        %v4587 = vld [vmem:[#allocation11 + $0x858] sm:$0xff]
        %v4588 = vld [vmem:[#allocation11 + $0x860] sm:$0xff]
        %v4589 = vld [vmem:[#allocation11 + $0x868] sm:$0xff]
        %v4590 = vld [vmem:[#allocation11 + $0x870] sm:$0xff]
        %v4591 = vld [vmem:[#allocation11 + $0x878] sm:$0xff]
        %v4592 = vld [vmem:[#allocation11 + $0x880] sm:$0xff]
        %v4593 = vld [vmem:[#allocation11 + $0x888] sm:$0xff]
        %v4594 = vld [vmem:[#allocation11 + $0x890] sm:$0xff]
        %v4595 = vld [vmem:[#allocation11 + $0x898] sm:$0xff]
        %v4596 = vld [vmem:[#allocation11 + $0x8a0] sm:$0xff]
        %v4597 = vld [vmem:[#allocation11 + $0x8a8] sm:$0xff]
        %v4598 = vld [vmem:[#allocation11 + $0x8b0] sm:$0xff]
        %v4599 = vld [vmem:[#allocation11 + $0x8b8] sm:$0xff]
        %v4600 = vld [vmem:[#allocation11 + $0x8c0] sm:$0xff]
        %v4601 = vld [vmem:[#allocation11 + $0x8c8] sm:$0xff]
        %v4602 = vld [vmem:[#allocation11 + $0x8d0] sm:$0xff]
        %v4603 = vld [vmem:[#allocation11 + $0x8d8] sm:$0xff]
        %v4604 = vld [vmem:[#allocation11 + $0x8e0] sm:$0xff]
        %v4605 = vld [vmem:[#allocation11 + $0x8e8] sm:$0xff]
        %v4606 = vld [vmem:[#allocation11 + $0x8f0] sm:$0xff]
        %v4607 = vld [vmem:[#allocation11 + $0x8f8] sm:$0xff]
        %v4704 = vunpack.c.l.b16 %v4512
        %v4705 = vunpack.c.h.b16 %v4512
        %v4706 = vunpack.c.l.b16 %v4513
        %v4707 = vunpack.c.h.b16 %v4513
        %v4708 = vunpack.c.l.b16 %v4514
        %v4709 = vunpack.c.h.b16 %v4514
        %v4710 = vunpack.c.l.b16 %v4515
        %v4711 = vunpack.c.h.b16 %v4515
        %v4712 = vunpack.c.l.b16 %v4516
        %v4713 = vunpack.c.h.b16 %v4516
        %v4714 = vunpack.c.l.b16 %v4517
        %v4715 = vunpack.c.h.b16 %v4517
        %v4716 = vunpack.c.l.b16 %v4518
        %v4717 = vunpack.c.h.b16 %v4518
        %v4718 = vunpack.c.l.b16 %v4519
        %v4719 = vunpack.c.h.b16 %v4519
        %v4720 = vunpack.c.l.b16 %v4520
        %v4721 = vunpack.c.h.b16 %v4520
        %v4722 = vunpack.c.l.b16 %v4521
        %v4723 = vunpack.c.h.b16 %v4521
        %v4724 = vunpack.c.l.b16 %v4522
        %v4725 = vunpack.c.h.b16 %v4522
        %v4726 = vunpack.c.l.b16 %v4523
        %v4727 = vunpack.c.h.b16 %v4523
        %v4728 = vunpack.c.l.b16 %v4524
        %v4729 = vunpack.c.h.b16 %v4524
        %v4730 = vunpack.c.l.b16 %v4525
        %v4731 = vunpack.c.h.b16 %v4525
        %v4732 = vunpack.c.l.b16 %v4526
        %v4733 = vunpack.c.h.b16 %v4526
        %v4734 = vunpack.c.l.b16 %v4527
        %v4735 = vunpack.c.h.b16 %v4527
        %v4736 = vunpack.c.l.b16 %v4528
        %v4737 = vunpack.c.h.b16 %v4528
        %v4738 = vunpack.c.l.b16 %v4529
        %v4739 = vunpack.c.h.b16 %v4529
        %v4740 = vunpack.c.l.b16 %v4530
        %v4741 = vunpack.c.h.b16 %v4530
        %v4742 = vunpack.c.l.b16 %v4531
        %v4743 = vunpack.c.h.b16 %v4531
        %v4744 = vunpack.c.l.b16 %v4532
        %v4745 = vunpack.c.h.b16 %v4532
        %v4746 = vunpack.c.l.b16 %v4533
        %v4747 = vunpack.c.h.b16 %v4533
        %v4748 = vunpack.c.l.b16 %v4534
        %v4749 = vunpack.c.h.b16 %v4534
        %v4750 = vunpack.c.l.b16 %v4535
        %v4751 = vunpack.c.h.b16 %v4535
        %v4752 = vunpack.c.l.b16 %v4536
        %v4753 = vunpack.c.h.b16 %v4536
        %v4754 = vunpack.c.l.b16 %v4537
        %v4755 = vunpack.c.h.b16 %v4537
        %v4756 = vunpack.c.l.b16 %v4538
        %v4757 = vunpack.c.h.b16 %v4538
        %v4758 = vunpack.c.l.b16 %v4539
        %v4759 = vunpack.c.h.b16 %v4539
        %v4760 = vunpack.c.l.b16 %v4540
        %v4761 = vunpack.c.h.b16 %v4540
        %v4762 = vunpack.c.l.b16 %v4541
        %v4763 = vunpack.c.h.b16 %v4541
        %v4764 = vunpack.c.l.b16 %v4542
        %v4765 = vunpack.c.h.b16 %v4542
        %v4766 = vunpack.c.l.b16 %v4543
        %v4767 = vunpack.c.h.b16 %v4543
        %v4768 = vunpack.c.l.b16 %v4544
        %v4769 = vunpack.c.h.b16 %v4544
        %v4770 = vunpack.c.l.b16 %v4545
        %v4771 = vunpack.c.h.b16 %v4545
        %v4772 = vunpack.c.l.b16 %v4546
        %v4773 = vunpack.c.h.b16 %v4546
        %v4774 = vunpack.c.l.b16 %v4547
        %v4775 = vunpack.c.h.b16 %v4547
        %v4776 = vunpack.c.l.b16 %v4548
        %v4777 = vunpack.c.h.b16 %v4548
        %v4778 = vunpack.c.l.b16 %v4549
        %v4779 = vunpack.c.h.b16 %v4549
        %v4780 = vunpack.c.l.b16 %v4550
        %v4781 = vunpack.c.h.b16 %v4550
        %v4782 = vunpack.c.l.b16 %v4551
        %v4783 = vunpack.c.h.b16 %v4551
        %v4784 = vunpack.c.l.b16 %v4552
        %v4785 = vunpack.c.h.b16 %v4552
        %v4786 = vunpack.c.l.b16 %v4553
        %v4787 = vunpack.c.h.b16 %v4553
        %v4788 = vunpack.c.l.b16 %v4554
        %v4789 = vunpack.c.h.b16 %v4554
        %v4790 = vunpack.c.l.b16 %v4555
        %v4791 = vunpack.c.h.b16 %v4555
        %v4792 = vunpack.c.l.b16 %v4556
        %v4793 = vunpack.c.h.b16 %v4556
        %v4794 = vunpack.c.l.b16 %v4557
        %v4795 = vunpack.c.h.b16 %v4557
        %v4796 = vunpack.c.l.b16 %v4558
        %v4797 = vunpack.c.h.b16 %v4558
        %v4798 = vunpack.c.l.b16 %v4559
        %v4799 = vunpack.c.h.b16 %v4559
        %v4800 = vunpack.c.l.b16 %v4560
        %v4801 = vunpack.c.h.b16 %v4560
        %v4802 = vunpack.c.l.b16 %v4561
        %v4803 = vunpack.c.h.b16 %v4561
        %v4804 = vunpack.c.l.b16 %v4562
        %v4805 = vunpack.c.h.b16 %v4562
        %v4806 = vunpack.c.l.b16 %v4563
        %v4807 = vunpack.c.h.b16 %v4563
        %v4808 = vunpack.c.l.b16 %v4564
        %v4809 = vunpack.c.h.b16 %v4564
        %v4810 = vunpack.c.l.b16 %v4565
        %v4811 = vunpack.c.h.b16 %v4565
        %v4812 = vunpack.c.l.b16 %v4566
        %v4813 = vunpack.c.h.b16 %v4566
        %v4814 = vunpack.c.l.b16 %v4567
        %v4815 = vunpack.c.h.b16 %v4567
        %v4816 = vunpack.c.l.b16 %v4568
        %v4817 = vunpack.c.h.b16 %v4568
        %v4818 = vunpack.c.l.b16 %v4569
        %v4819 = vunpack.c.h.b16 %v4569
        %v4820 = vunpack.c.l.b16 %v4570
        %v4821 = vunpack.c.h.b16 %v4570
        %v4822 = vunpack.c.l.b16 %v4571
        %v4823 = vunpack.c.h.b16 %v4571
        %v4824 = vunpack.c.l.b16 %v4572
        %v4825 = vunpack.c.h.b16 %v4572
        %v4826 = vunpack.c.l.b16 %v4573
        %v4827 = vunpack.c.h.b16 %v4573
        %v4828 = vunpack.c.l.b16 %v4574
        %v4829 = vunpack.c.h.b16 %v4574
        %v4830 = vunpack.c.l.b16 %v4575
        %v4831 = vunpack.c.h.b16 %v4575
        %v4832 = vunpack.c.l.b16 %v4576
        %v4833 = vunpack.c.h.b16 %v4576
        %v4834 = vunpack.c.l.b16 %v4577
        %v4835 = vunpack.c.h.b16 %v4577
        %v4836 = vunpack.c.l.b16 %v4578
        %v4837 = vunpack.c.h.b16 %v4578
        %v4838 = vunpack.c.l.b16 %v4579
        %v4839 = vunpack.c.h.b16 %v4579
        %v4840 = vunpack.c.l.b16 %v4580
        %v4841 = vunpack.c.h.b16 %v4580
        %v4842 = vunpack.c.l.b16 %v4581
        %v4843 = vunpack.c.h.b16 %v4581
        %v4844 = vunpack.c.l.b16 %v4582
        %v4845 = vunpack.c.h.b16 %v4582
        %v4846 = vunpack.c.l.b16 %v4583
        %v4847 = vunpack.c.h.b16 %v4583
        %v4848 = vunpack.c.l.b16 %v4584
        %v4849 = vunpack.c.h.b16 %v4584
        %v4850 = vunpack.c.l.b16 %v4585
        %v4851 = vunpack.c.h.b16 %v4585
        %v4852 = vunpack.c.l.b16 %v4586
        %v4853 = vunpack.c.h.b16 %v4586
        %v4854 = vunpack.c.l.b16 %v4587
        %v4855 = vunpack.c.h.b16 %v4587
        %v4856 = vunpack.c.l.b16 %v4588
        %v4857 = vunpack.c.h.b16 %v4588
        %v4858 = vunpack.c.l.b16 %v4589
        %v4859 = vunpack.c.h.b16 %v4589
        %v4860 = vunpack.c.l.b16 %v4590
        %v4861 = vunpack.c.h.b16 %v4590
        %v4862 = vunpack.c.l.b16 %v4591
        %v4863 = vunpack.c.h.b16 %v4591
        %v4864 = vunpack.c.l.b16 %v4592
        %v4865 = vunpack.c.h.b16 %v4592
        %v4866 = vunpack.c.l.b16 %v4593
        %v4867 = vunpack.c.h.b16 %v4593
        %v4868 = vunpack.c.l.b16 %v4594
        %v4869 = vunpack.c.h.b16 %v4594
        %v4870 = vunpack.c.l.b16 %v4595
        %v4871 = vunpack.c.h.b16 %v4595
        %v4872 = vunpack.c.l.b16 %v4596
        %v4873 = vunpack.c.h.b16 %v4596
        %v4874 = vunpack.c.l.b16 %v4597
        %v4875 = vunpack.c.h.b16 %v4597
        %v4876 = vunpack.c.l.b16 %v4598
        %v4877 = vunpack.c.h.b16 %v4598
        %v4878 = vunpack.c.l.b16 %v4599
        %v4879 = vunpack.c.h.b16 %v4599
        %v4880 = vunpack.c.l.b16 %v4600
        %v4881 = vunpack.c.h.b16 %v4600
        %v4882 = vunpack.c.l.b16 %v4601
        %v4883 = vunpack.c.h.b16 %v4601
        %v4884 = vunpack.c.l.b16 %v4602
        %v4885 = vunpack.c.h.b16 %v4602
        %v4886 = vunpack.c.l.b16 %v4603
        %v4887 = vunpack.c.h.b16 %v4603
        %v4888 = vunpack.c.l.b16 %v4604
        %v4889 = vunpack.c.h.b16 %v4604
        %v4890 = vunpack.c.l.b16 %v4605
        %v4891 = vunpack.c.h.b16 %v4605
        %v4892 = vunpack.c.l.b16 %v4606
        %v4893 = vunpack.c.h.b16 %v4606
        %v4894 = vunpack.c.l.b16 %v4607
        %v4895 = vunpack.c.h.b16 %v4607
        %v4896 = vpack.c.b16 %v4710, %v4704
        %v4897 = vpack.c.b16 %v4711, %v4705
        %v4898 = vpack.c.b16 %v4712, %v4706
        %v4899 = vpack.c.b16 %v4713, %v4707
        %v4900 = vpack.c.b16 %v4714, %v4708
        %v4901 = vpack.c.b16 %v4715, %v4709
        %v4902 = vpack.c.b16 %v4722, %v4716
        %v4903 = vpack.c.b16 %v4723, %v4717
        %v4904 = vpack.c.b16 %v4724, %v4718
        %v4905 = vpack.c.b16 %v4725, %v4719
        %v4906 = vpack.c.b16 %v4726, %v4720
        %v4907 = vpack.c.b16 %v4727, %v4721
        %v4908 = vpack.c.b16 %v4734, %v4728
        %v4909 = vpack.c.b16 %v4735, %v4729
        %v4910 = vpack.c.b16 %v4736, %v4730
        %v4911 = vpack.c.b16 %v4737, %v4731
        %v4912 = vpack.c.b16 %v4738, %v4732
        %v4913 = vpack.c.b16 %v4739, %v4733
        %v4914 = vpack.c.b16 %v4746, %v4740
        %v4915 = vpack.c.b16 %v4747, %v4741
        %v4916 = vpack.c.b16 %v4748, %v4742
        %v4917 = vpack.c.b16 %v4749, %v4743
        %v4918 = vpack.c.b16 %v4750, %v4744
        %v4919 = vpack.c.b16 %v4751, %v4745
        %v4920 = vpack.c.b16 %v4758, %v4752
        %v4921 = vpack.c.b16 %v4759, %v4753
        %v4922 = vpack.c.b16 %v4760, %v4754
        %v4923 = vpack.c.b16 %v4761, %v4755
        %v4924 = vpack.c.b16 %v4762, %v4756
        %v4925 = vpack.c.b16 %v4763, %v4757
        %v4926 = vpack.c.b16 %v4770, %v4764
        %v4927 = vpack.c.b16 %v4771, %v4765
        %v4928 = vpack.c.b16 %v4772, %v4766
        %v4929 = vpack.c.b16 %v4773, %v4767
        %v4930 = vpack.c.b16 %v4774, %v4768
        %v4931 = vpack.c.b16 %v4775, %v4769
        %v4932 = vpack.c.b16 %v4782, %v4776
        %v4933 = vpack.c.b16 %v4783, %v4777
        %v4934 = vpack.c.b16 %v4784, %v4778
        %v4935 = vpack.c.b16 %v4785, %v4779
        %v4936 = vpack.c.b16 %v4786, %v4780
        %v4937 = vpack.c.b16 %v4787, %v4781
        %v4938 = vpack.c.b16 %v4794, %v4788
        %v4939 = vpack.c.b16 %v4795, %v4789
        %v4940 = vpack.c.b16 %v4796, %v4790
        %v4941 = vpack.c.b16 %v4797, %v4791
        %v4942 = vpack.c.b16 %v4798, %v4792
        %v4943 = vpack.c.b16 %v4799, %v4793
        %v4944 = vpack.c.b16 %v4806, %v4800
        %v4945 = vpack.c.b16 %v4807, %v4801
        %v4946 = vpack.c.b16 %v4808, %v4802
        %v4947 = vpack.c.b16 %v4809, %v4803
        %v4948 = vpack.c.b16 %v4810, %v4804
        %v4949 = vpack.c.b16 %v4811, %v4805
        %v4950 = vpack.c.b16 %v4818, %v4812
        %v4951 = vpack.c.b16 %v4819, %v4813
        %v4952 = vpack.c.b16 %v4820, %v4814
        %v4953 = vpack.c.b16 %v4821, %v4815
        %v4954 = vpack.c.b16 %v4822, %v4816
        %v4955 = vpack.c.b16 %v4823, %v4817
        %v4956 = vpack.c.b16 %v4830, %v4824
        %v4957 = vpack.c.b16 %v4831, %v4825
        %v4958 = vpack.c.b16 %v4832, %v4826
        %v4959 = vpack.c.b16 %v4833, %v4827
        %v4960 = vpack.c.b16 %v4834, %v4828
        %v4961 = vpack.c.b16 %v4835, %v4829
        %v4962 = vpack.c.b16 %v4842, %v4836
        %v4963 = vpack.c.b16 %v4843, %v4837
        %v4964 = vpack.c.b16 %v4844, %v4838
        %v4965 = vpack.c.b16 %v4845, %v4839
        %v4966 = vpack.c.b16 %v4846, %v4840
        %v4967 = vpack.c.b16 %v4847, %v4841
        %v4968 = vpack.c.b16 %v4854, %v4848
        %v4969 = vpack.c.b16 %v4855, %v4849
        %v4970 = vpack.c.b16 %v4856, %v4850
        %v4971 = vpack.c.b16 %v4857, %v4851
        %v4972 = vpack.c.b16 %v4858, %v4852
        %v4973 = vpack.c.b16 %v4859, %v4853
        %v4974 = vpack.c.b16 %v4866, %v4860
        %v4975 = vpack.c.b16 %v4867, %v4861
        %v4976 = vpack.c.b16 %v4868, %v4862
        %v4977 = vpack.c.b16 %v4869, %v4863
        %v4978 = vpack.c.b16 %v4870, %v4864
        %v4979 = vpack.c.b16 %v4871, %v4865
        %v4980 = vpack.c.b16 %v4878, %v4872
        %v4981 = vpack.c.b16 %v4879, %v4873
        %v4982 = vpack.c.b16 %v4880, %v4874
        %v4983 = vpack.c.b16 %v4881, %v4875
        %v4984 = vpack.c.b16 %v4882, %v4876
        %v4985 = vpack.c.b16 %v4883, %v4877
        %v4986 = vpack.c.b16 %v4890, %v4884
        %v4987 = vpack.c.b16 %v4891, %v4885
        %v4988 = vpack.c.b16 %v4892, %v4886
        %v4989 = vpack.c.b16 %v4893, %v4887
        %v4990 = vpack.c.b16 %v4894, %v4888
        %v4991 = vpack.c.b16 %v4895, %v4889
        %5088 = vmatpush.bf16.msra.mxu0 %v4938
        %5089 = vmatpush.bf16.msra.mxu0 %v4932
        %5090 = vmatpush.bf16.msra.mxu0 %v4926
        %5091 = vmatpush.bf16.msra.mxu0 %v4920
        %5092 = vmatpush.bf16.msra.mxu0 %v4914
        %5093 = vmatpush.bf16.msra.mxu0 %v4908
        %5094 = vmatpush.bf16.msra.mxu0 %v4902
        %5095 = vmatpush.bf16.msra.mxu0 %v4896
        %5096 = vmatmul.bf16.gmra.mxu0 %v4510
        %v5097 = vpop.f32.mrf.mxu0
        %v5098 = vadd.f32 0.0, %v5097
        %v5099 = vpop.f32.mrf.mxu0
        %5100 = vdwg.mxu0
        %5101 = vmatpush.bf16.msra.mxu0 %v4986
        %5102 = vmatpush.bf16.msra.mxu0 %v4980
        %5103 = vmatpush.bf16.msra.mxu0 %v4974
        %5104 = vmatpush.bf16.msra.mxu0 %v4968
        %5105 = vmatpush.bf16.msra.mxu0 %v4962
        %5106 = vmatpush.bf16.msra.mxu0 %v4956
        %5107 = vmatpush.bf16.msra.mxu0 %v4950
        %5108 = vmatpush.bf16.msra.mxu0 %v4944
        %5109 = vmatmul.bf16.gmra.mxu0 %v4511
        %v5110 = vpop.f32.mrf.mxu0
        %v5111 = vadd.f32 %v5098, %v5110
        %v5112 = vpop.f32.mrf.mxu0
        %5113 = vdwg.mxu0
        %5114 = vmatpush.bf16.msra.mxu0 %v4939
        %5115 = vmatpush.bf16.msra.mxu0 %v4933
        %5116 = vmatpush.bf16.msra.mxu0 %v4927
        %5117 = vmatpush.bf16.msra.mxu0 %v4921
        %5118 = vmatpush.bf16.msra.mxu0 %v4915
        %5119 = vmatpush.bf16.msra.mxu0 %v4909
        %5120 = vmatpush.bf16.msra.mxu0 %v4903
        %5121 = vmatpush.bf16.msra.mxu0 %v4897
        %5122 = vmatmul.bf16.gmra.mxu0 %v4510
        %v5123 = vpop.f32.mrf.mxu0
        %v5124 = vadd.f32 0.0, %v5123
        %v5125 = vpop.f32.mrf.mxu0
        %5126 = vdwg.mxu0
        %5127 = vmatpush.bf16.msra.mxu0 %v4987
        %5128 = vmatpush.bf16.msra.mxu0 %v4981
        %5129 = vmatpush.bf16.msra.mxu0 %v4975
        %5130 = vmatpush.bf16.msra.mxu0 %v4969
        %5131 = vmatpush.bf16.msra.mxu0 %v4963
        %5132 = vmatpush.bf16.msra.mxu0 %v4957
        %5133 = vmatpush.bf16.msra.mxu0 %v4951
        %5134 = vmatpush.bf16.msra.mxu0 %v4945
        %5135 = vmatmul.bf16.gmra.mxu0 %v4511
        %v5136 = vpop.f32.mrf.mxu0
        %v5137 = vadd.f32 %v5124, %v5136
        %v5138 = vpop.f32.mrf.mxu0
        %5139 = vdwg.mxu0
        %5140 = vmatpush.bf16.msra.mxu0 %v4940
        %5141 = vmatpush.bf16.msra.mxu0 %v4934
        %5142 = vmatpush.bf16.msra.mxu0 %v4928
        %5143 = vmatpush.bf16.msra.mxu0 %v4922
        %5144 = vmatpush.bf16.msra.mxu0 %v4916
        %5145 = vmatpush.bf16.msra.mxu0 %v4910
        %5146 = vmatpush.bf16.msra.mxu0 %v4904
        %5147 = vmatpush.bf16.msra.mxu0 %v4898
        %5148 = vmatmul.bf16.gmra.mxu0 %v4510
        %v5149 = vpop.f32.mrf.mxu0
        %v5150 = vadd.f32 0.0, %v5149
        %v5151 = vpop.f32.mrf.mxu0
        %5152 = vdwg.mxu0
        %5153 = vmatpush.bf16.msra.mxu0 %v4988
        %5154 = vmatpush.bf16.msra.mxu0 %v4982
        %5155 = vmatpush.bf16.msra.mxu0 %v4976
        %5156 = vmatpush.bf16.msra.mxu0 %v4970
        %5157 = vmatpush.bf16.msra.mxu0 %v4964
        %5158 = vmatpush.bf16.msra.mxu0 %v4958
        %5159 = vmatpush.bf16.msra.mxu0 %v4952
        %5160 = vmatpush.bf16.msra.mxu0 %v4946
        %5161 = vmatmul.bf16.gmra.mxu0 %v4511
        %v5162 = vpop.f32.mrf.mxu0
        %v5163 = vadd.f32 %v5150, %v5162
        %v5164 = vpop.f32.mrf.mxu0
        %5165 = vdwg.mxu0
        %5166 = vmatpush.bf16.msra.mxu0 %v4941
        %5167 = vmatpush.bf16.msra.mxu0 %v4935
        %5168 = vmatpush.bf16.msra.mxu0 %v4929
        %5169 = vmatpush.bf16.msra.mxu0 %v4923
        %5170 = vmatpush.bf16.msra.mxu0 %v4917
        %5171 = vmatpush.bf16.msra.mxu0 %v4911
        %5172 = vmatpush.bf16.msra.mxu0 %v4905
        %5173 = vmatpush.bf16.msra.mxu0 %v4899
        %5174 = vmatmul.bf16.gmra.mxu0 %v4510
        %v5175 = vpop.f32.mrf.mxu0
        %v5176 = vadd.f32 0.0, %v5175
        %v5177 = vpop.f32.mrf.mxu0
        %5178 = vdwg.mxu0
        %5179 = vmatpush.bf16.msra.mxu0 %v4989
        %5180 = vmatpush.bf16.msra.mxu0 %v4983
        %5181 = vmatpush.bf16.msra.mxu0 %v4977
        %5182 = vmatpush.bf16.msra.mxu0 %v4971
        %5183 = vmatpush.bf16.msra.mxu0 %v4965
        %5184 = vmatpush.bf16.msra.mxu0 %v4959
        %5185 = vmatpush.bf16.msra.mxu0 %v4953
        %5186 = vmatpush.bf16.msra.mxu0 %v4947
        %5187 = vmatmul.bf16.gmra.mxu0 %v4511
        %v5188 = vpop.f32.mrf.mxu0
        %v5189 = vadd.f32 %v5176, %v5188
        %v5190 = vpop.f32.mrf.mxu0
        %5191 = vdwg.mxu0
        %5192 = vmatpush.bf16.msra.mxu0 %v4942
        %5193 = vmatpush.bf16.msra.mxu0 %v4936
        %5194 = vmatpush.bf16.msra.mxu0 %v4930
        %5195 = vmatpush.bf16.msra.mxu0 %v4924
        %5196 = vmatpush.bf16.msra.mxu0 %v4918
        %5197 = vmatpush.bf16.msra.mxu0 %v4912
        %5198 = vmatpush.bf16.msra.mxu0 %v4906
        %5199 = vmatpush.bf16.msra.mxu0 %v4900
        %5200 = vmatmul.bf16.gmra.mxu0 %v4510
        %v5201 = vpop.f32.mrf.mxu0
        %v5202 = vadd.f32 0.0, %v5201
        %v5203 = vpop.f32.mrf.mxu0
        %5204 = vdwg.mxu0
        %5205 = vmatpush.bf16.msra.mxu0 %v4990
        %5206 = vmatpush.bf16.msra.mxu0 %v4984
        %5207 = vmatpush.bf16.msra.mxu0 %v4978
        %5208 = vmatpush.bf16.msra.mxu0 %v4972
        %5209 = vmatpush.bf16.msra.mxu0 %v4966
        %5210 = vmatpush.bf16.msra.mxu0 %v4960
        %5211 = vmatpush.bf16.msra.mxu0 %v4954
        %5212 = vmatpush.bf16.msra.mxu0 %v4948
        %5213 = vmatmul.bf16.gmra.mxu0 %v4511
        %v5214 = vpop.f32.mrf.mxu0
        %v5215 = vadd.f32 %v5202, %v5214
        %v5216 = vpop.f32.mrf.mxu0
        %5217 = vdwg.mxu0
        %5218 = vmatpush.bf16.msra.mxu0 %v4943
        %5219 = vmatpush.bf16.msra.mxu0 %v4937
        %5220 = vmatpush.bf16.msra.mxu0 %v4931
        %5221 = vmatpush.bf16.msra.mxu0 %v4925
        %5222 = vmatpush.bf16.msra.mxu0 %v4919
        %5223 = vmatpush.bf16.msra.mxu0 %v4913
        %5224 = vmatpush.bf16.msra.mxu0 %v4907
        %5225 = vmatpush.bf16.msra.mxu0 %v4901
        %5226 = vmatmul.bf16.gmra.mxu0 %v4510
        %v5227 = vpop.f32.mrf.mxu0
        %v5228 = vadd.f32 0.0, %v5227
        %v5229 = vpop.f32.mrf.mxu0
        %5230 = vdwg.mxu0
        %5231 = vmatpush.bf16.msra.mxu0 %v4991
        %5232 = vmatpush.bf16.msra.mxu0 %v4985
        %5233 = vmatpush.bf16.msra.mxu0 %v4979
        %5234 = vmatpush.bf16.msra.mxu0 %v4973
        %5235 = vmatpush.bf16.msra.mxu0 %v4967
        %5236 = vmatpush.bf16.msra.mxu0 %v4961
        %5237 = vmatpush.bf16.msra.mxu0 %v4955
        %5238 = vmatpush.bf16.msra.mxu0 %v4949
        %5239 = vmatmul.bf16.gmra.mxu0 %v4511
        %v5240 = vpop.f32.mrf.mxu0
        %v5241 = vadd.f32 %v5228, %v5240
        %v5242 = vpop.f32.mrf.mxu0
        %5243 = vdwg.mxu0
        %v5244 = vadd.f32 %v4286, %v5111
        %v5245 = vadd.f32 %v4312, %v5137
        %v5246 = vadd.f32 %v4338, %v5163
        %v5247 = vadd.f32 %v4364, %v5189
        %v5248 = vadd.f32 %v4390, %v5215
        %v5249 = vadd.f32 %v4416, %v5241
        %v5250 = vld [vmem:[#allocation13] sm:$0x3f]
        %v5252 = vperm.slane %v5250, 0
        %v5253 = vperm.slane %v5250, 1
        %v5254 = vperm.slane %v5250, 2
        %v5255 = vperm.slane %v5250, 3
        %v5256 = vperm.slane %v5250, 4
        %v5257 = vperm.slane %v5250, 5
        %v5264 = vadd.f32 %v5244, %v5252
        %v5265 = vadd.f32 %v5245, %v5253
        %v5266 = vadd.f32 %v5246, %v5254
        %v5267 = vadd.f32 %v5247, %v5255
        %v5268 = vadd.f32 %v5248, %v5256
        %v5269 = vadd.f32 %v5249, %v5257
        %v5270 = vadd.f32 %v5264, %v546
        %v5271 = vadd.f32 %v5265, %v547
        %v5272 = vadd.f32 %v5266, %v548
        %v5273 = vadd.f32 %v5267, %v549
        %v5274 = vadd.f32 %v5268, %v550
        %v5275 = vadd.f32 %v5269, %v551
        %v5276 = vadd.f32 %v5270, %v5271
        %v5277 = vadd.f32 %v5276, %v5272
        %v5278 = vadd.f32 %v5277, %v5273
        %v5279 = vadd.f32 %v5278, %v5274
        %v5280 = vadd.f32 %v5279, %v5275
        %5281 = vadd.xlane.f32.xlu0 %v5280
        %v5282 = vpop.xlane.xlu0 %5281
        %v5283 = vrcp.pop 768.0
        %v5284 = vmul.f32 768.0, %v5283
        %v5285 = vsub.f32 1.0, %v5284
        %v5286 = vmul.f32 %v5283, %v5285
        %v5287 = vadd.f32 %v5283, %v5286
        %vm5288 = vweird.f32 %v5283
        %v5289 = vsel %vm5288, %v5283, %v5287
        %v5290 = vmul.f32 %v5282, %v5289
        %v5291 = vsub.f32 %v5270, %v5290
        %v5292 = vsub.f32 %v5271, %v5290
        %v5293 = vsub.f32 %v5272, %v5290
        %v5294 = vsub.f32 %v5273, %v5290
        %v5295 = vsub.f32 %v5274, %v5290
        %v5296 = vsub.f32 %v5275, %v5290
        %v5297 = vmul.f32 %v5291, %v5291
        %v5298 = vmul.f32 %v5292, %v5292
        %v5299 = vmul.f32 %v5293, %v5293
        %v5300 = vmul.f32 %v5294, %v5294
        %v5301 = vmul.f32 %v5295, %v5295
        %v5302 = vmul.f32 %v5296, %v5296
        %v5303 = vadd.f32 %v5297, %v5298
        %v5304 = vadd.f32 %v5303, %v5299
        %v5305 = vadd.f32 %v5304, %v5300
        %v5306 = vadd.f32 %v5305, %v5301
        %v5307 = vadd.f32 %v5306, %v5302
        %5308 = vadd.xlane.f32.xlu0 %v5307
        %v5309 = vpop.xlane.xlu0 %5308
        %v5310 = vmul.f32 %v5309, %v5289
        %v5311 = vadd.f32 %v5310, 1e-05
        %v5312 = vrsqrt.pop %v5311
        %v5313 = vmul.f32 %v5312, %v5311
        %v5314 = vmul.f32 %v5313, %v5312
        %v5315 = vmul.f32 0.5, %v5314
        %v5316 = vsub.f32 1.5, %v5315
        %v5317 = vmul.f32 %v5312, %v5316
        %vm5318 = vweird.f32 %v5311
        %vm5319 = vweird.f32 %v5312
        %vm5320 = vmor %vm5318, %vm5319
        %v5321 = vsel %vm5320, %v5312, %v5317
        %v5322 = vmul.f32 %v5291, %v5321
        %v5323 = vmul.f32 %v5292, %v5321
        %v5324 = vmul.f32 %v5293, %v5321
        %v5325 = vmul.f32 %v5294, %v5321
        %v5326 = vmul.f32 %v5295, %v5321
        %v5327 = vmul.f32 %v5296, %v5321
        %v5328 = vld [vmem:[#allocation14] sm:$0x3f]
        %v5330 = vperm.slane %v5328, 0
        %v5331 = vperm.slane %v5328, 1
        %v5332 = vperm.slane %v5328, 2
        %v5333 = vperm.slane %v5328, 3
        %v5334 = vperm.slane %v5328, 4
        %v5335 = vperm.slane %v5328, 5
        %v5342 = vmul.f32 %v5322, %v5330
        %v5343 = vmul.f32 %v5323, %v5331
        %v5344 = vmul.f32 %v5324, %v5332
        %v5345 = vmul.f32 %v5325, %v5333
        %v5346 = vmul.f32 %v5326, %v5334
        %v5347 = vmul.f32 %v5327, %v5335
        %v5348 = vld [vmem:[#allocation16] sm:$0x3f]
        %v5350 = vperm.slane %v5348, 0
        %v5351 = vperm.slane %v5348, 1
        %v5352 = vperm.slane %v5348, 2
        %v5353 = vperm.slane %v5348, 3
        %v5354 = vperm.slane %v5348, 4
        %v5355 = vperm.slane %v5348, 5
        %v5362 = vadd.f32 %v5342, %v5350
        %v5363 = vadd.f32 %v5343, %v5351
        %v5364 = vadd.f32 %v5344, %v5352
        %v5365 = vadd.f32 %v5345, %v5353
        %v5366 = vadd.f32 %v5346, %v5354
        %v5367 = vadd.f32 %v5347, %v5355
        %5368 = vst [vmem:[%s537] sm:$0xff] %v5362
        %5369 = vst [vmem:[%s537 + $0x8] sm:$0xff] %v5363
        %5370 = vst [vmem:[%s537 + $0x10] sm:$0xff] %v5364
        %5371 = vst [vmem:[%s537 + $0x18] sm:$0xff] %v5365
        %5372 = vst [vmem:[%s537 + $0x20] sm:$0xff] %v5366
        %5373 = vst [vmem:[%s537 + $0x28] sm:$0xff] %v5367
        %s5374 = sand.u32 %s263, 1
        %s5375 = scalar_lea.sflag [#allocation4], %s5374
        %s5376 = sand.u32 %s263, 1
        %s5377 = smul.addr %s5376, 48
        %s5378 = scalar_lea.vmem [#allocation17], %s5377
        %s5379 = sand.u32 %s291, 1
        %s5380 = scalar_lea.sflag [#allocation19], %s5379
        %s5381 = sand.u32 %s291, 1
        %s5382 = smul.addr %s5381, 24
        %s5383 = scalar_lea.vmem [#allocation18], %s5382
        // Predicated region
        $region93: #{tpu_custom_call.1} parent=55 // pred_check
          %p5384 = pneg %p273
        $region94: #{tpu_custom_call.1} parent=55 // pred_check_branch
          %5386 = sbr.rel (%p5384) target = $region96
        $region95: #{tpu_custom_call.1} parent=55 // pred_region
          %5388 = vsyncadd %s5375, 0
          %s5389 = smul.addr %s40, 6
          %s5390 = smul.addr %s39, 6
          %s5391 = sadd.s32 %s5389, %s5390
          %s5392 = smul.addr %s5391, 8
          %s5393 = scalar_lea.hbm %s9, %s5392
          %s5395 = sshll.u32 %s5378, 4
          %s5396 = int_to_ptr.vmem [resolvable:$true] %s5395
          %s5397 = sshll.u32 %s5393, 4
          %s5398 = int_to_ptr.hbm [resolvable:$true] %s5397
          %5400 = dma.vmem_to_hbm [thread:$0]  %s5396, 768, %s5398, %s5375
        $region96: #{tpu_custom_call.1} parent=55 // pred_fallthru
          _
        // Predicated region
        $region97: #{tpu_custom_call.1} parent=55 // pred_check
          %p5401 = pneg %p301
        $region98: #{tpu_custom_call.1} parent=55 // pred_check_branch
          %5403 = sbr.rel (%p5401) target = $region100
        $region99: #{tpu_custom_call.1} parent=55 // pred_region
          %5405 = vsyncadd %s5380, 0
          %s5406 = smul.addr %s39, 3
          %s5407 = sadd.s32 %s40, %s5406
          %s5408 = smul.addr %s5407, 8
          %s5409 = scalar_lea.hbm %s10, %s5408
          %s5410 = sshll.u32 %s5383, 4
          %s5411 = int_to_ptr.vmem [resolvable:$true] %s5410
          %s5412 = sshll.u32 %s5409, 4
          %s5413 = int_to_ptr.hbm [resolvable:$true] %s5412
          %5418 = dma.vmem_to_hbm [thread:$0]  %s5411, 384, %s5413, %s5380, 128, 128, 8
        $region100: #{tpu_custom_call.1} parent=55 // pred_fallthru
          _
      $region56: #{tpu_custom_call.1} parent=5 // pred_fallthru
        _
      %p5419 = scmp.le.s32.totalorder 2, %s30
      // Predicated region
      $region101: #{tpu_custom_call.1} parent=5 // pred_check
        %p5420 = pneg %p5419
      $region102: #{tpu_custom_call.1} parent=5 // pred_check_branch
        %5422 = sbr.rel (%p5420) target = $region104
      $region103: #{tpu_custom_call.1} parent=5 // pred_region
        %s5423 = ssub.s32 %s30, 2
        // Predicated region
        $region105: #{tpu_custom_call.1} parent=103 // pred_check
          %p5424 = pneg %p279
        $region106: #{tpu_custom_call.1} parent=103 // pred_check_branch
          %5426 = sbr.rel (%p5424) target = $region108
        $region107: #{tpu_custom_call.1} parent=103 // pred_region
          %s5427 = sand.u32 %s264, 1
          %s5428 = scalar_lea.sflag [#allocation4], %s5427
          %s5429 = sand.u32 %s264, 1
          %s5430 = smul.addr %s5429, 48
          %s5431 = scalar_lea.vmem [#allocation17], %s5430
          %5433 = dma.done %s5428, 768
        $region108: #{tpu_custom_call.1} parent=103 // pred_fallthru
          _
        // Predicated region
        $region109: #{tpu_custom_call.1} parent=103 // pred_check
          %p5434 = pneg %p307
        $region110: #{tpu_custom_call.1} parent=103 // pred_check_branch
          %5436 = sbr.rel (%p5434) target = $region112
        $region111: #{tpu_custom_call.1} parent=103 // pred_region
          %s5437 = sand.u32 %s292, 1
          %s5438 = scalar_lea.sflag [#allocation19], %s5437
          %s5439 = sand.u32 %s292, 1
          %s5440 = smul.addr %s5439, 24
          %s5441 = scalar_lea.vmem [#allocation18], %s5440
          %5443 = dma.done %s5438, 384
        $region112: #{tpu_custom_call.1} parent=103 // pred_fallthru
          _
      $region104: #{tpu_custom_call.1} parent=5 // pred_fallthru
        _
    $region6: #{tpu_custom_call.1} parent=1 // loop_footer
      %s34 = sadd.s32 1, %s30
    $region7: #{tpu_custom_call.1} parent=1 // loop_footer_branch
      %29 = sbr.rel target = $region3
    $region8: #{tpu_custom_call.1} parent=1 // loop_exit
      _
    %5444 = vsyncpa [#allocation3], 1
    %s5445 = scalar_lea.sflag [#allocation3], 1
    %5446 = vsyncpa %s5445, 1
    %5447 = vsyncpa [#allocation6], 1
    %5448 = vsyncpa [#allocation9], 1
    %5449 = vsyncpa [#allocation12], 1
    %5450 = vsyncpa [#allocation15], 1
    %5451 = vsyncpa [#allocation4], 1
    %s5452 = scalar_lea.sflag [#allocation4], 1
    %5453 = vsyncpa %s5452, 1
    %5454 = vsyncpa [#allocation19], 1
    %s5455 = scalar_lea.sflag [#allocation19], 1
    %5456 = vsyncpa %s5455, 1

// kernel: tpu_custom_call.1
$region0: #{tpu_custom_call.1}
  #allocation0 [shape = 'u32[]', space=smem, size = 0x4, offset = 0x4, fixed_abs, tag = 'smem constant byte address 0x4 - core index']
  #allocation1 [shape = 'u32[72,128]{1,0:T(1,128)}', space=vmem, size = 0x9000, scoped, tag = 'internal scratch']
  %s0 = inlined_call_operand.hbm [shape: f32[2,8,768], index: 0, kind: input, shape index: {}]
  %s1 = inlined_call_operand.hbm [shape: bf16[2,8,768], index: 1, kind: input, shape index: {}]
  %s2 = inlined_call_operand.hbm [shape: bf16[2,8,768], index: 2, kind: input, shape index: {}]
  %s3 = inlined_call_operand.hbm [shape: bf16[768,768], index: 3, kind: input, shape index: {}]
  %s4 = inlined_call_operand.hbm [shape: f32[1,768], index: 4, kind: input, shape index: {}]
  %s5 = inlined_call_operand.hbm [shape: bf16[768,768], index: 5, kind: input, shape index: {}]
  %s6 = inlined_call_operand.hbm [shape: f32[1,768], index: 6, kind: input, shape index: {}]
  %s7 = inlined_call_operand.hbm [shape: f32[1,768], index: 7, kind: input, shape index: {}]
  %s8 = inlined_call_operand.hbm [shape: f32[1,768], index: 8, kind: input, shape index: {}]
  %s9 = inlined_call_operand.hbm [shape: f32[2,8,768], index: 9, kind: output, shape index: {0}]
  %s10 = inlined_call_operand.hbm [shape: f32[2,3,8,8], index: 10, kind: output, shape index: {1}]
  %11 = xla_tuple %s9, %s10
  %s12 = sld [smem:[#allocation0]]
  $region113: #{tpu_custom_call.1} parent=0
    _
  %s14 = ssub.s32 1, %s12
  %s15 = scalar_select 0, %s14, %s12
  $region1: #{tpu_custom_call.1} parent=0
    #allocation2 [shape = 'u8[49152]{0}', space=vmem, size = 0xc000, scoped, tag = 'input window, operand 0']
    #allocation3 [shape = 's32[2]{0}', space=sflag, size = 0x8, scoped, tag = 'scoped memory for tpu_custom_call.1']
    #allocation4 [shape = 's32[2]{0}', space=sflag, size = 0x8, scoped, tag = 'scoped memory for tpu_custom_call.1']
    #allocation5 [shape = 'u8[24576]{0}', space=vmem, size = 0x6000, scoped, tag = 'input window, operand 1']
    #allocation6 [shape = 's32[2]{0}', space=sflag, size = 0x8, scoped, tag = 'scoped memory for tpu_custom_call.1']
    #allocation7 [shape = 'u8[24576]{0}', space=vmem, size = 0x6000, scoped, tag = 'input window, operand 2']
    #allocation8 [shape = 'u8[1179648]{0}', space=vmem, size = 0x120000, scoped, tag = 'input window, operand 3, single buffered']
    #allocation9 [shape = 's32[1]{0}', space=sflag, size = 0x4, scoped, tag = 'scoped memory for tpu_custom_call.1']
    #allocation10 [shape = 'u8[3072]{0}', space=vmem, size = 0xc00, scoped, tag = 'input window, operand 4, single buffered']
    #allocation11 [shape = 'u8[1179648]{0}', space=vmem, size = 0x120000, scoped, tag = 'input window, operand 5, single buffered']
    #allocation12 [shape = 's32[1]{0}', space=sflag, size = 0x4, scoped, tag = 'scoped memory for tpu_custom_call.1']
    #allocation13 [shape = 'u8[3072]{0}', space=vmem, size = 0xc00, scoped, tag = 'input window, operand 6, single buffered']
    #allocation14 [shape = 'u8[3072]{0}', space=vmem, size = 0xc00, scoped, tag = 'input window, operand 7, single buffered']
    #allocation15 [shape = 's32[1]{0}', space=sflag, size = 0x4, scoped, tag = 'scoped memory for tpu_custom_call.1']
    #allocation16 [shape = 'u8[3072]{0}', space=vmem, size = 0xc00, scoped, tag = 'input window, operand 8, single buffered']
    #allocation17 [shape = 'u8[49152]{0}', space=vmem, size = 0xc000, scoped, tag = 'output window, operand 0']
    #allocation18 [shape = 'u8[24576]{0}', space=vmem, size = 0x6000, scoped, tag = 'output window, operand 1']
    #allocation19 [shape = 's32[2]{0}', space=sflag, size = 0x8, scoped, tag = 'scoped memory for tpu_custom_call.1']
    %16 = vsyncpa [#allocation3], 0
    %s17 = scalar_lea.sflag [#allocation3], 1
    %18 = vsyncpa %s17, 0
    %19 = vsyncpa [#allocation6], 0
    %s20 = scalar_lea.sflag [#allocation6], 1
    %21 = vsyncpa %s20, 0
    %22 = vsyncpa [#allocation9], 0
    %23 = vsyncpa [#allocation12], 0
    %24 = vsyncpa [#allocation15], 0
    %25 = vsyncpa [#allocation4], 0
    %s26 = scalar_lea.sflag [#allocation4], 1
    %27 = vsyncpa %s26, 0
    %28 = vsyncpa [#allocation19], 0
    %s29 = scalar_lea.sflag [#allocation19], 1
    %30 = vsyncpa %s29, 0
    loop: start=0, step=1, limit=4
    $region2: #{tpu_custom_call.1} parent=1 // loop_pre_header
      _
    $region3: #{tpu_custom_call.1} parent=1 // loop_header
      %s32 = sphi 0, %s36
      %p33 = scmp.ge.s32.totalorder %s32, 4
      %s39 = sphi 0, %s51
      %s40 = sphi 0, %s47
      %s41 = sphi 0, %s39
      %s42 = sphi 0, %s40
      %s43 = sphi 0, %s41
      %s44 = sphi 0, %s42
      %s56 = sphi 0, %s58
      %s59 = sphi 0, %s56
      %s60 = sphi 0, %s59
      %s76 = sphi 0, %s60
      %s82 = sphi 0, %s84
      %s85 = sphi 0, %s82
      %s86 = sphi 0, %s85
      %s102 = sphi 0, %s86
      %s108 = sphi 0, %s110
      %s111 = sphi 0, %s108
      %s112 = sphi 0, %s111
      %s128 = sphi 0, %s112
      %s132 = sphi 0, %s132
      %s134 = sphi 0, %s132
      %s135 = sphi 0, %s134
      %s149 = sphi 0, %s135
      %s153 = sphi 0, %s153
      %s155 = sphi 0, %s153
      %s156 = sphi 0, %s155
      %s170 = sphi 0, %s156
      %s174 = sphi 0, %s174
      %s176 = sphi 0, %s174
      %s177 = sphi 0, %s176
      %s191 = sphi 0, %s177
      %s195 = sphi 0, %s195
      %s197 = sphi 0, %s195
      %s198 = sphi 0, %s197
      %s212 = sphi 0, %s198
      %s216 = sphi 0, %s216
      %s218 = sphi 0, %s216
      %s219 = sphi 0, %s218
      %s233 = sphi 0, %s219
      %s237 = sphi 0, %s237
      %s239 = sphi 0, %s237
      %s240 = sphi 0, %s239
      %s254 = sphi 0, %s240
      %s262 = sphi 0, %s264
      %s265 = sphi 0, %s262
      %s266 = sphi 0, %s265
      %s282 = sphi 0, %s266
      %s290 = sphi 0, %s292
      %s293 = sphi 0, %s290
      %s294 = sphi 0, %s293
      %s310 = sphi 0, %s294
    $region4: #{tpu_custom_call.1} parent=1 // loop_header_branch
      %35 = sbr.rel (%p33) target = $region8
    $region5: #{tpu_custom_call.1} parent=1 // loop_body
      %s37 = ssub.s32 %s32, 1
      %s38 = ssub.s32 %s32, 2
      %s45 = sadd.s32 1, %s40
      %p46 = scmp.ge.s32.totalorder %s45, 1
      %s47 = scalar_select %p46, 0, %s45
      %s48 = sadd.s32 1, %s39
      %s49 = scalar_select %p46, %s48, %s39
      %p50 = scmp.ge.s32.totalorder %s49, 2
      %s51 = scalar_select %p50, 0, %s49
      %s52 = ssub.s32 %s39, %s51
      %s53 = ssub.s32 %s40, %s47
      %s54 = sor.u32 %s52, %s53
      %p55 = scmp.eq.s32.totalorder %s54, 0
      %s57 = sadd.s32 %s56, 1
      %s58 = scalar_select %p55, %s56, %s57
      %p61 = pneg %p55
      %p62 = scmp.eq.s32.totalorder %s32, 1
      %p63 = por %p61, %p62
      %p64 = scmp.ne.s32.totalorder %s56, %s59
      %p65 = scmp.eq.s32.totalorder %s32, 0
      %p66 = por %p64, %p65
      %p67 = scmp.ne.s32.totalorder %s56, %s59
      %p68 = scmp.eq.s32.totalorder %s37, 1
      %p69 = por %p67, %p68
      %p70 = scmp.ne.s32.totalorder %s59, %s60
      %p71 = scmp.eq.s32.totalorder %s37, 0
      %p72 = por %p70, %p71
      %p73 = scmp.ne.s32.totalorder %s59, %s60
      %p74 = scmp.eq.s32.totalorder %s38, 1
      %p75 = por %p73, %p74
      %p77 = scmp.ne.s32.totalorder %s60, %s76
      %p78 = scmp.eq.s32.totalorder %s38, 0
      %p79 = por %p77, %p78
      %s80 = ssub.s32 %s39, %s51
      %p81 = scmp.eq.s32.totalorder %s80, 0
      %s83 = sadd.s32 %s82, 1
      %s84 = scalar_select %p81, %s82, %s83
      %p87 = pneg %p81
      %p88 = scmp.eq.s32.totalorder %s32, 1
      %p89 = por %p87, %p88
      %p90 = scmp.ne.s32.totalorder %s82, %s85
      %p91 = scmp.eq.s32.totalorder %s32, 0
      %p92 = por %p90, %p91
      %p93 = scmp.ne.s32.totalorder %s82, %s85
      %p94 = scmp.eq.s32.totalorder %s37, 1
      %p95 = por %p93, %p94
      %p96 = scmp.ne.s32.totalorder %s85, %s86
      %p97 = scmp.eq.s32.totalorder %s37, 0
      %p98 = por %p96, %p97
      %p99 = scmp.ne.s32.totalorder %s85, %s86
      %p100 = scmp.eq.s32.totalorder %s38, 1
      %p101 = por %p99, %p100
      %p103 = scmp.ne.s32.totalorder %s86, %s102
      %p104 = scmp.eq.s32.totalorder %s38, 0
      %p105 = por %p103, %p104
      %s106 = ssub.s32 %s39, %s51
      %p107 = scmp.eq.s32.totalorder %s106, 0
      %s109 = sadd.s32 %s108, 1
      %s110 = scalar_select %p107, %s108, %s109
      %p113 = pneg %p107
      %p114 = scmp.eq.s32.totalorder %s32, 1
      %p115 = por %p113, %p114
      %p116 = scmp.ne.s32.totalorder %s108, %s111
      %p117 = scmp.eq.s32.totalorder %s32, 0
      %p118 = por %p116, %p117
      %p119 = scmp.ne.s32.totalorder %s108, %s111
      %p120 = scmp.eq.s32.totalorder %s37, 1
      %p121 = por %p119, %p120
      %p122 = scmp.ne.s32.totalorder %s111, %s112
      %p123 = scmp.eq.s32.totalorder %s37, 0
      %p124 = por %p122, %p123
      %p125 = scmp.ne.s32.totalorder %s111, %s112
      %p126 = scmp.eq.s32.totalorder %s38, 1
      %p127 = por %p125, %p126
      %p129 = scmp.ne.s32.totalorder %s112, %s128
      %p130 = scmp.eq.s32.totalorder %s38, 0
      %p131 = por %p129, %p130
      %s133 = sadd.s32 %s132, 1
      %p136 = scmp.eq.s32.totalorder %s32, 1
      %p137 = scmp.ne.s32.totalorder %s132, %s134
      %p138 = scmp.eq.s32.totalorder %s32, 0
      %p139 = por %p137, %p138
      %p140 = scmp.ne.s32.totalorder %s132, %s134
      %p141 = scmp.eq.s32.totalorder %s37, 1
      %p142 = por %p140, %p141
      %p143 = scmp.ne.s32.totalorder %s134, %s135
      %p144 = scmp.eq.s32.totalorder %s37, 0
      %p145 = por %p143, %p144
      %p146 = scmp.ne.s32.totalorder %s134, %s135
      %p147 = scmp.eq.s32.totalorder %s38, 1
      %p148 = por %p146, %p147
      %p150 = scmp.ne.s32.totalorder %s135, %s149
      %p151 = scmp.eq.s32.totalorder %s38, 0
      %p152 = por %p150, %p151
      %s154 = sadd.s32 %s153, 1
      %p157 = scmp.eq.s32.totalorder %s32, 1
      %p158 = scmp.ne.s32.totalorder %s153, %s155
      %p159 = scmp.eq.s32.totalorder %s32, 0
      %p160 = por %p158, %p159
      %p161 = scmp.ne.s32.totalorder %s153, %s155
      %p162 = scmp.eq.s32.totalorder %s37, 1
      %p163 = por %p161, %p162
      %p164 = scmp.ne.s32.totalorder %s155, %s156
      %p165 = scmp.eq.s32.totalorder %s37, 0
      %p166 = por %p164, %p165
      %p167 = scmp.ne.s32.totalorder %s155, %s156
      %p168 = scmp.eq.s32.totalorder %s38, 1
      %p169 = por %p167, %p168
      %p171 = scmp.ne.s32.totalorder %s156, %s170
      %p172 = scmp.eq.s32.totalorder %s38, 0
      %p173 = por %p171, %p172
      %s175 = sadd.s32 %s174, 1
      %p178 = scmp.eq.s32.totalorder %s32, 1
      %p179 = scmp.ne.s32.totalorder %s174, %s176
      %p180 = scmp.eq.s32.totalorder %s32, 0
      %p181 = por %p179, %p180
      %p182 = scmp.ne.s32.totalorder %s174, %s176
      %p183 = scmp.eq.s32.totalorder %s37, 1
      %p184 = por %p182, %p183
      %p185 = scmp.ne.s32.totalorder %s176, %s177
      %p186 = scmp.eq.s32.totalorder %s37, 0
      %p187 = por %p185, %p186
      %p188 = scmp.ne.s32.totalorder %s176, %s177
      %p189 = scmp.eq.s32.totalorder %s38, 1
      %p190 = por %p188, %p189
      %p192 = scmp.ne.s32.totalorder %s177, %s191
      %p193 = scmp.eq.s32.totalorder %s38, 0
      %p194 = por %p192, %p193
      %s196 = sadd.s32 %s195, 1
      %p199 = scmp.eq.s32.totalorder %s32, 1
      %p200 = scmp.ne.s32.totalorder %s195, %s197
      %p201 = scmp.eq.s32.totalorder %s32, 0
      %p202 = por %p200, %p201
      %p203 = scmp.ne.s32.totalorder %s195, %s197
      %p204 = scmp.eq.s32.totalorder %s37, 1
      %p205 = por %p203, %p204
      %p206 = scmp.ne.s32.totalorder %s197, %s198
      %p207 = scmp.eq.s32.totalorder %s37, 0
      %p208 = por %p206, %p207
      %p209 = scmp.ne.s32.totalorder %s197, %s198
      %p210 = scmp.eq.s32.totalorder %s38, 1
      %p211 = por %p209, %p210
      %p213 = scmp.ne.s32.totalorder %s198, %s212
      %p214 = scmp.eq.s32.totalorder %s38, 0
      %p215 = por %p213, %p214
      %s217 = sadd.s32 %s216, 1
      %p220 = scmp.eq.s32.totalorder %s32, 1
      %p221 = scmp.ne.s32.totalorder %s216, %s218
      %p222 = scmp.eq.s32.totalorder %s32, 0
      %p223 = por %p221, %p222
      %p224 = scmp.ne.s32.totalorder %s216, %s218
      %p225 = scmp.eq.s32.totalorder %s37, 1
      %p226 = por %p224, %p225
      %p227 = scmp.ne.s32.totalorder %s218, %s219
      %p228 = scmp.eq.s32.totalorder %s37, 0
      %p229 = por %p227, %p228
      %p230 = scmp.ne.s32.totalorder %s218, %s219
      %p231 = scmp.eq.s32.totalorder %s38, 1
      %p232 = por %p230, %p231
      %p234 = scmp.ne.s32.totalorder %s219, %s233
      %p235 = scmp.eq.s32.totalorder %s38, 0
      %p236 = por %p234, %p235
      %s238 = sadd.s32 %s237, 1
      %p241 = scmp.eq.s32.totalorder %s32, 1
      %p242 = scmp.ne.s32.totalorder %s237, %s239
      %p243 = scmp.eq.s32.totalorder %s32, 0
      %p244 = por %p242, %p243
      %p245 = scmp.ne.s32.totalorder %s237, %s239
      %p246 = scmp.eq.s32.totalorder %s37, 1
      %p247 = por %p245, %p246
      %p248 = scmp.ne.s32.totalorder %s239, %s240
      %p249 = scmp.eq.s32.totalorder %s37, 0
      %p250 = por %p248, %p249
      %p251 = scmp.ne.s32.totalorder %s239, %s240
      %p252 = scmp.eq.s32.totalorder %s38, 1
      %p253 = por %p251, %p252
      %p255 = scmp.ne.s32.totalorder %s240, %s254
      %p256 = scmp.eq.s32.totalorder %s38, 0
      %p257 = por %p255, %p256
      %s258 = ssub.s32 %s39, %s51
      %s259 = ssub.s32 %s40, %s47
      %s260 = sor.u32 %s258, %s259
      %p261 = scmp.eq.s32.totalorder %s260, 0
      %s263 = sadd.s32 %s262, 1
      %s264 = scalar_select %p261, %s262, %s263
      %p267 = pneg %p261
      %p268 = scmp.eq.s32.totalorder %s32, 1
      %p269 = por %p267, %p268
      %p270 = scmp.ne.s32.totalorder %s262, %s265
      %p271 = scmp.eq.s32.totalorder %s32, 0
      %p272 = por %p270, %p271
      %p273 = scmp.ne.s32.totalorder %s262, %s265
      %p274 = scmp.eq.s32.totalorder %s37, 1
      %p275 = por %p273, %p274
      %p276 = scmp.ne.s32.totalorder %s265, %s266
      %p277 = scmp.eq.s32.totalorder %s37, 0
      %p278 = por %p276, %p277
      %p279 = scmp.ne.s32.totalorder %s265, %s266
      %p280 = scmp.eq.s32.totalorder %s38, 1
      %p281 = por %p279, %p280
      %p283 = scmp.ne.s32.totalorder %s266, %s282
      %p284 = scmp.eq.s32.totalorder %s38, 0
      %p285 = por %p283, %p284
      %s286 = ssub.s32 %s39, %s51
      %s287 = ssub.s32 %s40, %s47
      %s288 = sor.u32 %s286, %s287
      %p289 = scmp.eq.s32.totalorder %s288, 0
      %s291 = sadd.s32 %s290, 1
      %s292 = scalar_select %p289, %s290, %s291
      %p295 = pneg %p289
      %p296 = scmp.eq.s32.totalorder %s32, 1
      %p297 = por %p295, %p296
      %p298 = scmp.ne.s32.totalorder %s290, %s293
      %p299 = scmp.eq.s32.totalorder %s32, 0
      %p300 = por %p298, %p299
      %p301 = scmp.ne.s32.totalorder %s290, %s293
      %p302 = scmp.eq.s32.totalorder %s37, 1
      %p303 = por %p301, %p302
      %p304 = scmp.ne.s32.totalorder %s293, %s294
      %p305 = scmp.eq.s32.totalorder %s37, 0
      %p306 = por %p304, %p305
      %p307 = scmp.ne.s32.totalorder %s293, %s294
      %p308 = scmp.eq.s32.totalorder %s38, 1
      %p309 = por %p307, %p308
      %p311 = scmp.ne.s32.totalorder %s294, %s310
      %p312 = scmp.eq.s32.totalorder %s38, 0
      %p313 = por %p311, %p312
      %p314 = scmp.le.s32.totalorder 1, %s32
      %p315 = scmp.lt.s32.totalorder %s32, 3
      %p316 = pnand %p314, %p315
      %p317 = pneg %p316
      // Predicated region
      $region9: #{tpu_custom_call.1} parent=5 // pred_check
        _
      $region10: #{tpu_custom_call.1} parent=5 // pred_check_branch
        %319 = sbr.rel (%p316) target = $region12
      $region11: #{tpu_custom_call.1} parent=5 // pred_region
        %s320 = ssub.s32 %s32, 1
        // Predicated region
        $region13: #{tpu_custom_call.1} parent=11 // pred_check
          %p321 = pneg %p145
        $region14: #{tpu_custom_call.1} parent=11 // pred_check_branch
          %323 = sbr.rel (%p321) target = $region16
        $region15: #{tpu_custom_call.1} parent=11 // pred_region
          %325 = vsyncadd [#allocation9], 0
          %s326 = sshll.u32 %s3, 4
          %s327 = int_to_ptr.hbm [resolvable:$true] %s326
          %s328 = sshll.u32 [#allocation8], 4
          %s329 = int_to_ptr.vmem [resolvable:$true] %s328
          %334 = dma.hbm_to_vmem [thread:$0]  %s327, 36864, %s329, [#allocation9], 384, 384, 24
        $region16: #{tpu_custom_call.1} parent=11 // pred_fallthru
          _
        // Predicated region
        $region17: #{tpu_custom_call.1} parent=11 // pred_check
          %p335 = pneg %p166
        $region18: #{tpu_custom_call.1} parent=11 // pred_check_branch
          %337 = sbr.rel (%p335) target = $region20
        $region19: #{tpu_custom_call.1} parent=11 // pred_region
          %339 = vsyncadd [#allocation9], 0
          %s341 = sshll.u32 %s4, 4
          %s342 = int_to_ptr.hbm [resolvable:$true] %s341
          %s343 = sshll.u32 [#allocation10], 4
          %s344 = int_to_ptr.vmem [resolvable:$true] %s343
          %346 = dma.hbm_to_vmem [thread:$0]  %s342, 96, %s344, [#allocation9]
        $region20: #{tpu_custom_call.1} parent=11 // pred_fallthru
          _
        // Predicated region
        $region21: #{tpu_custom_call.1} parent=11 // pred_check
          %p347 = pneg %p187
        $region22: #{tpu_custom_call.1} parent=11 // pred_check_branch
          %349 = sbr.rel (%p347) target = $region24
        $region23: #{tpu_custom_call.1} parent=11 // pred_region
          %351 = vsyncadd [#allocation12], 0
          %s352 = sshll.u32 %s5, 4
          %s353 = int_to_ptr.hbm [resolvable:$true] %s352
          %s354 = sshll.u32 [#allocation11], 4
          %s355 = int_to_ptr.vmem [resolvable:$true] %s354
          %360 = dma.hbm_to_vmem [thread:$0]  %s353, 36864, %s355, [#allocation12], 384, 384, 24
        $region24: #{tpu_custom_call.1} parent=11 // pred_fallthru
          _
        // Predicated region
        $region25: #{tpu_custom_call.1} parent=11 // pred_check
          %p361 = pneg %p208
        $region26: #{tpu_custom_call.1} parent=11 // pred_check_branch
          %363 = sbr.rel (%p361) target = $region28
        $region27: #{tpu_custom_call.1} parent=11 // pred_region
          %365 = vsyncadd [#allocation12], 0
          %s367 = sshll.u32 %s6, 4
          %s368 = int_to_ptr.hbm [resolvable:$true] %s367
          %s369 = sshll.u32 [#allocation13], 4
          %s370 = int_to_ptr.vmem [resolvable:$true] %s369
          %372 = dma.hbm_to_vmem [thread:$0]  %s368, 96, %s370, [#allocation12]
        $region28: #{tpu_custom_call.1} parent=11 // pred_fallthru
          _
        // Predicated region
        $region29: #{tpu_custom_call.1} parent=11 // pred_check
          %p373 = pneg %p229
        $region30: #{tpu_custom_call.1} parent=11 // pred_check_branch
          %375 = sbr.rel (%p373) target = $region32
        $region31: #{tpu_custom_call.1} parent=11 // pred_region
          %377 = vsyncadd [#allocation15], 0
          %s379 = sshll.u32 %s7, 4
          %s380 = int_to_ptr.hbm [resolvable:$true] %s379
          %s381 = sshll.u32 [#allocation14], 4
          %s382 = int_to_ptr.vmem [resolvable:$true] %s381
          %384 = dma.hbm_to_vmem [thread:$0]  %s380, 96, %s382, [#allocation15]
        $region32: #{tpu_custom_call.1} parent=11 // pred_fallthru
          _
        // Predicated region
        $region33: #{tpu_custom_call.1} parent=11 // pred_check
          %p385 = pneg %p250
        $region34: #{tpu_custom_call.1} parent=11 // pred_check_branch
          %387 = sbr.rel (%p385) target = $region36
        $region35: #{tpu_custom_call.1} parent=11 // pred_region
          %389 = vsyncadd [#allocation15], 0
          %s391 = sshll.u32 %s8, 4
          %s392 = int_to_ptr.hbm [resolvable:$true] %s391
          %s393 = sshll.u32 [#allocation16], 4
          %s394 = int_to_ptr.vmem [resolvable:$true] %s393
          %396 = dma.hbm_to_vmem [thread:$0]  %s392, 96, %s394, [#allocation15]
        $region36: #{tpu_custom_call.1} parent=11 // pred_fallthru
          _
      $region12: #{tpu_custom_call.1} parent=5 // pred_fallthru
        _
      %p397 = scmp.lt.s32.totalorder %s32, 2
      // Predicated region
      $region37: #{tpu_custom_call.1} parent=5 // pred_check
        %p398 = pneg %p397
      $region38: #{tpu_custom_call.1} parent=5 // pred_check_branch
        %400 = sbr.rel (%p398) target = $region40
      $region39: #{tpu_custom_call.1} parent=5 // pred_region
        // Predicated region
        $region41: #{tpu_custom_call.1} parent=39 // pred_check
          %p401 = pneg %p66
        $region42: #{tpu_custom_call.1} parent=39 // pred_check_branch
          %403 = sbr.rel (%p401) target = $region44
        $region43: #{tpu_custom_call.1} parent=39 // pred_region
          %s404 = sand.u32 %s56, 1
          %s405 = scalar_lea.sflag [#allocation3], %s404
          %s406 = sand.u32 %s56, 1
          %s407 = smul.addr %s406, 48
          %s408 = scalar_lea.vmem [#allocation2], %s407
          %410 = vsyncadd %s405, 0
          %s411 = smul.addr %s40, 6
          %s412 = smul.addr %s39, 6
          %s413 = sadd.s32 %s411, %s412
          %s414 = smul.addr %s413, 8
          %s415 = scalar_lea.hbm %s0, %s414
          %s417 = sshll.u32 %s415, 4
          %s418 = int_to_ptr.hbm [resolvable:$true] %s417
          %s419 = sshll.u32 %s408, 4
          %s420 = int_to_ptr.vmem [resolvable:$true] %s419
          %422 = dma.hbm_to_vmem [thread:$0]  %s418, 768, %s420, %s405
        $region44: #{tpu_custom_call.1} parent=39 // pred_fallthru
          _
        // Predicated region
        $region45: #{tpu_custom_call.1} parent=39 // pred_check
          %p423 = pneg %p92
        $region46: #{tpu_custom_call.1} parent=39 // pred_check_branch
          %425 = sbr.rel (%p423) target = $region48
        $region47: #{tpu_custom_call.1} parent=39 // pred_region
          %s426 = sand.u32 %s32, 1
          %s427 = scalar_lea.sflag [#allocation6], %s426
          %s428 = sand.u32 %s82, 1
          %s429 = smul.addr %s428, 24
          %s430 = scalar_lea.vmem [#allocation5], %s429
          %432 = vsyncadd %s427, 0
          %s433 = smul.addr %s39, 6
          %s434 = smul.addr %s433, 4
          %s435 = scalar_lea.hbm %s1, %s434
          %s437 = sshll.u32 %s435, 4
          %s438 = int_to_ptr.hbm [resolvable:$true] %s437
          %s439 = sshll.u32 %s430, 4
          %s440 = int_to_ptr.vmem [resolvable:$true] %s439
          %442 = dma.hbm_to_vmem [thread:$0]  %s438, 384, %s440, %s427
        $region48: #{tpu_custom_call.1} parent=39 // pred_fallthru
          _
        // Predicated region
        $region49: #{tpu_custom_call.1} parent=39 // pred_check
          %p443 = pneg %p118
        $region50: #{tpu_custom_call.1} parent=39 // pred_check_branch
          %445 = sbr.rel (%p443) target = $region52
        $region51: #{tpu_custom_call.1} parent=39 // pred_region
          %s446 = sand.u32 %s32, 1
          %s447 = scalar_lea.sflag [#allocation6], %s446
          %s448 = sand.u32 %s108, 1
          %s449 = smul.addr %s448, 24
          %s450 = scalar_lea.vmem [#allocation7], %s449
          %452 = vsyncadd %s447, 0
          %s453 = smul.addr %s39, 6
          %s454 = smul.addr %s453, 4
          %s455 = scalar_lea.hbm %s2, %s454
          %s457 = sshll.u32 %s455, 4
          %s458 = int_to_ptr.hbm [resolvable:$true] %s457
          %s459 = sshll.u32 %s450, 4
          %s460 = int_to_ptr.vmem [resolvable:$true] %s459
          %462 = dma.hbm_to_vmem [thread:$0]  %s458, 384, %s460, %s447
        $region52: #{tpu_custom_call.1} parent=39 // pred_fallthru
          _
      $region40: #{tpu_custom_call.1} parent=5 // pred_fallthru
        _
      %p463 = scmp.le.s32.totalorder 1, %s32
      %p464 = scmp.lt.s32.totalorder %s32, 3
      %p465 = pnand %p463, %p464
      %p466 = pneg %p465
      // Predicated region
      $region53: #{tpu_custom_call.1} parent=5 // pred_check
        _
      $region54: #{tpu_custom_call.1} parent=5 // pred_check_branch
        %468 = sbr.rel (%p465) target = $region56
      $region55: #{tpu_custom_call.1} parent=5 // pred_region
        %s469 = ssub.s32 %s32, 1
        %s470 = sand.u32 %s59, 1
        %s471 = scalar_lea.sflag [#allocation3], %s470
        %s472 = sand.u32 %s59, 1
        %s473 = smul.addr %s472, 48
        %s474 = scalar_lea.vmem [#allocation2], %s473
        // Predicated region
        $region57: #{tpu_custom_call.1} parent=55 // pred_check
          %p475 = pneg %p72
        $region58: #{tpu_custom_call.1} parent=55 // pred_check_branch
          %477 = sbr.rel (%p475) target = $region60
        $region59: #{tpu_custom_call.1} parent=55 // pred_region
          %479 = dma.done %s471, 768
        $region60: #{tpu_custom_call.1} parent=55 // pred_fallthru
          _
        %s480 = sand.u32 %s37, 1
        %s481 = scalar_lea.sflag [#allocation6], %s480
        %s482 = sand.u32 %s85, 1
        %s483 = smul.addr %s482, 24
        %s484 = scalar_lea.vmem [#allocation5], %s483
        // Predicated region
        $region61: #{tpu_custom_call.1} parent=55 // pred_check
          %p485 = pneg %p98
        $region62: #{tpu_custom_call.1} parent=55 // pred_check_branch
          %487 = sbr.rel (%p485) target = $region64
        $region63: #{tpu_custom_call.1} parent=55 // pred_region
          %489 = dma.done %s481, 384
        $region64: #{tpu_custom_call.1} parent=55 // pred_fallthru
          _
        %s490 = sand.u32 %s37, 1
        %s491 = scalar_lea.sflag [#allocation6], %s490
        %s492 = sand.u32 %s111, 1
        %s493 = smul.addr %s492, 24
        %s494 = scalar_lea.vmem [#allocation7], %s493
        // Predicated region
        $region65: #{tpu_custom_call.1} parent=55 // pred_check
          %p495 = pneg %p124
        $region66: #{tpu_custom_call.1} parent=55 // pred_check_branch
          %497 = sbr.rel (%p495) target = $region68
        $region67: #{tpu_custom_call.1} parent=55 // pred_region
          %499 = dma.done %s491, 384
        $region68: #{tpu_custom_call.1} parent=55 // pred_fallthru
          _
        // Predicated region
        $region69: #{tpu_custom_call.1} parent=55 // pred_check
          %p500 = pneg %p145
        $region70: #{tpu_custom_call.1} parent=55 // pred_check_branch
          %502 = sbr.rel (%p500) target = $region72
        $region71: #{tpu_custom_call.1} parent=55 // pred_region
          %504 = dma.done [#allocation9], 36864
        $region72: #{tpu_custom_call.1} parent=55 // pred_fallthru
          _
        // Predicated region
        $region73: #{tpu_custom_call.1} parent=55 // pred_check
          %p505 = pneg %p166
        $region74: #{tpu_custom_call.1} parent=55 // pred_check_branch
          %507 = sbr.rel (%p505) target = $region76
        $region75: #{tpu_custom_call.1} parent=55 // pred_region
          %509 = dma.done [#allocation9], 96
        $region76: #{tpu_custom_call.1} parent=55 // pred_fallthru
          _
        // Predicated region
        $region77: #{tpu_custom_call.1} parent=55 // pred_check
          %p510 = pneg %p187
        $region78: #{tpu_custom_call.1} parent=55 // pred_check_branch
          %512 = sbr.rel (%p510) target = $region80
        $region79: #{tpu_custom_call.1} parent=55 // pred_region
          %514 = dma.done [#allocation12], 36864
        $region80: #{tpu_custom_call.1} parent=55 // pred_fallthru
          _
        // Predicated region
        $region81: #{tpu_custom_call.1} parent=55 // pred_check
          %p515 = pneg %p208
        $region82: #{tpu_custom_call.1} parent=55 // pred_check_branch
          %517 = sbr.rel (%p515) target = $region84
        $region83: #{tpu_custom_call.1} parent=55 // pred_region
          %519 = dma.done [#allocation12], 96
        $region84: #{tpu_custom_call.1} parent=55 // pred_fallthru
          _
        // Predicated region
        $region85: #{tpu_custom_call.1} parent=55 // pred_check
          %p520 = pneg %p229
        $region86: #{tpu_custom_call.1} parent=55 // pred_check_branch
          %522 = sbr.rel (%p520) target = $region88
        $region87: #{tpu_custom_call.1} parent=55 // pred_region
          %524 = dma.done [#allocation15], 96
        $region88: #{tpu_custom_call.1} parent=55 // pred_fallthru
          _
        // Predicated region
        $region89: #{tpu_custom_call.1} parent=55 // pred_check
          %p525 = pneg %p250
        $region90: #{tpu_custom_call.1} parent=55 // pred_check_branch
          %527 = sbr.rel (%p525) target = $region92
        $region91: #{tpu_custom_call.1} parent=55 // pred_region
          %529 = dma.done [#allocation15], 96
        $region92: #{tpu_custom_call.1} parent=55 // pred_fallthru
          _
        %s530 = sand.u32 %s59, 1
        %s531 = scalar_lea.sflag [#allocation3], %s530
        %s532 = sand.u32 %s59, 1
        %s533 = smul.addr %s532, 48
        %s534 = scalar_lea.vmem [#allocation2], %s533
        %p535 = pneg %p72
        %p536 = pneg %p69
        %s537 = sand.u32 %s37, 1
        %s538 = scalar_lea.sflag [#allocation6], %s537
        %s539 = sand.u32 %s85, 1
        %s540 = smul.addr %s539, 24
        %s541 = scalar_lea.vmem [#allocation5], %s540
        %p542 = pneg %p98
        %p543 = pneg %p95
        %s544 = sand.u32 %s37, 1
        %s545 = scalar_lea.sflag [#allocation6], %s544
        %s546 = sand.u32 %s111, 1
        %s547 = smul.addr %s546, 24
        %s548 = scalar_lea.vmem [#allocation7], %s547
        %p549 = pneg %p124
        %p550 = pneg %p121
        %p551 = pneg %p145
        %p552 = pneg %p142
        %p553 = pneg %p166
        %p554 = pneg %p163
        %p555 = pneg %p187
        %p556 = pneg %p184
        %p557 = pneg %p208
        %p558 = pneg %p205
        %p559 = pneg %p229
        %p560 = pneg %p226
        %p561 = pneg %p250
        %p562 = pneg %p247
        %p563 = pneg %p278
        %p564 = pneg %p275
        %s565 = sand.u32 %s265, 1
        %s566 = scalar_lea.sflag [#allocation4], %s565
        %s567 = sand.u32 %s265, 1
        %s568 = smul.addr %s567, 48
        %s569 = scalar_lea.vmem [#allocation17], %s568
        %p570 = pneg %p306
        %p571 = pneg %p303
        %s572 = sand.u32 %s293, 1
        %s573 = scalar_lea.sflag [#allocation19], %s572
        %s574 = sand.u32 %s293, 1
        %s575 = smul.addr %s574, 24
        %s576 = scalar_lea.vmem [#allocation18], %s575
        %v578 = vld [vmem:[%s474] sm:$0xff]
        %v579 = vld [vmem:[%s474 + $0x8] sm:$0xff]
        %v580 = vld [vmem:[%s474 + $0x10] sm:$0xff]
        %v581 = vld [vmem:[%s474 + $0x18] sm:$0xff]
        %v582 = vld [vmem:[%s474 + $0x20] sm:$0xff]
        %v583 = vld [vmem:[%s474 + $0x28] sm:$0xff]
        %v584 = vpack.c.bf16 %v578, %v578
        %v585 = vpack.c.bf16 %v579, %v579
        %v586 = vpack.c.bf16 %v580, %v580
        %v587 = vpack.c.bf16 %v581, %v581
        %v588 = vpack.c.bf16 %v582, %v582
        %v589 = vpack.c.bf16 %v583, %v583
        %v590 = vld [vmem:[#allocation8] sm:$0xff]
        %v591 = vld [vmem:[#allocation8 + $0x8] sm:$0xff]
        %v592 = vld [vmem:[#allocation8 + $0x10] sm:$0xff]
        %v593 = vld [vmem:[#allocation8 + $0x18] sm:$0xff]
        %v594 = vld [vmem:[#allocation8 + $0x20] sm:$0xff]
        %v595 = vld [vmem:[#allocation8 + $0x28] sm:$0xff]
        %v596 = vld [vmem:[#allocation8 + $0x30] sm:$0xff]
        %v597 = vld [vmem:[#allocation8 + $0x38] sm:$0xff]
        %v598 = vld [vmem:[#allocation8 + $0x40] sm:$0xff]
        %v599 = vld [vmem:[#allocation8 + $0x48] sm:$0xff]
        %v600 = vld [vmem:[#allocation8 + $0x50] sm:$0xff]
        %v601 = vld [vmem:[#allocation8 + $0x58] sm:$0xff]
        %v602 = vld [vmem:[#allocation8 + $0x60] sm:$0xff]
        %v603 = vld [vmem:[#allocation8 + $0x68] sm:$0xff]
        %v604 = vld [vmem:[#allocation8 + $0x70] sm:$0xff]
        %v605 = vld [vmem:[#allocation8 + $0x78] sm:$0xff]
        %v606 = vld [vmem:[#allocation8 + $0x80] sm:$0xff]
        %v607 = vld [vmem:[#allocation8 + $0x88] sm:$0xff]
        %v608 = vld [vmem:[#allocation8 + $0x90] sm:$0xff]
        %v609 = vld [vmem:[#allocation8 + $0x98] sm:$0xff]
        %v610 = vld [vmem:[#allocation8 + $0xa0] sm:$0xff]
        %v611 = vld [vmem:[#allocation8 + $0xa8] sm:$0xff]
        %v612 = vld [vmem:[#allocation8 + $0xb0] sm:$0xff]
        %v613 = vld [vmem:[#allocation8 + $0xb8] sm:$0xff]
        %v614 = vld [vmem:[#allocation8 + $0xc0] sm:$0xff]
        %v615 = vld [vmem:[#allocation8 + $0xc8] sm:$0xff]
        %v616 = vld [vmem:[#allocation8 + $0xd0] sm:$0xff]
        %v617 = vld [vmem:[#allocation8 + $0xd8] sm:$0xff]
        %v618 = vld [vmem:[#allocation8 + $0xe0] sm:$0xff]
        %v619 = vld [vmem:[#allocation8 + $0xe8] sm:$0xff]
        %v620 = vld [vmem:[#allocation8 + $0xf0] sm:$0xff]
        %v621 = vld [vmem:[#allocation8 + $0xf8] sm:$0xff]
        %v622 = vld [vmem:[#allocation8 + $0x100] sm:$0xff]
        %v623 = vld [vmem:[#allocation8 + $0x108] sm:$0xff]
        %v624 = vld [vmem:[#allocation8 + $0x110] sm:$0xff]
        %v625 = vld [vmem:[#allocation8 + $0x118] sm:$0xff]
        %v626 = vld [vmem:[#allocation8 + $0x120] sm:$0xff]
        %v627 = vld [vmem:[#allocation8 + $0x128] sm:$0xff]
        %v628 = vld [vmem:[#allocation8 + $0x130] sm:$0xff]
        %v629 = vld [vmem:[#allocation8 + $0x138] sm:$0xff]
        %v630 = vld [vmem:[#allocation8 + $0x140] sm:$0xff]
        %v631 = vld [vmem:[#allocation8 + $0x148] sm:$0xff]
        %v632 = vld [vmem:[#allocation8 + $0x150] sm:$0xff]
        %v633 = vld [vmem:[#allocation8 + $0x158] sm:$0xff]
        %v634 = vld [vmem:[#allocation8 + $0x160] sm:$0xff]
        %v635 = vld [vmem:[#allocation8 + $0x168] sm:$0xff]
        %v636 = vld [vmem:[#allocation8 + $0x170] sm:$0xff]
        %v637 = vld [vmem:[#allocation8 + $0x178] sm:$0xff]
        %v638 = vld [vmem:[#allocation8 + $0x180] sm:$0xff]
        %v639 = vld [vmem:[#allocation8 + $0x188] sm:$0xff]
        %v640 = vld [vmem:[#allocation8 + $0x190] sm:$0xff]
        %v641 = vld [vmem:[#allocation8 + $0x198] sm:$0xff]
        %v642 = vld [vmem:[#allocation8 + $0x1a0] sm:$0xff]
        %v643 = vld [vmem:[#allocation8 + $0x1a8] sm:$0xff]
        %v644 = vld [vmem:[#allocation8 + $0x1b0] sm:$0xff]
        %v645 = vld [vmem:[#allocation8 + $0x1b8] sm:$0xff]
        %v646 = vld [vmem:[#allocation8 + $0x1c0] sm:$0xff]
        %v647 = vld [vmem:[#allocation8 + $0x1c8] sm:$0xff]
        %v648 = vld [vmem:[#allocation8 + $0x1d0] sm:$0xff]
        %v649 = vld [vmem:[#allocation8 + $0x1d8] sm:$0xff]
        %v650 = vld [vmem:[#allocation8 + $0x1e0] sm:$0xff]
        %v651 = vld [vmem:[#allocation8 + $0x1e8] sm:$0xff]
        %v652 = vld [vmem:[#allocation8 + $0x1f0] sm:$0xff]
        %v653 = vld [vmem:[#allocation8 + $0x1f8] sm:$0xff]
        %v654 = vld [vmem:[#allocation8 + $0x200] sm:$0xff]
        %v655 = vld [vmem:[#allocation8 + $0x208] sm:$0xff]
        %v656 = vld [vmem:[#allocation8 + $0x210] sm:$0xff]
        %v657 = vld [vmem:[#allocation8 + $0x218] sm:$0xff]
        %v658 = vld [vmem:[#allocation8 + $0x220] sm:$0xff]
        %v659 = vld [vmem:[#allocation8 + $0x228] sm:$0xff]
        %v660 = vld [vmem:[#allocation8 + $0x230] sm:$0xff]
        %v661 = vld [vmem:[#allocation8 + $0x238] sm:$0xff]
        %v662 = vld [vmem:[#allocation8 + $0x240] sm:$0xff]
        %v663 = vld [vmem:[#allocation8 + $0x248] sm:$0xff]
        %v664 = vld [vmem:[#allocation8 + $0x250] sm:$0xff]
        %v665 = vld [vmem:[#allocation8 + $0x258] sm:$0xff]
        %v666 = vld [vmem:[#allocation8 + $0x260] sm:$0xff]
        %v667 = vld [vmem:[#allocation8 + $0x268] sm:$0xff]
        %v668 = vld [vmem:[#allocation8 + $0x270] sm:$0xff]
        %v669 = vld [vmem:[#allocation8 + $0x278] sm:$0xff]
        %v670 = vld [vmem:[#allocation8 + $0x280] sm:$0xff]
        %v671 = vld [vmem:[#allocation8 + $0x288] sm:$0xff]
        %v672 = vld [vmem:[#allocation8 + $0x290] sm:$0xff]
        %v673 = vld [vmem:[#allocation8 + $0x298] sm:$0xff]
        %v674 = vld [vmem:[#allocation8 + $0x2a0] sm:$0xff]
        %v675 = vld [vmem:[#allocation8 + $0x2a8] sm:$0xff]
        %v676 = vld [vmem:[#allocation8 + $0x2b0] sm:$0xff]
        %v677 = vld [vmem:[#allocation8 + $0x2b8] sm:$0xff]
        %v678 = vld [vmem:[#allocation8 + $0x2c0] sm:$0xff]
        %v679 = vld [vmem:[#allocation8 + $0x2c8] sm:$0xff]
        %v680 = vld [vmem:[#allocation8 + $0x2d0] sm:$0xff]
        %v681 = vld [vmem:[#allocation8 + $0x2d8] sm:$0xff]
        %v682 = vld [vmem:[#allocation8 + $0x2e0] sm:$0xff]
        %v683 = vld [vmem:[#allocation8 + $0x2e8] sm:$0xff]
        %v684 = vld [vmem:[#allocation8 + $0x2f0] sm:$0xff]
        %v685 = vld [vmem:[#allocation8 + $0x2f8] sm:$0xff]
        %v686 = vld [vmem:[#allocation8 + $0x300] sm:$0xff]
        %v687 = vld [vmem:[#allocation8 + $0x308] sm:$0xff]
        %v688 = vld [vmem:[#allocation8 + $0x310] sm:$0xff]
        %v689 = vld [vmem:[#allocation8 + $0x318] sm:$0xff]
        %v690 = vld [vmem:[#allocation8 + $0x320] sm:$0xff]
        %v691 = vld [vmem:[#allocation8 + $0x328] sm:$0xff]
        %v692 = vld [vmem:[#allocation8 + $0x330] sm:$0xff]
        %v693 = vld [vmem:[#allocation8 + $0x338] sm:$0xff]
        %v694 = vld [vmem:[#allocation8 + $0x340] sm:$0xff]
        %v695 = vld [vmem:[#allocation8 + $0x348] sm:$0xff]
        %v696 = vld [vmem:[#allocation8 + $0x350] sm:$0xff]
        %v697 = vld [vmem:[#allocation8 + $0x358] sm:$0xff]
        %v698 = vld [vmem:[#allocation8 + $0x360] sm:$0xff]
        %v699 = vld [vmem:[#allocation8 + $0x368] sm:$0xff]
        %v700 = vld [vmem:[#allocation8 + $0x370] sm:$0xff]
        %v701 = vld [vmem:[#allocation8 + $0x378] sm:$0xff]
        %v702 = vld [vmem:[#allocation8 + $0x380] sm:$0xff]
        %v703 = vld [vmem:[#allocation8 + $0x388] sm:$0xff]
        %v704 = vld [vmem:[#allocation8 + $0x390] sm:$0xff]
        %v705 = vld [vmem:[#allocation8 + $0x398] sm:$0xff]
        %v706 = vld [vmem:[#allocation8 + $0x3a0] sm:$0xff]
        %v707 = vld [vmem:[#allocation8 + $0x3a8] sm:$0xff]
        %v708 = vld [vmem:[#allocation8 + $0x3b0] sm:$0xff]
        %v709 = vld [vmem:[#allocation8 + $0x3b8] sm:$0xff]
        %v710 = vld [vmem:[#allocation8 + $0x3c0] sm:$0xff]
        %v711 = vld [vmem:[#allocation8 + $0x3c8] sm:$0xff]
        %v712 = vld [vmem:[#allocation8 + $0x3d0] sm:$0xff]
        %v713 = vld [vmem:[#allocation8 + $0x3d8] sm:$0xff]
        %v714 = vld [vmem:[#allocation8 + $0x3e0] sm:$0xff]
        %v715 = vld [vmem:[#allocation8 + $0x3e8] sm:$0xff]
        %v716 = vld [vmem:[#allocation8 + $0x3f0] sm:$0xff]
        %v717 = vld [vmem:[#allocation8 + $0x3f8] sm:$0xff]
        %v718 = vld [vmem:[#allocation8 + $0x400] sm:$0xff]
        %v719 = vld [vmem:[#allocation8 + $0x408] sm:$0xff]
        %v720 = vld [vmem:[#allocation8 + $0x410] sm:$0xff]
        %v721 = vld [vmem:[#allocation8 + $0x418] sm:$0xff]
        %v722 = vld [vmem:[#allocation8 + $0x420] sm:$0xff]
        %v723 = vld [vmem:[#allocation8 + $0x428] sm:$0xff]
        %v724 = vld [vmem:[#allocation8 + $0x430] sm:$0xff]
        %v725 = vld [vmem:[#allocation8 + $0x438] sm:$0xff]
        %v726 = vld [vmem:[#allocation8 + $0x440] sm:$0xff]
        %v727 = vld [vmem:[#allocation8 + $0x448] sm:$0xff]
        %v728 = vld [vmem:[#allocation8 + $0x450] sm:$0xff]
        %v729 = vld [vmem:[#allocation8 + $0x458] sm:$0xff]
        %v730 = vld [vmem:[#allocation8 + $0x460] sm:$0xff]
        %v731 = vld [vmem:[#allocation8 + $0x468] sm:$0xff]
        %v732 = vld [vmem:[#allocation8 + $0x470] sm:$0xff]
        %v733 = vld [vmem:[#allocation8 + $0x478] sm:$0xff]
        %v734 = vld [vmem:[#allocation8 + $0x480] sm:$0xff]
        %v735 = vld [vmem:[#allocation8 + $0x488] sm:$0xff]
        %v736 = vld [vmem:[#allocation8 + $0x490] sm:$0xff]
        %v737 = vld [vmem:[#allocation8 + $0x498] sm:$0xff]
        %v738 = vld [vmem:[#allocation8 + $0x4a0] sm:$0xff]
        %v739 = vld [vmem:[#allocation8 + $0x4a8] sm:$0xff]
        %v740 = vld [vmem:[#allocation8 + $0x4b0] sm:$0xff]
        %v741 = vld [vmem:[#allocation8 + $0x4b8] sm:$0xff]
        %v742 = vld [vmem:[#allocation8 + $0x4c0] sm:$0xff]
        %v743 = vld [vmem:[#allocation8 + $0x4c8] sm:$0xff]
        %v744 = vld [vmem:[#allocation8 + $0x4d0] sm:$0xff]
        %v745 = vld [vmem:[#allocation8 + $0x4d8] sm:$0xff]
        %v746 = vld [vmem:[#allocation8 + $0x4e0] sm:$0xff]
        %v747 = vld [vmem:[#allocation8 + $0x4e8] sm:$0xff]
        %v748 = vld [vmem:[#allocation8 + $0x4f0] sm:$0xff]
        %v749 = vld [vmem:[#allocation8 + $0x4f8] sm:$0xff]
        %v750 = vld [vmem:[#allocation8 + $0x500] sm:$0xff]
        %v751 = vld [vmem:[#allocation8 + $0x508] sm:$0xff]
        %v752 = vld [vmem:[#allocation8 + $0x510] sm:$0xff]
        %v753 = vld [vmem:[#allocation8 + $0x518] sm:$0xff]
        %v754 = vld [vmem:[#allocation8 + $0x520] sm:$0xff]
        %v755 = vld [vmem:[#allocation8 + $0x528] sm:$0xff]
        %v756 = vld [vmem:[#allocation8 + $0x530] sm:$0xff]
        %v757 = vld [vmem:[#allocation8 + $0x538] sm:$0xff]
        %v758 = vld [vmem:[#allocation8 + $0x540] sm:$0xff]
        %v759 = vld [vmem:[#allocation8 + $0x548] sm:$0xff]
        %v760 = vld [vmem:[#allocation8 + $0x550] sm:$0xff]
        %v761 = vld [vmem:[#allocation8 + $0x558] sm:$0xff]
        %v762 = vld [vmem:[#allocation8 + $0x560] sm:$0xff]
        %v763 = vld [vmem:[#allocation8 + $0x568] sm:$0xff]
        %v764 = vld [vmem:[#allocation8 + $0x570] sm:$0xff]
        %v765 = vld [vmem:[#allocation8 + $0x578] sm:$0xff]
        %v766 = vld [vmem:[#allocation8 + $0x580] sm:$0xff]
        %v767 = vld [vmem:[#allocation8 + $0x588] sm:$0xff]
        %v768 = vld [vmem:[#allocation8 + $0x590] sm:$0xff]
        %v769 = vld [vmem:[#allocation8 + $0x598] sm:$0xff]
        %v770 = vld [vmem:[#allocation8 + $0x5a0] sm:$0xff]
        %v771 = vld [vmem:[#allocation8 + $0x5a8] sm:$0xff]
        %v772 = vld [vmem:[#allocation8 + $0x5b0] sm:$0xff]
        %v773 = vld [vmem:[#allocation8 + $0x5b8] sm:$0xff]
        %v774 = vld [vmem:[#allocation8 + $0x5c0] sm:$0xff]
        %v775 = vld [vmem:[#allocation8 + $0x5c8] sm:$0xff]
        %v776 = vld [vmem:[#allocation8 + $0x5d0] sm:$0xff]
        %v777 = vld [vmem:[#allocation8 + $0x5d8] sm:$0xff]
        %v778 = vld [vmem:[#allocation8 + $0x5e0] sm:$0xff]
        %v779 = vld [vmem:[#allocation8 + $0x5e8] sm:$0xff]
        %v780 = vld [vmem:[#allocation8 + $0x5f0] sm:$0xff]
        %v781 = vld [vmem:[#allocation8 + $0x5f8] sm:$0xff]
        %v782 = vld [vmem:[#allocation8 + $0x600] sm:$0xff]
        %v783 = vld [vmem:[#allocation8 + $0x608] sm:$0xff]
        %v784 = vld [vmem:[#allocation8 + $0x610] sm:$0xff]
        %v785 = vld [vmem:[#allocation8 + $0x618] sm:$0xff]
        %v786 = vld [vmem:[#allocation8 + $0x620] sm:$0xff]
        %v787 = vld [vmem:[#allocation8 + $0x628] sm:$0xff]
        %v788 = vld [vmem:[#allocation8 + $0x630] sm:$0xff]
        %v789 = vld [vmem:[#allocation8 + $0x638] sm:$0xff]
        %v790 = vld [vmem:[#allocation8 + $0x640] sm:$0xff]
        %v791 = vld [vmem:[#allocation8 + $0x648] sm:$0xff]
        %v792 = vld [vmem:[#allocation8 + $0x650] sm:$0xff]
        %v793 = vld [vmem:[#allocation8 + $0x658] sm:$0xff]
        %v794 = vld [vmem:[#allocation8 + $0x660] sm:$0xff]
        %v795 = vld [vmem:[#allocation8 + $0x668] sm:$0xff]
        %v796 = vld [vmem:[#allocation8 + $0x670] sm:$0xff]
        %v797 = vld [vmem:[#allocation8 + $0x678] sm:$0xff]
        %v798 = vld [vmem:[#allocation8 + $0x680] sm:$0xff]
        %v799 = vld [vmem:[#allocation8 + $0x688] sm:$0xff]
        %v800 = vld [vmem:[#allocation8 + $0x690] sm:$0xff]
        %v801 = vld [vmem:[#allocation8 + $0x698] sm:$0xff]
        %v802 = vld [vmem:[#allocation8 + $0x6a0] sm:$0xff]
        %v803 = vld [vmem:[#allocation8 + $0x6a8] sm:$0xff]
        %v804 = vld [vmem:[#allocation8 + $0x6b0] sm:$0xff]
        %v805 = vld [vmem:[#allocation8 + $0x6b8] sm:$0xff]
        %v806 = vld [vmem:[#allocation8 + $0x6c0] sm:$0xff]
        %v807 = vld [vmem:[#allocation8 + $0x6c8] sm:$0xff]
        %v808 = vld [vmem:[#allocation8 + $0x6d0] sm:$0xff]
        %v809 = vld [vmem:[#allocation8 + $0x6d8] sm:$0xff]
        %v810 = vld [vmem:[#allocation8 + $0x6e0] sm:$0xff]
        %v811 = vld [vmem:[#allocation8 + $0x6e8] sm:$0xff]
        %v812 = vld [vmem:[#allocation8 + $0x6f0] sm:$0xff]
        %v813 = vld [vmem:[#allocation8 + $0x6f8] sm:$0xff]
        %v814 = vld [vmem:[#allocation8 + $0x700] sm:$0xff]
        %v815 = vld [vmem:[#allocation8 + $0x708] sm:$0xff]
        %v816 = vld [vmem:[#allocation8 + $0x710] sm:$0xff]
        %v817 = vld [vmem:[#allocation8 + $0x718] sm:$0xff]
        %v818 = vld [vmem:[#allocation8 + $0x720] sm:$0xff]
        %v819 = vld [vmem:[#allocation8 + $0x728] sm:$0xff]
        %v820 = vld [vmem:[#allocation8 + $0x730] sm:$0xff]
        %v821 = vld [vmem:[#allocation8 + $0x738] sm:$0xff]
        %v822 = vld [vmem:[#allocation8 + $0x740] sm:$0xff]
        %v823 = vld [vmem:[#allocation8 + $0x748] sm:$0xff]
        %v824 = vld [vmem:[#allocation8 + $0x750] sm:$0xff]
        %v825 = vld [vmem:[#allocation8 + $0x758] sm:$0xff]
        %v826 = vld [vmem:[#allocation8 + $0x760] sm:$0xff]
        %v827 = vld [vmem:[#allocation8 + $0x768] sm:$0xff]
        %v828 = vld [vmem:[#allocation8 + $0x770] sm:$0xff]
        %v829 = vld [vmem:[#allocation8 + $0x778] sm:$0xff]
        %v830 = vld [vmem:[#allocation8 + $0x780] sm:$0xff]
        %v831 = vld [vmem:[#allocation8 + $0x788] sm:$0xff]
        %v832 = vld [vmem:[#allocation8 + $0x790] sm:$0xff]
        %v833 = vld [vmem:[#allocation8 + $0x798] sm:$0xff]
        %v834 = vld [vmem:[#allocation8 + $0x7a0] sm:$0xff]
        %v835 = vld [vmem:[#allocation8 + $0x7a8] sm:$0xff]
        %v836 = vld [vmem:[#allocation8 + $0x7b0] sm:$0xff]
        %v837 = vld [vmem:[#allocation8 + $0x7b8] sm:$0xff]
        %v838 = vld [vmem:[#allocation8 + $0x7c0] sm:$0xff]
        %v839 = vld [vmem:[#allocation8 + $0x7c8] sm:$0xff]
        %v840 = vld [vmem:[#allocation8 + $0x7d0] sm:$0xff]
        %v841 = vld [vmem:[#allocation8 + $0x7d8] sm:$0xff]
        %v842 = vld [vmem:[#allocation8 + $0x7e0] sm:$0xff]
        %v843 = vld [vmem:[#allocation8 + $0x7e8] sm:$0xff]
        %v844 = vld [vmem:[#allocation8 + $0x7f0] sm:$0xff]
        %v845 = vld [vmem:[#allocation8 + $0x7f8] sm:$0xff]
        %v846 = vld [vmem:[#allocation8 + $0x800] sm:$0xff]
        %v847 = vld [vmem:[#allocation8 + $0x808] sm:$0xff]
        %v848 = vld [vmem:[#allocation8 + $0x810] sm:$0xff]
        %v849 = vld [vmem:[#allocation8 + $0x818] sm:$0xff]
        %v850 = vld [vmem:[#allocation8 + $0x820] sm:$0xff]
        %v851 = vld [vmem:[#allocation8 + $0x828] sm:$0xff]
        %v852 = vld [vmem:[#allocation8 + $0x830] sm:$0xff]
        %v853 = vld [vmem:[#allocation8 + $0x838] sm:$0xff]
        %v854 = vld [vmem:[#allocation8 + $0x840] sm:$0xff]
        %v855 = vld [vmem:[#allocation8 + $0x848] sm:$0xff]
        %v856 = vld [vmem:[#allocation8 + $0x850] sm:$0xff]
        %v857 = vld [vmem:[#allocation8 + $0x858] sm:$0xff]
        %v858 = vld [vmem:[#allocation8 + $0x860] sm:$0xff]
        %v859 = vld [vmem:[#allocation8 + $0x868] sm:$0xff]
        %v860 = vld [vmem:[#allocation8 + $0x870] sm:$0xff]
        %v861 = vld [vmem:[#allocation8 + $0x878] sm:$0xff]
        %v862 = vld [vmem:[#allocation8 + $0x880] sm:$0xff]
        %v863 = vld [vmem:[#allocation8 + $0x888] sm:$0xff]
        %v864 = vld [vmem:[#allocation8 + $0x890] sm:$0xff]
        %v865 = vld [vmem:[#allocation8 + $0x898] sm:$0xff]
        %v866 = vld [vmem:[#allocation8 + $0x8a0] sm:$0xff]
        %v867 = vld [vmem:[#allocation8 + $0x8a8] sm:$0xff]
        %v868 = vld [vmem:[#allocation8 + $0x8b0] sm:$0xff]
        %v869 = vld [vmem:[#allocation8 + $0x8b8] sm:$0xff]
        %v870 = vld [vmem:[#allocation8 + $0x8c0] sm:$0xff]
        %v871 = vld [vmem:[#allocation8 + $0x8c8] sm:$0xff]
        %v872 = vld [vmem:[#allocation8 + $0x8d0] sm:$0xff]
        %v873 = vld [vmem:[#allocation8 + $0x8d8] sm:$0xff]
        %v874 = vld [vmem:[#allocation8 + $0x8e0] sm:$0xff]
        %v875 = vld [vmem:[#allocation8 + $0x8e8] sm:$0xff]
        %v876 = vld [vmem:[#allocation8 + $0x8f0] sm:$0xff]
        %v877 = vld [vmem:[#allocation8 + $0x8f8] sm:$0xff]
        %v878 = vld [vmem:[#allocation10] sm:$0x3f]
        %v880 = vperm.slane %v878, 0
        %v881 = vperm.slane %v878, 1
        %v882 = vperm.slane %v878, 2
        %v883 = vperm.slane %v878, 3
        %v884 = vperm.slane %v878, 4
        %v885 = vperm.slane %v878, 5
        %v1180 = vunpack.c.l.b16 %v590
        %v1181 = vunpack.c.h.b16 %v590
        %v1182 = vunpack.c.l.b16 %v591
        %v1183 = vunpack.c.h.b16 %v591
        %v1184 = vunpack.c.l.b16 %v592
        %v1185 = vunpack.c.h.b16 %v592
        %v1186 = vunpack.c.l.b16 %v593
        %v1187 = vunpack.c.h.b16 %v593
        %v1188 = vunpack.c.l.b16 %v594
        %v1189 = vunpack.c.h.b16 %v594
        %v1190 = vunpack.c.l.b16 %v595
        %v1191 = vunpack.c.h.b16 %v595
        %v1192 = vunpack.c.l.b16 %v596
        %v1193 = vunpack.c.h.b16 %v596
        %v1194 = vunpack.c.l.b16 %v597
        %v1195 = vunpack.c.h.b16 %v597
        %v1196 = vunpack.c.l.b16 %v598
        %v1197 = vunpack.c.h.b16 %v598
        %v1198 = vunpack.c.l.b16 %v599
        %v1199 = vunpack.c.h.b16 %v599
        %v1200 = vunpack.c.l.b16 %v600
        %v1201 = vunpack.c.h.b16 %v600
        %v1202 = vunpack.c.l.b16 %v601
        %v1203 = vunpack.c.h.b16 %v601
        %v1204 = vunpack.c.l.b16 %v602
        %v1205 = vunpack.c.h.b16 %v602
        %v1206 = vunpack.c.l.b16 %v603
        %v1207 = vunpack.c.h.b16 %v603
        %v1208 = vunpack.c.l.b16 %v604
        %v1209 = vunpack.c.h.b16 %v604
        %v1210 = vunpack.c.l.b16 %v605
        %v1211 = vunpack.c.h.b16 %v605
        %v1212 = vunpack.c.l.b16 %v606
        %v1213 = vunpack.c.h.b16 %v606
        %v1214 = vunpack.c.l.b16 %v607
        %v1215 = vunpack.c.h.b16 %v607
        %v1216 = vunpack.c.l.b16 %v608
        %v1217 = vunpack.c.h.b16 %v608
        %v1218 = vunpack.c.l.b16 %v609
        %v1219 = vunpack.c.h.b16 %v609
        %v1220 = vunpack.c.l.b16 %v610
        %v1221 = vunpack.c.h.b16 %v610
        %v1222 = vunpack.c.l.b16 %v611
        %v1223 = vunpack.c.h.b16 %v611
        %v1224 = vunpack.c.l.b16 %v612
        %v1225 = vunpack.c.h.b16 %v612
        %v1226 = vunpack.c.l.b16 %v613
        %v1227 = vunpack.c.h.b16 %v613
        %v1228 = vunpack.c.l.b16 %v614
        %v1229 = vunpack.c.h.b16 %v614
        %v1230 = vunpack.c.l.b16 %v615
        %v1231 = vunpack.c.h.b16 %v615
        %v1232 = vunpack.c.l.b16 %v616
        %v1233 = vunpack.c.h.b16 %v616
        %v1234 = vunpack.c.l.b16 %v617
        %v1235 = vunpack.c.h.b16 %v617
        %v1236 = vunpack.c.l.b16 %v618
        %v1237 = vunpack.c.h.b16 %v618
        %v1238 = vunpack.c.l.b16 %v619
        %v1239 = vunpack.c.h.b16 %v619
        %v1240 = vunpack.c.l.b16 %v620
        %v1241 = vunpack.c.h.b16 %v620
        %v1242 = vunpack.c.l.b16 %v621
        %v1243 = vunpack.c.h.b16 %v621
        %v1244 = vunpack.c.l.b16 %v622
        %v1245 = vunpack.c.h.b16 %v622
        %v1246 = vunpack.c.l.b16 %v623
        %v1247 = vunpack.c.h.b16 %v623
        %v1248 = vunpack.c.l.b16 %v624
        %v1249 = vunpack.c.h.b16 %v624
        %v1250 = vunpack.c.l.b16 %v625
        %v1251 = vunpack.c.h.b16 %v625
        %v1252 = vunpack.c.l.b16 %v626
        %v1253 = vunpack.c.h.b16 %v626
        %v1254 = vunpack.c.l.b16 %v627
        %v1255 = vunpack.c.h.b16 %v627
        %v1256 = vunpack.c.l.b16 %v628
        %v1257 = vunpack.c.h.b16 %v628
        %v1258 = vunpack.c.l.b16 %v629
        %v1259 = vunpack.c.h.b16 %v629
        %v1260 = vunpack.c.l.b16 %v630
        %v1261 = vunpack.c.h.b16 %v630
        %v1262 = vunpack.c.l.b16 %v631
        %v1263 = vunpack.c.h.b16 %v631
        %v1264 = vunpack.c.l.b16 %v632
        %v1265 = vunpack.c.h.b16 %v632
        %v1266 = vunpack.c.l.b16 %v633
        %v1267 = vunpack.c.h.b16 %v633
        %v1268 = vunpack.c.l.b16 %v634
        %v1269 = vunpack.c.h.b16 %v634
        %v1270 = vunpack.c.l.b16 %v635
        %v1271 = vunpack.c.h.b16 %v635
        %v1272 = vunpack.c.l.b16 %v636
        %v1273 = vunpack.c.h.b16 %v636
        %v1274 = vunpack.c.l.b16 %v637
        %v1275 = vunpack.c.h.b16 %v637
        %v1276 = vunpack.c.l.b16 %v638
        %v1277 = vunpack.c.h.b16 %v638
        %v1278 = vunpack.c.l.b16 %v639
        %v1279 = vunpack.c.h.b16 %v639
        %v1280 = vunpack.c.l.b16 %v640
        %v1281 = vunpack.c.h.b16 %v640
        %v1282 = vunpack.c.l.b16 %v641
        %v1283 = vunpack.c.h.b16 %v641
        %v1284 = vunpack.c.l.b16 %v642
        %v1285 = vunpack.c.h.b16 %v642
        %v1286 = vunpack.c.l.b16 %v643
        %v1287 = vunpack.c.h.b16 %v643
        %v1288 = vunpack.c.l.b16 %v644
        %v1289 = vunpack.c.h.b16 %v644
        %v1290 = vunpack.c.l.b16 %v645
        %v1291 = vunpack.c.h.b16 %v645
        %v1292 = vunpack.c.l.b16 %v646
        %v1293 = vunpack.c.h.b16 %v646
        %v1294 = vunpack.c.l.b16 %v647
        %v1295 = vunpack.c.h.b16 %v647
        %v1296 = vunpack.c.l.b16 %v648
        %v1297 = vunpack.c.h.b16 %v648
        %v1298 = vunpack.c.l.b16 %v649
        %v1299 = vunpack.c.h.b16 %v649
        %v1300 = vunpack.c.l.b16 %v650
        %v1301 = vunpack.c.h.b16 %v650
        %v1302 = vunpack.c.l.b16 %v651
        %v1303 = vunpack.c.h.b16 %v651
        %v1304 = vunpack.c.l.b16 %v652
        %v1305 = vunpack.c.h.b16 %v652
        %v1306 = vunpack.c.l.b16 %v653
        %v1307 = vunpack.c.h.b16 %v653
        %v1308 = vunpack.c.l.b16 %v654
        %v1309 = vunpack.c.h.b16 %v654
        %v1310 = vunpack.c.l.b16 %v655
        %v1311 = vunpack.c.h.b16 %v655
        %v1312 = vunpack.c.l.b16 %v656
        %v1313 = vunpack.c.h.b16 %v656
        %v1314 = vunpack.c.l.b16 %v657
        %v1315 = vunpack.c.h.b16 %v657
        %v1316 = vunpack.c.l.b16 %v658
        %v1317 = vunpack.c.h.b16 %v658
        %v1318 = vunpack.c.l.b16 %v659
        %v1319 = vunpack.c.h.b16 %v659
        %v1320 = vunpack.c.l.b16 %v660
        %v1321 = vunpack.c.h.b16 %v660
        %v1322 = vunpack.c.l.b16 %v661
        %v1323 = vunpack.c.h.b16 %v661
        %v1324 = vunpack.c.l.b16 %v662
        %v1325 = vunpack.c.h.b16 %v662
        %v1326 = vunpack.c.l.b16 %v663
        %v1327 = vunpack.c.h.b16 %v663
        %v1328 = vunpack.c.l.b16 %v664
        %v1329 = vunpack.c.h.b16 %v664
        %v1330 = vunpack.c.l.b16 %v665
        %v1331 = vunpack.c.h.b16 %v665
        %v1332 = vunpack.c.l.b16 %v666
        %v1333 = vunpack.c.h.b16 %v666
        %v1334 = vunpack.c.l.b16 %v667
        %v1335 = vunpack.c.h.b16 %v667
        %v1336 = vunpack.c.l.b16 %v668
        %v1337 = vunpack.c.h.b16 %v668
        %v1338 = vunpack.c.l.b16 %v669
        %v1339 = vunpack.c.h.b16 %v669
        %v1340 = vunpack.c.l.b16 %v670
        %v1341 = vunpack.c.h.b16 %v670
        %v1342 = vunpack.c.l.b16 %v671
        %v1343 = vunpack.c.h.b16 %v671
        %v1344 = vunpack.c.l.b16 %v672
        %v1345 = vunpack.c.h.b16 %v672
        %v1346 = vunpack.c.l.b16 %v673
        %v1347 = vunpack.c.h.b16 %v673
        %v1348 = vunpack.c.l.b16 %v674
        %v1349 = vunpack.c.h.b16 %v674
        %v1350 = vunpack.c.l.b16 %v675
        %v1351 = vunpack.c.h.b16 %v675
        %v1352 = vunpack.c.l.b16 %v676
        %v1353 = vunpack.c.h.b16 %v676
        %v1354 = vunpack.c.l.b16 %v677
        %v1355 = vunpack.c.h.b16 %v677
        %v1356 = vunpack.c.l.b16 %v678
        %v1357 = vunpack.c.h.b16 %v678
        %v1358 = vunpack.c.l.b16 %v679
        %v1359 = vunpack.c.h.b16 %v679
        %v1360 = vunpack.c.l.b16 %v680
        %v1361 = vunpack.c.h.b16 %v680
        %v1362 = vunpack.c.l.b16 %v681
        %v1363 = vunpack.c.h.b16 %v681
        %v1364 = vunpack.c.l.b16 %v682
        %v1365 = vunpack.c.h.b16 %v682
        %v1366 = vunpack.c.l.b16 %v683
        %v1367 = vunpack.c.h.b16 %v683
        %v1368 = vunpack.c.l.b16 %v684
        %v1369 = vunpack.c.h.b16 %v684
        %v1370 = vunpack.c.l.b16 %v685
        %v1371 = vunpack.c.h.b16 %v685
        %v1372 = vunpack.c.l.b16 %v686
        %v1373 = vunpack.c.h.b16 %v686
        %v1374 = vunpack.c.l.b16 %v687
        %v1375 = vunpack.c.h.b16 %v687
        %v1376 = vunpack.c.l.b16 %v688
        %v1377 = vunpack.c.h.b16 %v688
        %v1378 = vunpack.c.l.b16 %v689
        %v1379 = vunpack.c.h.b16 %v689
        %v1380 = vunpack.c.l.b16 %v690
        %v1381 = vunpack.c.h.b16 %v690
        %v1382 = vunpack.c.l.b16 %v691
        %v1383 = vunpack.c.h.b16 %v691
        %v1384 = vunpack.c.l.b16 %v692
        %v1385 = vunpack.c.h.b16 %v692
        %v1386 = vunpack.c.l.b16 %v693
        %v1387 = vunpack.c.h.b16 %v693
        %v1388 = vunpack.c.l.b16 %v694
        %v1389 = vunpack.c.h.b16 %v694
        %v1390 = vunpack.c.l.b16 %v695
        %v1391 = vunpack.c.h.b16 %v695
        %v1392 = vunpack.c.l.b16 %v696
        %v1393 = vunpack.c.h.b16 %v696
        %v1394 = vunpack.c.l.b16 %v697
        %v1395 = vunpack.c.h.b16 %v697
        %v1396 = vunpack.c.l.b16 %v698
        %v1397 = vunpack.c.h.b16 %v698
        %v1398 = vunpack.c.l.b16 %v699
        %v1399 = vunpack.c.h.b16 %v699
        %v1400 = vunpack.c.l.b16 %v700
        %v1401 = vunpack.c.h.b16 %v700
        %v1402 = vunpack.c.l.b16 %v701
        %v1403 = vunpack.c.h.b16 %v701
        %v1404 = vunpack.c.l.b16 %v702
        %v1405 = vunpack.c.h.b16 %v702
        %v1406 = vunpack.c.l.b16 %v703
        %v1407 = vunpack.c.h.b16 %v703
        %v1408 = vunpack.c.l.b16 %v704
        %v1409 = vunpack.c.h.b16 %v704
        %v1410 = vunpack.c.l.b16 %v705
        %v1411 = vunpack.c.h.b16 %v705
        %v1412 = vunpack.c.l.b16 %v706
        %v1413 = vunpack.c.h.b16 %v706
        %v1414 = vunpack.c.l.b16 %v707
        %v1415 = vunpack.c.h.b16 %v707
        %v1416 = vunpack.c.l.b16 %v708
        %v1417 = vunpack.c.h.b16 %v708
        %v1418 = vunpack.c.l.b16 %v709
        %v1419 = vunpack.c.h.b16 %v709
        %v1420 = vunpack.c.l.b16 %v710
        %v1421 = vunpack.c.h.b16 %v710
        %v1422 = vunpack.c.l.b16 %v711
        %v1423 = vunpack.c.h.b16 %v711
        %v1424 = vunpack.c.l.b16 %v712
        %v1425 = vunpack.c.h.b16 %v712
        %v1426 = vunpack.c.l.b16 %v713
        %v1427 = vunpack.c.h.b16 %v713
        %v1428 = vunpack.c.l.b16 %v714
        %v1429 = vunpack.c.h.b16 %v714
        %v1430 = vunpack.c.l.b16 %v715
        %v1431 = vunpack.c.h.b16 %v715
        %v1432 = vunpack.c.l.b16 %v716
        %v1433 = vunpack.c.h.b16 %v716
        %v1434 = vunpack.c.l.b16 %v717
        %v1435 = vunpack.c.h.b16 %v717
        %v1436 = vunpack.c.l.b16 %v718
        %v1437 = vunpack.c.h.b16 %v718
        %v1438 = vunpack.c.l.b16 %v719
        %v1439 = vunpack.c.h.b16 %v719
        %v1440 = vunpack.c.l.b16 %v720
        %v1441 = vunpack.c.h.b16 %v720
        %v1442 = vunpack.c.l.b16 %v721
        %v1443 = vunpack.c.h.b16 %v721
        %v1444 = vunpack.c.l.b16 %v722
        %v1445 = vunpack.c.h.b16 %v722
        %v1446 = vunpack.c.l.b16 %v723
        %v1447 = vunpack.c.h.b16 %v723
        %v1448 = vunpack.c.l.b16 %v724
        %v1449 = vunpack.c.h.b16 %v724
        %v1450 = vunpack.c.l.b16 %v725
        %v1451 = vunpack.c.h.b16 %v725
        %v1452 = vunpack.c.l.b16 %v726
        %v1453 = vunpack.c.h.b16 %v726
        %v1454 = vunpack.c.l.b16 %v727
        %v1455 = vunpack.c.h.b16 %v727
        %v1456 = vunpack.c.l.b16 %v728
        %v1457 = vunpack.c.h.b16 %v728
        %v1458 = vunpack.c.l.b16 %v729
        %v1459 = vunpack.c.h.b16 %v729
        %v1460 = vunpack.c.l.b16 %v730
        %v1461 = vunpack.c.h.b16 %v730
        %v1462 = vunpack.c.l.b16 %v731
        %v1463 = vunpack.c.h.b16 %v731
        %v1464 = vunpack.c.l.b16 %v732
        %v1465 = vunpack.c.h.b16 %v732
        %v1466 = vunpack.c.l.b16 %v733
        %v1467 = vunpack.c.h.b16 %v733
        %v1468 = vunpack.c.l.b16 %v734
        %v1469 = vunpack.c.h.b16 %v734
        %v1470 = vunpack.c.l.b16 %v735
        %v1471 = vunpack.c.h.b16 %v735
        %v1472 = vunpack.c.l.b16 %v736
        %v1473 = vunpack.c.h.b16 %v736
        %v1474 = vunpack.c.l.b16 %v737
        %v1475 = vunpack.c.h.b16 %v737
        %v1476 = vunpack.c.l.b16 %v738
        %v1477 = vunpack.c.h.b16 %v738
        %v1478 = vunpack.c.l.b16 %v739
        %v1479 = vunpack.c.h.b16 %v739
        %v1480 = vunpack.c.l.b16 %v740
        %v1481 = vunpack.c.h.b16 %v740
        %v1482 = vunpack.c.l.b16 %v741
        %v1483 = vunpack.c.h.b16 %v741
        %v1484 = vunpack.c.l.b16 %v742
        %v1485 = vunpack.c.h.b16 %v742
        %v1486 = vunpack.c.l.b16 %v743
        %v1487 = vunpack.c.h.b16 %v743
        %v1488 = vunpack.c.l.b16 %v744
        %v1489 = vunpack.c.h.b16 %v744
        %v1490 = vunpack.c.l.b16 %v745
        %v1491 = vunpack.c.h.b16 %v745
        %v1492 = vunpack.c.l.b16 %v746
        %v1493 = vunpack.c.h.b16 %v746
        %v1494 = vunpack.c.l.b16 %v747
        %v1495 = vunpack.c.h.b16 %v747
        %v1496 = vunpack.c.l.b16 %v748
        %v1497 = vunpack.c.h.b16 %v748
        %v1498 = vunpack.c.l.b16 %v749
        %v1499 = vunpack.c.h.b16 %v749
        %v1500 = vunpack.c.l.b16 %v750
        %v1501 = vunpack.c.h.b16 %v750
        %v1502 = vunpack.c.l.b16 %v751
        %v1503 = vunpack.c.h.b16 %v751
        %v1504 = vunpack.c.l.b16 %v752
        %v1505 = vunpack.c.h.b16 %v752
        %v1506 = vunpack.c.l.b16 %v753
        %v1507 = vunpack.c.h.b16 %v753
        %v1508 = vunpack.c.l.b16 %v754
        %v1509 = vunpack.c.h.b16 %v754
        %v1510 = vunpack.c.l.b16 %v755
        %v1511 = vunpack.c.h.b16 %v755
        %v1512 = vunpack.c.l.b16 %v756
        %v1513 = vunpack.c.h.b16 %v756
        %v1514 = vunpack.c.l.b16 %v757
        %v1515 = vunpack.c.h.b16 %v757
        %v1516 = vunpack.c.l.b16 %v758
        %v1517 = vunpack.c.h.b16 %v758
        %v1518 = vunpack.c.l.b16 %v759
        %v1519 = vunpack.c.h.b16 %v759
        %v1520 = vunpack.c.l.b16 %v760
        %v1521 = vunpack.c.h.b16 %v760
        %v1522 = vunpack.c.l.b16 %v761
        %v1523 = vunpack.c.h.b16 %v761
        %v1524 = vunpack.c.l.b16 %v762
        %v1525 = vunpack.c.h.b16 %v762
        %v1526 = vunpack.c.l.b16 %v763
        %v1527 = vunpack.c.h.b16 %v763
        %v1528 = vunpack.c.l.b16 %v764
        %v1529 = vunpack.c.h.b16 %v764
        %v1530 = vunpack.c.l.b16 %v765
        %v1531 = vunpack.c.h.b16 %v765
        %v1532 = vunpack.c.l.b16 %v766
        %v1533 = vunpack.c.h.b16 %v766
        %v1534 = vunpack.c.l.b16 %v767
        %v1535 = vunpack.c.h.b16 %v767
        %v1536 = vunpack.c.l.b16 %v768
        %v1537 = vunpack.c.h.b16 %v768
        %v1538 = vunpack.c.l.b16 %v769
        %v1539 = vunpack.c.h.b16 %v769
        %v1540 = vunpack.c.l.b16 %v770
        %v1541 = vunpack.c.h.b16 %v770
        %v1542 = vunpack.c.l.b16 %v771
        %v1543 = vunpack.c.h.b16 %v771
        %v1544 = vunpack.c.l.b16 %v772
        %v1545 = vunpack.c.h.b16 %v772
        %v1546 = vunpack.c.l.b16 %v773
        %v1547 = vunpack.c.h.b16 %v773
        %v1548 = vunpack.c.l.b16 %v774
        %v1549 = vunpack.c.h.b16 %v774
        %v1550 = vunpack.c.l.b16 %v775
        %v1551 = vunpack.c.h.b16 %v775
        %v1552 = vunpack.c.l.b16 %v776
        %v1553 = vunpack.c.h.b16 %v776
        %v1554 = vunpack.c.l.b16 %v777
        %v1555 = vunpack.c.h.b16 %v777
        %v1556 = vunpack.c.l.b16 %v778
        %v1557 = vunpack.c.h.b16 %v778
        %v1558 = vunpack.c.l.b16 %v779
        %v1559 = vunpack.c.h.b16 %v779
        %v1560 = vunpack.c.l.b16 %v780
        %v1561 = vunpack.c.h.b16 %v780
        %v1562 = vunpack.c.l.b16 %v781
        %v1563 = vunpack.c.h.b16 %v781
        %v1564 = vunpack.c.l.b16 %v782
        %v1565 = vunpack.c.h.b16 %v782
        %v1566 = vunpack.c.l.b16 %v783
        %v1567 = vunpack.c.h.b16 %v783
        %v1568 = vunpack.c.l.b16 %v784
        %v1569 = vunpack.c.h.b16 %v784
        %v1570 = vunpack.c.l.b16 %v785
        %v1571 = vunpack.c.h.b16 %v785
        %v1572 = vunpack.c.l.b16 %v786
        %v1573 = vunpack.c.h.b16 %v786
        %v1574 = vunpack.c.l.b16 %v787
        %v1575 = vunpack.c.h.b16 %v787
        %v1576 = vunpack.c.l.b16 %v788
        %v1577 = vunpack.c.h.b16 %v788
        %v1578 = vunpack.c.l.b16 %v789
        %v1579 = vunpack.c.h.b16 %v789
        %v1580 = vunpack.c.l.b16 %v790
        %v1581 = vunpack.c.h.b16 %v790
        %v1582 = vunpack.c.l.b16 %v791
        %v1583 = vunpack.c.h.b16 %v791
        %v1584 = vunpack.c.l.b16 %v792
        %v1585 = vunpack.c.h.b16 %v792
        %v1586 = vunpack.c.l.b16 %v793
        %v1587 = vunpack.c.h.b16 %v793
        %v1588 = vunpack.c.l.b16 %v794
        %v1589 = vunpack.c.h.b16 %v794
        %v1590 = vunpack.c.l.b16 %v795
        %v1591 = vunpack.c.h.b16 %v795
        %v1592 = vunpack.c.l.b16 %v796
        %v1593 = vunpack.c.h.b16 %v796
        %v1594 = vunpack.c.l.b16 %v797
        %v1595 = vunpack.c.h.b16 %v797
        %v1596 = vunpack.c.l.b16 %v798
        %v1597 = vunpack.c.h.b16 %v798
        %v1598 = vunpack.c.l.b16 %v799
        %v1599 = vunpack.c.h.b16 %v799
        %v1600 = vunpack.c.l.b16 %v800
        %v1601 = vunpack.c.h.b16 %v800
        %v1602 = vunpack.c.l.b16 %v801
        %v1603 = vunpack.c.h.b16 %v801
        %v1604 = vunpack.c.l.b16 %v802
        %v1605 = vunpack.c.h.b16 %v802
        %v1606 = vunpack.c.l.b16 %v803
        %v1607 = vunpack.c.h.b16 %v803
        %v1608 = vunpack.c.l.b16 %v804
        %v1609 = vunpack.c.h.b16 %v804
        %v1610 = vunpack.c.l.b16 %v805
        %v1611 = vunpack.c.h.b16 %v805
        %v1612 = vunpack.c.l.b16 %v806
        %v1613 = vunpack.c.h.b16 %v806
        %v1614 = vunpack.c.l.b16 %v807
        %v1615 = vunpack.c.h.b16 %v807
        %v1616 = vunpack.c.l.b16 %v808
        %v1617 = vunpack.c.h.b16 %v808
        %v1618 = vunpack.c.l.b16 %v809
        %v1619 = vunpack.c.h.b16 %v809
        %v1620 = vunpack.c.l.b16 %v810
        %v1621 = vunpack.c.h.b16 %v810
        %v1622 = vunpack.c.l.b16 %v811
        %v1623 = vunpack.c.h.b16 %v811
        %v1624 = vunpack.c.l.b16 %v812
        %v1625 = vunpack.c.h.b16 %v812
        %v1626 = vunpack.c.l.b16 %v813
        %v1627 = vunpack.c.h.b16 %v813
        %v1628 = vunpack.c.l.b16 %v814
        %v1629 = vunpack.c.h.b16 %v814
        %v1630 = vunpack.c.l.b16 %v815
        %v1631 = vunpack.c.h.b16 %v815
        %v1632 = vunpack.c.l.b16 %v816
        %v1633 = vunpack.c.h.b16 %v816
        %v1634 = vunpack.c.l.b16 %v817
        %v1635 = vunpack.c.h.b16 %v817
        %v1636 = vunpack.c.l.b16 %v818
        %v1637 = vunpack.c.h.b16 %v818
        %v1638 = vunpack.c.l.b16 %v819
        %v1639 = vunpack.c.h.b16 %v819
        %v1640 = vunpack.c.l.b16 %v820
        %v1641 = vunpack.c.h.b16 %v820
        %v1642 = vunpack.c.l.b16 %v821
        %v1643 = vunpack.c.h.b16 %v821
        %v1644 = vunpack.c.l.b16 %v822
        %v1645 = vunpack.c.h.b16 %v822
        %v1646 = vunpack.c.l.b16 %v823
        %v1647 = vunpack.c.h.b16 %v823
        %v1648 = vunpack.c.l.b16 %v824
        %v1649 = vunpack.c.h.b16 %v824
        %v1650 = vunpack.c.l.b16 %v825
        %v1651 = vunpack.c.h.b16 %v825
        %v1652 = vunpack.c.l.b16 %v826
        %v1653 = vunpack.c.h.b16 %v826
        %v1654 = vunpack.c.l.b16 %v827
        %v1655 = vunpack.c.h.b16 %v827
        %v1656 = vunpack.c.l.b16 %v828
        %v1657 = vunpack.c.h.b16 %v828
        %v1658 = vunpack.c.l.b16 %v829
        %v1659 = vunpack.c.h.b16 %v829
        %v1660 = vunpack.c.l.b16 %v830
        %v1661 = vunpack.c.h.b16 %v830
        %v1662 = vunpack.c.l.b16 %v831
        %v1663 = vunpack.c.h.b16 %v831
        %v1664 = vunpack.c.l.b16 %v832
        %v1665 = vunpack.c.h.b16 %v832
        %v1666 = vunpack.c.l.b16 %v833
        %v1667 = vunpack.c.h.b16 %v833
        %v1668 = vunpack.c.l.b16 %v834
        %v1669 = vunpack.c.h.b16 %v834
        %v1670 = vunpack.c.l.b16 %v835
        %v1671 = vunpack.c.h.b16 %v835
        %v1672 = vunpack.c.l.b16 %v836
        %v1673 = vunpack.c.h.b16 %v836
        %v1674 = vunpack.c.l.b16 %v837
        %v1675 = vunpack.c.h.b16 %v837
        %v1676 = vunpack.c.l.b16 %v838
        %v1677 = vunpack.c.h.b16 %v838
        %v1678 = vunpack.c.l.b16 %v839
        %v1679 = vunpack.c.h.b16 %v839
        %v1680 = vunpack.c.l.b16 %v840
        %v1681 = vunpack.c.h.b16 %v840
        %v1682 = vunpack.c.l.b16 %v841
        %v1683 = vunpack.c.h.b16 %v841
        %v1684 = vunpack.c.l.b16 %v842
        %v1685 = vunpack.c.h.b16 %v842
        %v1686 = vunpack.c.l.b16 %v843
        %v1687 = vunpack.c.h.b16 %v843
        %v1688 = vunpack.c.l.b16 %v844
        %v1689 = vunpack.c.h.b16 %v844
        %v1690 = vunpack.c.l.b16 %v845
        %v1691 = vunpack.c.h.b16 %v845
        %v1692 = vunpack.c.l.b16 %v846
        %v1693 = vunpack.c.h.b16 %v846
        %v1694 = vunpack.c.l.b16 %v847
        %v1695 = vunpack.c.h.b16 %v847
        %v1696 = vunpack.c.l.b16 %v848
        %v1697 = vunpack.c.h.b16 %v848
        %v1698 = vunpack.c.l.b16 %v849
        %v1699 = vunpack.c.h.b16 %v849
        %v1700 = vunpack.c.l.b16 %v850
        %v1701 = vunpack.c.h.b16 %v850
        %v1702 = vunpack.c.l.b16 %v851
        %v1703 = vunpack.c.h.b16 %v851
        %v1704 = vunpack.c.l.b16 %v852
        %v1705 = vunpack.c.h.b16 %v852
        %v1706 = vunpack.c.l.b16 %v853
        %v1707 = vunpack.c.h.b16 %v853
        %v1708 = vunpack.c.l.b16 %v854
        %v1709 = vunpack.c.h.b16 %v854
        %v1710 = vunpack.c.l.b16 %v855
        %v1711 = vunpack.c.h.b16 %v855
        %v1712 = vunpack.c.l.b16 %v856
        %v1713 = vunpack.c.h.b16 %v856
        %v1714 = vunpack.c.l.b16 %v857
        %v1715 = vunpack.c.h.b16 %v857
        %v1716 = vunpack.c.l.b16 %v858
        %v1717 = vunpack.c.h.b16 %v858
        %v1718 = vunpack.c.l.b16 %v859
        %v1719 = vunpack.c.h.b16 %v859
        %v1720 = vunpack.c.l.b16 %v860
        %v1721 = vunpack.c.h.b16 %v860
        %v1722 = vunpack.c.l.b16 %v861
        %v1723 = vunpack.c.h.b16 %v861
        %v1724 = vunpack.c.l.b16 %v862
        %v1725 = vunpack.c.h.b16 %v862
        %v1726 = vunpack.c.l.b16 %v863
        %v1727 = vunpack.c.h.b16 %v863
        %v1728 = vunpack.c.l.b16 %v864
        %v1729 = vunpack.c.h.b16 %v864
        %v1730 = vunpack.c.l.b16 %v865
        %v1731 = vunpack.c.h.b16 %v865
        %v1732 = vunpack.c.l.b16 %v866
        %v1733 = vunpack.c.h.b16 %v866
        %v1734 = vunpack.c.l.b16 %v867
        %v1735 = vunpack.c.h.b16 %v867
        %v1736 = vunpack.c.l.b16 %v868
        %v1737 = vunpack.c.h.b16 %v868
        %v1738 = vunpack.c.l.b16 %v869
        %v1739 = vunpack.c.h.b16 %v869
        %v1740 = vunpack.c.l.b16 %v870
        %v1741 = vunpack.c.h.b16 %v870
        %v1742 = vunpack.c.l.b16 %v871
        %v1743 = vunpack.c.h.b16 %v871
        %v1744 = vunpack.c.l.b16 %v872
        %v1745 = vunpack.c.h.b16 %v872
        %v1746 = vunpack.c.l.b16 %v873
        %v1747 = vunpack.c.h.b16 %v873
        %v1748 = vunpack.c.l.b16 %v874
        %v1749 = vunpack.c.h.b16 %v874
        %v1750 = vunpack.c.l.b16 %v875
        %v1751 = vunpack.c.h.b16 %v875
        %v1752 = vunpack.c.l.b16 %v876
        %v1753 = vunpack.c.h.b16 %v876
        %v1754 = vunpack.c.l.b16 %v877
        %v1755 = vunpack.c.h.b16 %v877
        %v1756 = vpack.c.b16 %v1186, %v1180
        %v1757 = vpack.c.b16 %v1187, %v1181
        %v1758 = vpack.c.b16 %v1188, %v1182
        %v1759 = vpack.c.b16 %v1189, %v1183
        %v1760 = vpack.c.b16 %v1190, %v1184
        %v1761 = vpack.c.b16 %v1191, %v1185
        %v1762 = vpack.c.b16 %v1198, %v1192
        %v1763 = vpack.c.b16 %v1199, %v1193
        %v1764 = vpack.c.b16 %v1200, %v1194
        %v1765 = vpack.c.b16 %v1201, %v1195
        %v1766 = vpack.c.b16 %v1202, %v1196
        %v1767 = vpack.c.b16 %v1203, %v1197
        %v1768 = vpack.c.b16 %v1210, %v1204
        %v1769 = vpack.c.b16 %v1211, %v1205
        %v1770 = vpack.c.b16 %v1212, %v1206
        %v1771 = vpack.c.b16 %v1213, %v1207
        %v1772 = vpack.c.b16 %v1214, %v1208
        %v1773 = vpack.c.b16 %v1215, %v1209
        %v1774 = vpack.c.b16 %v1222, %v1216
        %v1775 = vpack.c.b16 %v1223, %v1217
        %v1776 = vpack.c.b16 %v1224, %v1218
        %v1777 = vpack.c.b16 %v1225, %v1219
        %v1778 = vpack.c.b16 %v1226, %v1220
        %v1779 = vpack.c.b16 %v1227, %v1221
        %v1780 = vpack.c.b16 %v1234, %v1228
        %v1781 = vpack.c.b16 %v1235, %v1229
        %v1782 = vpack.c.b16 %v1236, %v1230
        %v1783 = vpack.c.b16 %v1237, %v1231
        %v1784 = vpack.c.b16 %v1238, %v1232
        %v1785 = vpack.c.b16 %v1239, %v1233
        %v1786 = vpack.c.b16 %v1246, %v1240
        %v1787 = vpack.c.b16 %v1247, %v1241
        %v1788 = vpack.c.b16 %v1248, %v1242
        %v1789 = vpack.c.b16 %v1249, %v1243
        %v1790 = vpack.c.b16 %v1250, %v1244
        %v1791 = vpack.c.b16 %v1251, %v1245
        %v1792 = vpack.c.b16 %v1258, %v1252
        %v1793 = vpack.c.b16 %v1259, %v1253
        %v1794 = vpack.c.b16 %v1260, %v1254
        %v1795 = vpack.c.b16 %v1261, %v1255
        %v1796 = vpack.c.b16 %v1262, %v1256
        %v1797 = vpack.c.b16 %v1263, %v1257
        %v1798 = vpack.c.b16 %v1270, %v1264
        %v1799 = vpack.c.b16 %v1271, %v1265
        %v1800 = vpack.c.b16 %v1272, %v1266
        %v1801 = vpack.c.b16 %v1273, %v1267
        %v1802 = vpack.c.b16 %v1274, %v1268
        %v1803 = vpack.c.b16 %v1275, %v1269
        %v1804 = vpack.c.b16 %v1282, %v1276
        %v1805 = vpack.c.b16 %v1283, %v1277
        %v1806 = vpack.c.b16 %v1284, %v1278
        %v1807 = vpack.c.b16 %v1285, %v1279
        %v1808 = vpack.c.b16 %v1286, %v1280
        %v1809 = vpack.c.b16 %v1287, %v1281
        %v1810 = vpack.c.b16 %v1294, %v1288
        %v1811 = vpack.c.b16 %v1295, %v1289
        %v1812 = vpack.c.b16 %v1296, %v1290
        %v1813 = vpack.c.b16 %v1297, %v1291
        %v1814 = vpack.c.b16 %v1298, %v1292
        %v1815 = vpack.c.b16 %v1299, %v1293
        %v1816 = vpack.c.b16 %v1306, %v1300
        %v1817 = vpack.c.b16 %v1307, %v1301
        %v1818 = vpack.c.b16 %v1308, %v1302
        %v1819 = vpack.c.b16 %v1309, %v1303
        %v1820 = vpack.c.b16 %v1310, %v1304
        %v1821 = vpack.c.b16 %v1311, %v1305
        %v1822 = vpack.c.b16 %v1318, %v1312
        %v1823 = vpack.c.b16 %v1319, %v1313
        %v1824 = vpack.c.b16 %v1320, %v1314
        %v1825 = vpack.c.b16 %v1321, %v1315
        %v1826 = vpack.c.b16 %v1322, %v1316
        %v1827 = vpack.c.b16 %v1323, %v1317
        %v1828 = vpack.c.b16 %v1330, %v1324
        %v1829 = vpack.c.b16 %v1331, %v1325
        %v1830 = vpack.c.b16 %v1332, %v1326
        %v1831 = vpack.c.b16 %v1333, %v1327
        %v1832 = vpack.c.b16 %v1334, %v1328
        %v1833 = vpack.c.b16 %v1335, %v1329
        %v1834 = vpack.c.b16 %v1342, %v1336
        %v1835 = vpack.c.b16 %v1343, %v1337
        %v1836 = vpack.c.b16 %v1344, %v1338
        %v1837 = vpack.c.b16 %v1345, %v1339
        %v1838 = vpack.c.b16 %v1346, %v1340
        %v1839 = vpack.c.b16 %v1347, %v1341
        %v1840 = vpack.c.b16 %v1354, %v1348
        %v1841 = vpack.c.b16 %v1355, %v1349
        %v1842 = vpack.c.b16 %v1356, %v1350
        %v1843 = vpack.c.b16 %v1357, %v1351
        %v1844 = vpack.c.b16 %v1358, %v1352
        %v1845 = vpack.c.b16 %v1359, %v1353
        %v1846 = vpack.c.b16 %v1366, %v1360
        %v1847 = vpack.c.b16 %v1367, %v1361
        %v1848 = vpack.c.b16 %v1368, %v1362
        %v1849 = vpack.c.b16 %v1369, %v1363
        %v1850 = vpack.c.b16 %v1370, %v1364
        %v1851 = vpack.c.b16 %v1371, %v1365
        %v1852 = vpack.c.b16 %v1378, %v1372
        %v1853 = vpack.c.b16 %v1379, %v1373
        %v1854 = vpack.c.b16 %v1380, %v1374
        %v1855 = vpack.c.b16 %v1381, %v1375
        %v1856 = vpack.c.b16 %v1382, %v1376
        %v1857 = vpack.c.b16 %v1383, %v1377
        %v1858 = vpack.c.b16 %v1390, %v1384
        %v1859 = vpack.c.b16 %v1391, %v1385
        %v1860 = vpack.c.b16 %v1392, %v1386
        %v1861 = vpack.c.b16 %v1393, %v1387
        %v1862 = vpack.c.b16 %v1394, %v1388
        %v1863 = vpack.c.b16 %v1395, %v1389
        %v1864 = vpack.c.b16 %v1402, %v1396
        %v1865 = vpack.c.b16 %v1403, %v1397
        %v1866 = vpack.c.b16 %v1404, %v1398
        %v1867 = vpack.c.b16 %v1405, %v1399
        %v1868 = vpack.c.b16 %v1406, %v1400
        %v1869 = vpack.c.b16 %v1407, %v1401
        %v1870 = vpack.c.b16 %v1414, %v1408
        %v1871 = vpack.c.b16 %v1415, %v1409
        %v1872 = vpack.c.b16 %v1416, %v1410
        %v1873 = vpack.c.b16 %v1417, %v1411
        %v1874 = vpack.c.b16 %v1418, %v1412
        %v1875 = vpack.c.b16 %v1419, %v1413
        %v1876 = vpack.c.b16 %v1426, %v1420
        %v1877 = vpack.c.b16 %v1427, %v1421
        %v1878 = vpack.c.b16 %v1428, %v1422
        %v1879 = vpack.c.b16 %v1429, %v1423
        %v1880 = vpack.c.b16 %v1430, %v1424
        %v1881 = vpack.c.b16 %v1431, %v1425
        %v1882 = vpack.c.b16 %v1438, %v1432
        %v1883 = vpack.c.b16 %v1439, %v1433
        %v1884 = vpack.c.b16 %v1440, %v1434
        %v1885 = vpack.c.b16 %v1441, %v1435
        %v1886 = vpack.c.b16 %v1442, %v1436
        %v1887 = vpack.c.b16 %v1443, %v1437
        %v1888 = vpack.c.b16 %v1450, %v1444
        %v1889 = vpack.c.b16 %v1451, %v1445
        %v1890 = vpack.c.b16 %v1452, %v1446
        %v1891 = vpack.c.b16 %v1453, %v1447
        %v1892 = vpack.c.b16 %v1454, %v1448
        %v1893 = vpack.c.b16 %v1455, %v1449
        %v1894 = vpack.c.b16 %v1462, %v1456
        %v1895 = vpack.c.b16 %v1463, %v1457
        %v1896 = vpack.c.b16 %v1464, %v1458
        %v1897 = vpack.c.b16 %v1465, %v1459
        %v1898 = vpack.c.b16 %v1466, %v1460
        %v1899 = vpack.c.b16 %v1467, %v1461
        %v1900 = vpack.c.b16 %v1474, %v1468
        %v1901 = vpack.c.b16 %v1475, %v1469
        %v1902 = vpack.c.b16 %v1476, %v1470
        %v1903 = vpack.c.b16 %v1477, %v1471
        %v1904 = vpack.c.b16 %v1478, %v1472
        %v1905 = vpack.c.b16 %v1479, %v1473
        %v1906 = vpack.c.b16 %v1486, %v1480
        %v1907 = vpack.c.b16 %v1487, %v1481
        %v1908 = vpack.c.b16 %v1488, %v1482
        %v1909 = vpack.c.b16 %v1489, %v1483
        %v1910 = vpack.c.b16 %v1490, %v1484
        %v1911 = vpack.c.b16 %v1491, %v1485
        %v1912 = vpack.c.b16 %v1498, %v1492
        %v1913 = vpack.c.b16 %v1499, %v1493
        %v1914 = vpack.c.b16 %v1500, %v1494
        %v1915 = vpack.c.b16 %v1501, %v1495
        %v1916 = vpack.c.b16 %v1502, %v1496
        %v1917 = vpack.c.b16 %v1503, %v1497
        %v1918 = vpack.c.b16 %v1510, %v1504
        %v1919 = vpack.c.b16 %v1511, %v1505
        %v1920 = vpack.c.b16 %v1512, %v1506
        %v1921 = vpack.c.b16 %v1513, %v1507
        %v1922 = vpack.c.b16 %v1514, %v1508
        %v1923 = vpack.c.b16 %v1515, %v1509
        %v1924 = vpack.c.b16 %v1522, %v1516
        %v1925 = vpack.c.b16 %v1523, %v1517
        %v1926 = vpack.c.b16 %v1524, %v1518
        %v1927 = vpack.c.b16 %v1525, %v1519
        %v1928 = vpack.c.b16 %v1526, %v1520
        %v1929 = vpack.c.b16 %v1527, %v1521
        %v1930 = vpack.c.b16 %v1534, %v1528
        %v1931 = vpack.c.b16 %v1535, %v1529
        %v1932 = vpack.c.b16 %v1536, %v1530
        %v1933 = vpack.c.b16 %v1537, %v1531
        %v1934 = vpack.c.b16 %v1538, %v1532
        %v1935 = vpack.c.b16 %v1539, %v1533
        %v1936 = vpack.c.b16 %v1546, %v1540
        %v1937 = vpack.c.b16 %v1547, %v1541
        %v1938 = vpack.c.b16 %v1548, %v1542
        %v1939 = vpack.c.b16 %v1549, %v1543
        %v1940 = vpack.c.b16 %v1550, %v1544
        %v1941 = vpack.c.b16 %v1551, %v1545
        %v1942 = vpack.c.b16 %v1558, %v1552
        %v1943 = vpack.c.b16 %v1559, %v1553
        %v1944 = vpack.c.b16 %v1560, %v1554
        %v1945 = vpack.c.b16 %v1561, %v1555
        %v1946 = vpack.c.b16 %v1562, %v1556
        %v1947 = vpack.c.b16 %v1563, %v1557
        %v1948 = vpack.c.b16 %v1570, %v1564
        %v1949 = vpack.c.b16 %v1571, %v1565
        %v1950 = vpack.c.b16 %v1572, %v1566
        %v1951 = vpack.c.b16 %v1573, %v1567
        %v1952 = vpack.c.b16 %v1574, %v1568
        %v1953 = vpack.c.b16 %v1575, %v1569
        %v1954 = vpack.c.b16 %v1582, %v1576
        %v1955 = vpack.c.b16 %v1583, %v1577
        %v1956 = vpack.c.b16 %v1584, %v1578
        %v1957 = vpack.c.b16 %v1585, %v1579
        %v1958 = vpack.c.b16 %v1586, %v1580
        %v1959 = vpack.c.b16 %v1587, %v1581
        %v1960 = vpack.c.b16 %v1594, %v1588
        %v1961 = vpack.c.b16 %v1595, %v1589
        %v1962 = vpack.c.b16 %v1596, %v1590
        %v1963 = vpack.c.b16 %v1597, %v1591
        %v1964 = vpack.c.b16 %v1598, %v1592
        %v1965 = vpack.c.b16 %v1599, %v1593
        %v1966 = vpack.c.b16 %v1606, %v1600
        %v1967 = vpack.c.b16 %v1607, %v1601
        %v1968 = vpack.c.b16 %v1608, %v1602
        %v1969 = vpack.c.b16 %v1609, %v1603
        %v1970 = vpack.c.b16 %v1610, %v1604
        %v1971 = vpack.c.b16 %v1611, %v1605
        %v1972 = vpack.c.b16 %v1618, %v1612
        %v1973 = vpack.c.b16 %v1619, %v1613
        %v1974 = vpack.c.b16 %v1620, %v1614
        %v1975 = vpack.c.b16 %v1621, %v1615
        %v1976 = vpack.c.b16 %v1622, %v1616
        %v1977 = vpack.c.b16 %v1623, %v1617
        %v1978 = vpack.c.b16 %v1630, %v1624
        %v1979 = vpack.c.b16 %v1631, %v1625
        %v1980 = vpack.c.b16 %v1632, %v1626
        %v1981 = vpack.c.b16 %v1633, %v1627
        %v1982 = vpack.c.b16 %v1634, %v1628
        %v1983 = vpack.c.b16 %v1635, %v1629
        %v1984 = vpack.c.b16 %v1642, %v1636
        %v1985 = vpack.c.b16 %v1643, %v1637
        %v1986 = vpack.c.b16 %v1644, %v1638
        %v1987 = vpack.c.b16 %v1645, %v1639
        %v1988 = vpack.c.b16 %v1646, %v1640
        %v1989 = vpack.c.b16 %v1647, %v1641
        %v1990 = vpack.c.b16 %v1654, %v1648
        %v1991 = vpack.c.b16 %v1655, %v1649
        %v1992 = vpack.c.b16 %v1656, %v1650
        %v1993 = vpack.c.b16 %v1657, %v1651
        %v1994 = vpack.c.b16 %v1658, %v1652
        %v1995 = vpack.c.b16 %v1659, %v1653
        %v1996 = vpack.c.b16 %v1666, %v1660
        %v1997 = vpack.c.b16 %v1667, %v1661
        %v1998 = vpack.c.b16 %v1668, %v1662
        %v1999 = vpack.c.b16 %v1669, %v1663
        %v2000 = vpack.c.b16 %v1670, %v1664
        %v2001 = vpack.c.b16 %v1671, %v1665
        %v2002 = vpack.c.b16 %v1678, %v1672
        %v2003 = vpack.c.b16 %v1679, %v1673
        %v2004 = vpack.c.b16 %v1680, %v1674
        %v2005 = vpack.c.b16 %v1681, %v1675
        %v2006 = vpack.c.b16 %v1682, %v1676
        %v2007 = vpack.c.b16 %v1683, %v1677
        %v2008 = vpack.c.b16 %v1690, %v1684
        %v2009 = vpack.c.b16 %v1691, %v1685
        %v2010 = vpack.c.b16 %v1692, %v1686
        %v2011 = vpack.c.b16 %v1693, %v1687
        %v2012 = vpack.c.b16 %v1694, %v1688
        %v2013 = vpack.c.b16 %v1695, %v1689
        %v2014 = vpack.c.b16 %v1702, %v1696
        %v2015 = vpack.c.b16 %v1703, %v1697
        %v2016 = vpack.c.b16 %v1704, %v1698
        %v2017 = vpack.c.b16 %v1705, %v1699
        %v2018 = vpack.c.b16 %v1706, %v1700
        %v2019 = vpack.c.b16 %v1707, %v1701
        %v2020 = vpack.c.b16 %v1714, %v1708
        %v2021 = vpack.c.b16 %v1715, %v1709
        %v2022 = vpack.c.b16 %v1716, %v1710
        %v2023 = vpack.c.b16 %v1717, %v1711
        %v2024 = vpack.c.b16 %v1718, %v1712
        %v2025 = vpack.c.b16 %v1719, %v1713
        %v2026 = vpack.c.b16 %v1726, %v1720
        %v2027 = vpack.c.b16 %v1727, %v1721
        %v2028 = vpack.c.b16 %v1728, %v1722
        %v2029 = vpack.c.b16 %v1729, %v1723
        %v2030 = vpack.c.b16 %v1730, %v1724
        %v2031 = vpack.c.b16 %v1731, %v1725
        %v2032 = vpack.c.b16 %v1738, %v1732
        %v2033 = vpack.c.b16 %v1739, %v1733
        %v2034 = vpack.c.b16 %v1740, %v1734
        %v2035 = vpack.c.b16 %v1741, %v1735
        %v2036 = vpack.c.b16 %v1742, %v1736
        %v2037 = vpack.c.b16 %v1743, %v1737
        %v2038 = vpack.c.b16 %v1750, %v1744
        %v2039 = vpack.c.b16 %v1751, %v1745
        %v2040 = vpack.c.b16 %v1752, %v1746
        %v2041 = vpack.c.b16 %v1753, %v1747
        %v2042 = vpack.c.b16 %v1754, %v1748
        %v2043 = vpack.c.b16 %v1755, %v1749
        %2332 = vmatpush.bf16.msra.mxu0 %v1798
        %2333 = vmatpush.bf16.msra.mxu0 %v1792
        %2334 = vmatpush.bf16.msra.mxu0 %v1786
        %2335 = vmatpush.bf16.msra.mxu0 %v1780
        %2336 = vmatpush.bf16.msra.mxu0 %v1774
        %2337 = vmatpush.bf16.msra.mxu0 %v1768
        %2338 = vmatpush.bf16.msra.mxu0 %v1762
        %2339 = vmatpush.bf16.msra.mxu0 %v1756
        %2340 = vmatmul.bf16.gmra.mxu0 %v584
        %v2341 = vpop.f32.mrf.mxu0
        %v2342 = vadd.f32 %v880, %v2341
        %v2343 = vpop.f32.mrf.mxu0
        %2344 = vdwg.mxu0
        %2345 = vmatpush.bf16.msra.mxu0 %v1846
        %2346 = vmatpush.bf16.msra.mxu0 %v1840
        %2347 = vmatpush.bf16.msra.mxu0 %v1834
        %2348 = vmatpush.bf16.msra.mxu0 %v1828
        %2349 = vmatpush.bf16.msra.mxu0 %v1822
        %2350 = vmatpush.bf16.msra.mxu0 %v1816
        %2351 = vmatpush.bf16.msra.mxu0 %v1810
        %2352 = vmatpush.bf16.msra.mxu0 %v1804
        %2353 = vmatmul.bf16.gmra.mxu0 %v585
        %v2354 = vpop.f32.mrf.mxu0
        %v2355 = vadd.f32 %v2342, %v2354
        %v2356 = vpop.f32.mrf.mxu0
        %2357 = vdwg.mxu0
        %2358 = vmatpush.bf16.msra.mxu0 %v1894
        %2359 = vmatpush.bf16.msra.mxu0 %v1888
        %2360 = vmatpush.bf16.msra.mxu0 %v1882
        %2361 = vmatpush.bf16.msra.mxu0 %v1876
        %2362 = vmatpush.bf16.msra.mxu0 %v1870
        %2363 = vmatpush.bf16.msra.mxu0 %v1864
        %2364 = vmatpush.bf16.msra.mxu0 %v1858
        %2365 = vmatpush.bf16.msra.mxu0 %v1852
        %2366 = vmatmul.bf16.gmra.mxu0 %v586
        %v2367 = vpop.f32.mrf.mxu0
        %v2368 = vadd.f32 %v2355, %v2367
        %v2369 = vpop.f32.mrf.mxu0
        %2370 = vdwg.mxu0
        %2371 = vmatpush.bf16.msra.mxu0 %v1942
        %2372 = vmatpush.bf16.msra.mxu0 %v1936
        %2373 = vmatpush.bf16.msra.mxu0 %v1930
        %2374 = vmatpush.bf16.msra.mxu0 %v1924
        %2375 = vmatpush.bf16.msra.mxu0 %v1918
        %2376 = vmatpush.bf16.msra.mxu0 %v1912
        %2377 = vmatpush.bf16.msra.mxu0 %v1906
        %2378 = vmatpush.bf16.msra.mxu0 %v1900
        %2379 = vmatmul.bf16.gmra.mxu0 %v587
        %v2380 = vpop.f32.mrf.mxu0
        %v2381 = vadd.f32 %v2368, %v2380
        %v2382 = vpop.f32.mrf.mxu0
        %2383 = vdwg.mxu0
        %2384 = vmatpush.bf16.msra.mxu0 %v1990
        %2385 = vmatpush.bf16.msra.mxu0 %v1984
        %2386 = vmatpush.bf16.msra.mxu0 %v1978
        %2387 = vmatpush.bf16.msra.mxu0 %v1972
        %2388 = vmatpush.bf16.msra.mxu0 %v1966
        %2389 = vmatpush.bf16.msra.mxu0 %v1960
        %2390 = vmatpush.bf16.msra.mxu0 %v1954
        %2391 = vmatpush.bf16.msra.mxu0 %v1948
        %2392 = vmatmul.bf16.gmra.mxu0 %v588
        %v2393 = vpop.f32.mrf.mxu0
        %v2394 = vadd.f32 %v2381, %v2393
        %v2395 = vpop.f32.mrf.mxu0
        %2396 = vdwg.mxu0
        %2397 = vmatpush.bf16.msra.mxu0 %v2038
        %2398 = vmatpush.bf16.msra.mxu0 %v2032
        %2399 = vmatpush.bf16.msra.mxu0 %v2026
        %2400 = vmatpush.bf16.msra.mxu0 %v2020
        %2401 = vmatpush.bf16.msra.mxu0 %v2014
        %2402 = vmatpush.bf16.msra.mxu0 %v2008
        %2403 = vmatpush.bf16.msra.mxu0 %v2002
        %2404 = vmatpush.bf16.msra.mxu0 %v1996
        %2405 = vmatmul.bf16.gmra.mxu0 %v589
        %v2406 = vpop.f32.mrf.mxu0
        %v2407 = vadd.f32 %v2394, %v2406
        %v2408 = vpop.f32.mrf.mxu0
        %2409 = vdwg.mxu0
        %2410 = vmatpush.bf16.msra.mxu0 %v1799
        %2411 = vmatpush.bf16.msra.mxu0 %v1793
        %2412 = vmatpush.bf16.msra.mxu0 %v1787
        %2413 = vmatpush.bf16.msra.mxu0 %v1781
        %2414 = vmatpush.bf16.msra.mxu0 %v1775
        %2415 = vmatpush.bf16.msra.mxu0 %v1769
        %2416 = vmatpush.bf16.msra.mxu0 %v1763
        %2417 = vmatpush.bf16.msra.mxu0 %v1757
        %2418 = vmatmul.bf16.gmra.mxu0 %v584
        %v2419 = vpop.f32.mrf.mxu0
        %v2420 = vadd.f32 %v881, %v2419
        %v2421 = vpop.f32.mrf.mxu0
        %2422 = vdwg.mxu0
        %2423 = vmatpush.bf16.msra.mxu0 %v1847
        %2424 = vmatpush.bf16.msra.mxu0 %v1841
        %2425 = vmatpush.bf16.msra.mxu0 %v1835
        %2426 = vmatpush.bf16.msra.mxu0 %v1829
        %2427 = vmatpush.bf16.msra.mxu0 %v1823
        %2428 = vmatpush.bf16.msra.mxu0 %v1817
        %2429 = vmatpush.bf16.msra.mxu0 %v1811
        %2430 = vmatpush.bf16.msra.mxu0 %v1805
        %2431 = vmatmul.bf16.gmra.mxu0 %v585
        %v2432 = vpop.f32.mrf.mxu0
        %v2433 = vadd.f32 %v2420, %v2432
        %v2434 = vpop.f32.mrf.mxu0
        %2435 = vdwg.mxu0
        %2436 = vmatpush.bf16.msra.mxu0 %v1895
        %2437 = vmatpush.bf16.msra.mxu0 %v1889
        %2438 = vmatpush.bf16.msra.mxu0 %v1883
        %2439 = vmatpush.bf16.msra.mxu0 %v1877
        %2440 = vmatpush.bf16.msra.mxu0 %v1871
        %2441 = vmatpush.bf16.msra.mxu0 %v1865
        %2442 = vmatpush.bf16.msra.mxu0 %v1859
        %2443 = vmatpush.bf16.msra.mxu0 %v1853
        %2444 = vmatmul.bf16.gmra.mxu0 %v586
        %v2445 = vpop.f32.mrf.mxu0
        %v2446 = vadd.f32 %v2433, %v2445
        %v2447 = vpop.f32.mrf.mxu0
        %2448 = vdwg.mxu0
        %2449 = vmatpush.bf16.msra.mxu0 %v1943
        %2450 = vmatpush.bf16.msra.mxu0 %v1937
        %2451 = vmatpush.bf16.msra.mxu0 %v1931
        %2452 = vmatpush.bf16.msra.mxu0 %v1925
        %2453 = vmatpush.bf16.msra.mxu0 %v1919
        %2454 = vmatpush.bf16.msra.mxu0 %v1913
        %2455 = vmatpush.bf16.msra.mxu0 %v1907
        %2456 = vmatpush.bf16.msra.mxu0 %v1901
        %2457 = vmatmul.bf16.gmra.mxu0 %v587
        %v2458 = vpop.f32.mrf.mxu0
        %v2459 = vadd.f32 %v2446, %v2458
        %v2460 = vpop.f32.mrf.mxu0
        %2461 = vdwg.mxu0
        %2462 = vmatpush.bf16.msra.mxu0 %v1991
        %2463 = vmatpush.bf16.msra.mxu0 %v1985
        %2464 = vmatpush.bf16.msra.mxu0 %v1979
        %2465 = vmatpush.bf16.msra.mxu0 %v1973
        %2466 = vmatpush.bf16.msra.mxu0 %v1967
        %2467 = vmatpush.bf16.msra.mxu0 %v1961
        %2468 = vmatpush.bf16.msra.mxu0 %v1955
        %2469 = vmatpush.bf16.msra.mxu0 %v1949
        %2470 = vmatmul.bf16.gmra.mxu0 %v588
        %v2471 = vpop.f32.mrf.mxu0
        %v2472 = vadd.f32 %v2459, %v2471
        %v2473 = vpop.f32.mrf.mxu0
        %2474 = vdwg.mxu0
        %2475 = vmatpush.bf16.msra.mxu0 %v2039
        %2476 = vmatpush.bf16.msra.mxu0 %v2033
        %2477 = vmatpush.bf16.msra.mxu0 %v2027
        %2478 = vmatpush.bf16.msra.mxu0 %v2021
        %2479 = vmatpush.bf16.msra.mxu0 %v2015
        %2480 = vmatpush.bf16.msra.mxu0 %v2009
        %2481 = vmatpush.bf16.msra.mxu0 %v2003
        %2482 = vmatpush.bf16.msra.mxu0 %v1997
        %2483 = vmatmul.bf16.gmra.mxu0 %v589
        %v2484 = vpop.f32.mrf.mxu0
        %v2485 = vadd.f32 %v2472, %v2484
        %v2486 = vpop.f32.mrf.mxu0
        %2487 = vdwg.mxu0
        %2488 = vmatpush.bf16.msra.mxu0 %v1800
        %2489 = vmatpush.bf16.msra.mxu0 %v1794
        %2490 = vmatpush.bf16.msra.mxu0 %v1788
        %2491 = vmatpush.bf16.msra.mxu0 %v1782
        %2492 = vmatpush.bf16.msra.mxu0 %v1776
        %2493 = vmatpush.bf16.msra.mxu0 %v1770
        %2494 = vmatpush.bf16.msra.mxu0 %v1764
        %2495 = vmatpush.bf16.msra.mxu0 %v1758
        %2496 = vmatmul.bf16.gmra.mxu0 %v584
        %v2497 = vpop.f32.mrf.mxu0
        %v2498 = vadd.f32 %v882, %v2497
        %v2499 = vpop.f32.mrf.mxu0
        %2500 = vdwg.mxu0
        %2501 = vmatpush.bf16.msra.mxu0 %v1848
        %2502 = vmatpush.bf16.msra.mxu0 %v1842
        %2503 = vmatpush.bf16.msra.mxu0 %v1836
        %2504 = vmatpush.bf16.msra.mxu0 %v1830
        %2505 = vmatpush.bf16.msra.mxu0 %v1824
        %2506 = vmatpush.bf16.msra.mxu0 %v1818
        %2507 = vmatpush.bf16.msra.mxu0 %v1812
        %2508 = vmatpush.bf16.msra.mxu0 %v1806
        %2509 = vmatmul.bf16.gmra.mxu0 %v585
        %v2510 = vpop.f32.mrf.mxu0
        %v2511 = vadd.f32 %v2498, %v2510
        %v2512 = vpop.f32.mrf.mxu0
        %2513 = vdwg.mxu0
        %2514 = vmatpush.bf16.msra.mxu0 %v1896
        %2515 = vmatpush.bf16.msra.mxu0 %v1890
        %2516 = vmatpush.bf16.msra.mxu0 %v1884
        %2517 = vmatpush.bf16.msra.mxu0 %v1878
        %2518 = vmatpush.bf16.msra.mxu0 %v1872
        %2519 = vmatpush.bf16.msra.mxu0 %v1866
        %2520 = vmatpush.bf16.msra.mxu0 %v1860
        %2521 = vmatpush.bf16.msra.mxu0 %v1854
        %2522 = vmatmul.bf16.gmra.mxu0 %v586
        %v2523 = vpop.f32.mrf.mxu0
        %v2524 = vadd.f32 %v2511, %v2523
        %v2525 = vpop.f32.mrf.mxu0
        %2526 = vdwg.mxu0
        %2527 = vmatpush.bf16.msra.mxu0 %v1944
        %2528 = vmatpush.bf16.msra.mxu0 %v1938
        %2529 = vmatpush.bf16.msra.mxu0 %v1932
        %2530 = vmatpush.bf16.msra.mxu0 %v1926
        %2531 = vmatpush.bf16.msra.mxu0 %v1920
        %2532 = vmatpush.bf16.msra.mxu0 %v1914
        %2533 = vmatpush.bf16.msra.mxu0 %v1908
        %2534 = vmatpush.bf16.msra.mxu0 %v1902
        %2535 = vmatmul.bf16.gmra.mxu0 %v587
        %v2536 = vpop.f32.mrf.mxu0
        %v2537 = vadd.f32 %v2524, %v2536
        %v2538 = vpop.f32.mrf.mxu0
        %2539 = vdwg.mxu0
        %2540 = vmatpush.bf16.msra.mxu0 %v1992
        %2541 = vmatpush.bf16.msra.mxu0 %v1986
        %2542 = vmatpush.bf16.msra.mxu0 %v1980
        %2543 = vmatpush.bf16.msra.mxu0 %v1974
        %2544 = vmatpush.bf16.msra.mxu0 %v1968
        %2545 = vmatpush.bf16.msra.mxu0 %v1962
        %2546 = vmatpush.bf16.msra.mxu0 %v1956
        %2547 = vmatpush.bf16.msra.mxu0 %v1950
        %2548 = vmatmul.bf16.gmra.mxu0 %v588
        %v2549 = vpop.f32.mrf.mxu0
        %v2550 = vadd.f32 %v2537, %v2549
        %v2551 = vpop.f32.mrf.mxu0
        %2552 = vdwg.mxu0
        %2553 = vmatpush.bf16.msra.mxu0 %v2040
        %2554 = vmatpush.bf16.msra.mxu0 %v2034
        %2555 = vmatpush.bf16.msra.mxu0 %v2028
        %2556 = vmatpush.bf16.msra.mxu0 %v2022
        %2557 = vmatpush.bf16.msra.mxu0 %v2016
        %2558 = vmatpush.bf16.msra.mxu0 %v2010
        %2559 = vmatpush.bf16.msra.mxu0 %v2004
        %2560 = vmatpush.bf16.msra.mxu0 %v1998
        %2561 = vmatmul.bf16.gmra.mxu0 %v589
        %v2562 = vpop.f32.mrf.mxu0
        %v2563 = vadd.f32 %v2550, %v2562
        %v2564 = vpop.f32.mrf.mxu0
        %2565 = vdwg.mxu0
        %2566 = vmatpush.bf16.msra.mxu0 %v1801
        %2567 = vmatpush.bf16.msra.mxu0 %v1795
        %2568 = vmatpush.bf16.msra.mxu0 %v1789
        %2569 = vmatpush.bf16.msra.mxu0 %v1783
        %2570 = vmatpush.bf16.msra.mxu0 %v1777
        %2571 = vmatpush.bf16.msra.mxu0 %v1771
        %2572 = vmatpush.bf16.msra.mxu0 %v1765
        %2573 = vmatpush.bf16.msra.mxu0 %v1759
        %2574 = vmatmul.bf16.gmra.mxu0 %v584
        %v2575 = vpop.f32.mrf.mxu0
        %v2576 = vadd.f32 %v883, %v2575
        %v2577 = vpop.f32.mrf.mxu0
        %2578 = vdwg.mxu0
        %2579 = vmatpush.bf16.msra.mxu0 %v1849
        %2580 = vmatpush.bf16.msra.mxu0 %v1843
        %2581 = vmatpush.bf16.msra.mxu0 %v1837
        %2582 = vmatpush.bf16.msra.mxu0 %v1831
        %2583 = vmatpush.bf16.msra.mxu0 %v1825
        %2584 = vmatpush.bf16.msra.mxu0 %v1819
        %2585 = vmatpush.bf16.msra.mxu0 %v1813
        %2586 = vmatpush.bf16.msra.mxu0 %v1807
        %2587 = vmatmul.bf16.gmra.mxu0 %v585
        %v2588 = vpop.f32.mrf.mxu0
        %v2589 = vadd.f32 %v2576, %v2588
        %v2590 = vpop.f32.mrf.mxu0
        %2591 = vdwg.mxu0
        %2592 = vmatpush.bf16.msra.mxu0 %v1897
        %2593 = vmatpush.bf16.msra.mxu0 %v1891
        %2594 = vmatpush.bf16.msra.mxu0 %v1885
        %2595 = vmatpush.bf16.msra.mxu0 %v1879
        %2596 = vmatpush.bf16.msra.mxu0 %v1873
        %2597 = vmatpush.bf16.msra.mxu0 %v1867
        %2598 = vmatpush.bf16.msra.mxu0 %v1861
        %2599 = vmatpush.bf16.msra.mxu0 %v1855
        %2600 = vmatmul.bf16.gmra.mxu0 %v586
        %v2601 = vpop.f32.mrf.mxu0
        %v2602 = vadd.f32 %v2589, %v2601
        %v2603 = vpop.f32.mrf.mxu0
        %2604 = vdwg.mxu0
        %2605 = vmatpush.bf16.msra.mxu0 %v1945
        %2606 = vmatpush.bf16.msra.mxu0 %v1939
        %2607 = vmatpush.bf16.msra.mxu0 %v1933
        %2608 = vmatpush.bf16.msra.mxu0 %v1927
        %2609 = vmatpush.bf16.msra.mxu0 %v1921
        %2610 = vmatpush.bf16.msra.mxu0 %v1915
        %2611 = vmatpush.bf16.msra.mxu0 %v1909
        %2612 = vmatpush.bf16.msra.mxu0 %v1903
        %2613 = vmatmul.bf16.gmra.mxu0 %v587
        %v2614 = vpop.f32.mrf.mxu0
        %v2615 = vadd.f32 %v2602, %v2614
        %v2616 = vpop.f32.mrf.mxu0
        %2617 = vdwg.mxu0
        %2618 = vmatpush.bf16.msra.mxu0 %v1993
        %2619 = vmatpush.bf16.msra.mxu0 %v1987
        %2620 = vmatpush.bf16.msra.mxu0 %v1981
        %2621 = vmatpush.bf16.msra.mxu0 %v1975
        %2622 = vmatpush.bf16.msra.mxu0 %v1969
        %2623 = vmatpush.bf16.msra.mxu0 %v1963
        %2624 = vmatpush.bf16.msra.mxu0 %v1957
        %2625 = vmatpush.bf16.msra.mxu0 %v1951
        %2626 = vmatmul.bf16.gmra.mxu0 %v588
        %v2627 = vpop.f32.mrf.mxu0
        %v2628 = vadd.f32 %v2615, %v2627
        %v2629 = vpop.f32.mrf.mxu0
        %2630 = vdwg.mxu0
        %2631 = vmatpush.bf16.msra.mxu0 %v2041
        %2632 = vmatpush.bf16.msra.mxu0 %v2035
        %2633 = vmatpush.bf16.msra.mxu0 %v2029
        %2634 = vmatpush.bf16.msra.mxu0 %v2023
        %2635 = vmatpush.bf16.msra.mxu0 %v2017
        %2636 = vmatpush.bf16.msra.mxu0 %v2011
        %2637 = vmatpush.bf16.msra.mxu0 %v2005
        %2638 = vmatpush.bf16.msra.mxu0 %v1999
        %2639 = vmatmul.bf16.gmra.mxu0 %v589
        %v2640 = vpop.f32.mrf.mxu0
        %v2641 = vadd.f32 %v2628, %v2640
        %v2642 = vpop.f32.mrf.mxu0
        %2643 = vdwg.mxu0
        %2644 = vmatpush.bf16.msra.mxu0 %v1802
        %2645 = vmatpush.bf16.msra.mxu0 %v1796
        %2646 = vmatpush.bf16.msra.mxu0 %v1790
        %2647 = vmatpush.bf16.msra.mxu0 %v1784
        %2648 = vmatpush.bf16.msra.mxu0 %v1778
        %2649 = vmatpush.bf16.msra.mxu0 %v1772
        %2650 = vmatpush.bf16.msra.mxu0 %v1766
        %2651 = vmatpush.bf16.msra.mxu0 %v1760
        %2652 = vmatmul.bf16.gmra.mxu0 %v584
        %v2653 = vpop.f32.mrf.mxu0
        %v2654 = vadd.f32 %v884, %v2653
        %v2655 = vpop.f32.mrf.mxu0
        %2656 = vdwg.mxu0
        %2657 = vmatpush.bf16.msra.mxu0 %v1850
        %2658 = vmatpush.bf16.msra.mxu0 %v1844
        %2659 = vmatpush.bf16.msra.mxu0 %v1838
        %2660 = vmatpush.bf16.msra.mxu0 %v1832
        %2661 = vmatpush.bf16.msra.mxu0 %v1826
        %2662 = vmatpush.bf16.msra.mxu0 %v1820
        %2663 = vmatpush.bf16.msra.mxu0 %v1814
        %2664 = vmatpush.bf16.msra.mxu0 %v1808
        %2665 = vmatmul.bf16.gmra.mxu0 %v585
        %v2666 = vpop.f32.mrf.mxu0
        %v2667 = vadd.f32 %v2654, %v2666
        %v2668 = vpop.f32.mrf.mxu0
        %2669 = vdwg.mxu0
        %2670 = vmatpush.bf16.msra.mxu0 %v1898
        %2671 = vmatpush.bf16.msra.mxu0 %v1892
        %2672 = vmatpush.bf16.msra.mxu0 %v1886
        %2673 = vmatpush.bf16.msra.mxu0 %v1880
        %2674 = vmatpush.bf16.msra.mxu0 %v1874
        %2675 = vmatpush.bf16.msra.mxu0 %v1868
        %2676 = vmatpush.bf16.msra.mxu0 %v1862
        %2677 = vmatpush.bf16.msra.mxu0 %v1856
        %2678 = vmatmul.bf16.gmra.mxu0 %v586
        %v2679 = vpop.f32.mrf.mxu0
        %v2680 = vadd.f32 %v2667, %v2679
        %v2681 = vpop.f32.mrf.mxu0
        %2682 = vdwg.mxu0
        %2683 = vmatpush.bf16.msra.mxu0 %v1946
        %2684 = vmatpush.bf16.msra.mxu0 %v1940
        %2685 = vmatpush.bf16.msra.mxu0 %v1934
        %2686 = vmatpush.bf16.msra.mxu0 %v1928
        %2687 = vmatpush.bf16.msra.mxu0 %v1922
        %2688 = vmatpush.bf16.msra.mxu0 %v1916
        %2689 = vmatpush.bf16.msra.mxu0 %v1910
        %2690 = vmatpush.bf16.msra.mxu0 %v1904
        %2691 = vmatmul.bf16.gmra.mxu0 %v587
        %v2692 = vpop.f32.mrf.mxu0
        %v2693 = vadd.f32 %v2680, %v2692
        %v2694 = vpop.f32.mrf.mxu0
        %2695 = vdwg.mxu0
        %2696 = vmatpush.bf16.msra.mxu0 %v1994
        %2697 = vmatpush.bf16.msra.mxu0 %v1988
        %2698 = vmatpush.bf16.msra.mxu0 %v1982
        %2699 = vmatpush.bf16.msra.mxu0 %v1976
        %2700 = vmatpush.bf16.msra.mxu0 %v1970
        %2701 = vmatpush.bf16.msra.mxu0 %v1964
        %2702 = vmatpush.bf16.msra.mxu0 %v1958
        %2703 = vmatpush.bf16.msra.mxu0 %v1952
        %2704 = vmatmul.bf16.gmra.mxu0 %v588
        %v2705 = vpop.f32.mrf.mxu0
        %v2706 = vadd.f32 %v2693, %v2705
        %v2707 = vpop.f32.mrf.mxu0
        %2708 = vdwg.mxu0
        %2709 = vmatpush.bf16.msra.mxu0 %v2042
        %2710 = vmatpush.bf16.msra.mxu0 %v2036
        %2711 = vmatpush.bf16.msra.mxu0 %v2030
        %2712 = vmatpush.bf16.msra.mxu0 %v2024
        %2713 = vmatpush.bf16.msra.mxu0 %v2018
        %2714 = vmatpush.bf16.msra.mxu0 %v2012
        %2715 = vmatpush.bf16.msra.mxu0 %v2006
        %2716 = vmatpush.bf16.msra.mxu0 %v2000
        %2717 = vmatmul.bf16.gmra.mxu0 %v589
        %v2718 = vpop.f32.mrf.mxu0
        %v2719 = vadd.f32 %v2706, %v2718
        %v2720 = vpop.f32.mrf.mxu0
        %2721 = vdwg.mxu0
        %2722 = vmatpush.bf16.msra.mxu0 %v1803
        %2723 = vmatpush.bf16.msra.mxu0 %v1797
        %2724 = vmatpush.bf16.msra.mxu0 %v1791
        %2725 = vmatpush.bf16.msra.mxu0 %v1785
        %2726 = vmatpush.bf16.msra.mxu0 %v1779
        %2727 = vmatpush.bf16.msra.mxu0 %v1773
        %2728 = vmatpush.bf16.msra.mxu0 %v1767
        %2729 = vmatpush.bf16.msra.mxu0 %v1761
        %2730 = vmatmul.bf16.gmra.mxu0 %v584
        %v2731 = vpop.f32.mrf.mxu0
        %v2732 = vadd.f32 %v885, %v2731
        %v2733 = vpop.f32.mrf.mxu0
        %2734 = vdwg.mxu0
        %2735 = vmatpush.bf16.msra.mxu0 %v1851
        %2736 = vmatpush.bf16.msra.mxu0 %v1845
        %2737 = vmatpush.bf16.msra.mxu0 %v1839
        %2738 = vmatpush.bf16.msra.mxu0 %v1833
        %2739 = vmatpush.bf16.msra.mxu0 %v1827
        %2740 = vmatpush.bf16.msra.mxu0 %v1821
        %2741 = vmatpush.bf16.msra.mxu0 %v1815
        %2742 = vmatpush.bf16.msra.mxu0 %v1809
        %2743 = vmatmul.bf16.gmra.mxu0 %v585
        %v2744 = vpop.f32.mrf.mxu0
        %v2745 = vadd.f32 %v2732, %v2744
        %v2746 = vpop.f32.mrf.mxu0
        %2747 = vdwg.mxu0
        %2748 = vmatpush.bf16.msra.mxu0 %v1899
        %2749 = vmatpush.bf16.msra.mxu0 %v1893
        %2750 = vmatpush.bf16.msra.mxu0 %v1887
        %2751 = vmatpush.bf16.msra.mxu0 %v1881
        %2752 = vmatpush.bf16.msra.mxu0 %v1875
        %2753 = vmatpush.bf16.msra.mxu0 %v1869
        %2754 = vmatpush.bf16.msra.mxu0 %v1863
        %2755 = vmatpush.bf16.msra.mxu0 %v1857
        %2756 = vmatmul.bf16.gmra.mxu0 %v586
        %v2757 = vpop.f32.mrf.mxu0
        %v2758 = vadd.f32 %v2745, %v2757
        %v2759 = vpop.f32.mrf.mxu0
        %2760 = vdwg.mxu0
        %2761 = vmatpush.bf16.msra.mxu0 %v1947
        %2762 = vmatpush.bf16.msra.mxu0 %v1941
        %2763 = vmatpush.bf16.msra.mxu0 %v1935
        %2764 = vmatpush.bf16.msra.mxu0 %v1929
        %2765 = vmatpush.bf16.msra.mxu0 %v1923
        %2766 = vmatpush.bf16.msra.mxu0 %v1917
        %2767 = vmatpush.bf16.msra.mxu0 %v1911
        %2768 = vmatpush.bf16.msra.mxu0 %v1905
        %2769 = vmatmul.bf16.gmra.mxu0 %v587
        %v2770 = vpop.f32.mrf.mxu0
        %v2771 = vadd.f32 %v2758, %v2770
        %v2772 = vpop.f32.mrf.mxu0
        %2773 = vdwg.mxu0
        %2774 = vmatpush.bf16.msra.mxu0 %v1995
        %2775 = vmatpush.bf16.msra.mxu0 %v1989
        %2776 = vmatpush.bf16.msra.mxu0 %v1983
        %2777 = vmatpush.bf16.msra.mxu0 %v1977
        %2778 = vmatpush.bf16.msra.mxu0 %v1971
        %2779 = vmatpush.bf16.msra.mxu0 %v1965
        %2780 = vmatpush.bf16.msra.mxu0 %v1959
        %2781 = vmatpush.bf16.msra.mxu0 %v1953
        %2782 = vmatmul.bf16.gmra.mxu0 %v588
        %v2783 = vpop.f32.mrf.mxu0
        %v2784 = vadd.f32 %v2771, %v2783
        %v2785 = vpop.f32.mrf.mxu0
        %2786 = vdwg.mxu0
        %2787 = vmatpush.bf16.msra.mxu0 %v2043
        %2788 = vmatpush.bf16.msra.mxu0 %v2037
        %2789 = vmatpush.bf16.msra.mxu0 %v2031
        %2790 = vmatpush.bf16.msra.mxu0 %v2025
        %2791 = vmatpush.bf16.msra.mxu0 %v2019
        %2792 = vmatpush.bf16.msra.mxu0 %v2013
        %2793 = vmatpush.bf16.msra.mxu0 %v2007
        %2794 = vmatpush.bf16.msra.mxu0 %v2001
        %2795 = vmatmul.bf16.gmra.mxu0 %v589
        %v2796 = vpop.f32.mrf.mxu0
        %v2797 = vadd.f32 %v2784, %v2796
        %v2798 = vpop.f32.mrf.mxu0
        %2799 = vdwg.mxu0
        %v2800 = vpack.c.bf16 %v2407, %v2407
        %v2801 = vpack.c.bf16 %v2485, %v2485
        %v2802 = vld [vmem:[%s484] sm:$0xff]
        %v2803 = vld [vmem:[%s494] sm:$0xff]
        %v2805 = vunpack.c.l.b16 %v2802
        %v2806 = vunpack.c.h.b16 %v2802
        %v2807 = vpack.c.b16 %v2805, %v2805
        %v2808 = vpack.c.b16 %v2806, %v2806
        %2811 = vmatpush.bf16.xpose.msra.mxu0 0
        %2812 = vmatpush.bf16.xpose.msra.mxu0 0
        %2813 = vmatpush.bf16.xpose.msra.mxu0 0
        %2814 = vmatpush.bf16.xpose.msra.mxu0 0
        %2815 = vmatpush.bf16.xpose.msra.mxu0 0
        %2816 = vmatpush.bf16.xpose.msra.mxu0 0
        %2817 = vmatpush.bf16.xpose.msra.mxu0 0
        %2818 = vmatpush.bf16.xpose.msra.mxu0 %v2807
        %2819 = vmatmul.bf16.gmra.mxu0 %v2800
        %v2820 = vpop.f32.mrf.mxu0
        %v2821 = vadd.f32 0.0, %v2820
        %v2822 = vpop.f32.mrf.mxu0
        %2823 = vdwg.mxu0
        %2824 = vmatpush.bf16.xpose.msra.mxu0 0
        %2825 = vmatpush.bf16.xpose.msra.mxu0 0
        %2826 = vmatpush.bf16.xpose.msra.mxu0 0
        %2827 = vmatpush.bf16.xpose.msra.mxu0 0
        %2828 = vmatpush.bf16.xpose.msra.mxu0 0
        %2829 = vmatpush.bf16.xpose.msra.mxu0 0
        %2830 = vmatpush.bf16.xpose.msra.mxu0 0
        %2831 = vmatpush.bf16.xpose.msra.mxu0 %v2808
        %2832 = vmatmul.bf16.gmra.mxu0 %v2801
        %v2833 = vpop.f32.mrf.mxu0
        %v2834 = vadd.f32 %v2821, %v2833
        %v2835 = vpop.f32.mrf.mxu0
        %2836 = vdwg.mxu0
        %vm2837 = vcmask 64512
        %v2838 = vsel %vm2837, %v2834, -inf
        %2839 = vmax.xlane.f32.xlu0 %v2838
        %v2840 = vpop.xlane.xlu0 %2839
        %v2841 = vsub.f32 %v2834, %v2840
        %v2842 = vmul.f32 %v2841, 1.442695
        %v2843 = vpow.pop %v2842
        %v2844 = vsel %vm2837, %v2843, 0.0
        %2845 = vadd.xlane.f32.xlu0 %v2844
        %v2846 = vpop.xlane.xlu0 %2845
        %v2847 = vrcp.pop %v2846
        %v2848 = vmul.f32 %v2843, %v2847
        %2849 = vst.msk [vmem:[%s576] sm:$0xff] %vm2837, %v2848
        %v2850 = vpack.c.bf16 %v2848, %v2848
        %v2852 = vunpack.c.l.b16 %v2803
        %v2853 = vunpack.c.h.b16 %v2803
        %v2854 = vpack.c.b16 %v2852, %v2852
        %v2855 = vpack.c.b16 %v2853, %v2853
        %v2857 = vsel %vm2837, %v2850, 0
        %vm2859 = vcmask 1043456
        %v2861 = vsel %vm2859, %v2854, 0
        %v2864 = vsel %vm2859, %v2855, 0
        %2866 = vmatpush.bf16.msra.mxu0 0
        %2867 = vmatpush.bf16.msra.mxu0 0
        %2868 = vmatpush.bf16.msra.mxu0 0
        %2869 = vmatpush.bf16.msra.mxu0 0
        %2870 = vmatpush.bf16.msra.mxu0 0
        %2871 = vmatpush.bf16.msra.mxu0 0
        %2872 = vmatpush.bf16.msra.mxu0 0
        %2873 = vmatpush.bf16.msra.mxu0 %v2861
        %2874 = vmatmul.bf16.gmra.mxu0 %v2857
        %v2875 = vpop.f32.mrf.mxu0
        %v2876 = vadd.f32 0.0, %v2875
        %v2877 = vpop.f32.mrf.mxu0
        %2878 = vdwg.mxu0
        %2879 = vmatpush.bf16.msra.mxu0 0
        %2880 = vmatpush.bf16.msra.mxu0 0
        %2881 = vmatpush.bf16.msra.mxu0 0
        %2882 = vmatpush.bf16.msra.mxu0 0
        %2883 = vmatpush.bf16.msra.mxu0 0
        %2884 = vmatpush.bf16.msra.mxu0 0
        %2885 = vmatpush.bf16.msra.mxu0 0
        %2886 = vmatpush.bf16.msra.mxu0 %v2864
        %2887 = vmatmul.bf16.gmra.mxu0 %v2857
        %v2888 = vpop.f32.mrf.mxu0
        %v2889 = vadd.f32 0.0, %v2888
        %v2890 = vpop.f32.mrf.mxu0
        %2891 = vdwg.mxu0
        %v2892 = vpack.c.bf16 %v2876, %v2876
        %v2893 = vpack.c.bf16 %v2889, %v2889
        %v2894 = vld [vmem:[#allocation11] sm:$0xff]
        %v2895 = vld [vmem:[#allocation11 + $0x8] sm:$0xff]
        %v2896 = vld [vmem:[#allocation11 + $0x10] sm:$0xff]
        %v2897 = vld [vmem:[#allocation11 + $0x18] sm:$0xff]
        %v2898 = vld [vmem:[#allocation11 + $0x20] sm:$0xff]
        %v2899 = vld [vmem:[#allocation11 + $0x28] sm:$0xff]
        %v2900 = vld [vmem:[#allocation11 + $0x30] sm:$0xff]
        %v2901 = vld [vmem:[#allocation11 + $0x38] sm:$0xff]
        %v2902 = vld [vmem:[#allocation11 + $0x40] sm:$0xff]
        %v2903 = vld [vmem:[#allocation11 + $0x48] sm:$0xff]
        %v2904 = vld [vmem:[#allocation11 + $0x50] sm:$0xff]
        %v2905 = vld [vmem:[#allocation11 + $0x58] sm:$0xff]
        %v2906 = vld [vmem:[#allocation11 + $0x60] sm:$0xff]
        %v2907 = vld [vmem:[#allocation11 + $0x68] sm:$0xff]
        %v2908 = vld [vmem:[#allocation11 + $0x70] sm:$0xff]
        %v2909 = vld [vmem:[#allocation11 + $0x78] sm:$0xff]
        %v2910 = vld [vmem:[#allocation11 + $0x80] sm:$0xff]
        %v2911 = vld [vmem:[#allocation11 + $0x88] sm:$0xff]
        %v2912 = vld [vmem:[#allocation11 + $0x90] sm:$0xff]
        %v2913 = vld [vmem:[#allocation11 + $0x98] sm:$0xff]
        %v2914 = vld [vmem:[#allocation11 + $0xa0] sm:$0xff]
        %v2915 = vld [vmem:[#allocation11 + $0xa8] sm:$0xff]
        %v2916 = vld [vmem:[#allocation11 + $0xb0] sm:$0xff]
        %v2917 = vld [vmem:[#allocation11 + $0xb8] sm:$0xff]
        %v2918 = vld [vmem:[#allocation11 + $0xc0] sm:$0xff]
        %v2919 = vld [vmem:[#allocation11 + $0xc8] sm:$0xff]
        %v2920 = vld [vmem:[#allocation11 + $0xd0] sm:$0xff]
        %v2921 = vld [vmem:[#allocation11 + $0xd8] sm:$0xff]
        %v2922 = vld [vmem:[#allocation11 + $0xe0] sm:$0xff]
        %v2923 = vld [vmem:[#allocation11 + $0xe8] sm:$0xff]
        %v2924 = vld [vmem:[#allocation11 + $0xf0] sm:$0xff]
        %v2925 = vld [vmem:[#allocation11 + $0xf8] sm:$0xff]
        %v2926 = vld [vmem:[#allocation11 + $0x100] sm:$0xff]
        %v2927 = vld [vmem:[#allocation11 + $0x108] sm:$0xff]
        %v2928 = vld [vmem:[#allocation11 + $0x110] sm:$0xff]
        %v2929 = vld [vmem:[#allocation11 + $0x118] sm:$0xff]
        %v2930 = vld [vmem:[#allocation11 + $0x120] sm:$0xff]
        %v2931 = vld [vmem:[#allocation11 + $0x128] sm:$0xff]
        %v2932 = vld [vmem:[#allocation11 + $0x130] sm:$0xff]
        %v2933 = vld [vmem:[#allocation11 + $0x138] sm:$0xff]
        %v2934 = vld [vmem:[#allocation11 + $0x140] sm:$0xff]
        %v2935 = vld [vmem:[#allocation11 + $0x148] sm:$0xff]
        %v2936 = vld [vmem:[#allocation11 + $0x150] sm:$0xff]
        %v2937 = vld [vmem:[#allocation11 + $0x158] sm:$0xff]
        %v2938 = vld [vmem:[#allocation11 + $0x160] sm:$0xff]
        %v2939 = vld [vmem:[#allocation11 + $0x168] sm:$0xff]
        %v2940 = vld [vmem:[#allocation11 + $0x170] sm:$0xff]
        %v2941 = vld [vmem:[#allocation11 + $0x178] sm:$0xff]
        %v2942 = vld [vmem:[#allocation11 + $0x180] sm:$0xff]
        %v2943 = vld [vmem:[#allocation11 + $0x188] sm:$0xff]
        %v2944 = vld [vmem:[#allocation11 + $0x190] sm:$0xff]
        %v2945 = vld [vmem:[#allocation11 + $0x198] sm:$0xff]
        %v2946 = vld [vmem:[#allocation11 + $0x1a0] sm:$0xff]
        %v2947 = vld [vmem:[#allocation11 + $0x1a8] sm:$0xff]
        %v2948 = vld [vmem:[#allocation11 + $0x1b0] sm:$0xff]
        %v2949 = vld [vmem:[#allocation11 + $0x1b8] sm:$0xff]
        %v2950 = vld [vmem:[#allocation11 + $0x1c0] sm:$0xff]
        %v2951 = vld [vmem:[#allocation11 + $0x1c8] sm:$0xff]
        %v2952 = vld [vmem:[#allocation11 + $0x1d0] sm:$0xff]
        %v2953 = vld [vmem:[#allocation11 + $0x1d8] sm:$0xff]
        %v2954 = vld [vmem:[#allocation11 + $0x1e0] sm:$0xff]
        %v2955 = vld [vmem:[#allocation11 + $0x1e8] sm:$0xff]
        %v2956 = vld [vmem:[#allocation11 + $0x1f0] sm:$0xff]
        %v2957 = vld [vmem:[#allocation11 + $0x1f8] sm:$0xff]
        %v2958 = vld [vmem:[#allocation11 + $0x200] sm:$0xff]
        %v2959 = vld [vmem:[#allocation11 + $0x208] sm:$0xff]
        %v2960 = vld [vmem:[#allocation11 + $0x210] sm:$0xff]
        %v2961 = vld [vmem:[#allocation11 + $0x218] sm:$0xff]
        %v2962 = vld [vmem:[#allocation11 + $0x220] sm:$0xff]
        %v2963 = vld [vmem:[#allocation11 + $0x228] sm:$0xff]
        %v2964 = vld [vmem:[#allocation11 + $0x230] sm:$0xff]
        %v2965 = vld [vmem:[#allocation11 + $0x238] sm:$0xff]
        %v2966 = vld [vmem:[#allocation11 + $0x240] sm:$0xff]
        %v2967 = vld [vmem:[#allocation11 + $0x248] sm:$0xff]
        %v2968 = vld [vmem:[#allocation11 + $0x250] sm:$0xff]
        %v2969 = vld [vmem:[#allocation11 + $0x258] sm:$0xff]
        %v2970 = vld [vmem:[#allocation11 + $0x260] sm:$0xff]
        %v2971 = vld [vmem:[#allocation11 + $0x268] sm:$0xff]
        %v2972 = vld [vmem:[#allocation11 + $0x270] sm:$0xff]
        %v2973 = vld [vmem:[#allocation11 + $0x278] sm:$0xff]
        %v2974 = vld [vmem:[#allocation11 + $0x280] sm:$0xff]
        %v2975 = vld [vmem:[#allocation11 + $0x288] sm:$0xff]
        %v2976 = vld [vmem:[#allocation11 + $0x290] sm:$0xff]
        %v2977 = vld [vmem:[#allocation11 + $0x298] sm:$0xff]
        %v2978 = vld [vmem:[#allocation11 + $0x2a0] sm:$0xff]
        %v2979 = vld [vmem:[#allocation11 + $0x2a8] sm:$0xff]
        %v2980 = vld [vmem:[#allocation11 + $0x2b0] sm:$0xff]
        %v2981 = vld [vmem:[#allocation11 + $0x2b8] sm:$0xff]
        %v2982 = vld [vmem:[#allocation11 + $0x2c0] sm:$0xff]
        %v2983 = vld [vmem:[#allocation11 + $0x2c8] sm:$0xff]
        %v2984 = vld [vmem:[#allocation11 + $0x2d0] sm:$0xff]
        %v2985 = vld [vmem:[#allocation11 + $0x2d8] sm:$0xff]
        %v2986 = vld [vmem:[#allocation11 + $0x2e0] sm:$0xff]
        %v2987 = vld [vmem:[#allocation11 + $0x2e8] sm:$0xff]
        %v2988 = vld [vmem:[#allocation11 + $0x2f0] sm:$0xff]
        %v2989 = vld [vmem:[#allocation11 + $0x2f8] sm:$0xff]
        %v2990 = vpack.c.bf16 %v2563, %v2563
        %v2991 = vpack.c.bf16 %v2641, %v2641
        %v2992 = vld [vmem:[%s484 + $0x8] sm:$0xff]
        %v2993 = vld [vmem:[%s494 + $0x8] sm:$0xff]
        %v2995 = vunpack.c.l.b16 %v2992
        %v2996 = vunpack.c.h.b16 %v2992
        %v2997 = vpack.c.b16 %v2995, %v2995
        %v2998 = vpack.c.b16 %v2996, %v2996
        %3001 = vmatpush.bf16.xpose.msra.mxu0 0
        %3002 = vmatpush.bf16.xpose.msra.mxu0 0
        %3003 = vmatpush.bf16.xpose.msra.mxu0 0
        %3004 = vmatpush.bf16.xpose.msra.mxu0 0
        %3005 = vmatpush.bf16.xpose.msra.mxu0 0
        %3006 = vmatpush.bf16.xpose.msra.mxu0 0
        %3007 = vmatpush.bf16.xpose.msra.mxu0 0
        %3008 = vmatpush.bf16.xpose.msra.mxu0 %v2997
        %3009 = vmatmul.bf16.gmra.mxu0 %v2990
        %v3010 = vpop.f32.mrf.mxu0
        %v3011 = vadd.f32 0.0, %v3010
        %v3012 = vpop.f32.mrf.mxu0
        %3013 = vdwg.mxu0
        %3014 = vmatpush.bf16.xpose.msra.mxu0 0
        %3015 = vmatpush.bf16.xpose.msra.mxu0 0
        %3016 = vmatpush.bf16.xpose.msra.mxu0 0
        %3017 = vmatpush.bf16.xpose.msra.mxu0 0
        %3018 = vmatpush.bf16.xpose.msra.mxu0 0
        %3019 = vmatpush.bf16.xpose.msra.mxu0 0
        %3020 = vmatpush.bf16.xpose.msra.mxu0 0
        %3021 = vmatpush.bf16.xpose.msra.mxu0 %v2998
        %3022 = vmatmul.bf16.gmra.mxu0 %v2991
        %v3023 = vpop.f32.mrf.mxu0
        %v3024 = vadd.f32 %v3011, %v3023
        %v3025 = vpop.f32.mrf.mxu0
        %3026 = vdwg.mxu0
        %v3027 = vsel %vm2837, %v3024, -inf
        %3028 = vmax.xlane.f32.xlu0 %v3027
        %v3029 = vpop.xlane.xlu0 %3028
        %v3030 = vsub.f32 %v3024, %v3029
        %v3031 = vmul.f32 %v3030, 1.442695
        %v3032 = vpow.pop %v3031
        %v3033 = vsel %vm2837, %v3032, 0.0
        %3034 = vadd.xlane.f32.xlu0 %v3033
        %v3035 = vpop.xlane.xlu0 %3034
        %v3036 = vrcp.pop %v3035
        %v3037 = vmul.f32 %v3032, %v3036
        %s3038 = scalar_lea.vmem %s576, 8 [#allocation18]
        %3039 = vst.msk [vmem:[%s3038] sm:$0xff] %vm2837, %v3037
        %v3040 = vpack.c.bf16 %v3037, %v3037
        %v3042 = vunpack.c.l.b16 %v2993
        %v3043 = vunpack.c.h.b16 %v2993
        %v3044 = vpack.c.b16 %v3042, %v3042
        %v3045 = vpack.c.b16 %v3043, %v3043
        %v3047 = vsel %vm2837, %v3040, 0
        %v3050 = vsel %vm2859, %v3044, 0
        %v3053 = vsel %vm2859, %v3045, 0
        %3055 = vmatpush.bf16.msra.mxu0 0
        %3056 = vmatpush.bf16.msra.mxu0 0
        %3057 = vmatpush.bf16.msra.mxu0 0
        %3058 = vmatpush.bf16.msra.mxu0 0
        %3059 = vmatpush.bf16.msra.mxu0 0
        %3060 = vmatpush.bf16.msra.mxu0 0
        %3061 = vmatpush.bf16.msra.mxu0 0
        %3062 = vmatpush.bf16.msra.mxu0 %v3050
        %3063 = vmatmul.bf16.gmra.mxu0 %v3047
        %v3064 = vpop.f32.mrf.mxu0
        %v3065 = vadd.f32 0.0, %v3064
        %v3066 = vpop.f32.mrf.mxu0
        %3067 = vdwg.mxu0
        %3068 = vmatpush.bf16.msra.mxu0 0
        %3069 = vmatpush.bf16.msra.mxu0 0
        %3070 = vmatpush.bf16.msra.mxu0 0
        %3071 = vmatpush.bf16.msra.mxu0 0
        %3072 = vmatpush.bf16.msra.mxu0 0
        %3073 = vmatpush.bf16.msra.mxu0 0
        %3074 = vmatpush.bf16.msra.mxu0 0
        %3075 = vmatpush.bf16.msra.mxu0 %v3053
        %3076 = vmatmul.bf16.gmra.mxu0 %v3047
        %v3077 = vpop.f32.mrf.mxu0
        %v3078 = vadd.f32 0.0, %v3077
        %v3079 = vpop.f32.mrf.mxu0
        %3080 = vdwg.mxu0
        %v3081 = vpack.c.bf16 %v3065, %v3065
        %v3082 = vpack.c.bf16 %v3078, %v3078
        %v3083 = vld [vmem:[#allocation11 + $0x300] sm:$0xff]
        %v3084 = vld [vmem:[#allocation11 + $0x308] sm:$0xff]
        %v3085 = vld [vmem:[#allocation11 + $0x310] sm:$0xff]
        %v3086 = vld [vmem:[#allocation11 + $0x318] sm:$0xff]
        %v3087 = vld [vmem:[#allocation11 + $0x320] sm:$0xff]
        %v3088 = vld [vmem:[#allocation11 + $0x328] sm:$0xff]
        %v3089 = vld [vmem:[#allocation11 + $0x330] sm:$0xff]
        %v3090 = vld [vmem:[#allocation11 + $0x338] sm:$0xff]
        %v3091 = vld [vmem:[#allocation11 + $0x340] sm:$0xff]
        %v3092 = vld [vmem:[#allocation11 + $0x348] sm:$0xff]
        %v3093 = vld [vmem:[#allocation11 + $0x350] sm:$0xff]
        %v3094 = vld [vmem:[#allocation11 + $0x358] sm:$0xff]
        %v3095 = vld [vmem:[#allocation11 + $0x360] sm:$0xff]
        %v3096 = vld [vmem:[#allocation11 + $0x368] sm:$0xff]
        %v3097 = vld [vmem:[#allocation11 + $0x370] sm:$0xff]
        %v3098 = vld [vmem:[#allocation11 + $0x378] sm:$0xff]
        %v3099 = vld [vmem:[#allocation11 + $0x380] sm:$0xff]
        %v3100 = vld [vmem:[#allocation11 + $0x388] sm:$0xff]
        %v3101 = vld [vmem:[#allocation11 + $0x390] sm:$0xff]
        %v3102 = vld [vmem:[#allocation11 + $0x398] sm:$0xff]
        %v3103 = vld [vmem:[#allocation11 + $0x3a0] sm:$0xff]
        %v3104 = vld [vmem:[#allocation11 + $0x3a8] sm:$0xff]
        %v3105 = vld [vmem:[#allocation11 + $0x3b0] sm:$0xff]
        %v3106 = vld [vmem:[#allocation11 + $0x3b8] sm:$0xff]
        %v3107 = vld [vmem:[#allocation11 + $0x3c0] sm:$0xff]
        %v3108 = vld [vmem:[#allocation11 + $0x3c8] sm:$0xff]
        %v3109 = vld [vmem:[#allocation11 + $0x3d0] sm:$0xff]
        %v3110 = vld [vmem:[#allocation11 + $0x3d8] sm:$0xff]
        %v3111 = vld [vmem:[#allocation11 + $0x3e0] sm:$0xff]
        %v3112 = vld [vmem:[#allocation11 + $0x3e8] sm:$0xff]
        %v3113 = vld [vmem:[#allocation11 + $0x3f0] sm:$0xff]
        %v3114 = vld [vmem:[#allocation11 + $0x3f8] sm:$0xff]
        %v3115 = vld [vmem:[#allocation11 + $0x400] sm:$0xff]
        %v3116 = vld [vmem:[#allocation11 + $0x408] sm:$0xff]
        %v3117 = vld [vmem:[#allocation11 + $0x410] sm:$0xff]
        %v3118 = vld [vmem:[#allocation11 + $0x418] sm:$0xff]
        %v3119 = vld [vmem:[#allocation11 + $0x420] sm:$0xff]
        %v3120 = vld [vmem:[#allocation11 + $0x428] sm:$0xff]
        %v3121 = vld [vmem:[#allocation11 + $0x430] sm:$0xff]
        %v3122 = vld [vmem:[#allocation11 + $0x438] sm:$0xff]
        %v3123 = vld [vmem:[#allocation11 + $0x440] sm:$0xff]
        %v3124 = vld [vmem:[#allocation11 + $0x448] sm:$0xff]
        %v3125 = vld [vmem:[#allocation11 + $0x450] sm:$0xff]
        %v3126 = vld [vmem:[#allocation11 + $0x458] sm:$0xff]
        %v3127 = vld [vmem:[#allocation11 + $0x460] sm:$0xff]
        %v3128 = vld [vmem:[#allocation11 + $0x468] sm:$0xff]
        %v3129 = vld [vmem:[#allocation11 + $0x470] sm:$0xff]
        %v3130 = vld [vmem:[#allocation11 + $0x478] sm:$0xff]
        %v3131 = vld [vmem:[#allocation11 + $0x480] sm:$0xff]
        %v3132 = vld [vmem:[#allocation11 + $0x488] sm:$0xff]
        %v3133 = vld [vmem:[#allocation11 + $0x490] sm:$0xff]
        %v3134 = vld [vmem:[#allocation11 + $0x498] sm:$0xff]
        %v3135 = vld [vmem:[#allocation11 + $0x4a0] sm:$0xff]
        %v3136 = vld [vmem:[#allocation11 + $0x4a8] sm:$0xff]
        %v3137 = vld [vmem:[#allocation11 + $0x4b0] sm:$0xff]
        %v3138 = vld [vmem:[#allocation11 + $0x4b8] sm:$0xff]
        %v3139 = vld [vmem:[#allocation11 + $0x4c0] sm:$0xff]
        %v3140 = vld [vmem:[#allocation11 + $0x4c8] sm:$0xff]
        %v3141 = vld [vmem:[#allocation11 + $0x4d0] sm:$0xff]
        %v3142 = vld [vmem:[#allocation11 + $0x4d8] sm:$0xff]
        %v3143 = vld [vmem:[#allocation11 + $0x4e0] sm:$0xff]
        %v3144 = vld [vmem:[#allocation11 + $0x4e8] sm:$0xff]
        %v3145 = vld [vmem:[#allocation11 + $0x4f0] sm:$0xff]
        %v3146 = vld [vmem:[#allocation11 + $0x4f8] sm:$0xff]
        %v3147 = vld [vmem:[#allocation11 + $0x500] sm:$0xff]
        %v3148 = vld [vmem:[#allocation11 + $0x508] sm:$0xff]
        %v3149 = vld [vmem:[#allocation11 + $0x510] sm:$0xff]
        %v3150 = vld [vmem:[#allocation11 + $0x518] sm:$0xff]
        %v3151 = vld [vmem:[#allocation11 + $0x520] sm:$0xff]
        %v3152 = vld [vmem:[#allocation11 + $0x528] sm:$0xff]
        %v3153 = vld [vmem:[#allocation11 + $0x530] sm:$0xff]
        %v3154 = vld [vmem:[#allocation11 + $0x538] sm:$0xff]
        %v3155 = vld [vmem:[#allocation11 + $0x540] sm:$0xff]
        %v3156 = vld [vmem:[#allocation11 + $0x548] sm:$0xff]
        %v3157 = vld [vmem:[#allocation11 + $0x550] sm:$0xff]
        %v3158 = vld [vmem:[#allocation11 + $0x558] sm:$0xff]
        %v3159 = vld [vmem:[#allocation11 + $0x560] sm:$0xff]
        %v3160 = vld [vmem:[#allocation11 + $0x568] sm:$0xff]
        %v3161 = vld [vmem:[#allocation11 + $0x570] sm:$0xff]
        %v3162 = vld [vmem:[#allocation11 + $0x578] sm:$0xff]
        %v3163 = vld [vmem:[#allocation11 + $0x580] sm:$0xff]
        %v3164 = vld [vmem:[#allocation11 + $0x588] sm:$0xff]
        %v3165 = vld [vmem:[#allocation11 + $0x590] sm:$0xff]
        %v3166 = vld [vmem:[#allocation11 + $0x598] sm:$0xff]
        %v3167 = vld [vmem:[#allocation11 + $0x5a0] sm:$0xff]
        %v3168 = vld [vmem:[#allocation11 + $0x5a8] sm:$0xff]
        %v3169 = vld [vmem:[#allocation11 + $0x5b0] sm:$0xff]
        %v3170 = vld [vmem:[#allocation11 + $0x5b8] sm:$0xff]
        %v3171 = vld [vmem:[#allocation11 + $0x5c0] sm:$0xff]
        %v3172 = vld [vmem:[#allocation11 + $0x5c8] sm:$0xff]
        %v3173 = vld [vmem:[#allocation11 + $0x5d0] sm:$0xff]
        %v3174 = vld [vmem:[#allocation11 + $0x5d8] sm:$0xff]
        %v3175 = vld [vmem:[#allocation11 + $0x5e0] sm:$0xff]
        %v3176 = vld [vmem:[#allocation11 + $0x5e8] sm:$0xff]
        %v3177 = vld [vmem:[#allocation11 + $0x5f0] sm:$0xff]
        %v3178 = vld [vmem:[#allocation11 + $0x5f8] sm:$0xff]
        %v3275 = vunpack.c.l.b16 %v3083
        %v3276 = vunpack.c.h.b16 %v3083
        %v3277 = vunpack.c.l.b16 %v3084
        %v3278 = vunpack.c.h.b16 %v3084
        %v3279 = vunpack.c.l.b16 %v3085
        %v3280 = vunpack.c.h.b16 %v3085
        %v3281 = vunpack.c.l.b16 %v3086
        %v3282 = vunpack.c.h.b16 %v3086
        %v3283 = vunpack.c.l.b16 %v3087
        %v3284 = vunpack.c.h.b16 %v3087
        %v3285 = vunpack.c.l.b16 %v3088
        %v3286 = vunpack.c.h.b16 %v3088
        %v3287 = vunpack.c.l.b16 %v3089
        %v3288 = vunpack.c.h.b16 %v3089
        %v3289 = vunpack.c.l.b16 %v3090
        %v3290 = vunpack.c.h.b16 %v3090
        %v3291 = vunpack.c.l.b16 %v3091
        %v3292 = vunpack.c.h.b16 %v3091
        %v3293 = vunpack.c.l.b16 %v3092
        %v3294 = vunpack.c.h.b16 %v3092
        %v3295 = vunpack.c.l.b16 %v3093
        %v3296 = vunpack.c.h.b16 %v3093
        %v3297 = vunpack.c.l.b16 %v3094
        %v3298 = vunpack.c.h.b16 %v3094
        %v3299 = vunpack.c.l.b16 %v3095
        %v3300 = vunpack.c.h.b16 %v3095
        %v3301 = vunpack.c.l.b16 %v3096
        %v3302 = vunpack.c.h.b16 %v3096
        %v3303 = vunpack.c.l.b16 %v3097
        %v3304 = vunpack.c.h.b16 %v3097
        %v3305 = vunpack.c.l.b16 %v3098
        %v3306 = vunpack.c.h.b16 %v3098
        %v3307 = vunpack.c.l.b16 %v3099
        %v3308 = vunpack.c.h.b16 %v3099
        %v3309 = vunpack.c.l.b16 %v3100
        %v3310 = vunpack.c.h.b16 %v3100
        %v3311 = vunpack.c.l.b16 %v3101
        %v3312 = vunpack.c.h.b16 %v3101
        %v3313 = vunpack.c.l.b16 %v3102
        %v3314 = vunpack.c.h.b16 %v3102
        %v3315 = vunpack.c.l.b16 %v3103
        %v3316 = vunpack.c.h.b16 %v3103
        %v3317 = vunpack.c.l.b16 %v3104
        %v3318 = vunpack.c.h.b16 %v3104
        %v3319 = vunpack.c.l.b16 %v3105
        %v3320 = vunpack.c.h.b16 %v3105
        %v3321 = vunpack.c.l.b16 %v3106
        %v3322 = vunpack.c.h.b16 %v3106
        %v3323 = vunpack.c.l.b16 %v3107
        %v3324 = vunpack.c.h.b16 %v3107
        %v3325 = vunpack.c.l.b16 %v3108
        %v3326 = vunpack.c.h.b16 %v3108
        %v3327 = vunpack.c.l.b16 %v3109
        %v3328 = vunpack.c.h.b16 %v3109
        %v3329 = vunpack.c.l.b16 %v3110
        %v3330 = vunpack.c.h.b16 %v3110
        %v3331 = vunpack.c.l.b16 %v3111
        %v3332 = vunpack.c.h.b16 %v3111
        %v3333 = vunpack.c.l.b16 %v3112
        %v3334 = vunpack.c.h.b16 %v3112
        %v3335 = vunpack.c.l.b16 %v3113
        %v3336 = vunpack.c.h.b16 %v3113
        %v3337 = vunpack.c.l.b16 %v3114
        %v3338 = vunpack.c.h.b16 %v3114
        %v3339 = vunpack.c.l.b16 %v3115
        %v3340 = vunpack.c.h.b16 %v3115
        %v3341 = vunpack.c.l.b16 %v3116
        %v3342 = vunpack.c.h.b16 %v3116
        %v3343 = vunpack.c.l.b16 %v3117
        %v3344 = vunpack.c.h.b16 %v3117
        %v3345 = vunpack.c.l.b16 %v3118
        %v3346 = vunpack.c.h.b16 %v3118
        %v3347 = vunpack.c.l.b16 %v3119
        %v3348 = vunpack.c.h.b16 %v3119
        %v3349 = vunpack.c.l.b16 %v3120
        %v3350 = vunpack.c.h.b16 %v3120
        %v3351 = vunpack.c.l.b16 %v3121
        %v3352 = vunpack.c.h.b16 %v3121
        %v3353 = vunpack.c.l.b16 %v3122
        %v3354 = vunpack.c.h.b16 %v3122
        %v3355 = vunpack.c.l.b16 %v3123
        %v3356 = vunpack.c.h.b16 %v3123
        %v3357 = vunpack.c.l.b16 %v3124
        %v3358 = vunpack.c.h.b16 %v3124
        %v3359 = vunpack.c.l.b16 %v3125
        %v3360 = vunpack.c.h.b16 %v3125
        %v3361 = vunpack.c.l.b16 %v3126
        %v3362 = vunpack.c.h.b16 %v3126
        %v3363 = vunpack.c.l.b16 %v3127
        %v3364 = vunpack.c.h.b16 %v3127
        %v3365 = vunpack.c.l.b16 %v3128
        %v3366 = vunpack.c.h.b16 %v3128
        %v3367 = vunpack.c.l.b16 %v3129
        %v3368 = vunpack.c.h.b16 %v3129
        %v3369 = vunpack.c.l.b16 %v3130
        %v3370 = vunpack.c.h.b16 %v3130
        %v3371 = vunpack.c.l.b16 %v3131
        %v3372 = vunpack.c.h.b16 %v3131
        %v3373 = vunpack.c.l.b16 %v3132
        %v3374 = vunpack.c.h.b16 %v3132
        %v3375 = vunpack.c.l.b16 %v3133
        %v3376 = vunpack.c.h.b16 %v3133
        %v3377 = vunpack.c.l.b16 %v3134
        %v3378 = vunpack.c.h.b16 %v3134
        %v3379 = vunpack.c.l.b16 %v3135
        %v3380 = vunpack.c.h.b16 %v3135
        %v3381 = vunpack.c.l.b16 %v3136
        %v3382 = vunpack.c.h.b16 %v3136
        %v3383 = vunpack.c.l.b16 %v3137
        %v3384 = vunpack.c.h.b16 %v3137
        %v3385 = vunpack.c.l.b16 %v3138
        %v3386 = vunpack.c.h.b16 %v3138
        %v3387 = vunpack.c.l.b16 %v3139
        %v3388 = vunpack.c.h.b16 %v3139
        %v3389 = vunpack.c.l.b16 %v3140
        %v3390 = vunpack.c.h.b16 %v3140
        %v3391 = vunpack.c.l.b16 %v3141
        %v3392 = vunpack.c.h.b16 %v3141
        %v3393 = vunpack.c.l.b16 %v3142
        %v3394 = vunpack.c.h.b16 %v3142
        %v3395 = vunpack.c.l.b16 %v3143
        %v3396 = vunpack.c.h.b16 %v3143
        %v3397 = vunpack.c.l.b16 %v3144
        %v3398 = vunpack.c.h.b16 %v3144
        %v3399 = vunpack.c.l.b16 %v3145
        %v3400 = vunpack.c.h.b16 %v3145
        %v3401 = vunpack.c.l.b16 %v3146
        %v3402 = vunpack.c.h.b16 %v3146
        %v3403 = vunpack.c.l.b16 %v3147
        %v3404 = vunpack.c.h.b16 %v3147
        %v3405 = vunpack.c.l.b16 %v3148
        %v3406 = vunpack.c.h.b16 %v3148
        %v3407 = vunpack.c.l.b16 %v3149
        %v3408 = vunpack.c.h.b16 %v3149
        %v3409 = vunpack.c.l.b16 %v3150
        %v3410 = vunpack.c.h.b16 %v3150
        %v3411 = vunpack.c.l.b16 %v3151
        %v3412 = vunpack.c.h.b16 %v3151
        %v3413 = vunpack.c.l.b16 %v3152
        %v3414 = vunpack.c.h.b16 %v3152
        %v3415 = vunpack.c.l.b16 %v3153
        %v3416 = vunpack.c.h.b16 %v3153
        %v3417 = vunpack.c.l.b16 %v3154
        %v3418 = vunpack.c.h.b16 %v3154
        %v3419 = vunpack.c.l.b16 %v3155
        %v3420 = vunpack.c.h.b16 %v3155
        %v3421 = vunpack.c.l.b16 %v3156
        %v3422 = vunpack.c.h.b16 %v3156
        %v3423 = vunpack.c.l.b16 %v3157
        %v3424 = vunpack.c.h.b16 %v3157
        %v3425 = vunpack.c.l.b16 %v3158
        %v3426 = vunpack.c.h.b16 %v3158
        %v3427 = vunpack.c.l.b16 %v3159
        %v3428 = vunpack.c.h.b16 %v3159
        %v3429 = vunpack.c.l.b16 %v3160
        %v3430 = vunpack.c.h.b16 %v3160
        %v3431 = vunpack.c.l.b16 %v3161
        %v3432 = vunpack.c.h.b16 %v3161
        %v3433 = vunpack.c.l.b16 %v3162
        %v3434 = vunpack.c.h.b16 %v3162
        %v3435 = vunpack.c.l.b16 %v3163
        %v3436 = vunpack.c.h.b16 %v3163
        %v3437 = vunpack.c.l.b16 %v3164
        %v3438 = vunpack.c.h.b16 %v3164
        %v3439 = vunpack.c.l.b16 %v3165
        %v3440 = vunpack.c.h.b16 %v3165
        %v3441 = vunpack.c.l.b16 %v3166
        %v3442 = vunpack.c.h.b16 %v3166
        %v3443 = vunpack.c.l.b16 %v3167
        %v3444 = vunpack.c.h.b16 %v3167
        %v3445 = vunpack.c.l.b16 %v3168
        %v3446 = vunpack.c.h.b16 %v3168
        %v3447 = vunpack.c.l.b16 %v3169
        %v3448 = vunpack.c.h.b16 %v3169
        %v3449 = vunpack.c.l.b16 %v3170
        %v3450 = vunpack.c.h.b16 %v3170
        %v3451 = vunpack.c.l.b16 %v3171
        %v3452 = vunpack.c.h.b16 %v3171
        %v3453 = vunpack.c.l.b16 %v3172
        %v3454 = vunpack.c.h.b16 %v3172
        %v3455 = vunpack.c.l.b16 %v3173
        %v3456 = vunpack.c.h.b16 %v3173
        %v3457 = vunpack.c.l.b16 %v3174
        %v3458 = vunpack.c.h.b16 %v3174
        %v3459 = vunpack.c.l.b16 %v3175
        %v3460 = vunpack.c.h.b16 %v3175
        %v3461 = vunpack.c.l.b16 %v3176
        %v3462 = vunpack.c.h.b16 %v3176
        %v3463 = vunpack.c.l.b16 %v3177
        %v3464 = vunpack.c.h.b16 %v3177
        %v3465 = vunpack.c.l.b16 %v3178
        %v3466 = vunpack.c.h.b16 %v3178
        %v3467 = vpack.c.b16 %v3281, %v3275
        %v3468 = vpack.c.b16 %v3282, %v3276
        %v3469 = vpack.c.b16 %v3283, %v3277
        %v3470 = vpack.c.b16 %v3284, %v3278
        %v3471 = vpack.c.b16 %v3285, %v3279
        %v3472 = vpack.c.b16 %v3286, %v3280
        %v3473 = vpack.c.b16 %v3293, %v3287
        %v3474 = vpack.c.b16 %v3294, %v3288
        %v3475 = vpack.c.b16 %v3295, %v3289
        %v3476 = vpack.c.b16 %v3296, %v3290
        %v3477 = vpack.c.b16 %v3297, %v3291
        %v3478 = vpack.c.b16 %v3298, %v3292
        %v3479 = vpack.c.b16 %v3305, %v3299
        %v3480 = vpack.c.b16 %v3306, %v3300
        %v3481 = vpack.c.b16 %v3307, %v3301
        %v3482 = vpack.c.b16 %v3308, %v3302
        %v3483 = vpack.c.b16 %v3309, %v3303
        %v3484 = vpack.c.b16 %v3310, %v3304
        %v3485 = vpack.c.b16 %v3317, %v3311
        %v3486 = vpack.c.b16 %v3318, %v3312
        %v3487 = vpack.c.b16 %v3319, %v3313
        %v3488 = vpack.c.b16 %v3320, %v3314
        %v3489 = vpack.c.b16 %v3321, %v3315
        %v3490 = vpack.c.b16 %v3322, %v3316
        %v3491 = vpack.c.b16 %v3329, %v3323
        %v3492 = vpack.c.b16 %v3330, %v3324
        %v3493 = vpack.c.b16 %v3331, %v3325
        %v3494 = vpack.c.b16 %v3332, %v3326
        %v3495 = vpack.c.b16 %v3333, %v3327
        %v3496 = vpack.c.b16 %v3334, %v3328
        %v3497 = vpack.c.b16 %v3341, %v3335
        %v3498 = vpack.c.b16 %v3342, %v3336
        %v3499 = vpack.c.b16 %v3343, %v3337
        %v3500 = vpack.c.b16 %v3344, %v3338
        %v3501 = vpack.c.b16 %v3345, %v3339
        %v3502 = vpack.c.b16 %v3346, %v3340
        %v3503 = vpack.c.b16 %v3353, %v3347
        %v3504 = vpack.c.b16 %v3354, %v3348
        %v3505 = vpack.c.b16 %v3355, %v3349
        %v3506 = vpack.c.b16 %v3356, %v3350
        %v3507 = vpack.c.b16 %v3357, %v3351
        %v3508 = vpack.c.b16 %v3358, %v3352
        %v3509 = vpack.c.b16 %v3365, %v3359
        %v3510 = vpack.c.b16 %v3366, %v3360
        %v3511 = vpack.c.b16 %v3367, %v3361
        %v3512 = vpack.c.b16 %v3368, %v3362
        %v3513 = vpack.c.b16 %v3369, %v3363
        %v3514 = vpack.c.b16 %v3370, %v3364
        %v3515 = vpack.c.b16 %v3377, %v3371
        %v3516 = vpack.c.b16 %v3378, %v3372
        %v3517 = vpack.c.b16 %v3379, %v3373
        %v3518 = vpack.c.b16 %v3380, %v3374
        %v3519 = vpack.c.b16 %v3381, %v3375
        %v3520 = vpack.c.b16 %v3382, %v3376
        %v3521 = vpack.c.b16 %v3389, %v3383
        %v3522 = vpack.c.b16 %v3390, %v3384
        %v3523 = vpack.c.b16 %v3391, %v3385
        %v3524 = vpack.c.b16 %v3392, %v3386
        %v3525 = vpack.c.b16 %v3393, %v3387
        %v3526 = vpack.c.b16 %v3394, %v3388
        %v3527 = vpack.c.b16 %v3401, %v3395
        %v3528 = vpack.c.b16 %v3402, %v3396
        %v3529 = vpack.c.b16 %v3403, %v3397
        %v3530 = vpack.c.b16 %v3404, %v3398
        %v3531 = vpack.c.b16 %v3405, %v3399
        %v3532 = vpack.c.b16 %v3406, %v3400
        %v3533 = vpack.c.b16 %v3413, %v3407
        %v3534 = vpack.c.b16 %v3414, %v3408
        %v3535 = vpack.c.b16 %v3415, %v3409
        %v3536 = vpack.c.b16 %v3416, %v3410
        %v3537 = vpack.c.b16 %v3417, %v3411
        %v3538 = vpack.c.b16 %v3418, %v3412
        %v3539 = vpack.c.b16 %v3425, %v3419
        %v3540 = vpack.c.b16 %v3426, %v3420
        %v3541 = vpack.c.b16 %v3427, %v3421
        %v3542 = vpack.c.b16 %v3428, %v3422
        %v3543 = vpack.c.b16 %v3429, %v3423
        %v3544 = vpack.c.b16 %v3430, %v3424
        %v3545 = vpack.c.b16 %v3437, %v3431
        %v3546 = vpack.c.b16 %v3438, %v3432
        %v3547 = vpack.c.b16 %v3439, %v3433
        %v3548 = vpack.c.b16 %v3440, %v3434
        %v3549 = vpack.c.b16 %v3441, %v3435
        %v3550 = vpack.c.b16 %v3442, %v3436
        %v3551 = vpack.c.b16 %v3449, %v3443
        %v3552 = vpack.c.b16 %v3450, %v3444
        %v3553 = vpack.c.b16 %v3451, %v3445
        %v3554 = vpack.c.b16 %v3452, %v3446
        %v3555 = vpack.c.b16 %v3453, %v3447
        %v3556 = vpack.c.b16 %v3454, %v3448
        %v3557 = vpack.c.b16 %v3461, %v3455
        %v3558 = vpack.c.b16 %v3462, %v3456
        %v3559 = vpack.c.b16 %v3463, %v3457
        %v3560 = vpack.c.b16 %v3464, %v3458
        %v3561 = vpack.c.b16 %v3465, %v3459
        %v3562 = vpack.c.b16 %v3466, %v3460
        %3659 = vmatpush.bf16.msra.mxu0 %v3509
        %3660 = vmatpush.bf16.msra.mxu0 %v3503
        %3661 = vmatpush.bf16.msra.mxu0 %v3497
        %3662 = vmatpush.bf16.msra.mxu0 %v3491
        %3663 = vmatpush.bf16.msra.mxu0 %v3485
        %3664 = vmatpush.bf16.msra.mxu0 %v3479
        %3665 = vmatpush.bf16.msra.mxu0 %v3473
        %3666 = vmatpush.bf16.msra.mxu0 %v3467
        %3667 = vmatmul.bf16.gmra.mxu0 %v3081
        %v3668 = vpop.f32.mrf.mxu0
        %v3669 = vadd.f32 0.0, %v3668
        %v3670 = vpop.f32.mrf.mxu0
        %3671 = vdwg.mxu0
        %3672 = vmatpush.bf16.msra.mxu0 %v3557
        %3673 = vmatpush.bf16.msra.mxu0 %v3551
        %3674 = vmatpush.bf16.msra.mxu0 %v3545
        %3675 = vmatpush.bf16.msra.mxu0 %v3539
        %3676 = vmatpush.bf16.msra.mxu0 %v3533
        %3677 = vmatpush.bf16.msra.mxu0 %v3527
        %3678 = vmatpush.bf16.msra.mxu0 %v3521
        %3679 = vmatpush.bf16.msra.mxu0 %v3515
        %3680 = vmatmul.bf16.gmra.mxu0 %v3082
        %v3681 = vpop.f32.mrf.mxu0
        %v3682 = vadd.f32 %v3669, %v3681
        %v3683 = vpop.f32.mrf.mxu0
        %3684 = vdwg.mxu0
        %3685 = vmatpush.bf16.msra.mxu0 %v3510
        %3686 = vmatpush.bf16.msra.mxu0 %v3504
        %3687 = vmatpush.bf16.msra.mxu0 %v3498
        %3688 = vmatpush.bf16.msra.mxu0 %v3492
        %3689 = vmatpush.bf16.msra.mxu0 %v3486
        %3690 = vmatpush.bf16.msra.mxu0 %v3480
        %3691 = vmatpush.bf16.msra.mxu0 %v3474
        %3692 = vmatpush.bf16.msra.mxu0 %v3468
        %3693 = vmatmul.bf16.gmra.mxu0 %v3081
        %v3694 = vpop.f32.mrf.mxu0
        %v3695 = vadd.f32 0.0, %v3694
        %v3696 = vpop.f32.mrf.mxu0
        %3697 = vdwg.mxu0
        %3698 = vmatpush.bf16.msra.mxu0 %v3558
        %3699 = vmatpush.bf16.msra.mxu0 %v3552
        %3700 = vmatpush.bf16.msra.mxu0 %v3546
        %3701 = vmatpush.bf16.msra.mxu0 %v3540
        %3702 = vmatpush.bf16.msra.mxu0 %v3534
        %3703 = vmatpush.bf16.msra.mxu0 %v3528
        %3704 = vmatpush.bf16.msra.mxu0 %v3522
        %3705 = vmatpush.bf16.msra.mxu0 %v3516
        %3706 = vmatmul.bf16.gmra.mxu0 %v3082
        %v3707 = vpop.f32.mrf.mxu0
        %v3708 = vadd.f32 %v3695, %v3707
        %v3709 = vpop.f32.mrf.mxu0
        %3710 = vdwg.mxu0
        %3711 = vmatpush.bf16.msra.mxu0 %v3511
        %3712 = vmatpush.bf16.msra.mxu0 %v3505
        %3713 = vmatpush.bf16.msra.mxu0 %v3499
        %3714 = vmatpush.bf16.msra.mxu0 %v3493
        %3715 = vmatpush.bf16.msra.mxu0 %v3487
        %3716 = vmatpush.bf16.msra.mxu0 %v3481
        %3717 = vmatpush.bf16.msra.mxu0 %v3475
        %3718 = vmatpush.bf16.msra.mxu0 %v3469
        %3719 = vmatmul.bf16.gmra.mxu0 %v3081
        %v3720 = vpop.f32.mrf.mxu0
        %v3721 = vadd.f32 0.0, %v3720
        %v3722 = vpop.f32.mrf.mxu0
        %3723 = vdwg.mxu0
        %3724 = vmatpush.bf16.msra.mxu0 %v3559
        %3725 = vmatpush.bf16.msra.mxu0 %v3553
        %3726 = vmatpush.bf16.msra.mxu0 %v3547
        %3727 = vmatpush.bf16.msra.mxu0 %v3541
        %3728 = vmatpush.bf16.msra.mxu0 %v3535
        %3729 = vmatpush.bf16.msra.mxu0 %v3529
        %3730 = vmatpush.bf16.msra.mxu0 %v3523
        %3731 = vmatpush.bf16.msra.mxu0 %v3517
        %3732 = vmatmul.bf16.gmra.mxu0 %v3082
        %v3733 = vpop.f32.mrf.mxu0
        %v3734 = vadd.f32 %v3721, %v3733
        %v3735 = vpop.f32.mrf.mxu0
        %3736 = vdwg.mxu0
        %3737 = vmatpush.bf16.msra.mxu0 %v3512
        %3738 = vmatpush.bf16.msra.mxu0 %v3506
        %3739 = vmatpush.bf16.msra.mxu0 %v3500
        %3740 = vmatpush.bf16.msra.mxu0 %v3494
        %3741 = vmatpush.bf16.msra.mxu0 %v3488
        %3742 = vmatpush.bf16.msra.mxu0 %v3482
        %3743 = vmatpush.bf16.msra.mxu0 %v3476
        %3744 = vmatpush.bf16.msra.mxu0 %v3470
        %3745 = vmatmul.bf16.gmra.mxu0 %v3081
        %v3746 = vpop.f32.mrf.mxu0
        %v3747 = vadd.f32 0.0, %v3746
        %v3748 = vpop.f32.mrf.mxu0
        %3749 = vdwg.mxu0
        %3750 = vmatpush.bf16.msra.mxu0 %v3560
        %3751 = vmatpush.bf16.msra.mxu0 %v3554
        %3752 = vmatpush.bf16.msra.mxu0 %v3548
        %3753 = vmatpush.bf16.msra.mxu0 %v3542
        %3754 = vmatpush.bf16.msra.mxu0 %v3536
        %3755 = vmatpush.bf16.msra.mxu0 %v3530
        %3756 = vmatpush.bf16.msra.mxu0 %v3524
        %3757 = vmatpush.bf16.msra.mxu0 %v3518
        %3758 = vmatmul.bf16.gmra.mxu0 %v3082
        %v3759 = vpop.f32.mrf.mxu0
        %v3760 = vadd.f32 %v3747, %v3759
        %v3761 = vpop.f32.mrf.mxu0
        %3762 = vdwg.mxu0
        %3763 = vmatpush.bf16.msra.mxu0 %v3513
        %3764 = vmatpush.bf16.msra.mxu0 %v3507
        %3765 = vmatpush.bf16.msra.mxu0 %v3501
        %3766 = vmatpush.bf16.msra.mxu0 %v3495
        %3767 = vmatpush.bf16.msra.mxu0 %v3489
        %3768 = vmatpush.bf16.msra.mxu0 %v3483
        %3769 = vmatpush.bf16.msra.mxu0 %v3477
        %3770 = vmatpush.bf16.msra.mxu0 %v3471
        %3771 = vmatmul.bf16.gmra.mxu0 %v3081
        %v3772 = vpop.f32.mrf.mxu0
        %v3773 = vadd.f32 0.0, %v3772
        %v3774 = vpop.f32.mrf.mxu0
        %3775 = vdwg.mxu0
        %3776 = vmatpush.bf16.msra.mxu0 %v3561
        %3777 = vmatpush.bf16.msra.mxu0 %v3555
        %3778 = vmatpush.bf16.msra.mxu0 %v3549
        %3779 = vmatpush.bf16.msra.mxu0 %v3543
        %3780 = vmatpush.bf16.msra.mxu0 %v3537
        %3781 = vmatpush.bf16.msra.mxu0 %v3531
        %3782 = vmatpush.bf16.msra.mxu0 %v3525
        %3783 = vmatpush.bf16.msra.mxu0 %v3519
        %3784 = vmatmul.bf16.gmra.mxu0 %v3082
        %v3785 = vpop.f32.mrf.mxu0
        %v3786 = vadd.f32 %v3773, %v3785
        %v3787 = vpop.f32.mrf.mxu0
        %3788 = vdwg.mxu0
        %3789 = vmatpush.bf16.msra.mxu0 %v3514
        %3790 = vmatpush.bf16.msra.mxu0 %v3508
        %3791 = vmatpush.bf16.msra.mxu0 %v3502
        %3792 = vmatpush.bf16.msra.mxu0 %v3496
        %3793 = vmatpush.bf16.msra.mxu0 %v3490
        %3794 = vmatpush.bf16.msra.mxu0 %v3484
        %3795 = vmatpush.bf16.msra.mxu0 %v3478
        %3796 = vmatpush.bf16.msra.mxu0 %v3472
        %3797 = vmatmul.bf16.gmra.mxu0 %v3081
        %v3798 = vpop.f32.mrf.mxu0
        %v3799 = vadd.f32 0.0, %v3798
        %v3800 = vpop.f32.mrf.mxu0
        %3801 = vdwg.mxu0
        %3802 = vmatpush.bf16.msra.mxu0 %v3562
        %3803 = vmatpush.bf16.msra.mxu0 %v3556
        %3804 = vmatpush.bf16.msra.mxu0 %v3550
        %3805 = vmatpush.bf16.msra.mxu0 %v3544
        %3806 = vmatpush.bf16.msra.mxu0 %v3538
        %3807 = vmatpush.bf16.msra.mxu0 %v3532
        %3808 = vmatpush.bf16.msra.mxu0 %v3526
        %3809 = vmatpush.bf16.msra.mxu0 %v3520
        %3810 = vmatmul.bf16.gmra.mxu0 %v3082
        %v3811 = vpop.f32.mrf.mxu0
        %v3812 = vadd.f32 %v3799, %v3811
        %v3813 = vpop.f32.mrf.mxu0
        %3814 = vdwg.mxu0
        %v3911 = vunpack.c.l.b16 %v2894
        %v3912 = vunpack.c.h.b16 %v2894
        %v3913 = vunpack.c.l.b16 %v2895
        %v3914 = vunpack.c.h.b16 %v2895
        %v3915 = vunpack.c.l.b16 %v2896
        %v3916 = vunpack.c.h.b16 %v2896
        %v3917 = vunpack.c.l.b16 %v2897
        %v3918 = vunpack.c.h.b16 %v2897
        %v3919 = vunpack.c.l.b16 %v2898
        %v3920 = vunpack.c.h.b16 %v2898
        %v3921 = vunpack.c.l.b16 %v2899
        %v3922 = vunpack.c.h.b16 %v2899
        %v3923 = vunpack.c.l.b16 %v2900
        %v3924 = vunpack.c.h.b16 %v2900
        %v3925 = vunpack.c.l.b16 %v2901
        %v3926 = vunpack.c.h.b16 %v2901
        %v3927 = vunpack.c.l.b16 %v2902
        %v3928 = vunpack.c.h.b16 %v2902
        %v3929 = vunpack.c.l.b16 %v2903
        %v3930 = vunpack.c.h.b16 %v2903
        %v3931 = vunpack.c.l.b16 %v2904
        %v3932 = vunpack.c.h.b16 %v2904
        %v3933 = vunpack.c.l.b16 %v2905
        %v3934 = vunpack.c.h.b16 %v2905
        %v3935 = vunpack.c.l.b16 %v2906
        %v3936 = vunpack.c.h.b16 %v2906
        %v3937 = vunpack.c.l.b16 %v2907
        %v3938 = vunpack.c.h.b16 %v2907
        %v3939 = vunpack.c.l.b16 %v2908
        %v3940 = vunpack.c.h.b16 %v2908
        %v3941 = vunpack.c.l.b16 %v2909
        %v3942 = vunpack.c.h.b16 %v2909
        %v3943 = vunpack.c.l.b16 %v2910
        %v3944 = vunpack.c.h.b16 %v2910
        %v3945 = vunpack.c.l.b16 %v2911
        %v3946 = vunpack.c.h.b16 %v2911
        %v3947 = vunpack.c.l.b16 %v2912
        %v3948 = vunpack.c.h.b16 %v2912
        %v3949 = vunpack.c.l.b16 %v2913
        %v3950 = vunpack.c.h.b16 %v2913
        %v3951 = vunpack.c.l.b16 %v2914
        %v3952 = vunpack.c.h.b16 %v2914
        %v3953 = vunpack.c.l.b16 %v2915
        %v3954 = vunpack.c.h.b16 %v2915
        %v3955 = vunpack.c.l.b16 %v2916
        %v3956 = vunpack.c.h.b16 %v2916
        %v3957 = vunpack.c.l.b16 %v2917
        %v3958 = vunpack.c.h.b16 %v2917
        %v3959 = vunpack.c.l.b16 %v2918
        %v3960 = vunpack.c.h.b16 %v2918
        %v3961 = vunpack.c.l.b16 %v2919
        %v3962 = vunpack.c.h.b16 %v2919
        %v3963 = vunpack.c.l.b16 %v2920
        %v3964 = vunpack.c.h.b16 %v2920
        %v3965 = vunpack.c.l.b16 %v2921
        %v3966 = vunpack.c.h.b16 %v2921
        %v3967 = vunpack.c.l.b16 %v2922
        %v3968 = vunpack.c.h.b16 %v2922
        %v3969 = vunpack.c.l.b16 %v2923
        %v3970 = vunpack.c.h.b16 %v2923
        %v3971 = vunpack.c.l.b16 %v2924
        %v3972 = vunpack.c.h.b16 %v2924
        %v3973 = vunpack.c.l.b16 %v2925
        %v3974 = vunpack.c.h.b16 %v2925
        %v3975 = vunpack.c.l.b16 %v2926
        %v3976 = vunpack.c.h.b16 %v2926
        %v3977 = vunpack.c.l.b16 %v2927
        %v3978 = vunpack.c.h.b16 %v2927
        %v3979 = vunpack.c.l.b16 %v2928
        %v3980 = vunpack.c.h.b16 %v2928
        %v3981 = vunpack.c.l.b16 %v2929
        %v3982 = vunpack.c.h.b16 %v2929
        %v3983 = vunpack.c.l.b16 %v2930
        %v3984 = vunpack.c.h.b16 %v2930
        %v3985 = vunpack.c.l.b16 %v2931
        %v3986 = vunpack.c.h.b16 %v2931
        %v3987 = vunpack.c.l.b16 %v2932
        %v3988 = vunpack.c.h.b16 %v2932
        %v3989 = vunpack.c.l.b16 %v2933
        %v3990 = vunpack.c.h.b16 %v2933
        %v3991 = vunpack.c.l.b16 %v2934
        %v3992 = vunpack.c.h.b16 %v2934
        %v3993 = vunpack.c.l.b16 %v2935
        %v3994 = vunpack.c.h.b16 %v2935
        %v3995 = vunpack.c.l.b16 %v2936
        %v3996 = vunpack.c.h.b16 %v2936
        %v3997 = vunpack.c.l.b16 %v2937
        %v3998 = vunpack.c.h.b16 %v2937
        %v3999 = vunpack.c.l.b16 %v2938
        %v4000 = vunpack.c.h.b16 %v2938
        %v4001 = vunpack.c.l.b16 %v2939
        %v4002 = vunpack.c.h.b16 %v2939
        %v4003 = vunpack.c.l.b16 %v2940
        %v4004 = vunpack.c.h.b16 %v2940
        %v4005 = vunpack.c.l.b16 %v2941
        %v4006 = vunpack.c.h.b16 %v2941
        %v4007 = vunpack.c.l.b16 %v2942
        %v4008 = vunpack.c.h.b16 %v2942
        %v4009 = vunpack.c.l.b16 %v2943
        %v4010 = vunpack.c.h.b16 %v2943
        %v4011 = vunpack.c.l.b16 %v2944
        %v4012 = vunpack.c.h.b16 %v2944
        %v4013 = vunpack.c.l.b16 %v2945
        %v4014 = vunpack.c.h.b16 %v2945
        %v4015 = vunpack.c.l.b16 %v2946
        %v4016 = vunpack.c.h.b16 %v2946
        %v4017 = vunpack.c.l.b16 %v2947
        %v4018 = vunpack.c.h.b16 %v2947
        %v4019 = vunpack.c.l.b16 %v2948
        %v4020 = vunpack.c.h.b16 %v2948
        %v4021 = vunpack.c.l.b16 %v2949
        %v4022 = vunpack.c.h.b16 %v2949
        %v4023 = vunpack.c.l.b16 %v2950
        %v4024 = vunpack.c.h.b16 %v2950
        %v4025 = vunpack.c.l.b16 %v2951
        %v4026 = vunpack.c.h.b16 %v2951
        %v4027 = vunpack.c.l.b16 %v2952
        %v4028 = vunpack.c.h.b16 %v2952
        %v4029 = vunpack.c.l.b16 %v2953
        %v4030 = vunpack.c.h.b16 %v2953
        %v4031 = vunpack.c.l.b16 %v2954
        %v4032 = vunpack.c.h.b16 %v2954
        %v4033 = vunpack.c.l.b16 %v2955
        %v4034 = vunpack.c.h.b16 %v2955
        %v4035 = vunpack.c.l.b16 %v2956
        %v4036 = vunpack.c.h.b16 %v2956
        %v4037 = vunpack.c.l.b16 %v2957
        %v4038 = vunpack.c.h.b16 %v2957
        %v4039 = vunpack.c.l.b16 %v2958
        %v4040 = vunpack.c.h.b16 %v2958
        %v4041 = vunpack.c.l.b16 %v2959
        %v4042 = vunpack.c.h.b16 %v2959
        %v4043 = vunpack.c.l.b16 %v2960
        %v4044 = vunpack.c.h.b16 %v2960
        %v4045 = vunpack.c.l.b16 %v2961
        %v4046 = vunpack.c.h.b16 %v2961
        %v4047 = vunpack.c.l.b16 %v2962
        %v4048 = vunpack.c.h.b16 %v2962
        %v4049 = vunpack.c.l.b16 %v2963
        %v4050 = vunpack.c.h.b16 %v2963
        %v4051 = vunpack.c.l.b16 %v2964
        %v4052 = vunpack.c.h.b16 %v2964
        %v4053 = vunpack.c.l.b16 %v2965
        %v4054 = vunpack.c.h.b16 %v2965
        %v4055 = vunpack.c.l.b16 %v2966
        %v4056 = vunpack.c.h.b16 %v2966
        %v4057 = vunpack.c.l.b16 %v2967
        %v4058 = vunpack.c.h.b16 %v2967
        %v4059 = vunpack.c.l.b16 %v2968
        %v4060 = vunpack.c.h.b16 %v2968
        %v4061 = vunpack.c.l.b16 %v2969
        %v4062 = vunpack.c.h.b16 %v2969
        %v4063 = vunpack.c.l.b16 %v2970
        %v4064 = vunpack.c.h.b16 %v2970
        %v4065 = vunpack.c.l.b16 %v2971
        %v4066 = vunpack.c.h.b16 %v2971
        %v4067 = vunpack.c.l.b16 %v2972
        %v4068 = vunpack.c.h.b16 %v2972
        %v4069 = vunpack.c.l.b16 %v2973
        %v4070 = vunpack.c.h.b16 %v2973
        %v4071 = vunpack.c.l.b16 %v2974
        %v4072 = vunpack.c.h.b16 %v2974
        %v4073 = vunpack.c.l.b16 %v2975
        %v4074 = vunpack.c.h.b16 %v2975
        %v4075 = vunpack.c.l.b16 %v2976
        %v4076 = vunpack.c.h.b16 %v2976
        %v4077 = vunpack.c.l.b16 %v2977
        %v4078 = vunpack.c.h.b16 %v2977
        %v4079 = vunpack.c.l.b16 %v2978
        %v4080 = vunpack.c.h.b16 %v2978
        %v4081 = vunpack.c.l.b16 %v2979
        %v4082 = vunpack.c.h.b16 %v2979
        %v4083 = vunpack.c.l.b16 %v2980
        %v4084 = vunpack.c.h.b16 %v2980
        %v4085 = vunpack.c.l.b16 %v2981
        %v4086 = vunpack.c.h.b16 %v2981
        %v4087 = vunpack.c.l.b16 %v2982
        %v4088 = vunpack.c.h.b16 %v2982
        %v4089 = vunpack.c.l.b16 %v2983
        %v4090 = vunpack.c.h.b16 %v2983
        %v4091 = vunpack.c.l.b16 %v2984
        %v4092 = vunpack.c.h.b16 %v2984
        %v4093 = vunpack.c.l.b16 %v2985
        %v4094 = vunpack.c.h.b16 %v2985
        %v4095 = vunpack.c.l.b16 %v2986
        %v4096 = vunpack.c.h.b16 %v2986
        %v4097 = vunpack.c.l.b16 %v2987
        %v4098 = vunpack.c.h.b16 %v2987
        %v4099 = vunpack.c.l.b16 %v2988
        %v4100 = vunpack.c.h.b16 %v2988
        %v4101 = vunpack.c.l.b16 %v2989
        %v4102 = vunpack.c.h.b16 %v2989
        %v4103 = vpack.c.b16 %v3917, %v3911
        %v4104 = vpack.c.b16 %v3918, %v3912
        %v4105 = vpack.c.b16 %v3919, %v3913
        %v4106 = vpack.c.b16 %v3920, %v3914
        %v4107 = vpack.c.b16 %v3921, %v3915
        %v4108 = vpack.c.b16 %v3922, %v3916
        %v4109 = vpack.c.b16 %v3929, %v3923
        %v4110 = vpack.c.b16 %v3930, %v3924
        %v4111 = vpack.c.b16 %v3931, %v3925
        %v4112 = vpack.c.b16 %v3932, %v3926
        %v4113 = vpack.c.b16 %v3933, %v3927
        %v4114 = vpack.c.b16 %v3934, %v3928
        %v4115 = vpack.c.b16 %v3941, %v3935
        %v4116 = vpack.c.b16 %v3942, %v3936
        %v4117 = vpack.c.b16 %v3943, %v3937
        %v4118 = vpack.c.b16 %v3944, %v3938
        %v4119 = vpack.c.b16 %v3945, %v3939
        %v4120 = vpack.c.b16 %v3946, %v3940
        %v4121 = vpack.c.b16 %v3953, %v3947
        %v4122 = vpack.c.b16 %v3954, %v3948
        %v4123 = vpack.c.b16 %v3955, %v3949
        %v4124 = vpack.c.b16 %v3956, %v3950
        %v4125 = vpack.c.b16 %v3957, %v3951
        %v4126 = vpack.c.b16 %v3958, %v3952
        %v4127 = vpack.c.b16 %v3965, %v3959
        %v4128 = vpack.c.b16 %v3966, %v3960
        %v4129 = vpack.c.b16 %v3967, %v3961
        %v4130 = vpack.c.b16 %v3968, %v3962
        %v4131 = vpack.c.b16 %v3969, %v3963
        %v4132 = vpack.c.b16 %v3970, %v3964
        %v4133 = vpack.c.b16 %v3977, %v3971
        %v4134 = vpack.c.b16 %v3978, %v3972
        %v4135 = vpack.c.b16 %v3979, %v3973
        %v4136 = vpack.c.b16 %v3980, %v3974
        %v4137 = vpack.c.b16 %v3981, %v3975
        %v4138 = vpack.c.b16 %v3982, %v3976
        %v4139 = vpack.c.b16 %v3989, %v3983
        %v4140 = vpack.c.b16 %v3990, %v3984
        %v4141 = vpack.c.b16 %v3991, %v3985
        %v4142 = vpack.c.b16 %v3992, %v3986
        %v4143 = vpack.c.b16 %v3993, %v3987
        %v4144 = vpack.c.b16 %v3994, %v3988
        %v4145 = vpack.c.b16 %v4001, %v3995
        %v4146 = vpack.c.b16 %v4002, %v3996
        %v4147 = vpack.c.b16 %v4003, %v3997
        %v4148 = vpack.c.b16 %v4004, %v3998
        %v4149 = vpack.c.b16 %v4005, %v3999
        %v4150 = vpack.c.b16 %v4006, %v4000
        %v4151 = vpack.c.b16 %v4013, %v4007
        %v4152 = vpack.c.b16 %v4014, %v4008
        %v4153 = vpack.c.b16 %v4015, %v4009
        %v4154 = vpack.c.b16 %v4016, %v4010
        %v4155 = vpack.c.b16 %v4017, %v4011
        %v4156 = vpack.c.b16 %v4018, %v4012
        %v4157 = vpack.c.b16 %v4025, %v4019
        %v4158 = vpack.c.b16 %v4026, %v4020
        %v4159 = vpack.c.b16 %v4027, %v4021
        %v4160 = vpack.c.b16 %v4028, %v4022
        %v4161 = vpack.c.b16 %v4029, %v4023
        %v4162 = vpack.c.b16 %v4030, %v4024
        %v4163 = vpack.c.b16 %v4037, %v4031
        %v4164 = vpack.c.b16 %v4038, %v4032
        %v4165 = vpack.c.b16 %v4039, %v4033
        %v4166 = vpack.c.b16 %v4040, %v4034
        %v4167 = vpack.c.b16 %v4041, %v4035
        %v4168 = vpack.c.b16 %v4042, %v4036
        %v4169 = vpack.c.b16 %v4049, %v4043
        %v4170 = vpack.c.b16 %v4050, %v4044
        %v4171 = vpack.c.b16 %v4051, %v4045
        %v4172 = vpack.c.b16 %v4052, %v4046
        %v4173 = vpack.c.b16 %v4053, %v4047
        %v4174 = vpack.c.b16 %v4054, %v4048
        %v4175 = vpack.c.b16 %v4061, %v4055
        %v4176 = vpack.c.b16 %v4062, %v4056
        %v4177 = vpack.c.b16 %v4063, %v4057
        %v4178 = vpack.c.b16 %v4064, %v4058
        %v4179 = vpack.c.b16 %v4065, %v4059
        %v4180 = vpack.c.b16 %v4066, %v4060
        %v4181 = vpack.c.b16 %v4073, %v4067
        %v4182 = vpack.c.b16 %v4074, %v4068
        %v4183 = vpack.c.b16 %v4075, %v4069
        %v4184 = vpack.c.b16 %v4076, %v4070
        %v4185 = vpack.c.b16 %v4077, %v4071
        %v4186 = vpack.c.b16 %v4078, %v4072
        %v4187 = vpack.c.b16 %v4085, %v4079
        %v4188 = vpack.c.b16 %v4086, %v4080
        %v4189 = vpack.c.b16 %v4087, %v4081
        %v4190 = vpack.c.b16 %v4088, %v4082
        %v4191 = vpack.c.b16 %v4089, %v4083
        %v4192 = vpack.c.b16 %v4090, %v4084
        %v4193 = vpack.c.b16 %v4097, %v4091
        %v4194 = vpack.c.b16 %v4098, %v4092
        %v4195 = vpack.c.b16 %v4099, %v4093
        %v4196 = vpack.c.b16 %v4100, %v4094
        %v4197 = vpack.c.b16 %v4101, %v4095
        %v4198 = vpack.c.b16 %v4102, %v4096
        %4295 = vmatpush.bf16.msra.mxu0 %v4145
        %4296 = vmatpush.bf16.msra.mxu0 %v4139
        %4297 = vmatpush.bf16.msra.mxu0 %v4133
        %4298 = vmatpush.bf16.msra.mxu0 %v4127
        %4299 = vmatpush.bf16.msra.mxu0 %v4121
        %4300 = vmatpush.bf16.msra.mxu0 %v4115
        %4301 = vmatpush.bf16.msra.mxu0 %v4109
        %4302 = vmatpush.bf16.msra.mxu0 %v4103
        %4303 = vmatmul.bf16.gmra.mxu0 %v2892
        %v4304 = vpop.f32.mrf.mxu0
        %v4305 = vadd.f32 %v3682, %v4304
        %v4306 = vpop.f32.mrf.mxu0
        %4307 = vdwg.mxu0
        %4308 = vmatpush.bf16.msra.mxu0 %v4193
        %4309 = vmatpush.bf16.msra.mxu0 %v4187
        %4310 = vmatpush.bf16.msra.mxu0 %v4181
        %4311 = vmatpush.bf16.msra.mxu0 %v4175
        %4312 = vmatpush.bf16.msra.mxu0 %v4169
        %4313 = vmatpush.bf16.msra.mxu0 %v4163
        %4314 = vmatpush.bf16.msra.mxu0 %v4157
        %4315 = vmatpush.bf16.msra.mxu0 %v4151
        %4316 = vmatmul.bf16.gmra.mxu0 %v2893
        %v4317 = vpop.f32.mrf.mxu0
        %v4318 = vadd.f32 %v4305, %v4317
        %v4319 = vpop.f32.mrf.mxu0
        %4320 = vdwg.mxu0
        %4321 = vmatpush.bf16.msra.mxu0 %v4146
        %4322 = vmatpush.bf16.msra.mxu0 %v4140
        %4323 = vmatpush.bf16.msra.mxu0 %v4134
        %4324 = vmatpush.bf16.msra.mxu0 %v4128
        %4325 = vmatpush.bf16.msra.mxu0 %v4122
        %4326 = vmatpush.bf16.msra.mxu0 %v4116
        %4327 = vmatpush.bf16.msra.mxu0 %v4110
        %4328 = vmatpush.bf16.msra.mxu0 %v4104
        %4329 = vmatmul.bf16.gmra.mxu0 %v2892
        %v4330 = vpop.f32.mrf.mxu0
        %v4331 = vadd.f32 %v3708, %v4330
        %v4332 = vpop.f32.mrf.mxu0
        %4333 = vdwg.mxu0
        %4334 = vmatpush.bf16.msra.mxu0 %v4194
        %4335 = vmatpush.bf16.msra.mxu0 %v4188
        %4336 = vmatpush.bf16.msra.mxu0 %v4182
        %4337 = vmatpush.bf16.msra.mxu0 %v4176
        %4338 = vmatpush.bf16.msra.mxu0 %v4170
        %4339 = vmatpush.bf16.msra.mxu0 %v4164
        %4340 = vmatpush.bf16.msra.mxu0 %v4158
        %4341 = vmatpush.bf16.msra.mxu0 %v4152
        %4342 = vmatmul.bf16.gmra.mxu0 %v2893
        %v4343 = vpop.f32.mrf.mxu0
        %v4344 = vadd.f32 %v4331, %v4343
        %v4345 = vpop.f32.mrf.mxu0
        %4346 = vdwg.mxu0
        %4347 = vmatpush.bf16.msra.mxu0 %v4147
        %4348 = vmatpush.bf16.msra.mxu0 %v4141
        %4349 = vmatpush.bf16.msra.mxu0 %v4135
        %4350 = vmatpush.bf16.msra.mxu0 %v4129
        %4351 = vmatpush.bf16.msra.mxu0 %v4123
        %4352 = vmatpush.bf16.msra.mxu0 %v4117
        %4353 = vmatpush.bf16.msra.mxu0 %v4111
        %4354 = vmatpush.bf16.msra.mxu0 %v4105
        %4355 = vmatmul.bf16.gmra.mxu0 %v2892
        %v4356 = vpop.f32.mrf.mxu0
        %v4357 = vadd.f32 %v3734, %v4356
        %v4358 = vpop.f32.mrf.mxu0
        %4359 = vdwg.mxu0
        %4360 = vmatpush.bf16.msra.mxu0 %v4195
        %4361 = vmatpush.bf16.msra.mxu0 %v4189
        %4362 = vmatpush.bf16.msra.mxu0 %v4183
        %4363 = vmatpush.bf16.msra.mxu0 %v4177
        %4364 = vmatpush.bf16.msra.mxu0 %v4171
        %4365 = vmatpush.bf16.msra.mxu0 %v4165
        %4366 = vmatpush.bf16.msra.mxu0 %v4159
        %4367 = vmatpush.bf16.msra.mxu0 %v4153
        %4368 = vmatmul.bf16.gmra.mxu0 %v2893
        %v4369 = vpop.f32.mrf.mxu0
        %v4370 = vadd.f32 %v4357, %v4369
        %v4371 = vpop.f32.mrf.mxu0
        %4372 = vdwg.mxu0
        %4373 = vmatpush.bf16.msra.mxu0 %v4148
        %4374 = vmatpush.bf16.msra.mxu0 %v4142
        %4375 = vmatpush.bf16.msra.mxu0 %v4136
        %4376 = vmatpush.bf16.msra.mxu0 %v4130
        %4377 = vmatpush.bf16.msra.mxu0 %v4124
        %4378 = vmatpush.bf16.msra.mxu0 %v4118
        %4379 = vmatpush.bf16.msra.mxu0 %v4112
        %4380 = vmatpush.bf16.msra.mxu0 %v4106
        %4381 = vmatmul.bf16.gmra.mxu0 %v2892
        %v4382 = vpop.f32.mrf.mxu0
        %v4383 = vadd.f32 %v3760, %v4382
        %v4384 = vpop.f32.mrf.mxu0
        %4385 = vdwg.mxu0
        %4386 = vmatpush.bf16.msra.mxu0 %v4196
        %4387 = vmatpush.bf16.msra.mxu0 %v4190
        %4388 = vmatpush.bf16.msra.mxu0 %v4184
        %4389 = vmatpush.bf16.msra.mxu0 %v4178
        %4390 = vmatpush.bf16.msra.mxu0 %v4172
        %4391 = vmatpush.bf16.msra.mxu0 %v4166
        %4392 = vmatpush.bf16.msra.mxu0 %v4160
        %4393 = vmatpush.bf16.msra.mxu0 %v4154
        %4394 = vmatmul.bf16.gmra.mxu0 %v2893
        %v4395 = vpop.f32.mrf.mxu0
        %v4396 = vadd.f32 %v4383, %v4395
        %v4397 = vpop.f32.mrf.mxu0
        %4398 = vdwg.mxu0
        %4399 = vmatpush.bf16.msra.mxu0 %v4149
        %4400 = vmatpush.bf16.msra.mxu0 %v4143
        %4401 = vmatpush.bf16.msra.mxu0 %v4137
        %4402 = vmatpush.bf16.msra.mxu0 %v4131
        %4403 = vmatpush.bf16.msra.mxu0 %v4125
        %4404 = vmatpush.bf16.msra.mxu0 %v4119
        %4405 = vmatpush.bf16.msra.mxu0 %v4113
        %4406 = vmatpush.bf16.msra.mxu0 %v4107
        %4407 = vmatmul.bf16.gmra.mxu0 %v2892
        %v4408 = vpop.f32.mrf.mxu0
        %v4409 = vadd.f32 %v3786, %v4408
        %v4410 = vpop.f32.mrf.mxu0
        %4411 = vdwg.mxu0
        %4412 = vmatpush.bf16.msra.mxu0 %v4197
        %4413 = vmatpush.bf16.msra.mxu0 %v4191
        %4414 = vmatpush.bf16.msra.mxu0 %v4185
        %4415 = vmatpush.bf16.msra.mxu0 %v4179
        %4416 = vmatpush.bf16.msra.mxu0 %v4173
        %4417 = vmatpush.bf16.msra.mxu0 %v4167
        %4418 = vmatpush.bf16.msra.mxu0 %v4161
        %4419 = vmatpush.bf16.msra.mxu0 %v4155
        %4420 = vmatmul.bf16.gmra.mxu0 %v2893
        %v4421 = vpop.f32.mrf.mxu0
        %v4422 = vadd.f32 %v4409, %v4421
        %v4423 = vpop.f32.mrf.mxu0
        %4424 = vdwg.mxu0
        %4425 = vmatpush.bf16.msra.mxu0 %v4150
        %4426 = vmatpush.bf16.msra.mxu0 %v4144
        %4427 = vmatpush.bf16.msra.mxu0 %v4138
        %4428 = vmatpush.bf16.msra.mxu0 %v4132
        %4429 = vmatpush.bf16.msra.mxu0 %v4126
        %4430 = vmatpush.bf16.msra.mxu0 %v4120
        %4431 = vmatpush.bf16.msra.mxu0 %v4114
        %4432 = vmatpush.bf16.msra.mxu0 %v4108
        %4433 = vmatmul.bf16.gmra.mxu0 %v2892
        %v4434 = vpop.f32.mrf.mxu0
        %v4435 = vadd.f32 %v3812, %v4434
        %v4436 = vpop.f32.mrf.mxu0
        %4437 = vdwg.mxu0
        %4438 = vmatpush.bf16.msra.mxu0 %v4198
        %4439 = vmatpush.bf16.msra.mxu0 %v4192
        %4440 = vmatpush.bf16.msra.mxu0 %v4186
        %4441 = vmatpush.bf16.msra.mxu0 %v4180
        %4442 = vmatpush.bf16.msra.mxu0 %v4174
        %4443 = vmatpush.bf16.msra.mxu0 %v4168
        %4444 = vmatpush.bf16.msra.mxu0 %v4162
        %4445 = vmatpush.bf16.msra.mxu0 %v4156
        %4446 = vmatmul.bf16.gmra.mxu0 %v2893
        %v4447 = vpop.f32.mrf.mxu0
        %v4448 = vadd.f32 %v4435, %v4447
        %v4449 = vpop.f32.mrf.mxu0
        %4450 = vdwg.mxu0
        %v4451 = vpack.c.bf16 %v2719, %v2719
        %v4452 = vpack.c.bf16 %v2797, %v2797
        %v4453 = vld [vmem:[%s484 + $0x10] sm:$0xff]
        %v4454 = vld [vmem:[%s494 + $0x10] sm:$0xff]
        %v4456 = vunpack.c.l.b16 %v4453
        %v4457 = vunpack.c.h.b16 %v4453
        %v4458 = vpack.c.b16 %v4456, %v4456
        %v4459 = vpack.c.b16 %v4457, %v4457
        %4462 = vmatpush.bf16.xpose.msra.mxu0 0
        %4463 = vmatpush.bf16.xpose.msra.mxu0 0
        %4464 = vmatpush.bf16.xpose.msra.mxu0 0
        %4465 = vmatpush.bf16.xpose.msra.mxu0 0
        %4466 = vmatpush.bf16.xpose.msra.mxu0 0
        %4467 = vmatpush.bf16.xpose.msra.mxu0 0
        %4468 = vmatpush.bf16.xpose.msra.mxu0 0
        %4469 = vmatpush.bf16.xpose.msra.mxu0 %v4458
        %4470 = vmatmul.bf16.gmra.mxu0 %v4451
        %v4471 = vpop.f32.mrf.mxu0
        %v4472 = vadd.f32 0.0, %v4471
        %v4473 = vpop.f32.mrf.mxu0
        %4474 = vdwg.mxu0
        %4475 = vmatpush.bf16.xpose.msra.mxu0 0
        %4476 = vmatpush.bf16.xpose.msra.mxu0 0
        %4477 = vmatpush.bf16.xpose.msra.mxu0 0
        %4478 = vmatpush.bf16.xpose.msra.mxu0 0
        %4479 = vmatpush.bf16.xpose.msra.mxu0 0
        %4480 = vmatpush.bf16.xpose.msra.mxu0 0
        %4481 = vmatpush.bf16.xpose.msra.mxu0 0
        %4482 = vmatpush.bf16.xpose.msra.mxu0 %v4459
        %4483 = vmatmul.bf16.gmra.mxu0 %v4452
        %v4484 = vpop.f32.mrf.mxu0
        %v4485 = vadd.f32 %v4472, %v4484
        %v4486 = vpop.f32.mrf.mxu0
        %4487 = vdwg.mxu0
        %v4488 = vsel %vm2837, %v4485, -inf
        %4489 = vmax.xlane.f32.xlu0 %v4488
        %v4490 = vpop.xlane.xlu0 %4489
        %v4491 = vsub.f32 %v4485, %v4490
        %v4492 = vmul.f32 %v4491, 1.442695
        %v4493 = vpow.pop %v4492
        %v4494 = vsel %vm2837, %v4493, 0.0
        %4495 = vadd.xlane.f32.xlu0 %v4494
        %v4496 = vpop.xlane.xlu0 %4495
        %v4497 = vrcp.pop %v4496
        %v4498 = vmul.f32 %v4493, %v4497
        %s4499 = scalar_lea.vmem %s576, 16 [#allocation18]
        %4500 = vst.msk [vmem:[%s4499] sm:$0xff] %vm2837, %v4498
        %v4501 = vpack.c.bf16 %v4498, %v4498
        %v4503 = vunpack.c.l.b16 %v4454
        %v4504 = vunpack.c.h.b16 %v4454
        %v4505 = vpack.c.b16 %v4503, %v4503
        %v4506 = vpack.c.b16 %v4504, %v4504
        %v4508 = vsel %vm2837, %v4501, 0
        %v4511 = vsel %vm2859, %v4505, 0
        %v4514 = vsel %vm2859, %v4506, 0
        %4516 = vmatpush.bf16.msra.mxu0 0
        %4517 = vmatpush.bf16.msra.mxu0 0
        %4518 = vmatpush.bf16.msra.mxu0 0
        %4519 = vmatpush.bf16.msra.mxu0 0
        %4520 = vmatpush.bf16.msra.mxu0 0
        %4521 = vmatpush.bf16.msra.mxu0 0
        %4522 = vmatpush.bf16.msra.mxu0 0
        %4523 = vmatpush.bf16.msra.mxu0 %v4511
        %4524 = vmatmul.bf16.gmra.mxu0 %v4508
        %v4525 = vpop.f32.mrf.mxu0
        %v4526 = vadd.f32 0.0, %v4525
        %v4527 = vpop.f32.mrf.mxu0
        %4528 = vdwg.mxu0
        %4529 = vmatpush.bf16.msra.mxu0 0
        %4530 = vmatpush.bf16.msra.mxu0 0
        %4531 = vmatpush.bf16.msra.mxu0 0
        %4532 = vmatpush.bf16.msra.mxu0 0
        %4533 = vmatpush.bf16.msra.mxu0 0
        %4534 = vmatpush.bf16.msra.mxu0 0
        %4535 = vmatpush.bf16.msra.mxu0 0
        %4536 = vmatpush.bf16.msra.mxu0 %v4514
        %4537 = vmatmul.bf16.gmra.mxu0 %v4508
        %v4538 = vpop.f32.mrf.mxu0
        %v4539 = vadd.f32 0.0, %v4538
        %v4540 = vpop.f32.mrf.mxu0
        %4541 = vdwg.mxu0
        %v4542 = vpack.c.bf16 %v4526, %v4526
        %v4543 = vpack.c.bf16 %v4539, %v4539
        %v4544 = vld [vmem:[#allocation11 + $0x600] sm:$0xff]
        %v4545 = vld [vmem:[#allocation11 + $0x608] sm:$0xff]
        %v4546 = vld [vmem:[#allocation11 + $0x610] sm:$0xff]
        %v4547 = vld [vmem:[#allocation11 + $0x618] sm:$0xff]
        %v4548 = vld [vmem:[#allocation11 + $0x620] sm:$0xff]
        %v4549 = vld [vmem:[#allocation11 + $0x628] sm:$0xff]
        %v4550 = vld [vmem:[#allocation11 + $0x630] sm:$0xff]
        %v4551 = vld [vmem:[#allocation11 + $0x638] sm:$0xff]
        %v4552 = vld [vmem:[#allocation11 + $0x640] sm:$0xff]
        %v4553 = vld [vmem:[#allocation11 + $0x648] sm:$0xff]
        %v4554 = vld [vmem:[#allocation11 + $0x650] sm:$0xff]
        %v4555 = vld [vmem:[#allocation11 + $0x658] sm:$0xff]
        %v4556 = vld [vmem:[#allocation11 + $0x660] sm:$0xff]
        %v4557 = vld [vmem:[#allocation11 + $0x668] sm:$0xff]
        %v4558 = vld [vmem:[#allocation11 + $0x670] sm:$0xff]
        %v4559 = vld [vmem:[#allocation11 + $0x678] sm:$0xff]
        %v4560 = vld [vmem:[#allocation11 + $0x680] sm:$0xff]
        %v4561 = vld [vmem:[#allocation11 + $0x688] sm:$0xff]
        %v4562 = vld [vmem:[#allocation11 + $0x690] sm:$0xff]
        %v4563 = vld [vmem:[#allocation11 + $0x698] sm:$0xff]
        %v4564 = vld [vmem:[#allocation11 + $0x6a0] sm:$0xff]
        %v4565 = vld [vmem:[#allocation11 + $0x6a8] sm:$0xff]
        %v4566 = vld [vmem:[#allocation11 + $0x6b0] sm:$0xff]
        %v4567 = vld [vmem:[#allocation11 + $0x6b8] sm:$0xff]
        %v4568 = vld [vmem:[#allocation11 + $0x6c0] sm:$0xff]
        %v4569 = vld [vmem:[#allocation11 + $0x6c8] sm:$0xff]
        %v4570 = vld [vmem:[#allocation11 + $0x6d0] sm:$0xff]
        %v4571 = vld [vmem:[#allocation11 + $0x6d8] sm:$0xff]
        %v4572 = vld [vmem:[#allocation11 + $0x6e0] sm:$0xff]
        %v4573 = vld [vmem:[#allocation11 + $0x6e8] sm:$0xff]
        %v4574 = vld [vmem:[#allocation11 + $0x6f0] sm:$0xff]
        %v4575 = vld [vmem:[#allocation11 + $0x6f8] sm:$0xff]
        %v4576 = vld [vmem:[#allocation11 + $0x700] sm:$0xff]
        %v4577 = vld [vmem:[#allocation11 + $0x708] sm:$0xff]
        %v4578 = vld [vmem:[#allocation11 + $0x710] sm:$0xff]
        %v4579 = vld [vmem:[#allocation11 + $0x718] sm:$0xff]
        %v4580 = vld [vmem:[#allocation11 + $0x720] sm:$0xff]
        %v4581 = vld [vmem:[#allocation11 + $0x728] sm:$0xff]
        %v4582 = vld [vmem:[#allocation11 + $0x730] sm:$0xff]
        %v4583 = vld [vmem:[#allocation11 + $0x738] sm:$0xff]
        %v4584 = vld [vmem:[#allocation11 + $0x740] sm:$0xff]
        %v4585 = vld [vmem:[#allocation11 + $0x748] sm:$0xff]
        %v4586 = vld [vmem:[#allocation11 + $0x750] sm:$0xff]
        %v4587 = vld [vmem:[#allocation11 + $0x758] sm:$0xff]
        %v4588 = vld [vmem:[#allocation11 + $0x760] sm:$0xff]
        %v4589 = vld [vmem:[#allocation11 + $0x768] sm:$0xff]
        %v4590 = vld [vmem:[#allocation11 + $0x770] sm:$0xff]
        %v4591 = vld [vmem:[#allocation11 + $0x778] sm:$0xff]
        %v4592 = vld [vmem:[#allocation11 + $0x780] sm:$0xff]
        %v4593 = vld [vmem:[#allocation11 + $0x788] sm:$0xff]
        %v4594 = vld [vmem:[#allocation11 + $0x790] sm:$0xff]
        %v4595 = vld [vmem:[#allocation11 + $0x798] sm:$0xff]
        %v4596 = vld [vmem:[#allocation11 + $0x7a0] sm:$0xff]
        %v4597 = vld [vmem:[#allocation11 + $0x7a8] sm:$0xff]
        %v4598 = vld [vmem:[#allocation11 + $0x7b0] sm:$0xff]
        %v4599 = vld [vmem:[#allocation11 + $0x7b8] sm:$0xff]
        %v4600 = vld [vmem:[#allocation11 + $0x7c0] sm:$0xff]
        %v4601 = vld [vmem:[#allocation11 + $0x7c8] sm:$0xff]
        %v4602 = vld [vmem:[#allocation11 + $0x7d0] sm:$0xff]
        %v4603 = vld [vmem:[#allocation11 + $0x7d8] sm:$0xff]
        %v4604 = vld [vmem:[#allocation11 + $0x7e0] sm:$0xff]
        %v4605 = vld [vmem:[#allocation11 + $0x7e8] sm:$0xff]
        %v4606 = vld [vmem:[#allocation11 + $0x7f0] sm:$0xff]
        %v4607 = vld [vmem:[#allocation11 + $0x7f8] sm:$0xff]
        %v4608 = vld [vmem:[#allocation11 + $0x800] sm:$0xff]
        %v4609 = vld [vmem:[#allocation11 + $0x808] sm:$0xff]
        %v4610 = vld [vmem:[#allocation11 + $0x810] sm:$0xff]
        %v4611 = vld [vmem:[#allocation11 + $0x818] sm:$0xff]
        %v4612 = vld [vmem:[#allocation11 + $0x820] sm:$0xff]
        %v4613 = vld [vmem:[#allocation11 + $0x828] sm:$0xff]
        %v4614 = vld [vmem:[#allocation11 + $0x830] sm:$0xff]
        %v4615 = vld [vmem:[#allocation11 + $0x838] sm:$0xff]
        %v4616 = vld [vmem:[#allocation11 + $0x840] sm:$0xff]
        %v4617 = vld [vmem:[#allocation11 + $0x848] sm:$0xff]
        %v4618 = vld [vmem:[#allocation11 + $0x850] sm:$0xff]
        %v4619 = vld [vmem:[#allocation11 + $0x858] sm:$0xff]
        %v4620 = vld [vmem:[#allocation11 + $0x860] sm:$0xff]
        %v4621 = vld [vmem:[#allocation11 + $0x868] sm:$0xff]
        %v4622 = vld [vmem:[#allocation11 + $0x870] sm:$0xff]
        %v4623 = vld [vmem:[#allocation11 + $0x878] sm:$0xff]
        %v4624 = vld [vmem:[#allocation11 + $0x880] sm:$0xff]
        %v4625 = vld [vmem:[#allocation11 + $0x888] sm:$0xff]
        %v4626 = vld [vmem:[#allocation11 + $0x890] sm:$0xff]
        %v4627 = vld [vmem:[#allocation11 + $0x898] sm:$0xff]
        %v4628 = vld [vmem:[#allocation11 + $0x8a0] sm:$0xff]
        %v4629 = vld [vmem:[#allocation11 + $0x8a8] sm:$0xff]
        %v4630 = vld [vmem:[#allocation11 + $0x8b0] sm:$0xff]
        %v4631 = vld [vmem:[#allocation11 + $0x8b8] sm:$0xff]
        %v4632 = vld [vmem:[#allocation11 + $0x8c0] sm:$0xff]
        %v4633 = vld [vmem:[#allocation11 + $0x8c8] sm:$0xff]
        %v4634 = vld [vmem:[#allocation11 + $0x8d0] sm:$0xff]
        %v4635 = vld [vmem:[#allocation11 + $0x8d8] sm:$0xff]
        %v4636 = vld [vmem:[#allocation11 + $0x8e0] sm:$0xff]
        %v4637 = vld [vmem:[#allocation11 + $0x8e8] sm:$0xff]
        %v4638 = vld [vmem:[#allocation11 + $0x8f0] sm:$0xff]
        %v4639 = vld [vmem:[#allocation11 + $0x8f8] sm:$0xff]
        %v4736 = vunpack.c.l.b16 %v4544
        %v4737 = vunpack.c.h.b16 %v4544
        %v4738 = vunpack.c.l.b16 %v4545
        %v4739 = vunpack.c.h.b16 %v4545
        %v4740 = vunpack.c.l.b16 %v4546
        %v4741 = vunpack.c.h.b16 %v4546
        %v4742 = vunpack.c.l.b16 %v4547
        %v4743 = vunpack.c.h.b16 %v4547
        %v4744 = vunpack.c.l.b16 %v4548
        %v4745 = vunpack.c.h.b16 %v4548
        %v4746 = vunpack.c.l.b16 %v4549
        %v4747 = vunpack.c.h.b16 %v4549
        %v4748 = vunpack.c.l.b16 %v4550
        %v4749 = vunpack.c.h.b16 %v4550
        %v4750 = vunpack.c.l.b16 %v4551
        %v4751 = vunpack.c.h.b16 %v4551
        %v4752 = vunpack.c.l.b16 %v4552
        %v4753 = vunpack.c.h.b16 %v4552
        %v4754 = vunpack.c.l.b16 %v4553
        %v4755 = vunpack.c.h.b16 %v4553
        %v4756 = vunpack.c.l.b16 %v4554
        %v4757 = vunpack.c.h.b16 %v4554
        %v4758 = vunpack.c.l.b16 %v4555
        %v4759 = vunpack.c.h.b16 %v4555
        %v4760 = vunpack.c.l.b16 %v4556
        %v4761 = vunpack.c.h.b16 %v4556
        %v4762 = vunpack.c.l.b16 %v4557
        %v4763 = vunpack.c.h.b16 %v4557
        %v4764 = vunpack.c.l.b16 %v4558
        %v4765 = vunpack.c.h.b16 %v4558
        %v4766 = vunpack.c.l.b16 %v4559
        %v4767 = vunpack.c.h.b16 %v4559
        %v4768 = vunpack.c.l.b16 %v4560
        %v4769 = vunpack.c.h.b16 %v4560
        %v4770 = vunpack.c.l.b16 %v4561
        %v4771 = vunpack.c.h.b16 %v4561
        %v4772 = vunpack.c.l.b16 %v4562
        %v4773 = vunpack.c.h.b16 %v4562
        %v4774 = vunpack.c.l.b16 %v4563
        %v4775 = vunpack.c.h.b16 %v4563
        %v4776 = vunpack.c.l.b16 %v4564
        %v4777 = vunpack.c.h.b16 %v4564
        %v4778 = vunpack.c.l.b16 %v4565
        %v4779 = vunpack.c.h.b16 %v4565
        %v4780 = vunpack.c.l.b16 %v4566
        %v4781 = vunpack.c.h.b16 %v4566
        %v4782 = vunpack.c.l.b16 %v4567
        %v4783 = vunpack.c.h.b16 %v4567
        %v4784 = vunpack.c.l.b16 %v4568
        %v4785 = vunpack.c.h.b16 %v4568
        %v4786 = vunpack.c.l.b16 %v4569
        %v4787 = vunpack.c.h.b16 %v4569
        %v4788 = vunpack.c.l.b16 %v4570
        %v4789 = vunpack.c.h.b16 %v4570
        %v4790 = vunpack.c.l.b16 %v4571
        %v4791 = vunpack.c.h.b16 %v4571
        %v4792 = vunpack.c.l.b16 %v4572
        %v4793 = vunpack.c.h.b16 %v4572
        %v4794 = vunpack.c.l.b16 %v4573
        %v4795 = vunpack.c.h.b16 %v4573
        %v4796 = vunpack.c.l.b16 %v4574
        %v4797 = vunpack.c.h.b16 %v4574
        %v4798 = vunpack.c.l.b16 %v4575
        %v4799 = vunpack.c.h.b16 %v4575
        %v4800 = vunpack.c.l.b16 %v4576
        %v4801 = vunpack.c.h.b16 %v4576
        %v4802 = vunpack.c.l.b16 %v4577
        %v4803 = vunpack.c.h.b16 %v4577
        %v4804 = vunpack.c.l.b16 %v4578
        %v4805 = vunpack.c.h.b16 %v4578
        %v4806 = vunpack.c.l.b16 %v4579
        %v4807 = vunpack.c.h.b16 %v4579
        %v4808 = vunpack.c.l.b16 %v4580
        %v4809 = vunpack.c.h.b16 %v4580
        %v4810 = vunpack.c.l.b16 %v4581
        %v4811 = vunpack.c.h.b16 %v4581
        %v4812 = vunpack.c.l.b16 %v4582
        %v4813 = vunpack.c.h.b16 %v4582
        %v4814 = vunpack.c.l.b16 %v4583
        %v4815 = vunpack.c.h.b16 %v4583
        %v4816 = vunpack.c.l.b16 %v4584
        %v4817 = vunpack.c.h.b16 %v4584
        %v4818 = vunpack.c.l.b16 %v4585
        %v4819 = vunpack.c.h.b16 %v4585
        %v4820 = vunpack.c.l.b16 %v4586
        %v4821 = vunpack.c.h.b16 %v4586
        %v4822 = vunpack.c.l.b16 %v4587
        %v4823 = vunpack.c.h.b16 %v4587
        %v4824 = vunpack.c.l.b16 %v4588
        %v4825 = vunpack.c.h.b16 %v4588
        %v4826 = vunpack.c.l.b16 %v4589
        %v4827 = vunpack.c.h.b16 %v4589
        %v4828 = vunpack.c.l.b16 %v4590
        %v4829 = vunpack.c.h.b16 %v4590
        %v4830 = vunpack.c.l.b16 %v4591
        %v4831 = vunpack.c.h.b16 %v4591
        %v4832 = vunpack.c.l.b16 %v4592
        %v4833 = vunpack.c.h.b16 %v4592
        %v4834 = vunpack.c.l.b16 %v4593
        %v4835 = vunpack.c.h.b16 %v4593
        %v4836 = vunpack.c.l.b16 %v4594
        %v4837 = vunpack.c.h.b16 %v4594
        %v4838 = vunpack.c.l.b16 %v4595
        %v4839 = vunpack.c.h.b16 %v4595
        %v4840 = vunpack.c.l.b16 %v4596
        %v4841 = vunpack.c.h.b16 %v4596
        %v4842 = vunpack.c.l.b16 %v4597
        %v4843 = vunpack.c.h.b16 %v4597
        %v4844 = vunpack.c.l.b16 %v4598
        %v4845 = vunpack.c.h.b16 %v4598
        %v4846 = vunpack.c.l.b16 %v4599
        %v4847 = vunpack.c.h.b16 %v4599
        %v4848 = vunpack.c.l.b16 %v4600
        %v4849 = vunpack.c.h.b16 %v4600
        %v4850 = vunpack.c.l.b16 %v4601
        %v4851 = vunpack.c.h.b16 %v4601
        %v4852 = vunpack.c.l.b16 %v4602
        %v4853 = vunpack.c.h.b16 %v4602
        %v4854 = vunpack.c.l.b16 %v4603
        %v4855 = vunpack.c.h.b16 %v4603
        %v4856 = vunpack.c.l.b16 %v4604
        %v4857 = vunpack.c.h.b16 %v4604
        %v4858 = vunpack.c.l.b16 %v4605
        %v4859 = vunpack.c.h.b16 %v4605
        %v4860 = vunpack.c.l.b16 %v4606
        %v4861 = vunpack.c.h.b16 %v4606
        %v4862 = vunpack.c.l.b16 %v4607
        %v4863 = vunpack.c.h.b16 %v4607
        %v4864 = vunpack.c.l.b16 %v4608
        %v4865 = vunpack.c.h.b16 %v4608
        %v4866 = vunpack.c.l.b16 %v4609
        %v4867 = vunpack.c.h.b16 %v4609
        %v4868 = vunpack.c.l.b16 %v4610
        %v4869 = vunpack.c.h.b16 %v4610
        %v4870 = vunpack.c.l.b16 %v4611
        %v4871 = vunpack.c.h.b16 %v4611
        %v4872 = vunpack.c.l.b16 %v4612
        %v4873 = vunpack.c.h.b16 %v4612
        %v4874 = vunpack.c.l.b16 %v4613
        %v4875 = vunpack.c.h.b16 %v4613
        %v4876 = vunpack.c.l.b16 %v4614
        %v4877 = vunpack.c.h.b16 %v4614
        %v4878 = vunpack.c.l.b16 %v4615
        %v4879 = vunpack.c.h.b16 %v4615
        %v4880 = vunpack.c.l.b16 %v4616
        %v4881 = vunpack.c.h.b16 %v4616
        %v4882 = vunpack.c.l.b16 %v4617
        %v4883 = vunpack.c.h.b16 %v4617
        %v4884 = vunpack.c.l.b16 %v4618
        %v4885 = vunpack.c.h.b16 %v4618
        %v4886 = vunpack.c.l.b16 %v4619
        %v4887 = vunpack.c.h.b16 %v4619
        %v4888 = vunpack.c.l.b16 %v4620
        %v4889 = vunpack.c.h.b16 %v4620
        %v4890 = vunpack.c.l.b16 %v4621
        %v4891 = vunpack.c.h.b16 %v4621
        %v4892 = vunpack.c.l.b16 %v4622
        %v4893 = vunpack.c.h.b16 %v4622
        %v4894 = vunpack.c.l.b16 %v4623
        %v4895 = vunpack.c.h.b16 %v4623
        %v4896 = vunpack.c.l.b16 %v4624
        %v4897 = vunpack.c.h.b16 %v4624
        %v4898 = vunpack.c.l.b16 %v4625
        %v4899 = vunpack.c.h.b16 %v4625
        %v4900 = vunpack.c.l.b16 %v4626
        %v4901 = vunpack.c.h.b16 %v4626
        %v4902 = vunpack.c.l.b16 %v4627
        %v4903 = vunpack.c.h.b16 %v4627
        %v4904 = vunpack.c.l.b16 %v4628
        %v4905 = vunpack.c.h.b16 %v4628
        %v4906 = vunpack.c.l.b16 %v4629
        %v4907 = vunpack.c.h.b16 %v4629
        %v4908 = vunpack.c.l.b16 %v4630
        %v4909 = vunpack.c.h.b16 %v4630
        %v4910 = vunpack.c.l.b16 %v4631
        %v4911 = vunpack.c.h.b16 %v4631
        %v4912 = vunpack.c.l.b16 %v4632
        %v4913 = vunpack.c.h.b16 %v4632
        %v4914 = vunpack.c.l.b16 %v4633
        %v4915 = vunpack.c.h.b16 %v4633
        %v4916 = vunpack.c.l.b16 %v4634
        %v4917 = vunpack.c.h.b16 %v4634
        %v4918 = vunpack.c.l.b16 %v4635
        %v4919 = vunpack.c.h.b16 %v4635
        %v4920 = vunpack.c.l.b16 %v4636
        %v4921 = vunpack.c.h.b16 %v4636
        %v4922 = vunpack.c.l.b16 %v4637
        %v4923 = vunpack.c.h.b16 %v4637
        %v4924 = vunpack.c.l.b16 %v4638
        %v4925 = vunpack.c.h.b16 %v4638
        %v4926 = vunpack.c.l.b16 %v4639
        %v4927 = vunpack.c.h.b16 %v4639
        %v4928 = vpack.c.b16 %v4742, %v4736
        %v4929 = vpack.c.b16 %v4743, %v4737
        %v4930 = vpack.c.b16 %v4744, %v4738
        %v4931 = vpack.c.b16 %v4745, %v4739
        %v4932 = vpack.c.b16 %v4746, %v4740
        %v4933 = vpack.c.b16 %v4747, %v4741
        %v4934 = vpack.c.b16 %v4754, %v4748
        %v4935 = vpack.c.b16 %v4755, %v4749
        %v4936 = vpack.c.b16 %v4756, %v4750
        %v4937 = vpack.c.b16 %v4757, %v4751
        %v4938 = vpack.c.b16 %v4758, %v4752
        %v4939 = vpack.c.b16 %v4759, %v4753
        %v4940 = vpack.c.b16 %v4766, %v4760
        %v4941 = vpack.c.b16 %v4767, %v4761
        %v4942 = vpack.c.b16 %v4768, %v4762
        %v4943 = vpack.c.b16 %v4769, %v4763
        %v4944 = vpack.c.b16 %v4770, %v4764
        %v4945 = vpack.c.b16 %v4771, %v4765
        %v4946 = vpack.c.b16 %v4778, %v4772
        %v4947 = vpack.c.b16 %v4779, %v4773
        %v4948 = vpack.c.b16 %v4780, %v4774
        %v4949 = vpack.c.b16 %v4781, %v4775
        %v4950 = vpack.c.b16 %v4782, %v4776
        %v4951 = vpack.c.b16 %v4783, %v4777
        %v4952 = vpack.c.b16 %v4790, %v4784
        %v4953 = vpack.c.b16 %v4791, %v4785
        %v4954 = vpack.c.b16 %v4792, %v4786
        %v4955 = vpack.c.b16 %v4793, %v4787
        %v4956 = vpack.c.b16 %v4794, %v4788
        %v4957 = vpack.c.b16 %v4795, %v4789
        %v4958 = vpack.c.b16 %v4802, %v4796
        %v4959 = vpack.c.b16 %v4803, %v4797
        %v4960 = vpack.c.b16 %v4804, %v4798
        %v4961 = vpack.c.b16 %v4805, %v4799
        %v4962 = vpack.c.b16 %v4806, %v4800
        %v4963 = vpack.c.b16 %v4807, %v4801
        %v4964 = vpack.c.b16 %v4814, %v4808
        %v4965 = vpack.c.b16 %v4815, %v4809
        %v4966 = vpack.c.b16 %v4816, %v4810
        %v4967 = vpack.c.b16 %v4817, %v4811
        %v4968 = vpack.c.b16 %v4818, %v4812
        %v4969 = vpack.c.b16 %v4819, %v4813
        %v4970 = vpack.c.b16 %v4826, %v4820
        %v4971 = vpack.c.b16 %v4827, %v4821
        %v4972 = vpack.c.b16 %v4828, %v4822
        %v4973 = vpack.c.b16 %v4829, %v4823
        %v4974 = vpack.c.b16 %v4830, %v4824
        %v4975 = vpack.c.b16 %v4831, %v4825
        %v4976 = vpack.c.b16 %v4838, %v4832
        %v4977 = vpack.c.b16 %v4839, %v4833
        %v4978 = vpack.c.b16 %v4840, %v4834
        %v4979 = vpack.c.b16 %v4841, %v4835
        %v4980 = vpack.c.b16 %v4842, %v4836
        %v4981 = vpack.c.b16 %v4843, %v4837
        %v4982 = vpack.c.b16 %v4850, %v4844
        %v4983 = vpack.c.b16 %v4851, %v4845
        %v4984 = vpack.c.b16 %v4852, %v4846
        %v4985 = vpack.c.b16 %v4853, %v4847
        %v4986 = vpack.c.b16 %v4854, %v4848
        %v4987 = vpack.c.b16 %v4855, %v4849
        %v4988 = vpack.c.b16 %v4862, %v4856
        %v4989 = vpack.c.b16 %v4863, %v4857
        %v4990 = vpack.c.b16 %v4864, %v4858
        %v4991 = vpack.c.b16 %v4865, %v4859
        %v4992 = vpack.c.b16 %v4866, %v4860
        %v4993 = vpack.c.b16 %v4867, %v4861
        %v4994 = vpack.c.b16 %v4874, %v4868
        %v4995 = vpack.c.b16 %v4875, %v4869
        %v4996 = vpack.c.b16 %v4876, %v4870
        %v4997 = vpack.c.b16 %v4877, %v4871
        %v4998 = vpack.c.b16 %v4878, %v4872
        %v4999 = vpack.c.b16 %v4879, %v4873
        %v5000 = vpack.c.b16 %v4886, %v4880
        %v5001 = vpack.c.b16 %v4887, %v4881
        %v5002 = vpack.c.b16 %v4888, %v4882
        %v5003 = vpack.c.b16 %v4889, %v4883
        %v5004 = vpack.c.b16 %v4890, %v4884
        %v5005 = vpack.c.b16 %v4891, %v4885
        %v5006 = vpack.c.b16 %v4898, %v4892
        %v5007 = vpack.c.b16 %v4899, %v4893
        %v5008 = vpack.c.b16 %v4900, %v4894
        %v5009 = vpack.c.b16 %v4901, %v4895
        %v5010 = vpack.c.b16 %v4902, %v4896
        %v5011 = vpack.c.b16 %v4903, %v4897
        %v5012 = vpack.c.b16 %v4910, %v4904
        %v5013 = vpack.c.b16 %v4911, %v4905
        %v5014 = vpack.c.b16 %v4912, %v4906
        %v5015 = vpack.c.b16 %v4913, %v4907
        %v5016 = vpack.c.b16 %v4914, %v4908
        %v5017 = vpack.c.b16 %v4915, %v4909
        %v5018 = vpack.c.b16 %v4922, %v4916
        %v5019 = vpack.c.b16 %v4923, %v4917
        %v5020 = vpack.c.b16 %v4924, %v4918
        %v5021 = vpack.c.b16 %v4925, %v4919
        %v5022 = vpack.c.b16 %v4926, %v4920
        %v5023 = vpack.c.b16 %v4927, %v4921
        %5120 = vmatpush.bf16.msra.mxu0 %v4970
        %5121 = vmatpush.bf16.msra.mxu0 %v4964
        %5122 = vmatpush.bf16.msra.mxu0 %v4958
        %5123 = vmatpush.bf16.msra.mxu0 %v4952
        %5124 = vmatpush.bf16.msra.mxu0 %v4946
        %5125 = vmatpush.bf16.msra.mxu0 %v4940
        %5126 = vmatpush.bf16.msra.mxu0 %v4934
        %5127 = vmatpush.bf16.msra.mxu0 %v4928
        %5128 = vmatmul.bf16.gmra.mxu0 %v4542
        %v5129 = vpop.f32.mrf.mxu0
        %v5130 = vadd.f32 0.0, %v5129
        %v5131 = vpop.f32.mrf.mxu0
        %5132 = vdwg.mxu0
        %5133 = vmatpush.bf16.msra.mxu0 %v5018
        %5134 = vmatpush.bf16.msra.mxu0 %v5012
        %5135 = vmatpush.bf16.msra.mxu0 %v5006
        %5136 = vmatpush.bf16.msra.mxu0 %v5000
        %5137 = vmatpush.bf16.msra.mxu0 %v4994
        %5138 = vmatpush.bf16.msra.mxu0 %v4988
        %5139 = vmatpush.bf16.msra.mxu0 %v4982
        %5140 = vmatpush.bf16.msra.mxu0 %v4976
        %5141 = vmatmul.bf16.gmra.mxu0 %v4543
        %v5142 = vpop.f32.mrf.mxu0
        %v5143 = vadd.f32 %v5130, %v5142
        %v5144 = vpop.f32.mrf.mxu0
        %5145 = vdwg.mxu0
        %5146 = vmatpush.bf16.msra.mxu0 %v4971
        %5147 = vmatpush.bf16.msra.mxu0 %v4965
        %5148 = vmatpush.bf16.msra.mxu0 %v4959
        %5149 = vmatpush.bf16.msra.mxu0 %v4953
        %5150 = vmatpush.bf16.msra.mxu0 %v4947
        %5151 = vmatpush.bf16.msra.mxu0 %v4941
        %5152 = vmatpush.bf16.msra.mxu0 %v4935
        %5153 = vmatpush.bf16.msra.mxu0 %v4929
        %5154 = vmatmul.bf16.gmra.mxu0 %v4542
        %v5155 = vpop.f32.mrf.mxu0
        %v5156 = vadd.f32 0.0, %v5155
        %v5157 = vpop.f32.mrf.mxu0
        %5158 = vdwg.mxu0
        %5159 = vmatpush.bf16.msra.mxu0 %v5019
        %5160 = vmatpush.bf16.msra.mxu0 %v5013
        %5161 = vmatpush.bf16.msra.mxu0 %v5007
        %5162 = vmatpush.bf16.msra.mxu0 %v5001
        %5163 = vmatpush.bf16.msra.mxu0 %v4995
        %5164 = vmatpush.bf16.msra.mxu0 %v4989
        %5165 = vmatpush.bf16.msra.mxu0 %v4983
        %5166 = vmatpush.bf16.msra.mxu0 %v4977
        %5167 = vmatmul.bf16.gmra.mxu0 %v4543
        %v5168 = vpop.f32.mrf.mxu0
        %v5169 = vadd.f32 %v5156, %v5168
        %v5170 = vpop.f32.mrf.mxu0
        %5171 = vdwg.mxu0
        %5172 = vmatpush.bf16.msra.mxu0 %v4972
        %5173 = vmatpush.bf16.msra.mxu0 %v4966
        %5174 = vmatpush.bf16.msra.mxu0 %v4960
        %5175 = vmatpush.bf16.msra.mxu0 %v4954
        %5176 = vmatpush.bf16.msra.mxu0 %v4948
        %5177 = vmatpush.bf16.msra.mxu0 %v4942
        %5178 = vmatpush.bf16.msra.mxu0 %v4936
        %5179 = vmatpush.bf16.msra.mxu0 %v4930
        %5180 = vmatmul.bf16.gmra.mxu0 %v4542
        %v5181 = vpop.f32.mrf.mxu0
        %v5182 = vadd.f32 0.0, %v5181
        %v5183 = vpop.f32.mrf.mxu0
        %5184 = vdwg.mxu0
        %5185 = vmatpush.bf16.msra.mxu0 %v5020
        %5186 = vmatpush.bf16.msra.mxu0 %v5014
        %5187 = vmatpush.bf16.msra.mxu0 %v5008
        %5188 = vmatpush.bf16.msra.mxu0 %v5002
        %5189 = vmatpush.bf16.msra.mxu0 %v4996
        %5190 = vmatpush.bf16.msra.mxu0 %v4990
        %5191 = vmatpush.bf16.msra.mxu0 %v4984
        %5192 = vmatpush.bf16.msra.mxu0 %v4978
        %5193 = vmatmul.bf16.gmra.mxu0 %v4543
        %v5194 = vpop.f32.mrf.mxu0
        %v5195 = vadd.f32 %v5182, %v5194
        %v5196 = vpop.f32.mrf.mxu0
        %5197 = vdwg.mxu0
        %5198 = vmatpush.bf16.msra.mxu0 %v4973
        %5199 = vmatpush.bf16.msra.mxu0 %v4967
        %5200 = vmatpush.bf16.msra.mxu0 %v4961
        %5201 = vmatpush.bf16.msra.mxu0 %v4955
        %5202 = vmatpush.bf16.msra.mxu0 %v4949
        %5203 = vmatpush.bf16.msra.mxu0 %v4943
        %5204 = vmatpush.bf16.msra.mxu0 %v4937
        %5205 = vmatpush.bf16.msra.mxu0 %v4931
        %5206 = vmatmul.bf16.gmra.mxu0 %v4542
        %v5207 = vpop.f32.mrf.mxu0
        %v5208 = vadd.f32 0.0, %v5207
        %v5209 = vpop.f32.mrf.mxu0
        %5210 = vdwg.mxu0
        %5211 = vmatpush.bf16.msra.mxu0 %v5021
        %5212 = vmatpush.bf16.msra.mxu0 %v5015
        %5213 = vmatpush.bf16.msra.mxu0 %v5009
        %5214 = vmatpush.bf16.msra.mxu0 %v5003
        %5215 = vmatpush.bf16.msra.mxu0 %v4997
        %5216 = vmatpush.bf16.msra.mxu0 %v4991
        %5217 = vmatpush.bf16.msra.mxu0 %v4985
        %5218 = vmatpush.bf16.msra.mxu0 %v4979
        %5219 = vmatmul.bf16.gmra.mxu0 %v4543
        %v5220 = vpop.f32.mrf.mxu0
        %v5221 = vadd.f32 %v5208, %v5220
        %v5222 = vpop.f32.mrf.mxu0
        %5223 = vdwg.mxu0
        %5224 = vmatpush.bf16.msra.mxu0 %v4974
        %5225 = vmatpush.bf16.msra.mxu0 %v4968
        %5226 = vmatpush.bf16.msra.mxu0 %v4962
        %5227 = vmatpush.bf16.msra.mxu0 %v4956
        %5228 = vmatpush.bf16.msra.mxu0 %v4950
        %5229 = vmatpush.bf16.msra.mxu0 %v4944
        %5230 = vmatpush.bf16.msra.mxu0 %v4938
        %5231 = vmatpush.bf16.msra.mxu0 %v4932
        %5232 = vmatmul.bf16.gmra.mxu0 %v4542
        %v5233 = vpop.f32.mrf.mxu0
        %v5234 = vadd.f32 0.0, %v5233
        %v5235 = vpop.f32.mrf.mxu0
        %5236 = vdwg.mxu0
        %5237 = vmatpush.bf16.msra.mxu0 %v5022
        %5238 = vmatpush.bf16.msra.mxu0 %v5016
        %5239 = vmatpush.bf16.msra.mxu0 %v5010
        %5240 = vmatpush.bf16.msra.mxu0 %v5004
        %5241 = vmatpush.bf16.msra.mxu0 %v4998
        %5242 = vmatpush.bf16.msra.mxu0 %v4992
        %5243 = vmatpush.bf16.msra.mxu0 %v4986
        %5244 = vmatpush.bf16.msra.mxu0 %v4980
        %5245 = vmatmul.bf16.gmra.mxu0 %v4543
        %v5246 = vpop.f32.mrf.mxu0
        %v5247 = vadd.f32 %v5234, %v5246
        %v5248 = vpop.f32.mrf.mxu0
        %5249 = vdwg.mxu0
        %5250 = vmatpush.bf16.msra.mxu0 %v4975
        %5251 = vmatpush.bf16.msra.mxu0 %v4969
        %5252 = vmatpush.bf16.msra.mxu0 %v4963
        %5253 = vmatpush.bf16.msra.mxu0 %v4957
        %5254 = vmatpush.bf16.msra.mxu0 %v4951
        %5255 = vmatpush.bf16.msra.mxu0 %v4945
        %5256 = vmatpush.bf16.msra.mxu0 %v4939
        %5257 = vmatpush.bf16.msra.mxu0 %v4933
        %5258 = vmatmul.bf16.gmra.mxu0 %v4542
        %v5259 = vpop.f32.mrf.mxu0
        %v5260 = vadd.f32 0.0, %v5259
        %v5261 = vpop.f32.mrf.mxu0
        %5262 = vdwg.mxu0
        %5263 = vmatpush.bf16.msra.mxu0 %v5023
        %5264 = vmatpush.bf16.msra.mxu0 %v5017
        %5265 = vmatpush.bf16.msra.mxu0 %v5011
        %5266 = vmatpush.bf16.msra.mxu0 %v5005
        %5267 = vmatpush.bf16.msra.mxu0 %v4999
        %5268 = vmatpush.bf16.msra.mxu0 %v4993
        %5269 = vmatpush.bf16.msra.mxu0 %v4987
        %5270 = vmatpush.bf16.msra.mxu0 %v4981
        %5271 = vmatmul.bf16.gmra.mxu0 %v4543
        %v5272 = vpop.f32.mrf.mxu0
        %v5273 = vadd.f32 %v5260, %v5272
        %v5274 = vpop.f32.mrf.mxu0
        %5275 = vdwg.mxu0
        %v5276 = vadd.f32 %v4318, %v5143
        %v5277 = vadd.f32 %v4344, %v5169
        %v5278 = vadd.f32 %v4370, %v5195
        %v5279 = vadd.f32 %v4396, %v5221
        %v5280 = vadd.f32 %v4422, %v5247
        %v5281 = vadd.f32 %v4448, %v5273
        %v5282 = vld [vmem:[#allocation13] sm:$0x3f]
        %v5284 = vperm.slane %v5282, 0
        %v5285 = vperm.slane %v5282, 1
        %v5286 = vperm.slane %v5282, 2
        %v5287 = vperm.slane %v5282, 3
        %v5288 = vperm.slane %v5282, 4
        %v5289 = vperm.slane %v5282, 5
        %v5296 = vadd.f32 %v5276, %v5284
        %v5297 = vadd.f32 %v5277, %v5285
        %v5298 = vadd.f32 %v5278, %v5286
        %v5299 = vadd.f32 %v5279, %v5287
        %v5300 = vadd.f32 %v5280, %v5288
        %v5301 = vadd.f32 %v5281, %v5289
        %v5302 = vadd.f32 %v5296, %v578
        %v5303 = vadd.f32 %v5297, %v579
        %v5304 = vadd.f32 %v5298, %v580
        %v5305 = vadd.f32 %v5299, %v581
        %v5306 = vadd.f32 %v5300, %v582
        %v5307 = vadd.f32 %v5301, %v583
        %v5308 = vadd.f32 %v5302, %v5303
        %v5309 = vadd.f32 %v5308, %v5304
        %v5310 = vadd.f32 %v5309, %v5305
        %v5311 = vadd.f32 %v5310, %v5306
        %v5312 = vadd.f32 %v5311, %v5307
        %5313 = vadd.xlane.f32.xlu0 %v5312
        %v5314 = vpop.xlane.xlu0 %5313
        %v5315 = vrcp.pop 768.0
        %v5316 = vmul.f32 768.0, %v5315
        %v5317 = vsub.f32 1.0, %v5316
        %v5318 = vmul.f32 %v5315, %v5317
        %v5319 = vadd.f32 %v5315, %v5318
        %vm5320 = vweird.f32 %v5315
        %v5321 = vsel %vm5320, %v5315, %v5319
        %v5322 = vmul.f32 %v5314, %v5321
        %v5323 = vsub.f32 %v5302, %v5322
        %v5324 = vsub.f32 %v5303, %v5322
        %v5325 = vsub.f32 %v5304, %v5322
        %v5326 = vsub.f32 %v5305, %v5322
        %v5327 = vsub.f32 %v5306, %v5322
        %v5328 = vsub.f32 %v5307, %v5322
        %v5329 = vmul.f32 %v5323, %v5323
        %v5330 = vmul.f32 %v5324, %v5324
        %v5331 = vmul.f32 %v5325, %v5325
        %v5332 = vmul.f32 %v5326, %v5326
        %v5333 = vmul.f32 %v5327, %v5327
        %v5334 = vmul.f32 %v5328, %v5328
        %v5335 = vadd.f32 %v5329, %v5330
        %v5336 = vadd.f32 %v5335, %v5331
        %v5337 = vadd.f32 %v5336, %v5332
        %v5338 = vadd.f32 %v5337, %v5333
        %v5339 = vadd.f32 %v5338, %v5334
        %5340 = vadd.xlane.f32.xlu0 %v5339
        %v5341 = vpop.xlane.xlu0 %5340
        %v5342 = vmul.f32 %v5341, %v5321
        %v5343 = vadd.f32 %v5342, 1e-05
        %v5344 = vrsqrt.pop %v5343
        %v5345 = vmul.f32 %v5344, %v5343
        %v5346 = vmul.f32 %v5345, %v5344
        %v5347 = vmul.f32 0.5, %v5346
        %v5348 = vsub.f32 1.5, %v5347
        %v5349 = vmul.f32 %v5344, %v5348
        %vm5350 = vweird.f32 %v5343
        %vm5351 = vweird.f32 %v5344
        %vm5352 = vmor %vm5350, %vm5351
        %v5353 = vsel %vm5352, %v5344, %v5349
        %v5354 = vmul.f32 %v5323, %v5353
        %v5355 = vmul.f32 %v5324, %v5353
        %v5356 = vmul.f32 %v5325, %v5353
        %v5357 = vmul.f32 %v5326, %v5353
        %v5358 = vmul.f32 %v5327, %v5353
        %v5359 = vmul.f32 %v5328, %v5353
        %v5360 = vld [vmem:[#allocation14] sm:$0x3f]
        %v5362 = vperm.slane %v5360, 0
        %v5363 = vperm.slane %v5360, 1
        %v5364 = vperm.slane %v5360, 2
        %v5365 = vperm.slane %v5360, 3
        %v5366 = vperm.slane %v5360, 4
        %v5367 = vperm.slane %v5360, 5
        %v5374 = vmul.f32 %v5354, %v5362
        %v5375 = vmul.f32 %v5355, %v5363
        %v5376 = vmul.f32 %v5356, %v5364
        %v5377 = vmul.f32 %v5357, %v5365
        %v5378 = vmul.f32 %v5358, %v5366
        %v5379 = vmul.f32 %v5359, %v5367
        %v5380 = vld [vmem:[#allocation16] sm:$0x3f]
        %v5382 = vperm.slane %v5380, 0
        %v5383 = vperm.slane %v5380, 1
        %v5384 = vperm.slane %v5380, 2
        %v5385 = vperm.slane %v5380, 3
        %v5386 = vperm.slane %v5380, 4
        %v5387 = vperm.slane %v5380, 5
        %v5394 = vadd.f32 %v5374, %v5382
        %v5395 = vadd.f32 %v5375, %v5383
        %v5396 = vadd.f32 %v5376, %v5384
        %v5397 = vadd.f32 %v5377, %v5385
        %v5398 = vadd.f32 %v5378, %v5386
        %v5399 = vadd.f32 %v5379, %v5387
        %5400 = vst [vmem:[%s569] sm:$0xff] %v5394
        %5401 = vst [vmem:[%s569 + $0x8] sm:$0xff] %v5395
        %5402 = vst [vmem:[%s569 + $0x10] sm:$0xff] %v5396
        %5403 = vst [vmem:[%s569 + $0x18] sm:$0xff] %v5397
        %5404 = vst [vmem:[%s569 + $0x20] sm:$0xff] %v5398
        %5405 = vst [vmem:[%s569 + $0x28] sm:$0xff] %v5399
        %s5406 = sand.u32 %s265, 1
        %s5407 = scalar_lea.sflag [#allocation4], %s5406
        %s5408 = sand.u32 %s265, 1
        %s5409 = smul.addr %s5408, 48
        %s5410 = scalar_lea.vmem [#allocation17], %s5409
        %s5411 = sand.u32 %s293, 1
        %s5412 = scalar_lea.sflag [#allocation19], %s5411
        %s5413 = sand.u32 %s293, 1
        %s5414 = smul.addr %s5413, 24
        %s5415 = scalar_lea.vmem [#allocation18], %s5414
        // Predicated region
        $region93: #{tpu_custom_call.1} parent=55 // pred_check
          %p5416 = pneg %p275
        $region94: #{tpu_custom_call.1} parent=55 // pred_check_branch
          %5418 = sbr.rel (%p5416) target = $region96
        $region95: #{tpu_custom_call.1} parent=55 // pred_region
          %5420 = vsyncadd %s5407, 0
          %s5421 = smul.addr %s42, 6
          %s5422 = smul.addr %s41, 6
          %s5423 = sadd.s32 %s5421, %s5422
          %s5424 = smul.addr %s5423, 8
          %s5425 = scalar_lea.hbm %s9, %s5424
          %s5427 = sshll.u32 %s5410, 4
          %s5428 = int_to_ptr.vmem [resolvable:$true] %s5427
          %s5429 = sshll.u32 %s5425, 4
          %s5430 = int_to_ptr.hbm [resolvable:$true] %s5429
          %5432 = dma.vmem_to_hbm [thread:$0]  %s5428, 768, %s5430, %s5407
        $region96: #{tpu_custom_call.1} parent=55 // pred_fallthru
          _
        // Predicated region
        $region97: #{tpu_custom_call.1} parent=55 // pred_check
          %p5433 = pneg %p303
        $region98: #{tpu_custom_call.1} parent=55 // pred_check_branch
          %5435 = sbr.rel (%p5433) target = $region100
        $region99: #{tpu_custom_call.1} parent=55 // pred_region
          %5437 = vsyncadd %s5412, 0
          %s5438 = smul.addr %s41, 3
          %s5439 = sadd.s32 %s42, %s5438
          %s5440 = smul.addr %s5439, 8
          %s5441 = scalar_lea.hbm %s10, %s5440
          %s5442 = sshll.u32 %s5415, 4
          %s5443 = int_to_ptr.vmem [resolvable:$true] %s5442
          %s5444 = sshll.u32 %s5441, 4
          %s5445 = int_to_ptr.hbm [resolvable:$true] %s5444
          %5450 = dma.vmem_to_hbm [thread:$0]  %s5443, 384, %s5445, %s5412, 128, 128, 8
        $region100: #{tpu_custom_call.1} parent=55 // pred_fallthru
          _
      $region56: #{tpu_custom_call.1} parent=5 // pred_fallthru
        _
      %p5451 = scmp.le.s32.totalorder 2, %s32
      // Predicated region
      $region101: #{tpu_custom_call.1} parent=5 // pred_check
        %p5452 = pneg %p5451
      $region102: #{tpu_custom_call.1} parent=5 // pred_check_branch
        %5454 = sbr.rel (%p5452) target = $region104
      $region103: #{tpu_custom_call.1} parent=5 // pred_region
        %s5455 = ssub.s32 %s32, 2
        // Predicated region
        $region105: #{tpu_custom_call.1} parent=103 // pred_check
          %p5456 = pneg %p281
        $region106: #{tpu_custom_call.1} parent=103 // pred_check_branch
          %5458 = sbr.rel (%p5456) target = $region108
        $region107: #{tpu_custom_call.1} parent=103 // pred_region
          %s5459 = sand.u32 %s266, 1
          %s5460 = scalar_lea.sflag [#allocation4], %s5459
          %s5461 = sand.u32 %s266, 1
          %s5462 = smul.addr %s5461, 48
          %s5463 = scalar_lea.vmem [#allocation17], %s5462
          %5465 = dma.done %s5460, 768
        $region108: #{tpu_custom_call.1} parent=103 // pred_fallthru
          _
        // Predicated region
        $region109: #{tpu_custom_call.1} parent=103 // pred_check
          %p5466 = pneg %p309
        $region110: #{tpu_custom_call.1} parent=103 // pred_check_branch
          %5468 = sbr.rel (%p5466) target = $region112
        $region111: #{tpu_custom_call.1} parent=103 // pred_region
          %s5469 = sand.u32 %s294, 1
          %s5470 = scalar_lea.sflag [#allocation19], %s5469
          %s5471 = sand.u32 %s294, 1
          %s5472 = smul.addr %s5471, 24
          %s5473 = scalar_lea.vmem [#allocation18], %s5472
          %5475 = dma.done %s5470, 384
        $region112: #{tpu_custom_call.1} parent=103 // pred_fallthru
          _
      $region104: #{tpu_custom_call.1} parent=5 // pred_fallthru
        _
    $region6: #{tpu_custom_call.1} parent=1 // loop_footer
      %s36 = sadd.s32 1, %s32
    $region7: #{tpu_custom_call.1} parent=1 // loop_footer_branch
      %31 = sbr.rel target = $region3
    $region8: #{tpu_custom_call.1} parent=1 // loop_exit
      _
    %5476 = vsyncpa [#allocation3], 1
    %s5477 = scalar_lea.sflag [#allocation3], 1
    %5478 = vsyncpa %s5477, 1
    %5479 = vsyncpa [#allocation6], 1
    %s5480 = scalar_lea.sflag [#allocation6], 1
    %5481 = vsyncpa %s5480, 1
    %5482 = vsyncpa [#allocation9], 1
    %5483 = vsyncpa [#allocation12], 1
    %5484 = vsyncpa [#allocation15], 1
    %5485 = vsyncpa [#allocation4], 1
    %s5486 = scalar_lea.sflag [#allocation4], 1
    %5487 = vsyncpa %s5486, 1
    %5488 = vsyncpa [#allocation19], 1
    %s5489 = scalar_lea.sflag [#allocation19], 1
    %5490 = vsyncpa %s5489, 1

</llo_original>
